<compile_context>
chip_gen: v6e
topology: v6e:2x2x1
jax: 0.10.0
libtpu: 0.0.40
codegen_flags: <defaults>
</compile_context>

<pallas_src>
import math
import functools

import jax
import jax.numpy as jnp
from jax.experimental import pallas as pl
from jax.experimental.pallas import tpu as pltpu


# ----------------------------------------------------------------------------------------------
# In-kernel building blocks
# ----------------------------------------------------------------------------------------------

def _layer_norm(x, w, b, eps=1e-5):
    mean = jnp.mean(x, axis=-1, keepdims=True)
    var = jnp.mean(jnp.square(x - mean), axis=-1, keepdims=True)
    return (x - mean) * jax.lax.rsqrt(var + eps) * w + b


def _encoder_stack(x, w, head_masks, *, num_layers):
    """Pre-norm (norm_first=True) TransformerEncoder stack, relu FFN, dropout=identity (eval).

    MXU operands are bf16 (weights arrive bf16 from the packed slab), accumulation is f32.
    Q/K/V/O stay single full-width (D,D) matmuls; per-head score/context use the hoisted lane
    masks so no tiny dh-wide projections or lane-unaligned concatenations are needed.
    """
    f32, bf16 = jnp.float32, jnp.bfloat16
    G, S, D = x.shape
    nhead = len(head_masks)
    dh = D // nhead
    scale = 1.0 / math.sqrt(dh)

    for _ in range(num_layers):
        # --- self-attention block (pre-norm) ---
        xn2 = _layer_norm(x, w['ln1w'], w['ln1b']).reshape(G * S, D).astype(bf16)
        q = (jnp.dot(xn2, w['wq'], preferred_element_type=f32) + w['bq']).reshape(G, S, D)
        k = (jnp.dot(xn2, w['wk'], preferred_element_type=f32) + w['bk']).reshape(G, S, D)
        v = (jnp.dot(xn2, w['wv'], preferred_element_type=f32) + w['bv']).reshape(G, S, D)
        kb, vb = k.astype(bf16), v.astype(bf16)
        ctx = jnp.zeros((G, S, D), f32)
        # TODO(synk): at large d_model switch to a head-batched ('gqhd,gkhd->ghqk') layout; the
        # masked full-D contraction below does nhead x the necessary score/context MXU flops.
        for m in head_masks:
            s = jnp.einsum('gqd,gkd->gqk', (q * m).astype(bf16), kb,
                           preferred_element_type=f32) * scale
            s = s - jnp.max(s, axis=-1, keepdims=True)
            p = jnp.exp(s)
            p = p * pl.reciprocal(jnp.sum(p, axis=-1, keepdims=True), approx=True)
            ctx = ctx + jnp.einsum('gqk,gkd->gqd', p.astype(bf16), vb,
                                   preferred_element_type=f32) * m
        attn = jnp.dot(ctx.reshape(G * S, D).astype(bf16), w['wo'],
                       preferred_element_type=f32) + w['bo']
        x = x + attn.reshape(G, S, D)

        # --- feed-forward block (pre-norm) ---
        xn2 = _layer_norm(x, w['ln2w'], w['ln2b']).reshape(G * S, D).astype(bf16)
        hid = jnp.maximum(jnp.dot(xn2, w['w1'], preferred_element_type=f32) + w['b1'], 0.0)
        ff = jnp.dot(hid.astype(bf16), w['w2'], preferred_element_type=f32) + w['b2']
        x = x + ff.reshape(G, S, D)
    return x


# ----------------------------------------------------------------------------------------------
# Fused forward kernel (one grid step == one batch tile)
# ----------------------------------------------------------------------------------------------

def matnet_kernel(x1_ref, x2_ref, x3_ref, mats_ref, vecs_ref, o_ref, *,
                  nhead, num_layers, s_in, s_out, d_model, dff, pv, hw, fw,
                  moff, voff):
    f32, bf16 = jnp.float32, jnp.bfloat16
    D, F = d_model, dff
    bB = x1_ref.shape[0]                           # batch tile handled by this grid step

    def mat(name):                                 # bf16 matrix block (8-aligned ref slice)
        r, nr, nc = moff[name]
        return mats_ref[r:r + nr, 0:nc]

    V = vecs_ref[...]                              # every small f32 vector in a single load
    def vec(name):
        r, nr, nc = voff[name]
        return V[r:r + nr, 0:nc]

    # ------------------ conv stems + sinusoidal positional encoding ------------------
    # Production branch, kernel_size=3 'same' Conv1d: the +/-1 time shifts are sublane rolls of
    # the flattened (bB*s_in, pv) rows; iota masks zero the wrapped rows at per-sample boundaries.
    # (3 tiny K=pv matmuls kept separate on purpose: a lane concat of pv-wide chunks to fuse them
    #  would be 128-lane-unaligned; the MXU cost difference at K<=3*pv is negligible.)
    x1 = x1_ref[...].reshape(bB * s_in, pv)
    t_idx = jax.lax.broadcasted_iota(jnp.int32, (bB * s_in, 1), 0)
    not_first = (t_idx % s_in != 0).astype(f32)        # t == 0     -> no x[t-1] contribution
    not_last = ((t_idx + 1) % s_in != 0).astype(f32)   # t == S-1   -> no x[t+1] contribution
    xm1 = pltpu.roll(x1, shift=1, axis=0)                      # row t <- x[t-1]
    xp1 = pltpu.roll(x1, shift=bB * s_in - 1, axis=0)          # row t <- x[t+1]
    a2 = (jnp.dot(xm1.astype(bf16), mat('wpv0'), preferred_element_type=f32) * not_first
          + jnp.dot(x1.astype(bf16), mat('wpv1'), preferred_element_type=f32)
          + jnp.dot(xp1.astype(bf16), mat('wpv2'), preferred_element_type=f32) * not_last
          + vec('bpv'))
    # Weather branches: kernel_size=1 convs == per-timestep linear maps on flattened rows.
    h2 = jnp.dot(x2_ref[...].reshape(bB * s_in, hw).astype(bf16), mat('whw'),
                 preferred_element_type=f32) + vec('bhw')
    t2 = jnp.dot(x3_ref[...].reshape(bB * s_out, fw).astype(bf16), mat('wtw'),
                 preferred_element_type=f32) + vec('btw')

    pe_in, pe_out = vec('pe_in'), vec('pe_out')
    a3 = a2.reshape(bB, s_in, D) + pe_in[None]
    h3 = h2.reshape(bB, s_in, D) + pe_in[None]
    t3 = t2.reshape(bB, s_out, D) + pe_out[None]

    # --------------- shared-weight pre-norm Transformer encoder stacks ---------------
    w = dict(ln1w=vec('ln1w'), ln1b=vec('ln1b'), ln2w=vec('ln2w'), ln2b=vec('ln2b'),
             wq=mat('wq'), bq=vec('bq'), wk=mat('wk'), bk=vec('bk'),
             wv=mat('wv'), bv=vec('bv'), wo=mat('wo'), bo=vec('bo'),
             w1=mat('w1'), b1=vec('b1'), w2=mat('w2'), b2=vec('b2'))
    dh = D // nhead
    lane = jax.lax.broadcasted_iota(jnp.int32, (1, 1, D), 2)
    head_masks = [((lane >= h * dh) & (lane < (h + 1) * dh)).astype(f32)
                  for h in range(nhead)]           # built once; hoisted out of the layer loop

    # Production + historic-weather branches share encoder weights -> one run at 2*bB rows,
    # packed with a register-level leading-axis concat (no VMEM scratch round trip).
    ah_enc = _encoder_stack(jnp.concatenate([a3, h3], axis=0), w, head_masks,
                            num_layers=num_layers)
    # TODO(synk): pad the target-weather branch to s_in with a key mask and fold it into the same
    # encoder run to remove this second (low-row-occupancy) serial pass.
    t_enc = _encoder_stack(t3, w, head_masks, num_layers=num_layers)

    # ----------------------------------- fusion head -----------------------------------
    # linearN(x.permute(0,2,1)).permute(0,2,1)[:, -1, :] == sum_s x[:, s, :] * W_N[-1, s] + b_N[-1]
    a_last = jnp.sum(ah_enc[:bB] * vec('lin1c')[None], axis=1) + vec('lin1b')
    h_last = jnp.sum(ah_enc[bB:] * vec('lin2c')[None], axis=1) + vec('lin2b')
    t_last = jnp.sum(t_enc * vec('lin3c')[None], axis=1) + vec('lin3b')

    def mm(x, name):
        return jnp.dot(x.astype(bf16), mat(name), preferred_element_type=f32)

    # fc weights are pre-split into two D-wide halves == torch.cat-then-matmul (agg|hist, out|trg).
    out1 = jnp.maximum(mm(a_last, 'fc1wa') + mm(h_last, 'fc1wb') + vec('fc1bias'), 0.0)
    hid2 = jnp.maximum(mm(out1, 'fc2awa') + mm(t_last, 'fc2awb') + vec('fc2abias'), 0.0)
    logits = mm(hid2, 'fc2bw') + vec('fc2bbias')
    o_ref[...] = jax.nn.sigmoid(logits)[:, None, :]


# ----------------------------------------------------------------------------------------------
# Host-side parameter packing (two slabs -> two DMAs instead of ~40)
# ----------------------------------------------------------------------------------------------

class _Packer:
    """Packs many small parameter tensors into one 2-D slab (one DMA, one VMEM tile)."""

    def __init__(self, width, row_align):
        self.width, self.row_align = width, row_align
        self.blocks, self.index, self.rows = [], {}, 0

    def add(self, name, arr):
        arr = jnp.asarray(arr, jnp.float32)
        if arr.ndim == 1:
            arr = arr[None, :]
        r, c = arr.shape
        rp = -(-r // self.row_align) * self.row_align
        self.blocks.append(jnp.zeros((rp, self.width), jnp.float32).at[:r, :c].set(arr))
        self.index[name] = (self.rows, r, c)
        self.rows += rp

    def finalize(self, dtype):
        slab = jnp.concatenate(self.blocks, axis=0)
        pad = (-slab.shape[0]) % 8
        if pad:
            slab = jnp.concatenate([slab, jnp.zeros((pad, self.width), jnp.float32)], axis=0)
        return slab.astype(dtype), dict(self.index)


def _pack_params(params, pe_in, pe_out, *, d_model, dff, s_in, s_out):
    D, F = d_model, dff
    cp, ch, ct, enc = params['conv_pv'], params['conv_hw'], params['conv_tw'], params['enc']
    width = max(D, F, s_out)

    # Matrix slab (bf16 MXU operands); 8-aligned row offsets so the kernel slices the ref directly.
    mp = _Packer(width, row_align=8)
    for name, arr in [('wq', enc['wq']), ('wk', enc['wk']), ('wv', enc['wv']), ('wo', enc['wo']),
                      ('w1', enc['w1']), ('w2', enc['w2']),
                      ('fc1wa', params['fc1_W'][:D]), ('fc1wb', params['fc1_W'][D:]),
                      ('fc2awa', params['fc2a_W'][:D]), ('fc2awb', params['fc2a_W'][D:]),
                      ('fc2bw', params['fc2b_W']),
                      ('wpv0', cp['w0']), ('wpv1', cp['w1']), ('wpv2', cp['w2']),
                      ('whw', ch['w']), ('wtw', ct['w'])]:
        mp.add(name, arr)
    mats, moff = mp.finalize(jnp.bfloat16)

    # Vector slab (f32): PE tables, every bias / LN vector, time-mix row -1 (stored as columns),
    # and the three time-mix scalar biases. Multi-row entries go first (8-aligned offsets).
    vp = _Packer(width, row_align=1)
    for name, arr in [('pe_in', pe_in), ('pe_out', pe_out),
                      ('lin1c', params['lin1_W'][-1][:, None]),
                      ('lin2c', params['lin2_W'][-1][:, None]),
                      ('lin3c', params['lin3_W'][-1][:, None]),
                      ('bpv', cp['b']), ('bhw', ch['b']), ('btw', ct['b']),
                      ('bq', enc['bq']), ('bk', enc['bk']), ('bv', enc['bv']), ('bo', enc['bo']),
                      ('b1', enc['b1']), ('b2', enc['b2']),
                      ('ln1w', enc['ln1w']), ('ln1b', enc['ln1b']),
                      ('ln2w', enc['ln2w']), ('ln2b', enc['ln2b']),
                      ('fc1bias', params['fc1_b']), ('fc2abias', params['fc2a_b']),
                      ('fc2bbias', params['fc2b_b']),
                      ('lin1b', params['lin1_b'][-1].reshape(1, 1)),
                      ('lin2b', params['lin2_b'][-1].reshape(1, 1)),
                      ('lin3b', params['lin3_b'][-1].reshape(1, 1))]:
        vp.add(name, arr)
    vecs, voff = vp.finalize(jnp.float32)
    return mats, moff, vecs, voff


# ----------------------------------------------------------------------------------------------
# Wrapper
# ----------------------------------------------------------------------------------------------

def sinusoidal_pe(max_len, d_model):
    pos = jnp.arange(max_len, dtype=jnp.float32)[:, None]
    div = jnp.exp(jnp.arange(0, d_model, 2, dtype=jnp.float32) * (-math.log(10000.0) / d_model))
    pe = jnp.zeros((max_len, d_model), jnp.float32)
    pe = pe.at[:, 0::2].set(jnp.sin(pos * div))
    pe = pe.at[:, 1::2].set(jnp.cos(pos * div))
    return pe


def matnet_forward(params, x1, x2, x3, *, nhead, num_layers, block_b=None):
    """x1: (B, n_steps_in, pv), x2: (B, n_steps_in, hw), x3: (B, n_steps_out, fw) -> (B, n_steps_out)."""
    B, s_in, pv = x1.shape
    hw = x2.shape[-1]
    s_out, fw = x3.shape[1], x3.shape[-1]
    D = params['enc']['wq'].shape[0]
    F = params['enc']['w1'].shape[1]

    if block_b is None:                 # >=2 grid steps when possible: both v7x TensorCores used,
        block_b = B // 2 if (B % 2 == 0 and B > 1) else B   # and the VMEM scaling path for v5e.
    if B % block_b != 0:
        raise ValueError("batch must be divisible by block_b")

    mats, moff, vecs, voff = _pack_params(
        params, sinusoidal_pe(s_in, D), sinusoidal_pe(s_out, D),
        d_model=D, dff=F, s_in=s_in, s_out=s_out)

    kernel = functools.partial(
        matnet_kernel, nhead=nhead, num_layers=num_layers,
        s_in=s_in, s_out=s_out, d_model=D, dff=F, pv=pv, hw=hw, fw=fw,
        moff=moff, voff=voff)

    # Rough per-grid-step VMEM residency (lane-padded f32 activations, per-head score tensors,
    # double-buffered weight slabs) with 2x headroom; capped below v7x's 64 MiB physical VMEM.
    lanes = 128 * pl.cdiv(max(D, F), 128)
    g = 2 * block_b
    est = (12 * 4 * g * s_in * lanes
           + 4 * 4 * g * s_in * (128 * pl.cdiv(s_in, 128))
           + 2 * (mats.size * 2 + vecs.size * 4)
           + (2 << 20))
    vmem_limit = int(min(60 * 2**20, max(24 * 2**20, 2 * est)))

    out = pl.pallas_call(
        kernel,
        out_shape=jax.ShapeDtypeStruct((B, 1, s_out), jnp.float32),
        grid=(B // block_b,),
        in_specs=[
            pl.BlockSpec((block_b, s_in, pv), lambda b: (b, 0, 0)),
            pl.BlockSpec((block_b, s_in, hw), lambda b: (b, 0, 0)),
            pl.BlockSpec((block_b, s_out, fw), lambda b: (b, 0, 0)),
            pl.BlockSpec(mats.shape, lambda b: (0, 0)),   # constant index -> stays resident
            pl.BlockSpec(vecs.shape, lambda b: (0, 0)),   # constant index -> stays resident
        ],
        out_specs=pl.BlockSpec((block_b, 1, s_out), lambda b: (b, 0, 0)),
        compiler_params=pltpu.CompilerParams(
            dimension_semantics=("parallel",),
            vmem_limit_bytes=vmem_limit),
    )(x1, x2, x3, mats, vecs)
    return out.reshape(B, s_out)


# ----------------------------------------------------------------------------------------------
# Parameter construction (plain JAX; random weights matching the module's structure)
# ----------------------------------------------------------------------------------------------

def init_params(key, *, pv, hw, fw, s_in, s_out, d_model, nhead, dff):
    D, F = d_model, dff
    keys = iter(jax.random.split(key, 40))

    def w(shape, scale=0.1):
        return scale * jax.random.normal(next(keys), shape, jnp.float32)

    # Conv1d weights stored per tap as (Cin, D): tap 0 <-> x[t-1], tap 1 <-> x[t], tap 2 <-> x[t+1].
    conv_pv = dict(w0=w((pv, D)), w1=w((pv, D)), w2=w((pv, D)), b=w((1, D), 0.02))
    conv_hw = dict(w=w((hw, D)), b=w((1, D), 0.02))
    conv_tw = dict(w=w((fw, D)), b=w((1, D), 0.02))

    # One TransformerEncoderLayer parameter set (shared by every layer of every branch, as at init).
    enc = dict(
        ln1w=jnp.ones((1, D), jnp.float32), ln1b=jnp.zeros((1, D), jnp.float32),
        wq=w((D, D)), bq=w((1, D), 0.02),
        wk=w((D, D)), bk=w((1, D), 0.02),
        wv=w((D, D)), bv=w((1, D), 0.02),
        wo=w((D, D)), bo=w((1, D), 0.02),
        ln2w=jnp.ones((1, D), jnp.float32), ln2b=jnp.zeros((1, D), jnp.float32),
        w1=w((D, F)), b1=w((1, F), 0.02),
        w2=w((F, D)), b2=w((1, D), 0.02),
    )

    return dict(
        conv_pv=conv_pv, conv_hw=conv_hw, conv_tw=conv_tw, enc=enc,
        lin1_W=w((s_in, s_in)), lin1_b=w((s_in,), 0.02),
        lin2_W=w((s_in, s_in)), lin2_b=w((s_in,), 0.02),
        lin3_W=w((s_out, s_out)), lin3_b=w((s_out,), 0.02),
        fc1_W=w((2 * D, D)), fc1_b=w((1, D), 0.02),
        fc2a_W=w((2 * D, D)), fc2a_b=w((1, D), 0.02),
        fc2b_W=w((D, s_out)), fc2b_b=w((1, s_out), 0.02),
    )


# ----------------------------------------------------------------------------------------------

if __name__ == "__main__":
    B = 2
    PV_FEATURES, HW_FEATURES, FW_FEATURES = 4, 8, 8
    N_STEPS_IN, N_STEPS_OUT = 16, 8
    D_MODEL, NHEAD, NUM_LAYERS, DIM_FF = 32, 4, 2, 64

    key = jax.random.PRNGKey(0)
    kp, k1, k2, k3 = jax.random.split(key, 4)
    params = init_params(kp, pv=PV_FEATURES, hw=HW_FEATURES, fw=FW_FEATURES,
                         s_in=N_STEPS_IN, s_out=N_STEPS_OUT,
                         d_model=D_MODEL, nhead=NHEAD, dff=DIM_FF)

    x1 = jax.random.normal(k1, (B, N_STEPS_IN, PV_FEATURES), jnp.float32)   # aggregated production
    x2 = jax.random.normal(k2, (B, N_STEPS_IN, HW_FEATURES), jnp.float32)   # historic weather
    x3 = jax.random.normal(k3, (B, N_STEPS_OUT, FW_FEATURES), jnp.float32)  # day-ahead weather

    fwd = jax.jit(functools.partial(matnet_forward, nhead=NHEAD, num_layers=NUM_LAYERS))
    out = fwd(params, x1, x2, x3)
    jax.block_until_ready(out)

    assert out.shape == (B, N_STEPS_OUT), out.shape
    assert bool(jnp.all(jnp.isfinite(out)))
    assert bool(jnp.all((out >= 0.0) & (out <= 1.0)))   # sigmoid output range
    print("KERNEL_OK")
</pallas_src>

<mosaic_0001>
module attributes {stable_mosaic.version = 11 : i64} {
  func.func @matnet_kernel(%arg0: i32, %arg1: memref<1x16x4xf32, #tpu.memory_space<vmem>>, %arg2: memref<1x16x8xf32, #tpu.memory_space<vmem>>, %arg3: memref<1x8x8xf32, #tpu.memory_space<vmem>>, %arg4: memref<424x64xbf16, #tpu.memory_space<vmem>>, %arg5: memref<88x64xf32, #tpu.memory_space<vmem>>, %arg6: memref<1x1x8xf32, #tpu.memory_space<vmem>>) attributes {dimension_semantics = [#tpu.dimension_semantics<parallel>], iteration_bounds = array<i64: 2>, scalar_prefetch = 0 : i64, scratch_operands = 0 : i64, tpu.core_type = #tpu.core_type<tc>, window_params = [{transform_indices = @transform_0, window_bounds = array<i64: 1, 16, 4>}, {transform_indices = @transform_1, window_bounds = array<i64: 1, 16, 8>}, {transform_indices = @transform_2, window_bounds = array<i64: 1, 8, 8>}, {pipeline_mode = #tpu.pipeline_mode<synchronous>, transform_indices = @transform_3, window_bounds = array<i64: 424, 64>}, {pipeline_mode = #tpu.pipeline_mode<synchronous>, transform_indices = @transform_4, window_bounds = array<i64: 88, 64>}, {transform_indices = @transform_5, window_bounds = array<i64: 1, 1, 8>}]} {
    %c0 = arith.constant 0 : index
    %c0_0 = arith.constant 0 : index
    %0 = vector.load %arg5[%c0, %c0_0] : memref<88x64xf32, #tpu.memory_space<vmem>>, vector<88x64xf32>
    %c0_1 = arith.constant 0 : index
    %c0_2 = arith.constant 0 : index
    %c0_3 = arith.constant 0 : index
    %1 = vector.load %arg1[%c0_1, %c0_2, %c0_3] : memref<1x16x4xf32, #tpu.memory_space<vmem>>, vector<1x16x4xf32>
    %2 = vector.shape_cast %1 : vector<1x16x4xf32> to vector<16x4xf32>
    %3 = tpu.iota {dimensions = array<i32: 0>} : vector<16x1xi32>
    %c16_i32 = arith.constant 16 : i32
    %c0_i32 = arith.constant 0 : i32
    %4 = arith.cmpi eq, %c16_i32, %c0_i32 : i32
    %c1_i32 = arith.constant 1 : i32
    %5 = arith.select %4, %c1_i32, %c16_i32 : i32
    %6 = vector.broadcast %5 : i32 to vector<16x1xi32>
    %7 = arith.remsi %3, %6 : vector<16x1xi32>
    %c0_i32_4 = arith.constant 0 : i32
    %8 = vector.broadcast %c0_i32_4 : i32 to vector<16x1xi32>
    %9 = arith.cmpi ne, %7, %8 : vector<16x1xi32>
    %c0_i32_5 = arith.constant 0 : i32
    %10 = vector.broadcast %c0_i32_5 : i32 to vector<16x1xi32>
    %11 = arith.cmpi slt, %7, %10 : vector<16x1xi32>
    %c0_i32_6 = arith.constant 0 : i32
    %12 = arith.cmpi slt, %5, %c0_i32_6 : i32
    %13 = vector.broadcast %12 : i1 to vector<16x1xi1>
    %14 = vector.broadcast %13 : vector<16x1xi1> to vector<16x1xi1>
    %15 = arith.xori %11, %14 : vector<16x1xi1>
    %16 = arith.andi %15, %9 : vector<16x1xi1>
    %17 = vector.broadcast %5 : i32 to vector<16x1xi32>
    %18 = arith.addi %7, %17 : vector<16x1xi32>
    %19 = arith.select %16, %18, %7 : vector<16x1xi1>, vector<16x1xi32>
    %c0_i32_7 = arith.constant 0 : i32
    %20 = vector.broadcast %c0_i32_7 : i32 to vector<16x1xi32>
    %21 = arith.cmpi ne, %19, %20 : vector<16x1xi32>
    %22 = arith.extui %21 : vector<16x1xi1> to vector<16x1xi32>
    %23 = arith.sitofp %22 : vector<16x1xi32> to vector<16x1xf32>
    %c1_i32_8 = arith.constant 1 : i32
    %24 = vector.broadcast %c1_i32_8 : i32 to vector<16x1xi32>
    %25 = arith.addi %3, %24 : vector<16x1xi32>
    %c16_i32_9 = arith.constant 16 : i32
    %c0_i32_10 = arith.constant 0 : i32
    %26 = arith.cmpi eq, %c16_i32_9, %c0_i32_10 : i32
    %c1_i32_11 = arith.constant 1 : i32
    %27 = arith.select %26, %c1_i32_11, %c16_i32_9 : i32
    %28 = vector.broadcast %27 : i32 to vector<16x1xi32>
    %29 = arith.remsi %25, %28 : vector<16x1xi32>
    %c0_i32_12 = arith.constant 0 : i32
    %30 = vector.broadcast %c0_i32_12 : i32 to vector<16x1xi32>
    %31 = arith.cmpi ne, %29, %30 : vector<16x1xi32>
    %c0_i32_13 = arith.constant 0 : i32
    %32 = vector.broadcast %c0_i32_13 : i32 to vector<16x1xi32>
    %33 = arith.cmpi slt, %29, %32 : vector<16x1xi32>
    %c0_i32_14 = arith.constant 0 : i32
    %34 = arith.cmpi slt, %27, %c0_i32_14 : i32
    %35 = vector.broadcast %34 : i1 to vector<16x1xi1>
    %36 = vector.broadcast %35 : vector<16x1xi1> to vector<16x1xi1>
    %37 = arith.xori %33, %36 : vector<16x1xi1>
    %38 = arith.andi %37, %31 : vector<16x1xi1>
    %39 = vector.broadcast %27 : i32 to vector<16x1xi32>
    %40 = arith.addi %29, %39 : vector<16x1xi32>
    %41 = arith.select %38, %40, %29 : vector<16x1xi1>, vector<16x1xi32>
    %c0_i32_15 = arith.constant 0 : i32
    %42 = vector.broadcast %c0_i32_15 : i32 to vector<16x1xi32>
    %43 = arith.cmpi ne, %41, %42 : vector<16x1xi32>
    %44 = arith.extui %43 : vector<16x1xi1> to vector<16x1xi32>
    %45 = arith.sitofp %44 : vector<16x1xi32> to vector<16x1xf32>
    %c1_i32_16 = arith.constant 1 : i32
    %46 = tpu.dynamic_rotate %2 by %c1_i32_16 dim 0 : vector<16x4xf32>, i32 -> vector<16x4xf32>
    %c15_i32 = arith.constant 15 : i32
    %47 = tpu.dynamic_rotate %2 by %c15_i32 dim 0 : vector<16x4xf32>, i32 -> vector<16x4xf32>
    %48 = arith.truncf %46 : vector<16x4xf32> to vector<16x4xbf16>
    %c384 = arith.constant 384 : index
    %c0_17 = arith.constant 0 : index
    %49 = vector.load %arg4[%c384, %c0_17] : memref<424x64xbf16, #tpu.memory_space<vmem>>, vector<4x32xbf16>
    %cst = arith.constant dense<0.000000e+00> : vector<16x32xf32>
    %50 = tpu.matmul %48, %49, %cst {dimension_numbers = #tpu.dot_dimension_numbers<[1], [0], [0], [1], [0, 0, 1, 1], [], []>} : vector<16x4xbf16>, vector<4x32xbf16>, vector<16x32xf32> -> vector<16x32xf32>
    %51 = vector.broadcast %23 : vector<16x1xf32> to vector<16x32xf32>
    %52 = arith.mulf %50, %51 : vector<16x32xf32>
    %53 = arith.truncf %2 : vector<16x4xf32> to vector<16x4xbf16>
    %c392 = arith.constant 392 : index
    %c0_18 = arith.constant 0 : index
    %54 = vector.load %arg4[%c392, %c0_18] : memref<424x64xbf16, #tpu.memory_space<vmem>>, vector<4x32xbf16>
    %cst_19 = arith.constant dense<0.000000e+00> : vector<16x32xf32>
    %55 = tpu.matmul %53, %54, %cst_19 {dimension_numbers = #tpu.dot_dimension_numbers<[1], [0], [0], [1], [0, 0, 1, 1], [], []>} : vector<16x4xbf16>, vector<4x32xbf16>, vector<16x32xf32> -> vector<16x32xf32>
    %56 = arith.addf %52, %55 : vector<16x32xf32>
    %57 = arith.truncf %47 : vector<16x4xf32> to vector<16x4xbf16>
    %c400 = arith.constant 400 : index
    %c0_20 = arith.constant 0 : index
    %58 = vector.load %arg4[%c400, %c0_20] : memref<424x64xbf16, #tpu.memory_space<vmem>>, vector<4x32xbf16>
    %cst_21 = arith.constant dense<0.000000e+00> : vector<16x32xf32>
    %59 = tpu.matmul %57, %58, %cst_21 {dimension_numbers = #tpu.dot_dimension_numbers<[1], [0], [0], [1], [0, 0, 1, 1], [], []>} : vector<16x4xbf16>, vector<4x32xbf16>, vector<16x32xf32> -> vector<16x32xf32>
    %60 = vector.broadcast %45 : vector<16x1xf32> to vector<16x32xf32>
    %61 = arith.mulf %59, %60 : vector<16x32xf32>
    %62 = arith.addf %56, %61 : vector<16x32xf32>
    %63 = vector.extract_strided_slice %0 {offsets = [64, 0], sizes = [1, 32], strides = [1, 1]} : vector<88x64xf32> to vector<1x32xf32>
    %64 = vector.broadcast %63 : vector<1x32xf32> to vector<16x32xf32>
    %65 = arith.addf %62, %64 : vector<16x32xf32>
    %c0_22 = arith.constant 0 : index
    %c0_23 = arith.constant 0 : index
    %c0_24 = arith.constant 0 : index
    %66 = vector.load %arg2[%c0_22, %c0_23, %c0_24] : memref<1x16x8xf32, #tpu.memory_space<vmem>>, vector<1x16x8xf32>
    %67 = vector.shape_cast %66 : vector<1x16x8xf32> to vector<16x8xf32>
    %68 = arith.truncf %67 : vector<16x8xf32> to vector<16x8xbf16>
    %c408 = arith.constant 408 : index
    %c0_25 = arith.constant 0 : index
    %69 = vector.load %arg4[%c408, %c0_25] : memref<424x64xbf16, #tpu.memory_space<vmem>>, vector<8x32xbf16>
    %cst_26 = arith.constant dense<0.000000e+00> : vector<16x32xf32>
    %70 = tpu.matmul %68, %69, %cst_26 {dimension_numbers = #tpu.dot_dimension_numbers<[1], [0], [0], [1], [0, 0, 1, 1], [], []>} : vector<16x8xbf16>, vector<8x32xbf16>, vector<16x32xf32> -> vector<16x32xf32>
    %71 = vector.extract_strided_slice %0 {offsets = [65, 0], sizes = [1, 32], strides = [1, 1]} : vector<88x64xf32> to vector<1x32xf32>
    %72 = vector.broadcast %71 : vector<1x32xf32> to vector<16x32xf32>
    %73 = arith.addf %70, %72 : vector<16x32xf32>
    %c0_27 = arith.constant 0 : index
    %c0_28 = arith.constant 0 : index
    %c0_29 = arith.constant 0 : index
    %74 = vector.load %arg3[%c0_27, %c0_28, %c0_29] : memref<1x8x8xf32, #tpu.memory_space<vmem>>, vector<1x8x8xf32>
    %75 = vector.shape_cast %74 : vector<1x8x8xf32> to vector<8x8xf32>
    %76 = arith.truncf %75 : vector<8x8xf32> to vector<8x8xbf16>
    %c416 = arith.constant 416 : index
    %c0_30 = arith.constant 0 : index
    %77 = vector.load %arg4[%c416, %c0_30] : memref<424x64xbf16, #tpu.memory_space<vmem>>, vector<8x32xbf16>
    %cst_31 = arith.constant dense<0.000000e+00> : vector<8x32xf32>
    %78 = tpu.matmul %76, %77, %cst_31 {dimension_numbers = #tpu.dot_dimension_numbers<[1], [0], [0], [1], [0, 0, 1, 1], [], []>} : vector<8x8xbf16>, vector<8x32xbf16>, vector<8x32xf32> -> vector<8x32xf32>
    %79 = vector.extract_strided_slice %0 {offsets = [66, 0], sizes = [1, 32], strides = [1, 1]} : vector<88x64xf32> to vector<1x32xf32>
    %80 = vector.broadcast %79 : vector<1x32xf32> to vector<8x32xf32>
    %81 = arith.addf %78, %80 : vector<8x32xf32>
    %82 = vector.extract_strided_slice %0 {offsets = [0, 0], sizes = [16, 32], strides = [1, 1]} : vector<88x64xf32> to vector<16x32xf32>
    %83 = vector.extract_strided_slice %0 {offsets = [16, 0], sizes = [8, 32], strides = [1, 1]} : vector<88x64xf32> to vector<8x32xf32>
    %84 = vector.shape_cast %65 : vector<16x32xf32> to vector<1x16x32xf32>
    %85 = vector.shape_cast %82 : vector<16x32xf32> to vector<1x16x32xf32>
    %86 = arith.addf %84, %85 : vector<1x16x32xf32>
    %87 = vector.shape_cast %73 : vector<16x32xf32> to vector<1x16x32xf32>
    %88 = vector.shape_cast %82 : vector<16x32xf32> to vector<1x16x32xf32>
    %89 = arith.addf %87, %88 : vector<1x16x32xf32>
    %90 = vector.shape_cast %81 : vector<8x32xf32> to vector<1x8x32xf32>
    %91 = vector.shape_cast %83 : vector<8x32xf32> to vector<1x8x32xf32>
    %92 = arith.addf %90, %91 : vector<1x8x32xf32>
    %93 = vector.extract_strided_slice %0 {offsets = [73, 0], sizes = [1, 32], strides = [1, 1]} : vector<88x64xf32> to vector<1x32xf32>
    %94 = vector.extract_strided_slice %0 {offsets = [74, 0], sizes = [1, 32], strides = [1, 1]} : vector<88x64xf32> to vector<1x32xf32>
    %95 = vector.extract_strided_slice %0 {offsets = [75, 0], sizes = [1, 32], strides = [1, 1]} : vector<88x64xf32> to vector<1x32xf32>
    %96 = vector.extract_strided_slice %0 {offsets = [76, 0], sizes = [1, 32], strides = [1, 1]} : vector<88x64xf32> to vector<1x32xf32>
    %c0_32 = arith.constant 0 : index
    %c0_33 = arith.constant 0 : index
    %97 = vector.load %arg4[%c0_32, %c0_33] : memref<424x64xbf16, #tpu.memory_space<vmem>>, vector<32x32xbf16>
    %98 = vector.extract_strided_slice %0 {offsets = [67, 0], sizes = [1, 32], strides = [1, 1]} : vector<88x64xf32> to vector<1x32xf32>
    %c32 = arith.constant 32 : index
    %c0_34 = arith.constant 0 : index
    %99 = vector.load %arg4[%c32, %c0_34] : memref<424x64xbf16, #tpu.memory_space<vmem>>, vector<32x32xbf16>
    %100 = vector.extract_strided_slice %0 {offsets = [68, 0], sizes = [1, 32], strides = [1, 1]} : vector<88x64xf32> to vector<1x32xf32>
    %c64 = arith.constant 64 : index
    %c0_35 = arith.constant 0 : index
    %101 = vector.load %arg4[%c64, %c0_35] : memref<424x64xbf16, #tpu.memory_space<vmem>>, vector<32x32xbf16>
    %102 = vector.extract_strided_slice %0 {offsets = [69, 0], sizes = [1, 32], strides = [1, 1]} : vector<88x64xf32> to vector<1x32xf32>
    %c96 = arith.constant 96 : index
    %c0_36 = arith.constant 0 : index
    %103 = vector.load %arg4[%c96, %c0_36] : memref<424x64xbf16, #tpu.memory_space<vmem>>, vector<32x32xbf16>
    %104 = vector.extract_strided_slice %0 {offsets = [70, 0], sizes = [1, 32], strides = [1, 1]} : vector<88x64xf32> to vector<1x32xf32>
    %c128 = arith.constant 128 : index
    %c0_37 = arith.constant 0 : index
    %105 = vector.load %arg4[%c128, %c0_37] : memref<424x64xbf16, #tpu.memory_space<vmem>>, vector<32x64xbf16>
    %106 = vector.extract_strided_slice %0 {offsets = [71, 0], sizes = [1, 64], strides = [1, 1]} : vector<88x64xf32> to vector<1x64xf32>
    %c160 = arith.constant 160 : index
    %c0_38 = arith.constant 0 : index
    %107 = vector.load %arg4[%c160, %c0_38] : memref<424x64xbf16, #tpu.memory_space<vmem>>, vector<64x32xbf16>
    %108 = vector.extract_strided_slice %0 {offsets = [72, 0], sizes = [1, 32], strides = [1, 1]} : vector<88x64xf32> to vector<1x32xf32>
    %109 = tpu.iota {dimensions = array<i32: 2>} : vector<1x1x32xi32>
    %c0_i32_39 = arith.constant 0 : i32
    %110 = vector.broadcast %c0_i32_39 : i32 to vector<1x1x32xi32>
    %111 = arith.cmpi sge, %109, %110 : vector<1x1x32xi32>
    %c8_i32 = arith.constant 8 : i32
    %112 = vector.broadcast %c8_i32 : i32 to vector<1x1x32xi32>
    %113 = arith.cmpi slt, %109, %112 : vector<1x1x32xi32>
    %114 = arith.andi %111, %113 : vector<1x1x32xi1>
    %115 = arith.extui %114 : vector<1x1x32xi1> to vector<1x1x32xi32>
    %116 = arith.sitofp %115 : vector<1x1x32xi32> to vector<1x1x32xf32>
    %c8_i32_40 = arith.constant 8 : i32
    %117 = vector.broadcast %c8_i32_40 : i32 to vector<1x1x32xi32>
    %118 = arith.cmpi sge, %109, %117 : vector<1x1x32xi32>
    %c16_i32_41 = arith.constant 16 : i32
    %119 = vector.broadcast %c16_i32_41 : i32 to vector<1x1x32xi32>
    %120 = arith.cmpi slt, %109, %119 : vector<1x1x32xi32>
    %121 = arith.andi %118, %120 : vector<1x1x32xi1>
    %122 = arith.extui %121 : vector<1x1x32xi1> to vector<1x1x32xi32>
    %123 = arith.sitofp %122 : vector<1x1x32xi32> to vector<1x1x32xf32>
    %c16_i32_42 = arith.constant 16 : i32
    %124 = vector.broadcast %c16_i32_42 : i32 to vector<1x1x32xi32>
    %125 = arith.cmpi sge, %109, %124 : vector<1x1x32xi32>
    %c24_i32 = arith.constant 24 : i32
    %126 = vector.broadcast %c24_i32 : i32 to vector<1x1x32xi32>
    %127 = arith.cmpi slt, %109, %126 : vector<1x1x32xi32>
    %128 = arith.andi %125, %127 : vector<1x1x32xi1>
    %129 = arith.extui %128 : vector<1x1x32xi1> to vector<1x1x32xi32>
    %130 = arith.sitofp %129 : vector<1x1x32xi32> to vector<1x1x32xf32>
    %c24_i32_43 = arith.constant 24 : i32
    %131 = vector.broadcast %c24_i32_43 : i32 to vector<1x1x32xi32>
    %132 = arith.cmpi sge, %109, %131 : vector<1x1x32xi32>
    %c32_i32 = arith.constant 32 : i32
    %133 = vector.broadcast %c32_i32 : i32 to vector<1x1x32xi32>
    %134 = arith.cmpi slt, %109, %133 : vector<1x1x32xi32>
    %135 = arith.andi %132, %134 : vector<1x1x32xi1>
    %136 = arith.extui %135 : vector<1x1x32xi1> to vector<1x1x32xi32>
    %137 = arith.sitofp %136 : vector<1x1x32xi32> to vector<1x1x32xf32>
    %138 = tpu.concatenate %86, %89 in 0 : vector<1x16x32xf32>, vector<1x16x32xf32> -> vector<2x16x32xf32>
    %cst_44 = arith.constant dense<0.000000e+00> : vector<2x16xf32>
    %139 = vector.multi_reduction <add>, %138, %cst_44 [2] : vector<2x16x32xf32> to vector<2x16xf32>
    %140 = vector.shape_cast %139 : vector<2x16xf32> to vector<2x16x1xf32>
    %cst_45 = arith.constant 3.200000e+01 : f32
    %141 = vector.broadcast %cst_45 : f32 to vector<2x16x1xf32>
    %142 = arith.divf %140, %141 : vector<2x16x1xf32>
    %143 = vector.broadcast %142 : vector<2x16x1xf32> to vector<2x16x32xf32>
    %144 = arith.subf %138, %143 : vector<2x16x32xf32>
    %145 = arith.mulf %144, %144 : vector<2x16x32xf32>
    %cst_46 = arith.constant dense<0.000000e+00> : vector<2x16xf32>
    %146 = vector.multi_reduction <add>, %145, %cst_46 [2] : vector<2x16x32xf32> to vector<2x16xf32>
    %147 = vector.shape_cast %146 : vector<2x16xf32> to vector<2x16x1xf32>
    %cst_47 = arith.constant 3.200000e+01 : f32
    %148 = vector.broadcast %cst_47 : f32 to vector<2x16x1xf32>
    %149 = arith.divf %147, %148 : vector<2x16x1xf32>
    %150 = vector.broadcast %142 : vector<2x16x1xf32> to vector<2x16x32xf32>
    %151 = arith.subf %138, %150 : vector<2x16x32xf32>
    %cst_48 = arith.constant 9.99999974E-6 : f32
    %152 = vector.broadcast %cst_48 : f32 to vector<2x16x1xf32>
    %153 = arith.addf %149, %152 : vector<2x16x1xf32>
    %154 = math.rsqrt %153 : vector<2x16x1xf32>
    %155 = vector.broadcast %154 : vector<2x16x1xf32> to vector<2x16x32xf32>
    %156 = arith.mulf %151, %155 : vector<2x16x32xf32>
    %157 = vector.shape_cast %93 : vector<1x32xf32> to vector<1x1x32xf32>
    %158 = vector.broadcast %157 : vector<1x1x32xf32> to vector<2x16x32xf32>
    %159 = arith.mulf %156, %158 : vector<2x16x32xf32>
    %160 = vector.shape_cast %94 : vector<1x32xf32> to vector<1x1x32xf32>
    %161 = vector.broadcast %160 : vector<1x1x32xf32> to vector<2x16x32xf32>
    %162 = arith.addf %159, %161 : vector<2x16x32xf32>
    %163 = vector.shape_cast %162 : vector<2x16x32xf32> to vector<32x32xf32>
    %164 = arith.truncf %163 : vector<32x32xf32> to vector<32x32xbf16>
    %cst_49 = arith.constant dense<0.000000e+00> : vector<32x32xf32>
    %165 = tpu.matmul %164, %97, %cst_49 {dimension_numbers = #tpu.dot_dimension_numbers<[1], [0], [0], [1], [0, 0, 1, 1], [], []>} : vector<32x32xbf16>, vector<32x32xbf16>, vector<32x32xf32> -> vector<32x32xf32>
    %166 = vector.broadcast %98 : vector<1x32xf32> to vector<32x32xf32>
    %167 = arith.addf %165, %166 : vector<32x32xf32>
    %168 = vector.shape_cast %167 : vector<32x32xf32> to vector<2x16x32xf32>
    %cst_50 = arith.constant dense<0.000000e+00> : vector<32x32xf32>
    %169 = tpu.matmul %164, %99, %cst_50 {dimension_numbers = #tpu.dot_dimension_numbers<[1], [0], [0], [1], [0, 0, 1, 1], [], []>} : vector<32x32xbf16>, vector<32x32xbf16>, vector<32x32xf32> -> vector<32x32xf32>
    %170 = vector.broadcast %100 : vector<1x32xf32> to vector<32x32xf32>
    %171 = arith.addf %169, %170 : vector<32x32xf32>
    %172 = vector.shape_cast %171 : vector<32x32xf32> to vector<2x16x32xf32>
    %cst_51 = arith.constant dense<0.000000e+00> : vector<32x32xf32>
    %173 = tpu.matmul %164, %101, %cst_51 {dimension_numbers = #tpu.dot_dimension_numbers<[1], [0], [0], [1], [0, 0, 1, 1], [], []>} : vector<32x32xbf16>, vector<32x32xbf16>, vector<32x32xf32> -> vector<32x32xf32>
    %174 = vector.broadcast %102 : vector<1x32xf32> to vector<32x32xf32>
    %175 = arith.addf %173, %174 : vector<32x32xf32>
    %176 = vector.shape_cast %175 : vector<32x32xf32> to vector<2x16x32xf32>
    %177 = arith.truncf %172 : vector<2x16x32xf32> to vector<2x16x32xbf16>
    %178 = arith.truncf %176 : vector<2x16x32xf32> to vector<2x16x32xbf16>
    %cst_52 = arith.constant 0.000000e+00 : f32
    %179 = vector.broadcast %cst_52 : f32 to vector<2x16x32xf32>
    %180 = vector.broadcast %116 : vector<1x1x32xf32> to vector<2x16x32xf32>
    %181 = arith.mulf %168, %180 : vector<2x16x32xf32>
    %182 = arith.truncf %181 : vector<2x16x32xf32> to vector<2x16x32xbf16>
    "tpu.trace_start"() <{level = 10 : i32, message = "gqd,gkd->gqk"}> : () -> ()
    %cst_53 = arith.constant dense<0.000000e+00> : vector<2x16x16xf32>
    %183 = tpu.matmul %182, %177, %cst_53 {dimension_numbers = #tpu.dot_dimension_numbers<[2], [2], [1], [1], [0, 0, 0, 1, 1, 1], [0], [0]>} : vector<2x16x32xbf16>, vector<2x16x32xbf16>, vector<2x16x16xf32> -> vector<2x16x16xf32>
    "tpu.trace_stop"() : () -> ()
    %cst_54 = arith.constant 0.353553385 : f32
    %184 = vector.broadcast %cst_54 : f32 to vector<2x16x16xf32>
    %185 = arith.mulf %183, %184 : vector<2x16x16xf32>
    %cst_55 = arith.constant dense<0xFF800000> : vector<2x16xf32>
    %186 = vector.multi_reduction <maximumf>, %185, %cst_55 [2] : vector<2x16x16xf32> to vector<2x16xf32>
    %187 = vector.shape_cast %186 : vector<2x16xf32> to vector<2x16x1xf32>
    %188 = vector.broadcast %187 : vector<2x16x1xf32> to vector<2x16x16xf32>
    %189 = arith.subf %185, %188 : vector<2x16x16xf32>
    %190 = math.exp %189 : vector<2x16x16xf32>
    %cst_56 = arith.constant dense<0.000000e+00> : vector<2x16xf32>
    %191 = vector.multi_reduction <add>, %190, %cst_56 [2] : vector<2x16x16xf32> to vector<2x16xf32>
    %192 = vector.shape_cast %191 : vector<2x16xf32> to vector<2x16x1xf32>
    %193 = tpu.reciprocal %192 {approx = true} : vector<2x16x1xf32> -> vector<2x16x1xf32>
    %194 = vector.broadcast %193 : vector<2x16x1xf32> to vector<2x16x16xf32>
    %195 = arith.mulf %190, %194 : vector<2x16x16xf32>
    %196 = arith.truncf %195 : vector<2x16x16xf32> to vector<2x16x16xbf16>
    "tpu.trace_start"() <{level = 10 : i32, message = "gqk,gkd->gqd"}> : () -> ()
    %cst_57 = arith.constant dense<0.000000e+00> : vector<2x16x32xf32>
    %197 = tpu.matmul %196, %178, %cst_57 {dimension_numbers = #tpu.dot_dimension_numbers<[2], [1], [1], [2], [0, 0, 0, 1, 1, 2], [0], [0]>} : vector<2x16x16xbf16>, vector<2x16x32xbf16>, vector<2x16x32xf32> -> vector<2x16x32xf32>
    "tpu.trace_stop"() : () -> ()
    %198 = vector.broadcast %116 : vector<1x1x32xf32> to vector<2x16x32xf32>
    %199 = arith.mulf %197, %198 : vector<2x16x32xf32>
    %200 = arith.addf %179, %199 : vector<2x16x32xf32>
    %201 = vector.broadcast %123 : vector<1x1x32xf32> to vector<2x16x32xf32>
    %202 = arith.mulf %168, %201 : vector<2x16x32xf32>
    %203 = arith.truncf %202 : vector<2x16x32xf32> to vector<2x16x32xbf16>
    "tpu.trace_start"() <{level = 10 : i32, message = "gqd,gkd->gqk"}> : () -> ()
    %cst_58 = arith.constant dense<0.000000e+00> : vector<2x16x16xf32>
    %204 = tpu.matmul %203, %177, %cst_58 {dimension_numbers = #tpu.dot_dimension_numbers<[2], [2], [1], [1], [0, 0, 0, 1, 1, 1], [0], [0]>} : vector<2x16x32xbf16>, vector<2x16x32xbf16>, vector<2x16x16xf32> -> vector<2x16x16xf32>
    "tpu.trace_stop"() : () -> ()
    %cst_59 = arith.constant 0.353553385 : f32
    %205 = vector.broadcast %cst_59 : f32 to vector<2x16x16xf32>
    %206 = arith.mulf %204, %205 : vector<2x16x16xf32>
    %cst_60 = arith.constant dense<0xFF800000> : vector<2x16xf32>
    %207 = vector.multi_reduction <maximumf>, %206, %cst_60 [2] : vector<2x16x16xf32> to vector<2x16xf32>
    %208 = vector.shape_cast %207 : vector<2x16xf32> to vector<2x16x1xf32>
    %209 = vector.broadcast %208 : vector<2x16x1xf32> to vector<2x16x16xf32>
    %210 = arith.subf %206, %209 : vector<2x16x16xf32>
    %211 = math.exp %210 : vector<2x16x16xf32>
    %cst_61 = arith.constant dense<0.000000e+00> : vector<2x16xf32>
    %212 = vector.multi_reduction <add>, %211, %cst_61 [2] : vector<2x16x16xf32> to vector<2x16xf32>
    %213 = vector.shape_cast %212 : vector<2x16xf32> to vector<2x16x1xf32>
    %214 = tpu.reciprocal %213 {approx = true} : vector<2x16x1xf32> -> vector<2x16x1xf32>
    %215 = vector.broadcast %214 : vector<2x16x1xf32> to vector<2x16x16xf32>
    %216 = arith.mulf %211, %215 : vector<2x16x16xf32>
    %217 = arith.truncf %216 : vector<2x16x16xf32> to vector<2x16x16xbf16>
    "tpu.trace_start"() <{level = 10 : i32, message = "gqk,gkd->gqd"}> : () -> ()
    %cst_62 = arith.constant dense<0.000000e+00> : vector<2x16x32xf32>
    %218 = tpu.matmul %217, %178, %cst_62 {dimension_numbers = #tpu.dot_dimension_numbers<[2], [1], [1], [2], [0, 0, 0, 1, 1, 2], [0], [0]>} : vector<2x16x16xbf16>, vector<2x16x32xbf16>, vector<2x16x32xf32> -> vector<2x16x32xf32>
    "tpu.trace_stop"() : () -> ()
    %219 = vector.broadcast %123 : vector<1x1x32xf32> to vector<2x16x32xf32>
    %220 = arith.mulf %218, %219 : vector<2x16x32xf32>
    %221 = arith.addf %200, %220 : vector<2x16x32xf32>
    %222 = vector.broadcast %130 : vector<1x1x32xf32> to vector<2x16x32xf32>
    %223 = arith.mulf %168, %222 : vector<2x16x32xf32>
    %224 = arith.truncf %223 : vector<2x16x32xf32> to vector<2x16x32xbf16>
    "tpu.trace_start"() <{level = 10 : i32, message = "gqd,gkd->gqk"}> : () -> ()
    %cst_63 = arith.constant dense<0.000000e+00> : vector<2x16x16xf32>
    %225 = tpu.matmul %224, %177, %cst_63 {dimension_numbers = #tpu.dot_dimension_numbers<[2], [2], [1], [1], [0, 0, 0, 1, 1, 1], [0], [0]>} : vector<2x16x32xbf16>, vector<2x16x32xbf16>, vector<2x16x16xf32> -> vector<2x16x16xf32>
    "tpu.trace_stop"() : () -> ()
    %cst_64 = arith.constant 0.353553385 : f32
    %226 = vector.broadcast %cst_64 : f32 to vector<2x16x16xf32>
    %227 = arith.mulf %225, %226 : vector<2x16x16xf32>
    %cst_65 = arith.constant dense<0xFF800000> : vector<2x16xf32>
    %228 = vector.multi_reduction <maximumf>, %227, %cst_65 [2] : vector<2x16x16xf32> to vector<2x16xf32>
    %229 = vector.shape_cast %228 : vector<2x16xf32> to vector<2x16x1xf32>
    %230 = vector.broadcast %229 : vector<2x16x1xf32> to vector<2x16x16xf32>
    %231 = arith.subf %227, %230 : vector<2x16x16xf32>
    %232 = math.exp %231 : vector<2x16x16xf32>
    %cst_66 = arith.constant dense<0.000000e+00> : vector<2x16xf32>
    %233 = vector.multi_reduction <add>, %232, %cst_66 [2] : vector<2x16x16xf32> to vector<2x16xf32>
    %234 = vector.shape_cast %233 : vector<2x16xf32> to vector<2x16x1xf32>
    %235 = tpu.reciprocal %234 {approx = true} : vector<2x16x1xf32> -> vector<2x16x1xf32>
    %236 = vector.broadcast %235 : vector<2x16x1xf32> to vector<2x16x16xf32>
    %237 = arith.mulf %232, %236 : vector<2x16x16xf32>
    %238 = arith.truncf %237 : vector<2x16x16xf32> to vector<2x16x16xbf16>
    "tpu.trace_start"() <{level = 10 : i32, message = "gqk,gkd->gqd"}> : () -> ()
    %cst_67 = arith.constant dense<0.000000e+00> : vector<2x16x32xf32>
    %239 = tpu.matmul %238, %178, %cst_67 {dimension_numbers = #tpu.dot_dimension_numbers<[2], [1], [1], [2], [0, 0, 0, 1, 1, 2], [0], [0]>} : vector<2x16x16xbf16>, vector<2x16x32xbf16>, vector<2x16x32xf32> -> vector<2x16x32xf32>
    "tpu.trace_stop"() : () -> ()
    %240 = vector.broadcast %130 : vector<1x1x32xf32> to vector<2x16x32xf32>
    %241 = arith.mulf %239, %240 : vector<2x16x32xf32>
    %242 = arith.addf %221, %241 : vector<2x16x32xf32>
    %243 = vector.broadcast %137 : vector<1x1x32xf32> to vector<2x16x32xf32>
    %244 = arith.mulf %168, %243 : vector<2x16x32xf32>
    %245 = arith.truncf %244 : vector<2x16x32xf32> to vector<2x16x32xbf16>
    "tpu.trace_start"() <{level = 10 : i32, message = "gqd,gkd->gqk"}> : () -> ()
    %cst_68 = arith.constant dense<0.000000e+00> : vector<2x16x16xf32>
    %246 = tpu.matmul %245, %177, %cst_68 {dimension_numbers = #tpu.dot_dimension_numbers<[2], [2], [1], [1], [0, 0, 0, 1, 1, 1], [0], [0]>} : vector<2x16x32xbf16>, vector<2x16x32xbf16>, vector<2x16x16xf32> -> vector<2x16x16xf32>
    "tpu.trace_stop"() : () -> ()
    %cst_69 = arith.constant 0.353553385 : f32
    %247 = vector.broadcast %cst_69 : f32 to vector<2x16x16xf32>
    %248 = arith.mulf %246, %247 : vector<2x16x16xf32>
    %cst_70 = arith.constant dense<0xFF800000> : vector<2x16xf32>
    %249 = vector.multi_reduction <maximumf>, %248, %cst_70 [2] : vector<2x16x16xf32> to vector<2x16xf32>
    %250 = vector.shape_cast %249 : vector<2x16xf32> to vector<2x16x1xf32>
    %251 = vector.broadcast %250 : vector<2x16x1xf32> to vector<2x16x16xf32>
    %252 = arith.subf %248, %251 : vector<2x16x16xf32>
    %253 = math.exp %252 : vector<2x16x16xf32>
    %cst_71 = arith.constant dense<0.000000e+00> : vector<2x16xf32>
    %254 = vector.multi_reduction <add>, %253, %cst_71 [2] : vector<2x16x16xf32> to vector<2x16xf32>
    %255 = vector.shape_cast %254 : vector<2x16xf32> to vector<2x16x1xf32>
    %256 = tpu.reciprocal %255 {approx = true} : vector<2x16x1xf32> -> vector<2x16x1xf32>
    %257 = vector.broadcast %256 : vector<2x16x1xf32> to vector<2x16x16xf32>
    %258 = arith.mulf %253, %257 : vector<2x16x16xf32>
    %259 = arith.truncf %258 : vector<2x16x16xf32> to vector<2x16x16xbf16>
    "tpu.trace_start"() <{level = 10 : i32, message = "gqk,gkd->gqd"}> : () -> ()
    %cst_72 = arith.constant dense<0.000000e+00> : vector<2x16x32xf32>
    %260 = tpu.matmul %259, %178, %cst_72 {dimension_numbers = #tpu.dot_dimension_numbers<[2], [1], [1], [2], [0, 0, 0, 1, 1, 2], [0], [0]>} : vector<2x16x16xbf16>, vector<2x16x32xbf16>, vector<2x16x32xf32> -> vector<2x16x32xf32>
    "tpu.trace_stop"() : () -> ()
    %261 = vector.broadcast %137 : vector<1x1x32xf32> to vector<2x16x32xf32>
    %262 = arith.mulf %260, %261 : vector<2x16x32xf32>
    %263 = arith.addf %242, %262 : vector<2x16x32xf32>
    %264 = vector.shape_cast %263 : vector<2x16x32xf32> to vector<32x32xf32>
    %265 = arith.truncf %264 : vector<32x32xf32> to vector<32x32xbf16>
    %cst_73 = arith.constant dense<0.000000e+00> : vector<32x32xf32>
    %266 = tpu.matmul %265, %103, %cst_73 {dimension_numbers = #tpu.dot_dimension_numbers<[1], [0], [0], [1], [0, 0, 1, 1], [], []>} : vector<32x32xbf16>, vector<32x32xbf16>, vector<32x32xf32> -> vector<32x32xf32>
    %267 = vector.broadcast %104 : vector<1x32xf32> to vector<32x32xf32>
    %268 = arith.addf %266, %267 : vector<32x32xf32>
    %269 = vector.shape_cast %268 : vector<32x32xf32> to vector<2x16x32xf32>
    %270 = arith.addf %138, %269 : vector<2x16x32xf32>
    %cst_74 = arith.constant dense<0.000000e+00> : vector<2x16xf32>
    %271 = vector.multi_reduction <add>, %270, %cst_74 [2] : vector<2x16x32xf32> to vector<2x16xf32>
    %272 = vector.shape_cast %271 : vector<2x16xf32> to vector<2x16x1xf32>
    %cst_75 = arith.constant 3.200000e+01 : f32
    %273 = vector.broadcast %cst_75 : f32 to vector<2x16x1xf32>
    %274 = arith.divf %272, %273 : vector<2x16x1xf32>
    %275 = vector.broadcast %274 : vector<2x16x1xf32> to vector<2x16x32xf32>
    %276 = arith.subf %270, %275 : vector<2x16x32xf32>
    %277 = arith.mulf %276, %276 : vector<2x16x32xf32>
    %cst_76 = arith.constant dense<0.000000e+00> : vector<2x16xf32>
    %278 = vector.multi_reduction <add>, %277, %cst_76 [2] : vector<2x16x32xf32> to vector<2x16xf32>
    %279 = vector.shape_cast %278 : vector<2x16xf32> to vector<2x16x1xf32>
    %cst_77 = arith.constant 3.200000e+01 : f32
    %280 = vector.broadcast %cst_77 : f32 to vector<2x16x1xf32>
    %281 = arith.divf %279, %280 : vector<2x16x1xf32>
    %282 = vector.broadcast %274 : vector<2x16x1xf32> to vector<2x16x32xf32>
    %283 = arith.subf %270, %282 : vector<2x16x32xf32>
    %cst_78 = arith.constant 9.99999974E-6 : f32
    %284 = vector.broadcast %cst_78 : f32 to vector<2x16x1xf32>
    %285 = arith.addf %281, %284 : vector<2x16x1xf32>
    %286 = math.rsqrt %285 : vector<2x16x1xf32>
    %287 = vector.broadcast %286 : vector<2x16x1xf32> to vector<2x16x32xf32>
    %288 = arith.mulf %283, %287 : vector<2x16x32xf32>
    %289 = vector.shape_cast %95 : vector<1x32xf32> to vector<1x1x32xf32>
    %290 = vector.broadcast %289 : vector<1x1x32xf32> to vector<2x16x32xf32>
    %291 = arith.mulf %288, %290 : vector<2x16x32xf32>
    %292 = vector.shape_cast %96 : vector<1x32xf32> to vector<1x1x32xf32>
    %293 = vector.broadcast %292 : vector<1x1x32xf32> to vector<2x16x32xf32>
    %294 = arith.addf %291, %293 : vector<2x16x32xf32>
    %295 = vector.shape_cast %294 : vector<2x16x32xf32> to vector<32x32xf32>
    %296 = arith.truncf %295 : vector<32x32xf32> to vector<32x32xbf16>
    %cst_79 = arith.constant dense<0.000000e+00> : vector<32x64xf32>
    %297 = tpu.matmul %296, %105, %cst_79 {dimension_numbers = #tpu.dot_dimension_numbers<[1], [0], [0], [1], [0, 0, 1, 1], [], []>} : vector<32x32xbf16>, vector<32x64xbf16>, vector<32x64xf32> -> vector<32x64xf32>
    %298 = vector.broadcast %106 : vector<1x64xf32> to vector<32x64xf32>
    %299 = arith.addf %297, %298 : vector<32x64xf32>
    %cst_80 = arith.constant 0.000000e+00 : f32
    %300 = vector.broadcast %cst_80 : f32 to vector<32x64xf32>
    %301 = arith.maximumf %299, %300 : vector<32x64xf32>
    %302 = arith.truncf %301 : vector<32x64xf32> to vector<32x64xbf16>
    %cst_81 = arith.constant dense<0.000000e+00> : vector<32x32xf32>
    %303 = tpu.matmul %302, %107, %cst_81 {dimension_numbers = #tpu.dot_dimension_numbers<[1], [0], [0], [1], [0, 0, 1, 1], [], []>} : vector<32x64xbf16>, vector<64x32xbf16>, vector<32x32xf32> -> vector<32x32xf32>
    %304 = vector.broadcast %108 : vector<1x32xf32> to vector<32x32xf32>
    %305 = arith.addf %303, %304 : vector<32x32xf32>
    %306 = vector.shape_cast %305 : vector<32x32xf32> to vector<2x16x32xf32>
    %307 = arith.addf %270, %306 : vector<2x16x32xf32>
    %cst_82 = arith.constant dense<0.000000e+00> : vector<2x16xf32>
    %308 = vector.multi_reduction <add>, %307, %cst_82 [2] : vector<2x16x32xf32> to vector<2x16xf32>
    %309 = vector.shape_cast %308 : vector<2x16xf32> to vector<2x16x1xf32>
    %cst_83 = arith.constant 3.200000e+01 : f32
    %310 = vector.broadcast %cst_83 : f32 to vector<2x16x1xf32>
    %311 = arith.divf %309, %310 : vector<2x16x1xf32>
    %312 = vector.broadcast %311 : vector<2x16x1xf32> to vector<2x16x32xf32>
    %313 = arith.subf %307, %312 : vector<2x16x32xf32>
    %314 = arith.mulf %313, %313 : vector<2x16x32xf32>
    %cst_84 = arith.constant dense<0.000000e+00> : vector<2x16xf32>
    %315 = vector.multi_reduction <add>, %314, %cst_84 [2] : vector<2x16x32xf32> to vector<2x16xf32>
    %316 = vector.shape_cast %315 : vector<2x16xf32> to vector<2x16x1xf32>
    %cst_85 = arith.constant 3.200000e+01 : f32
    %317 = vector.broadcast %cst_85 : f32 to vector<2x16x1xf32>
    %318 = arith.divf %316, %317 : vector<2x16x1xf32>
    %319 = vector.broadcast %311 : vector<2x16x1xf32> to vector<2x16x32xf32>
    %320 = arith.subf %307, %319 : vector<2x16x32xf32>
    %cst_86 = arith.constant 9.99999974E-6 : f32
    %321 = vector.broadcast %cst_86 : f32 to vector<2x16x1xf32>
    %322 = arith.addf %318, %321 : vector<2x16x1xf32>
    %323 = math.rsqrt %322 : vector<2x16x1xf32>
    %324 = vector.broadcast %323 : vector<2x16x1xf32> to vector<2x16x32xf32>
    %325 = arith.mulf %320, %324 : vector<2x16x32xf32>
    %326 = vector.shape_cast %93 : vector<1x32xf32> to vector<1x1x32xf32>
    %327 = vector.broadcast %326 : vector<1x1x32xf32> to vector<2x16x32xf32>
    %328 = arith.mulf %325, %327 : vector<2x16x32xf32>
    %329 = vector.shape_cast %94 : vector<1x32xf32> to vector<1x1x32xf32>
    %330 = vector.broadcast %329 : vector<1x1x32xf32> to vector<2x16x32xf32>
    %331 = arith.addf %328, %330 : vector<2x16x32xf32>
    %332 = vector.shape_cast %331 : vector<2x16x32xf32> to vector<32x32xf32>
    %333 = arith.truncf %332 : vector<32x32xf32> to vector<32x32xbf16>
    %cst_87 = arith.constant dense<0.000000e+00> : vector<32x32xf32>
    %334 = tpu.matmul %333, %97, %cst_87 {dimension_numbers = #tpu.dot_dimension_numbers<[1], [0], [0], [1], [0, 0, 1, 1], [], []>} : vector<32x32xbf16>, vector<32x32xbf16>, vector<32x32xf32> -> vector<32x32xf32>
    %335 = vector.broadcast %98 : vector<1x32xf32> to vector<32x32xf32>
    %336 = arith.addf %334, %335 : vector<32x32xf32>
    %337 = vector.shape_cast %336 : vector<32x32xf32> to vector<2x16x32xf32>
    %cst_88 = arith.constant dense<0.000000e+00> : vector<32x32xf32>
    %338 = tpu.matmul %333, %99, %cst_88 {dimension_numbers = #tpu.dot_dimension_numbers<[1], [0], [0], [1], [0, 0, 1, 1], [], []>} : vector<32x32xbf16>, vector<32x32xbf16>, vector<32x32xf32> -> vector<32x32xf32>
    %339 = vector.broadcast %100 : vector<1x32xf32> to vector<32x32xf32>
    %340 = arith.addf %338, %339 : vector<32x32xf32>
    %341 = vector.shape_cast %340 : vector<32x32xf32> to vector<2x16x32xf32>
    %cst_89 = arith.constant dense<0.000000e+00> : vector<32x32xf32>
    %342 = tpu.matmul %333, %101, %cst_89 {dimension_numbers = #tpu.dot_dimension_numbers<[1], [0], [0], [1], [0, 0, 1, 1], [], []>} : vector<32x32xbf16>, vector<32x32xbf16>, vector<32x32xf32> -> vector<32x32xf32>
    %343 = vector.broadcast %102 : vector<1x32xf32> to vector<32x32xf32>
    %344 = arith.addf %342, %343 : vector<32x32xf32>
    %345 = vector.shape_cast %344 : vector<32x32xf32> to vector<2x16x32xf32>
    %346 = arith.truncf %341 : vector<2x16x32xf32> to vector<2x16x32xbf16>
    %347 = arith.truncf %345 : vector<2x16x32xf32> to vector<2x16x32xbf16>
    %cst_90 = arith.constant 0.000000e+00 : f32
    %348 = vector.broadcast %cst_90 : f32 to vector<2x16x32xf32>
    %349 = vector.broadcast %116 : vector<1x1x32xf32> to vector<2x16x32xf32>
    %350 = arith.mulf %337, %349 : vector<2x16x32xf32>
    %351 = arith.truncf %350 : vector<2x16x32xf32> to vector<2x16x32xbf16>
    "tpu.trace_start"() <{level = 10 : i32, message = "gqd,gkd->gqk"}> : () -> ()
    %cst_91 = arith.constant dense<0.000000e+00> : vector<2x16x16xf32>
    %352 = tpu.matmul %351, %346, %cst_91 {dimension_numbers = #tpu.dot_dimension_numbers<[2], [2], [1], [1], [0, 0, 0, 1, 1, 1], [0], [0]>} : vector<2x16x32xbf16>, vector<2x16x32xbf16>, vector<2x16x16xf32> -> vector<2x16x16xf32>
    "tpu.trace_stop"() : () -> ()
    %cst_92 = arith.constant 0.353553385 : f32
    %353 = vector.broadcast %cst_92 : f32 to vector<2x16x16xf32>
    %354 = arith.mulf %352, %353 : vector<2x16x16xf32>
    %cst_93 = arith.constant dense<0xFF800000> : vector<2x16xf32>
    %355 = vector.multi_reduction <maximumf>, %354, %cst_93 [2] : vector<2x16x16xf32> to vector<2x16xf32>
    %356 = vector.shape_cast %355 : vector<2x16xf32> to vector<2x16x1xf32>
    %357 = vector.broadcast %356 : vector<2x16x1xf32> to vector<2x16x16xf32>
    %358 = arith.subf %354, %357 : vector<2x16x16xf32>
    %359 = math.exp %358 : vector<2x16x16xf32>
    %cst_94 = arith.constant dense<0.000000e+00> : vector<2x16xf32>
    %360 = vector.multi_reduction <add>, %359, %cst_94 [2] : vector<2x16x16xf32> to vector<2x16xf32>
    %361 = vector.shape_cast %360 : vector<2x16xf32> to vector<2x16x1xf32>
    %362 = tpu.reciprocal %361 {approx = true} : vector<2x16x1xf32> -> vector<2x16x1xf32>
    %363 = vector.broadcast %362 : vector<2x16x1xf32> to vector<2x16x16xf32>
    %364 = arith.mulf %359, %363 : vector<2x16x16xf32>
    %365 = arith.truncf %364 : vector<2x16x16xf32> to vector<2x16x16xbf16>
    "tpu.trace_start"() <{level = 10 : i32, message = "gqk,gkd->gqd"}> : () -> ()
    %cst_95 = arith.constant dense<0.000000e+00> : vector<2x16x32xf32>
    %366 = tpu.matmul %365, %347, %cst_95 {dimension_numbers = #tpu.dot_dimension_numbers<[2], [1], [1], [2], [0, 0, 0, 1, 1, 2], [0], [0]>} : vector<2x16x16xbf16>, vector<2x16x32xbf16>, vector<2x16x32xf32> -> vector<2x16x32xf32>
    "tpu.trace_stop"() : () -> ()
    %367 = vector.broadcast %116 : vector<1x1x32xf32> to vector<2x16x32xf32>
    %368 = arith.mulf %366, %367 : vector<2x16x32xf32>
    %369 = arith.addf %348, %368 : vector<2x16x32xf32>
    %370 = vector.broadcast %123 : vector<1x1x32xf32> to vector<2x16x32xf32>
    %371 = arith.mulf %337, %370 : vector<2x16x32xf32>
    %372 = arith.truncf %371 : vector<2x16x32xf32> to vector<2x16x32xbf16>
    "tpu.trace_start"() <{level = 10 : i32, message = "gqd,gkd->gqk"}> : () -> ()
    %cst_96 = arith.constant dense<0.000000e+00> : vector<2x16x16xf32>
    %373 = tpu.matmul %372, %346, %cst_96 {dimension_numbers = #tpu.dot_dimension_numbers<[2], [2], [1], [1], [0, 0, 0, 1, 1, 1], [0], [0]>} : vector<2x16x32xbf16>, vector<2x16x32xbf16>, vector<2x16x16xf32> -> vector<2x16x16xf32>
    "tpu.trace_stop"() : () -> ()
    %cst_97 = arith.constant 0.353553385 : f32
    %374 = vector.broadcast %cst_97 : f32 to vector<2x16x16xf32>
    %375 = arith.mulf %373, %374 : vector<2x16x16xf32>
    %cst_98 = arith.constant dense<0xFF800000> : vector<2x16xf32>
    %376 = vector.multi_reduction <maximumf>, %375, %cst_98 [2] : vector<2x16x16xf32> to vector<2x16xf32>
    %377 = vector.shape_cast %376 : vector<2x16xf32> to vector<2x16x1xf32>
    %378 = vector.broadcast %377 : vector<2x16x1xf32> to vector<2x16x16xf32>
    %379 = arith.subf %375, %378 : vector<2x16x16xf32>
    %380 = math.exp %379 : vector<2x16x16xf32>
    %cst_99 = arith.constant dense<0.000000e+00> : vector<2x16xf32>
    %381 = vector.multi_reduction <add>, %380, %cst_99 [2] : vector<2x16x16xf32> to vector<2x16xf32>
    %382 = vector.shape_cast %381 : vector<2x16xf32> to vector<2x16x1xf32>
    %383 = tpu.reciprocal %382 {approx = true} : vector<2x16x1xf32> -> vector<2x16x1xf32>
    %384 = vector.broadcast %383 : vector<2x16x1xf32> to vector<2x16x16xf32>
    %385 = arith.mulf %380, %384 : vector<2x16x16xf32>
    %386 = arith.truncf %385 : vector<2x16x16xf32> to vector<2x16x16xbf16>
    "tpu.trace_start"() <{level = 10 : i32, message = "gqk,gkd->gqd"}> : () -> ()
    %cst_100 = arith.constant dense<0.000000e+00> : vector<2x16x32xf32>
    %387 = tpu.matmul %386, %347, %cst_100 {dimension_numbers = #tpu.dot_dimension_numbers<[2], [1], [1], [2], [0, 0, 0, 1, 1, 2], [0], [0]>} : vector<2x16x16xbf16>, vector<2x16x32xbf16>, vector<2x16x32xf32> -> vector<2x16x32xf32>
    "tpu.trace_stop"() : () -> ()
    %388 = vector.broadcast %123 : vector<1x1x32xf32> to vector<2x16x32xf32>
    %389 = arith.mulf %387, %388 : vector<2x16x32xf32>
    %390 = arith.addf %369, %389 : vector<2x16x32xf32>
    %391 = vector.broadcast %130 : vector<1x1x32xf32> to vector<2x16x32xf32>
    %392 = arith.mulf %337, %391 : vector<2x16x32xf32>
    %393 = arith.truncf %392 : vector<2x16x32xf32> to vector<2x16x32xbf16>
    "tpu.trace_start"() <{level = 10 : i32, message = "gqd,gkd->gqk"}> : () -> ()
    %cst_101 = arith.constant dense<0.000000e+00> : vector<2x16x16xf32>
    %394 = tpu.matmul %393, %346, %cst_101 {dimension_numbers = #tpu.dot_dimension_numbers<[2], [2], [1], [1], [0, 0, 0, 1, 1, 1], [0], [0]>} : vector<2x16x32xbf16>, vector<2x16x32xbf16>, vector<2x16x16xf32> -> vector<2x16x16xf32>
    "tpu.trace_stop"() : () -> ()
    %cst_102 = arith.constant 0.353553385 : f32
    %395 = vector.broadcast %cst_102 : f32 to vector<2x16x16xf32>
    %396 = arith.mulf %394, %395 : vector<2x16x16xf32>
    %cst_103 = arith.constant dense<0xFF800000> : vector<2x16xf32>
    %397 = vector.multi_reduction <maximumf>, %396, %cst_103 [2] : vector<2x16x16xf32> to vector<2x16xf32>
    %398 = vector.shape_cast %397 : vector<2x16xf32> to vector<2x16x1xf32>
    %399 = vector.broadcast %398 : vector<2x16x1xf32> to vector<2x16x16xf32>
    %400 = arith.subf %396, %399 : vector<2x16x16xf32>
    %401 = math.exp %400 : vector<2x16x16xf32>
    %cst_104 = arith.constant dense<0.000000e+00> : vector<2x16xf32>
    %402 = vector.multi_reduction <add>, %401, %cst_104 [2] : vector<2x16x16xf32> to vector<2x16xf32>
    %403 = vector.shape_cast %402 : vector<2x16xf32> to vector<2x16x1xf32>
    %404 = tpu.reciprocal %403 {approx = true} : vector<2x16x1xf32> -> vector<2x16x1xf32>
    %405 = vector.broadcast %404 : vector<2x16x1xf32> to vector<2x16x16xf32>
    %406 = arith.mulf %401, %405 : vector<2x16x16xf32>
    %407 = arith.truncf %406 : vector<2x16x16xf32> to vector<2x16x16xbf16>
    "tpu.trace_start"() <{level = 10 : i32, message = "gqk,gkd->gqd"}> : () -> ()
    %cst_105 = arith.constant dense<0.000000e+00> : vector<2x16x32xf32>
    %408 = tpu.matmul %407, %347, %cst_105 {dimension_numbers = #tpu.dot_dimension_numbers<[2], [1], [1], [2], [0, 0, 0, 1, 1, 2], [0], [0]>} : vector<2x16x16xbf16>, vector<2x16x32xbf16>, vector<2x16x32xf32> -> vector<2x16x32xf32>
    "tpu.trace_stop"() : () -> ()
    %409 = vector.broadcast %130 : vector<1x1x32xf32> to vector<2x16x32xf32>
    %410 = arith.mulf %408, %409 : vector<2x16x32xf32>
    %411 = arith.addf %390, %410 : vector<2x16x32xf32>
    %412 = vector.broadcast %137 : vector<1x1x32xf32> to vector<2x16x32xf32>
    %413 = arith.mulf %337, %412 : vector<2x16x32xf32>
    %414 = arith.truncf %413 : vector<2x16x32xf32> to vector<2x16x32xbf16>
    "tpu.trace_start"() <{level = 10 : i32, message = "gqd,gkd->gqk"}> : () -> ()
    %cst_106 = arith.constant dense<0.000000e+00> : vector<2x16x16xf32>
    %415 = tpu.matmul %414, %346, %cst_106 {dimension_numbers = #tpu.dot_dimension_numbers<[2], [2], [1], [1], [0, 0, 0, 1, 1, 1], [0], [0]>} : vector<2x16x32xbf16>, vector<2x16x32xbf16>, vector<2x16x16xf32> -> vector<2x16x16xf32>
    "tpu.trace_stop"() : () -> ()
    %cst_107 = arith.constant 0.353553385 : f32
    %416 = vector.broadcast %cst_107 : f32 to vector<2x16x16xf32>
    %417 = arith.mulf %415, %416 : vector<2x16x16xf32>
    %cst_108 = arith.constant dense<0xFF800000> : vector<2x16xf32>
    %418 = vector.multi_reduction <maximumf>, %417, %cst_108 [2] : vector<2x16x16xf32> to vector<2x16xf32>
    %419 = vector.shape_cast %418 : vector<2x16xf32> to vector<2x16x1xf32>
    %420 = vector.broadcast %419 : vector<2x16x1xf32> to vector<2x16x16xf32>
    %421 = arith.subf %417, %420 : vector<2x16x16xf32>
    %422 = math.exp %421 : vector<2x16x16xf32>
    %cst_109 = arith.constant dense<0.000000e+00> : vector<2x16xf32>
    %423 = vector.multi_reduction <add>, %422, %cst_109 [2] : vector<2x16x16xf32> to vector<2x16xf32>
    %424 = vector.shape_cast %423 : vector<2x16xf32> to vector<2x16x1xf32>
    %425 = tpu.reciprocal %424 {approx = true} : vector<2x16x1xf32> -> vector<2x16x1xf32>
    %426 = vector.broadcast %425 : vector<2x16x1xf32> to vector<2x16x16xf32>
    %427 = arith.mulf %422, %426 : vector<2x16x16xf32>
    %428 = arith.truncf %427 : vector<2x16x16xf32> to vector<2x16x16xbf16>
    "tpu.trace_start"() <{level = 10 : i32, message = "gqk,gkd->gqd"}> : () -> ()
    %cst_110 = arith.constant dense<0.000000e+00> : vector<2x16x32xf32>
    %429 = tpu.matmul %428, %347, %cst_110 {dimension_numbers = #tpu.dot_dimension_numbers<[2], [1], [1], [2], [0, 0, 0, 1, 1, 2], [0], [0]>} : vector<2x16x16xbf16>, vector<2x16x32xbf16>, vector<2x16x32xf32> -> vector<2x16x32xf32>
    "tpu.trace_stop"() : () -> ()
    %430 = vector.broadcast %137 : vector<1x1x32xf32> to vector<2x16x32xf32>
    %431 = arith.mulf %429, %430 : vector<2x16x32xf32>
    %432 = arith.addf %411, %431 : vector<2x16x32xf32>
    %433 = vector.shape_cast %432 : vector<2x16x32xf32> to vector<32x32xf32>
    %434 = arith.truncf %433 : vector<32x32xf32> to vector<32x32xbf16>
    %cst_111 = arith.constant dense<0.000000e+00> : vector<32x32xf32>
    %435 = tpu.matmul %434, %103, %cst_111 {dimension_numbers = #tpu.dot_dimension_numbers<[1], [0], [0], [1], [0, 0, 1, 1], [], []>} : vector<32x32xbf16>, vector<32x32xbf16>, vector<32x32xf32> -> vector<32x32xf32>
    %436 = vector.broadcast %104 : vector<1x32xf32> to vector<32x32xf32>
    %437 = arith.addf %435, %436 : vector<32x32xf32>
    %438 = vector.shape_cast %437 : vector<32x32xf32> to vector<2x16x32xf32>
    %439 = arith.addf %307, %438 : vector<2x16x32xf32>
    %cst_112 = arith.constant dense<0.000000e+00> : vector<2x16xf32>
    %440 = vector.multi_reduction <add>, %439, %cst_112 [2] : vector<2x16x32xf32> to vector<2x16xf32>
    %441 = vector.shape_cast %440 : vector<2x16xf32> to vector<2x16x1xf32>
    %cst_113 = arith.constant 3.200000e+01 : f32
    %442 = vector.broadcast %cst_113 : f32 to vector<2x16x1xf32>
    %443 = arith.divf %441, %442 : vector<2x16x1xf32>
    %444 = vector.broadcast %443 : vector<2x16x1xf32> to vector<2x16x32xf32>
    %445 = arith.subf %439, %444 : vector<2x16x32xf32>
    %446 = arith.mulf %445, %445 : vector<2x16x32xf32>
    %cst_114 = arith.constant dense<0.000000e+00> : vector<2x16xf32>
    %447 = vector.multi_reduction <add>, %446, %cst_114 [2] : vector<2x16x32xf32> to vector<2x16xf32>
    %448 = vector.shape_cast %447 : vector<2x16xf32> to vector<2x16x1xf32>
    %cst_115 = arith.constant 3.200000e+01 : f32
    %449 = vector.broadcast %cst_115 : f32 to vector<2x16x1xf32>
    %450 = arith.divf %448, %449 : vector<2x16x1xf32>
    %451 = vector.broadcast %443 : vector<2x16x1xf32> to vector<2x16x32xf32>
    %452 = arith.subf %439, %451 : vector<2x16x32xf32>
    %cst_116 = arith.constant 9.99999974E-6 : f32
    %453 = vector.broadcast %cst_116 : f32 to vector<2x16x1xf32>
    %454 = arith.addf %450, %453 : vector<2x16x1xf32>
    %455 = math.rsqrt %454 : vector<2x16x1xf32>
    %456 = vector.broadcast %455 : vector<2x16x1xf32> to vector<2x16x32xf32>
    %457 = arith.mulf %452, %456 : vector<2x16x32xf32>
    %458 = vector.shape_cast %95 : vector<1x32xf32> to vector<1x1x32xf32>
    %459 = vector.broadcast %458 : vector<1x1x32xf32> to vector<2x16x32xf32>
    %460 = arith.mulf %457, %459 : vector<2x16x32xf32>
    %461 = vector.shape_cast %96 : vector<1x32xf32> to vector<1x1x32xf32>
    %462 = vector.broadcast %461 : vector<1x1x32xf32> to vector<2x16x32xf32>
    %463 = arith.addf %460, %462 : vector<2x16x32xf32>
    %464 = vector.shape_cast %463 : vector<2x16x32xf32> to vector<32x32xf32>
    %465 = arith.truncf %464 : vector<32x32xf32> to vector<32x32xbf16>
    %cst_117 = arith.constant dense<0.000000e+00> : vector<32x64xf32>
    %466 = tpu.matmul %465, %105, %cst_117 {dimension_numbers = #tpu.dot_dimension_numbers<[1], [0], [0], [1], [0, 0, 1, 1], [], []>} : vector<32x32xbf16>, vector<32x64xbf16>, vector<32x64xf32> -> vector<32x64xf32>
    %467 = vector.broadcast %106 : vector<1x64xf32> to vector<32x64xf32>
    %468 = arith.addf %466, %467 : vector<32x64xf32>
    %cst_118 = arith.constant 0.000000e+00 : f32
    %469 = vector.broadcast %cst_118 : f32 to vector<32x64xf32>
    %470 = arith.maximumf %468, %469 : vector<32x64xf32>
    %471 = arith.truncf %470 : vector<32x64xf32> to vector<32x64xbf16>
    %cst_119 = arith.constant dense<0.000000e+00> : vector<32x32xf32>
    %472 = tpu.matmul %471, %107, %cst_119 {dimension_numbers = #tpu.dot_dimension_numbers<[1], [0], [0], [1], [0, 0, 1, 1], [], []>} : vector<32x64xbf16>, vector<64x32xbf16>, vector<32x32xf32> -> vector<32x32xf32>
    %473 = vector.broadcast %108 : vector<1x32xf32> to vector<32x32xf32>
    %474 = arith.addf %472, %473 : vector<32x32xf32>
    %475 = vector.shape_cast %474 : vector<32x32xf32> to vector<2x16x32xf32>
    %476 = arith.addf %439, %475 : vector<2x16x32xf32>
    %cst_120 = arith.constant dense<0.000000e+00> : vector<1x8xf32>
    %477 = vector.multi_reduction <add>, %92, %cst_120 [2] : vector<1x8x32xf32> to vector<1x8xf32>
    %478 = vector.shape_cast %477 : vector<1x8xf32> to vector<1x8x1xf32>
    %cst_121 = arith.constant 3.200000e+01 : f32
    %479 = vector.broadcast %cst_121 : f32 to vector<1x8x1xf32>
    %480 = arith.divf %478, %479 : vector<1x8x1xf32>
    %481 = vector.broadcast %480 : vector<1x8x1xf32> to vector<1x8x32xf32>
    %482 = arith.subf %92, %481 : vector<1x8x32xf32>
    %483 = arith.mulf %482, %482 : vector<1x8x32xf32>
    %cst_122 = arith.constant dense<0.000000e+00> : vector<1x8xf32>
    %484 = vector.multi_reduction <add>, %483, %cst_122 [2] : vector<1x8x32xf32> to vector<1x8xf32>
    %485 = vector.shape_cast %484 : vector<1x8xf32> to vector<1x8x1xf32>
    %cst_123 = arith.constant 3.200000e+01 : f32
    %486 = vector.broadcast %cst_123 : f32 to vector<1x8x1xf32>
    %487 = arith.divf %485, %486 : vector<1x8x1xf32>
    %488 = vector.broadcast %480 : vector<1x8x1xf32> to vector<1x8x32xf32>
    %489 = arith.subf %92, %488 : vector<1x8x32xf32>
    %cst_124 = arith.constant 9.99999974E-6 : f32
    %490 = vector.broadcast %cst_124 : f32 to vector<1x8x1xf32>
    %491 = arith.addf %487, %490 : vector<1x8x1xf32>
    %492 = math.rsqrt %491 : vector<1x8x1xf32>
    %493 = vector.broadcast %492 : vector<1x8x1xf32> to vector<1x8x32xf32>
    %494 = arith.mulf %489, %493 : vector<1x8x32xf32>
    %495 = vector.shape_cast %93 : vector<1x32xf32> to vector<1x1x32xf32>
    %496 = vector.broadcast %495 : vector<1x1x32xf32> to vector<1x8x32xf32>
    %497 = arith.mulf %494, %496 : vector<1x8x32xf32>
    %498 = vector.shape_cast %94 : vector<1x32xf32> to vector<1x1x32xf32>
    %499 = vector.broadcast %498 : vector<1x1x32xf32> to vector<1x8x32xf32>
    %500 = arith.addf %497, %499 : vector<1x8x32xf32>
    %501 = vector.shape_cast %500 : vector<1x8x32xf32> to vector<8x32xf32>
    %502 = arith.truncf %501 : vector<8x32xf32> to vector<8x32xbf16>
    %cst_125 = arith.constant dense<0.000000e+00> : vector<8x32xf32>
    %503 = tpu.matmul %502, %97, %cst_125 {dimension_numbers = #tpu.dot_dimension_numbers<[1], [0], [0], [1], [0, 0, 1, 1], [], []>} : vector<8x32xbf16>, vector<32x32xbf16>, vector<8x32xf32> -> vector<8x32xf32>
    %504 = vector.broadcast %98 : vector<1x32xf32> to vector<8x32xf32>
    %505 = arith.addf %503, %504 : vector<8x32xf32>
    %506 = vector.shape_cast %505 : vector<8x32xf32> to vector<1x8x32xf32>
    %cst_126 = arith.constant dense<0.000000e+00> : vector<8x32xf32>
    %507 = tpu.matmul %502, %99, %cst_126 {dimension_numbers = #tpu.dot_dimension_numbers<[1], [0], [0], [1], [0, 0, 1, 1], [], []>} : vector<8x32xbf16>, vector<32x32xbf16>, vector<8x32xf32> -> vector<8x32xf32>
    %508 = vector.broadcast %100 : vector<1x32xf32> to vector<8x32xf32>
    %509 = arith.addf %507, %508 : vector<8x32xf32>
    %510 = vector.shape_cast %509 : vector<8x32xf32> to vector<1x8x32xf32>
    %cst_127 = arith.constant dense<0.000000e+00> : vector<8x32xf32>
    %511 = tpu.matmul %502, %101, %cst_127 {dimension_numbers = #tpu.dot_dimension_numbers<[1], [0], [0], [1], [0, 0, 1, 1], [], []>} : vector<8x32xbf16>, vector<32x32xbf16>, vector<8x32xf32> -> vector<8x32xf32>
    %512 = vector.broadcast %102 : vector<1x32xf32> to vector<8x32xf32>
    %513 = arith.addf %511, %512 : vector<8x32xf32>
    %514 = vector.shape_cast %513 : vector<8x32xf32> to vector<1x8x32xf32>
    %515 = arith.truncf %510 : vector<1x8x32xf32> to vector<1x8x32xbf16>
    %516 = arith.truncf %514 : vector<1x8x32xf32> to vector<1x8x32xbf16>
    %cst_128 = arith.constant 0.000000e+00 : f32
    %517 = vector.broadcast %cst_128 : f32 to vector<1x8x32xf32>
    %518 = vector.broadcast %116 : vector<1x1x32xf32> to vector<1x8x32xf32>
    %519 = arith.mulf %506, %518 : vector<1x8x32xf32>
    %520 = arith.truncf %519 : vector<1x8x32xf32> to vector<1x8x32xbf16>
    "tpu.trace_start"() <{level = 10 : i32, message = "gqd,gkd->gqk"}> : () -> ()
    %cst_129 = arith.constant dense<0.000000e+00> : vector<1x8x8xf32>
    %521 = tpu.matmul %520, %515, %cst_129 {dimension_numbers = #tpu.dot_dimension_numbers<[2], [2], [1], [1], [0, 0, 0, 1, 1, 1], [0], [0]>} : vector<1x8x32xbf16>, vector<1x8x32xbf16>, vector<1x8x8xf32> -> vector<1x8x8xf32>
    "tpu.trace_stop"() : () -> ()
    %cst_130 = arith.constant 0.353553385 : f32
    %522 = vector.broadcast %cst_130 : f32 to vector<1x8x8xf32>
    %523 = arith.mulf %521, %522 : vector<1x8x8xf32>
    %cst_131 = arith.constant dense<0xFF800000> : vector<1x8xf32>
    %524 = vector.multi_reduction <maximumf>, %523, %cst_131 [2] : vector<1x8x8xf32> to vector<1x8xf32>
    %525 = vector.shape_cast %524 : vector<1x8xf32> to vector<1x8x1xf32>
    %526 = vector.broadcast %525 : vector<1x8x1xf32> to vector<1x8x8xf32>
    %527 = arith.subf %523, %526 : vector<1x8x8xf32>
    %528 = math.exp %527 : vector<1x8x8xf32>
    %cst_132 = arith.constant dense<0.000000e+00> : vector<1x8xf32>
    %529 = vector.multi_reduction <add>, %528, %cst_132 [2] : vector<1x8x8xf32> to vector<1x8xf32>
    %530 = vector.shape_cast %529 : vector<1x8xf32> to vector<1x8x1xf32>
    %531 = tpu.reciprocal %530 {approx = true} : vector<1x8x1xf32> -> vector<1x8x1xf32>
    %532 = vector.broadcast %531 : vector<1x8x1xf32> to vector<1x8x8xf32>
    %533 = arith.mulf %528, %532 : vector<1x8x8xf32>
    %534 = arith.truncf %533 : vector<1x8x8xf32> to vector<1x8x8xbf16>
    "tpu.trace_start"() <{level = 10 : i32, message = "gqk,gkd->gqd"}> : () -> ()
    %cst_133 = arith.constant dense<0.000000e+00> : vector<1x8x32xf32>
    %535 = tpu.matmul %534, %516, %cst_133 {dimension_numbers = #tpu.dot_dimension_numbers<[2], [1], [1], [2], [0, 0, 0, 1, 1, 2], [0], [0]>} : vector<1x8x8xbf16>, vector<1x8x32xbf16>, vector<1x8x32xf32> -> vector<1x8x32xf32>
    "tpu.trace_stop"() : () -> ()
    %536 = vector.broadcast %116 : vector<1x1x32xf32> to vector<1x8x32xf32>
    %537 = arith.mulf %535, %536 : vector<1x8x32xf32>
    %538 = arith.addf %517, %537 : vector<1x8x32xf32>
    %539 = vector.broadcast %123 : vector<1x1x32xf32> to vector<1x8x32xf32>
    %540 = arith.mulf %506, %539 : vector<1x8x32xf32>
    %541 = arith.truncf %540 : vector<1x8x32xf32> to vector<1x8x32xbf16>
    "tpu.trace_start"() <{level = 10 : i32, message = "gqd,gkd->gqk"}> : () -> ()
    %cst_134 = arith.constant dense<0.000000e+00> : vector<1x8x8xf32>
    %542 = tpu.matmul %541, %515, %cst_134 {dimension_numbers = #tpu.dot_dimension_numbers<[2], [2], [1], [1], [0, 0, 0, 1, 1, 1], [0], [0]>} : vector<1x8x32xbf16>, vector<1x8x32xbf16>, vector<1x8x8xf32> -> vector<1x8x8xf32>
    "tpu.trace_stop"() : () -> ()
    %cst_135 = arith.constant 0.353553385 : f32
    %543 = vector.broadcast %cst_135 : f32 to vector<1x8x8xf32>
    %544 = arith.mulf %542, %543 : vector<1x8x8xf32>
    %cst_136 = arith.constant dense<0xFF800000> : vector<1x8xf32>
    %545 = vector.multi_reduction <maximumf>, %544, %cst_136 [2] : vector<1x8x8xf32> to vector<1x8xf32>
    %546 = vector.shape_cast %545 : vector<1x8xf32> to vector<1x8x1xf32>
    %547 = vector.broadcast %546 : vector<1x8x1xf32> to vector<1x8x8xf32>
    %548 = arith.subf %544, %547 : vector<1x8x8xf32>
    %549 = math.exp %548 : vector<1x8x8xf32>
    %cst_137 = arith.constant dense<0.000000e+00> : vector<1x8xf32>
    %550 = vector.multi_reduction <add>, %549, %cst_137 [2] : vector<1x8x8xf32> to vector<1x8xf32>
    %551 = vector.shape_cast %550 : vector<1x8xf32> to vector<1x8x1xf32>
    %552 = tpu.reciprocal %551 {approx = true} : vector<1x8x1xf32> -> vector<1x8x1xf32>
    %553 = vector.broadcast %552 : vector<1x8x1xf32> to vector<1x8x8xf32>
    %554 = arith.mulf %549, %553 : vector<1x8x8xf32>
    %555 = arith.truncf %554 : vector<1x8x8xf32> to vector<1x8x8xbf16>
    "tpu.trace_start"() <{level = 10 : i32, message = "gqk,gkd->gqd"}> : () -> ()
    %cst_138 = arith.constant dense<0.000000e+00> : vector<1x8x32xf32>
    %556 = tpu.matmul %555, %516, %cst_138 {dimension_numbers = #tpu.dot_dimension_numbers<[2], [1], [1], [2], [0, 0, 0, 1, 1, 2], [0], [0]>} : vector<1x8x8xbf16>, vector<1x8x32xbf16>, vector<1x8x32xf32> -> vector<1x8x32xf32>
    "tpu.trace_stop"() : () -> ()
    %557 = vector.broadcast %123 : vector<1x1x32xf32> to vector<1x8x32xf32>
    %558 = arith.mulf %556, %557 : vector<1x8x32xf32>
    %559 = arith.addf %538, %558 : vector<1x8x32xf32>
    %560 = vector.broadcast %130 : vector<1x1x32xf32> to vector<1x8x32xf32>
    %561 = arith.mulf %506, %560 : vector<1x8x32xf32>
    %562 = arith.truncf %561 : vector<1x8x32xf32> to vector<1x8x32xbf16>
    "tpu.trace_start"() <{level = 10 : i32, message = "gqd,gkd->gqk"}> : () -> ()
    %cst_139 = arith.constant dense<0.000000e+00> : vector<1x8x8xf32>
    %563 = tpu.matmul %562, %515, %cst_139 {dimension_numbers = #tpu.dot_dimension_numbers<[2], [2], [1], [1], [0, 0, 0, 1, 1, 1], [0], [0]>} : vector<1x8x32xbf16>, vector<1x8x32xbf16>, vector<1x8x8xf32> -> vector<1x8x8xf32>
    "tpu.trace_stop"() : () -> ()
    %cst_140 = arith.constant 0.353553385 : f32
    %564 = vector.broadcast %cst_140 : f32 to vector<1x8x8xf32>
    %565 = arith.mulf %563, %564 : vector<1x8x8xf32>
    %cst_141 = arith.constant dense<0xFF800000> : vector<1x8xf32>
    %566 = vector.multi_reduction <maximumf>, %565, %cst_141 [2] : vector<1x8x8xf32> to vector<1x8xf32>
    %567 = vector.shape_cast %566 : vector<1x8xf32> to vector<1x8x1xf32>
    %568 = vector.broadcast %567 : vector<1x8x1xf32> to vector<1x8x8xf32>
    %569 = arith.subf %565, %568 : vector<1x8x8xf32>
    %570 = math.exp %569 : vector<1x8x8xf32>
    %cst_142 = arith.constant dense<0.000000e+00> : vector<1x8xf32>
    %571 = vector.multi_reduction <add>, %570, %cst_142 [2] : vector<1x8x8xf32> to vector<1x8xf32>
    %572 = vector.shape_cast %571 : vector<1x8xf32> to vector<1x8x1xf32>
    %573 = tpu.reciprocal %572 {approx = true} : vector<1x8x1xf32> -> vector<1x8x1xf32>
    %574 = vector.broadcast %573 : vector<1x8x1xf32> to vector<1x8x8xf32>
    %575 = arith.mulf %570, %574 : vector<1x8x8xf32>
    %576 = arith.truncf %575 : vector<1x8x8xf32> to vector<1x8x8xbf16>
    "tpu.trace_start"() <{level = 10 : i32, message = "gqk,gkd->gqd"}> : () -> ()
    %cst_143 = arith.constant dense<0.000000e+00> : vector<1x8x32xf32>
    %577 = tpu.matmul %576, %516, %cst_143 {dimension_numbers = #tpu.dot_dimension_numbers<[2], [1], [1], [2], [0, 0, 0, 1, 1, 2], [0], [0]>} : vector<1x8x8xbf16>, vector<1x8x32xbf16>, vector<1x8x32xf32> -> vector<1x8x32xf32>
    "tpu.trace_stop"() : () -> ()
    %578 = vector.broadcast %130 : vector<1x1x32xf32> to vector<1x8x32xf32>
    %579 = arith.mulf %577, %578 : vector<1x8x32xf32>
    %580 = arith.addf %559, %579 : vector<1x8x32xf32>
    %581 = vector.broadcast %137 : vector<1x1x32xf32> to vector<1x8x32xf32>
    %582 = arith.mulf %506, %581 : vector<1x8x32xf32>
    %583 = arith.truncf %582 : vector<1x8x32xf32> to vector<1x8x32xbf16>
    "tpu.trace_start"() <{level = 10 : i32, message = "gqd,gkd->gqk"}> : () -> ()
    %cst_144 = arith.constant dense<0.000000e+00> : vector<1x8x8xf32>
    %584 = tpu.matmul %583, %515, %cst_144 {dimension_numbers = #tpu.dot_dimension_numbers<[2], [2], [1], [1], [0, 0, 0, 1, 1, 1], [0], [0]>} : vector<1x8x32xbf16>, vector<1x8x32xbf16>, vector<1x8x8xf32> -> vector<1x8x8xf32>
    "tpu.trace_stop"() : () -> ()
    %cst_145 = arith.constant 0.353553385 : f32
    %585 = vector.broadcast %cst_145 : f32 to vector<1x8x8xf32>
    %586 = arith.mulf %584, %585 : vector<1x8x8xf32>
    %cst_146 = arith.constant dense<0xFF800000> : vector<1x8xf32>
    %587 = vector.multi_reduction <maximumf>, %586, %cst_146 [2] : vector<1x8x8xf32> to vector<1x8xf32>
    %588 = vector.shape_cast %587 : vector<1x8xf32> to vector<1x8x1xf32>
    %589 = vector.broadcast %588 : vector<1x8x1xf32> to vector<1x8x8xf32>
    %590 = arith.subf %586, %589 : vector<1x8x8xf32>
    %591 = math.exp %590 : vector<1x8x8xf32>
    %cst_147 = arith.constant dense<0.000000e+00> : vector<1x8xf32>
    %592 = vector.multi_reduction <add>, %591, %cst_147 [2] : vector<1x8x8xf32> to vector<1x8xf32>
    %593 = vector.shape_cast %592 : vector<1x8xf32> to vector<1x8x1xf32>
    %594 = tpu.reciprocal %593 {approx = true} : vector<1x8x1xf32> -> vector<1x8x1xf32>
    %595 = vector.broadcast %594 : vector<1x8x1xf32> to vector<1x8x8xf32>
    %596 = arith.mulf %591, %595 : vector<1x8x8xf32>
    %597 = arith.truncf %596 : vector<1x8x8xf32> to vector<1x8x8xbf16>
    "tpu.trace_start"() <{level = 10 : i32, message = "gqk,gkd->gqd"}> : () -> ()
    %cst_148 = arith.constant dense<0.000000e+00> : vector<1x8x32xf32>
    %598 = tpu.matmul %597, %516, %cst_148 {dimension_numbers = #tpu.dot_dimension_numbers<[2], [1], [1], [2], [0, 0, 0, 1, 1, 2], [0], [0]>} : vector<1x8x8xbf16>, vector<1x8x32xbf16>, vector<1x8x32xf32> -> vector<1x8x32xf32>
    "tpu.trace_stop"() : () -> ()
    %599 = vector.broadcast %137 : vector<1x1x32xf32> to vector<1x8x32xf32>
    %600 = arith.mulf %598, %599 : vector<1x8x32xf32>
    %601 = arith.addf %580, %600 : vector<1x8x32xf32>
    %602 = vector.shape_cast %601 : vector<1x8x32xf32> to vector<8x32xf32>
    %603 = arith.truncf %602 : vector<8x32xf32> to vector<8x32xbf16>
    %cst_149 = arith.constant dense<0.000000e+00> : vector<8x32xf32>
    %604 = tpu.matmul %603, %103, %cst_149 {dimension_numbers = #tpu.dot_dimension_numbers<[1], [0], [0], [1], [0, 0, 1, 1], [], []>} : vector<8x32xbf16>, vector<32x32xbf16>, vector<8x32xf32> -> vector<8x32xf32>
    %605 = vector.broadcast %104 : vector<1x32xf32> to vector<8x32xf32>
    %606 = arith.addf %604, %605 : vector<8x32xf32>
    %607 = vector.shape_cast %606 : vector<8x32xf32> to vector<1x8x32xf32>
    %608 = arith.addf %92, %607 : vector<1x8x32xf32>
    %cst_150 = arith.constant dense<0.000000e+00> : vector<1x8xf32>
    %609 = vector.multi_reduction <add>, %608, %cst_150 [2] : vector<1x8x32xf32> to vector<1x8xf32>
    %610 = vector.shape_cast %609 : vector<1x8xf32> to vector<1x8x1xf32>
    %cst_151 = arith.constant 3.200000e+01 : f32
    %611 = vector.broadcast %cst_151 : f32 to vector<1x8x1xf32>
    %612 = arith.divf %610, %611 : vector<1x8x1xf32>
    %613 = vector.broadcast %612 : vector<1x8x1xf32> to vector<1x8x32xf32>
    %614 = arith.subf %608, %613 : vector<1x8x32xf32>
    %615 = arith.mulf %614, %614 : vector<1x8x32xf32>
    %cst_152 = arith.constant dense<0.000000e+00> : vector<1x8xf32>
    %616 = vector.multi_reduction <add>, %615, %cst_152 [2] : vector<1x8x32xf32> to vector<1x8xf32>
    %617 = vector.shape_cast %616 : vector<1x8xf32> to vector<1x8x1xf32>
    %cst_153 = arith.constant 3.200000e+01 : f32
    %618 = vector.broadcast %cst_153 : f32 to vector<1x8x1xf32>
    %619 = arith.divf %617, %618 : vector<1x8x1xf32>
    %620 = vector.broadcast %612 : vector<1x8x1xf32> to vector<1x8x32xf32>
    %621 = arith.subf %608, %620 : vector<1x8x32xf32>
    %cst_154 = arith.constant 9.99999974E-6 : f32
    %622 = vector.broadcast %cst_154 : f32 to vector<1x8x1xf32>
    %623 = arith.addf %619, %622 : vector<1x8x1xf32>
    %624 = math.rsqrt %623 : vector<1x8x1xf32>
    %625 = vector.broadcast %624 : vector<1x8x1xf32> to vector<1x8x32xf32>
    %626 = arith.mulf %621, %625 : vector<1x8x32xf32>
    %627 = vector.shape_cast %95 : vector<1x32xf32> to vector<1x1x32xf32>
    %628 = vector.broadcast %627 : vector<1x1x32xf32> to vector<1x8x32xf32>
    %629 = arith.mulf %626, %628 : vector<1x8x32xf32>
    %630 = vector.shape_cast %96 : vector<1x32xf32> to vector<1x1x32xf32>
    %631 = vector.broadcast %630 : vector<1x1x32xf32> to vector<1x8x32xf32>
    %632 = arith.addf %629, %631 : vector<1x8x32xf32>
    %633 = vector.shape_cast %632 : vector<1x8x32xf32> to vector<8x32xf32>
    %634 = arith.truncf %633 : vector<8x32xf32> to vector<8x32xbf16>
    %cst_155 = arith.constant dense<0.000000e+00> : vector<8x64xf32>
    %635 = tpu.matmul %634, %105, %cst_155 {dimension_numbers = #tpu.dot_dimension_numbers<[1], [0], [0], [1], [0, 0, 1, 1], [], []>} : vector<8x32xbf16>, vector<32x64xbf16>, vector<8x64xf32> -> vector<8x64xf32>
    %636 = vector.broadcast %106 : vector<1x64xf32> to vector<8x64xf32>
    %637 = arith.addf %635, %636 : vector<8x64xf32>
    %cst_156 = arith.constant 0.000000e+00 : f32
    %638 = vector.broadcast %cst_156 : f32 to vector<8x64xf32>
    %639 = arith.maximumf %637, %638 : vector<8x64xf32>
    %640 = arith.truncf %639 : vector<8x64xf32> to vector<8x64xbf16>
    %cst_157 = arith.constant dense<0.000000e+00> : vector<8x32xf32>
    %641 = tpu.matmul %640, %107, %cst_157 {dimension_numbers = #tpu.dot_dimension_numbers<[1], [0], [0], [1], [0, 0, 1, 1], [], []>} : vector<8x64xbf16>, vector<64x32xbf16>, vector<8x32xf32> -> vector<8x32xf32>
    %642 = vector.broadcast %108 : vector<1x32xf32> to vector<8x32xf32>
    %643 = arith.addf %641, %642 : vector<8x32xf32>
    %644 = vector.shape_cast %643 : vector<8x32xf32> to vector<1x8x32xf32>
    %645 = arith.addf %608, %644 : vector<1x8x32xf32>
    %cst_158 = arith.constant dense<0.000000e+00> : vector<1x8xf32>
    %646 = vector.multi_reduction <add>, %645, %cst_158 [2] : vector<1x8x32xf32> to vector<1x8xf32>
    %647 = vector.shape_cast %646 : vector<1x8xf32> to vector<1x8x1xf32>
    %cst_159 = arith.constant 3.200000e+01 : f32
    %648 = vector.broadcast %cst_159 : f32 to vector<1x8x1xf32>
    %649 = arith.divf %647, %648 : vector<1x8x1xf32>
    %650 = vector.broadcast %649 : vector<1x8x1xf32> to vector<1x8x32xf32>
    %651 = arith.subf %645, %650 : vector<1x8x32xf32>
    %652 = arith.mulf %651, %651 : vector<1x8x32xf32>
    %cst_160 = arith.constant dense<0.000000e+00> : vector<1x8xf32>
    %653 = vector.multi_reduction <add>, %652, %cst_160 [2] : vector<1x8x32xf32> to vector<1x8xf32>
    %654 = vector.shape_cast %653 : vector<1x8xf32> to vector<1x8x1xf32>
    %cst_161 = arith.constant 3.200000e+01 : f32
    %655 = vector.broadcast %cst_161 : f32 to vector<1x8x1xf32>
    %656 = arith.divf %654, %655 : vector<1x8x1xf32>
    %657 = vector.broadcast %649 : vector<1x8x1xf32> to vector<1x8x32xf32>
    %658 = arith.subf %645, %657 : vector<1x8x32xf32>
    %cst_162 = arith.constant 9.99999974E-6 : f32
    %659 = vector.broadcast %cst_162 : f32 to vector<1x8x1xf32>
    %660 = arith.addf %656, %659 : vector<1x8x1xf32>
    %661 = math.rsqrt %660 : vector<1x8x1xf32>
    %662 = vector.broadcast %661 : vector<1x8x1xf32> to vector<1x8x32xf32>
    %663 = arith.mulf %658, %662 : vector<1x8x32xf32>
    %664 = vector.shape_cast %93 : vector<1x32xf32> to vector<1x1x32xf32>
    %665 = vector.broadcast %664 : vector<1x1x32xf32> to vector<1x8x32xf32>
    %666 = arith.mulf %663, %665 : vector<1x8x32xf32>
    %667 = vector.shape_cast %94 : vector<1x32xf32> to vector<1x1x32xf32>
    %668 = vector.broadcast %667 : vector<1x1x32xf32> to vector<1x8x32xf32>
    %669 = arith.addf %666, %668 : vector<1x8x32xf32>
    %670 = vector.shape_cast %669 : vector<1x8x32xf32> to vector<8x32xf32>
    %671 = arith.truncf %670 : vector<8x32xf32> to vector<8x32xbf16>
    %cst_163 = arith.constant dense<0.000000e+00> : vector<8x32xf32>
    %672 = tpu.matmul %671, %97, %cst_163 {dimension_numbers = #tpu.dot_dimension_numbers<[1], [0], [0], [1], [0, 0, 1, 1], [], []>} : vector<8x32xbf16>, vector<32x32xbf16>, vector<8x32xf32> -> vector<8x32xf32>
    %673 = vector.broadcast %98 : vector<1x32xf32> to vector<8x32xf32>
    %674 = arith.addf %672, %673 : vector<8x32xf32>
    %675 = vector.shape_cast %674 : vector<8x32xf32> to vector<1x8x32xf32>
    %cst_164 = arith.constant dense<0.000000e+00> : vector<8x32xf32>
    %676 = tpu.matmul %671, %99, %cst_164 {dimension_numbers = #tpu.dot_dimension_numbers<[1], [0], [0], [1], [0, 0, 1, 1], [], []>} : vector<8x32xbf16>, vector<32x32xbf16>, vector<8x32xf32> -> vector<8x32xf32>
    %677 = vector.broadcast %100 : vector<1x32xf32> to vector<8x32xf32>
    %678 = arith.addf %676, %677 : vector<8x32xf32>
    %679 = vector.shape_cast %678 : vector<8x32xf32> to vector<1x8x32xf32>
    %cst_165 = arith.constant dense<0.000000e+00> : vector<8x32xf32>
    %680 = tpu.matmul %671, %101, %cst_165 {dimension_numbers = #tpu.dot_dimension_numbers<[1], [0], [0], [1], [0, 0, 1, 1], [], []>} : vector<8x32xbf16>, vector<32x32xbf16>, vector<8x32xf32> -> vector<8x32xf32>
    %681 = vector.broadcast %102 : vector<1x32xf32> to vector<8x32xf32>
    %682 = arith.addf %680, %681 : vector<8x32xf32>
    %683 = vector.shape_cast %682 : vector<8x32xf32> to vector<1x8x32xf32>
    %684 = arith.truncf %679 : vector<1x8x32xf32> to vector<1x8x32xbf16>
    %685 = arith.truncf %683 : vector<1x8x32xf32> to vector<1x8x32xbf16>
    %cst_166 = arith.constant 0.000000e+00 : f32
    %686 = vector.broadcast %cst_166 : f32 to vector<1x8x32xf32>
    %687 = vector.broadcast %116 : vector<1x1x32xf32> to vector<1x8x32xf32>
    %688 = arith.mulf %675, %687 : vector<1x8x32xf32>
    %689 = arith.truncf %688 : vector<1x8x32xf32> to vector<1x8x32xbf16>
    "tpu.trace_start"() <{level = 10 : i32, message = "gqd,gkd->gqk"}> : () -> ()
    %cst_167 = arith.constant dense<0.000000e+00> : vector<1x8x8xf32>
    %690 = tpu.matmul %689, %684, %cst_167 {dimension_numbers = #tpu.dot_dimension_numbers<[2], [2], [1], [1], [0, 0, 0, 1, 1, 1], [0], [0]>} : vector<1x8x32xbf16>, vector<1x8x32xbf16>, vector<1x8x8xf32> -> vector<1x8x8xf32>
    "tpu.trace_stop"() : () -> ()
    %cst_168 = arith.constant 0.353553385 : f32
    %691 = vector.broadcast %cst_168 : f32 to vector<1x8x8xf32>
    %692 = arith.mulf %690, %691 : vector<1x8x8xf32>
    %cst_169 = arith.constant dense<0xFF800000> : vector<1x8xf32>
    %693 = vector.multi_reduction <maximumf>, %692, %cst_169 [2] : vector<1x8x8xf32> to vector<1x8xf32>
    %694 = vector.shape_cast %693 : vector<1x8xf32> to vector<1x8x1xf32>
    %695 = vector.broadcast %694 : vector<1x8x1xf32> to vector<1x8x8xf32>
    %696 = arith.subf %692, %695 : vector<1x8x8xf32>
    %697 = math.exp %696 : vector<1x8x8xf32>
    %cst_170 = arith.constant dense<0.000000e+00> : vector<1x8xf32>
    %698 = vector.multi_reduction <add>, %697, %cst_170 [2] : vector<1x8x8xf32> to vector<1x8xf32>
    %699 = vector.shape_cast %698 : vector<1x8xf32> to vector<1x8x1xf32>
    %700 = tpu.reciprocal %699 {approx = true} : vector<1x8x1xf32> -> vector<1x8x1xf32>
    %701 = vector.broadcast %700 : vector<1x8x1xf32> to vector<1x8x8xf32>
    %702 = arith.mulf %697, %701 : vector<1x8x8xf32>
    %703 = arith.truncf %702 : vector<1x8x8xf32> to vector<1x8x8xbf16>
    "tpu.trace_start"() <{level = 10 : i32, message = "gqk,gkd->gqd"}> : () -> ()
    %cst_171 = arith.constant dense<0.000000e+00> : vector<1x8x32xf32>
    %704 = tpu.matmul %703, %685, %cst_171 {dimension_numbers = #tpu.dot_dimension_numbers<[2], [1], [1], [2], [0, 0, 0, 1, 1, 2], [0], [0]>} : vector<1x8x8xbf16>, vector<1x8x32xbf16>, vector<1x8x32xf32> -> vector<1x8x32xf32>
    "tpu.trace_stop"() : () -> ()
    %705 = vector.broadcast %116 : vector<1x1x32xf32> to vector<1x8x32xf32>
    %706 = arith.mulf %704, %705 : vector<1x8x32xf32>
    %707 = arith.addf %686, %706 : vector<1x8x32xf32>
    %708 = vector.broadcast %123 : vector<1x1x32xf32> to vector<1x8x32xf32>
    %709 = arith.mulf %675, %708 : vector<1x8x32xf32>
    %710 = arith.truncf %709 : vector<1x8x32xf32> to vector<1x8x32xbf16>
    "tpu.trace_start"() <{level = 10 : i32, message = "gqd,gkd->gqk"}> : () -> ()
    %cst_172 = arith.constant dense<0.000000e+00> : vector<1x8x8xf32>
    %711 = tpu.matmul %710, %684, %cst_172 {dimension_numbers = #tpu.dot_dimension_numbers<[2], [2], [1], [1], [0, 0, 0, 1, 1, 1], [0], [0]>} : vector<1x8x32xbf16>, vector<1x8x32xbf16>, vector<1x8x8xf32> -> vector<1x8x8xf32>
    "tpu.trace_stop"() : () -> ()
    %cst_173 = arith.constant 0.353553385 : f32
    %712 = vector.broadcast %cst_173 : f32 to vector<1x8x8xf32>
    %713 = arith.mulf %711, %712 : vector<1x8x8xf32>
    %cst_174 = arith.constant dense<0xFF800000> : vector<1x8xf32>
    %714 = vector.multi_reduction <maximumf>, %713, %cst_174 [2] : vector<1x8x8xf32> to vector<1x8xf32>
    %715 = vector.shape_cast %714 : vector<1x8xf32> to vector<1x8x1xf32>
    %716 = vector.broadcast %715 : vector<1x8x1xf32> to vector<1x8x8xf32>
    %717 = arith.subf %713, %716 : vector<1x8x8xf32>
    %718 = math.exp %717 : vector<1x8x8xf32>
    %cst_175 = arith.constant dense<0.000000e+00> : vector<1x8xf32>
    %719 = vector.multi_reduction <add>, %718, %cst_175 [2] : vector<1x8x8xf32> to vector<1x8xf32>
    %720 = vector.shape_cast %719 : vector<1x8xf32> to vector<1x8x1xf32>
    %721 = tpu.reciprocal %720 {approx = true} : vector<1x8x1xf32> -> vector<1x8x1xf32>
    %722 = vector.broadcast %721 : vector<1x8x1xf32> to vector<1x8x8xf32>
    %723 = arith.mulf %718, %722 : vector<1x8x8xf32>
    %724 = arith.truncf %723 : vector<1x8x8xf32> to vector<1x8x8xbf16>
    "tpu.trace_start"() <{level = 10 : i32, message = "gqk,gkd->gqd"}> : () -> ()
    %cst_176 = arith.constant dense<0.000000e+00> : vector<1x8x32xf32>
    %725 = tpu.matmul %724, %685, %cst_176 {dimension_numbers = #tpu.dot_dimension_numbers<[2], [1], [1], [2], [0, 0, 0, 1, 1, 2], [0], [0]>} : vector<1x8x8xbf16>, vector<1x8x32xbf16>, vector<1x8x32xf32> -> vector<1x8x32xf32>
    "tpu.trace_stop"() : () -> ()
    %726 = vector.broadcast %123 : vector<1x1x32xf32> to vector<1x8x32xf32>
    %727 = arith.mulf %725, %726 : vector<1x8x32xf32>
    %728 = arith.addf %707, %727 : vector<1x8x32xf32>
    %729 = vector.broadcast %130 : vector<1x1x32xf32> to vector<1x8x32xf32>
    %730 = arith.mulf %675, %729 : vector<1x8x32xf32>
    %731 = arith.truncf %730 : vector<1x8x32xf32> to vector<1x8x32xbf16>
    "tpu.trace_start"() <{level = 10 : i32, message = "gqd,gkd->gqk"}> : () -> ()
    %cst_177 = arith.constant dense<0.000000e+00> : vector<1x8x8xf32>
    %732 = tpu.matmul %731, %684, %cst_177 {dimension_numbers = #tpu.dot_dimension_numbers<[2], [2], [1], [1], [0, 0, 0, 1, 1, 1], [0], [0]>} : vector<1x8x32xbf16>, vector<1x8x32xbf16>, vector<1x8x8xf32> -> vector<1x8x8xf32>
    "tpu.trace_stop"() : () -> ()
    %cst_178 = arith.constant 0.353553385 : f32
    %733 = vector.broadcast %cst_178 : f32 to vector<1x8x8xf32>
    %734 = arith.mulf %732, %733 : vector<1x8x8xf32>
    %cst_179 = arith.constant dense<0xFF800000> : vector<1x8xf32>
    %735 = vector.multi_reduction <maximumf>, %734, %cst_179 [2] : vector<1x8x8xf32> to vector<1x8xf32>
    %736 = vector.shape_cast %735 : vector<1x8xf32> to vector<1x8x1xf32>
    %737 = vector.broadcast %736 : vector<1x8x1xf32> to vector<1x8x8xf32>
    %738 = arith.subf %734, %737 : vector<1x8x8xf32>
    %739 = math.exp %738 : vector<1x8x8xf32>
    %cst_180 = arith.constant dense<0.000000e+00> : vector<1x8xf32>
    %740 = vector.multi_reduction <add>, %739, %cst_180 [2] : vector<1x8x8xf32> to vector<1x8xf32>
    %741 = vector.shape_cast %740 : vector<1x8xf32> to vector<1x8x1xf32>
    %742 = tpu.reciprocal %741 {approx = true} : vector<1x8x1xf32> -> vector<1x8x1xf32>
    %743 = vector.broadcast %742 : vector<1x8x1xf32> to vector<1x8x8xf32>
    %744 = arith.mulf %739, %743 : vector<1x8x8xf32>
    %745 = arith.truncf %744 : vector<1x8x8xf32> to vector<1x8x8xbf16>
    "tpu.trace_start"() <{level = 10 : i32, message = "gqk,gkd->gqd"}> : () -> ()
    %cst_181 = arith.constant dense<0.000000e+00> : vector<1x8x32xf32>
    %746 = tpu.matmul %745, %685, %cst_181 {dimension_numbers = #tpu.dot_dimension_numbers<[2], [1], [1], [2], [0, 0, 0, 1, 1, 2], [0], [0]>} : vector<1x8x8xbf16>, vector<1x8x32xbf16>, vector<1x8x32xf32> -> vector<1x8x32xf32>
    "tpu.trace_stop"() : () -> ()
    %747 = vector.broadcast %130 : vector<1x1x32xf32> to vector<1x8x32xf32>
    %748 = arith.mulf %746, %747 : vector<1x8x32xf32>
    %749 = arith.addf %728, %748 : vector<1x8x32xf32>
    %750 = vector.broadcast %137 : vector<1x1x32xf32> to vector<1x8x32xf32>
    %751 = arith.mulf %675, %750 : vector<1x8x32xf32>
    %752 = arith.truncf %751 : vector<1x8x32xf32> to vector<1x8x32xbf16>
    "tpu.trace_start"() <{level = 10 : i32, message = "gqd,gkd->gqk"}> : () -> ()
    %cst_182 = arith.constant dense<0.000000e+00> : vector<1x8x8xf32>
    %753 = tpu.matmul %752, %684, %cst_182 {dimension_numbers = #tpu.dot_dimension_numbers<[2], [2], [1], [1], [0, 0, 0, 1, 1, 1], [0], [0]>} : vector<1x8x32xbf16>, vector<1x8x32xbf16>, vector<1x8x8xf32> -> vector<1x8x8xf32>
    "tpu.trace_stop"() : () -> ()
    %cst_183 = arith.constant 0.353553385 : f32
    %754 = vector.broadcast %cst_183 : f32 to vector<1x8x8xf32>
    %755 = arith.mulf %753, %754 : vector<1x8x8xf32>
    %cst_184 = arith.constant dense<0xFF800000> : vector<1x8xf32>
    %756 = vector.multi_reduction <maximumf>, %755, %cst_184 [2] : vector<1x8x8xf32> to vector<1x8xf32>
    %757 = vector.shape_cast %756 : vector<1x8xf32> to vector<1x8x1xf32>
    %758 = vector.broadcast %757 : vector<1x8x1xf32> to vector<1x8x8xf32>
    %759 = arith.subf %755, %758 : vector<1x8x8xf32>
    %760 = math.exp %759 : vector<1x8x8xf32>
    %cst_185 = arith.constant dense<0.000000e+00> : vector<1x8xf32>
    %761 = vector.multi_reduction <add>, %760, %cst_185 [2] : vector<1x8x8xf32> to vector<1x8xf32>
    %762 = vector.shape_cast %761 : vector<1x8xf32> to vector<1x8x1xf32>
    %763 = tpu.reciprocal %762 {approx = true} : vector<1x8x1xf32> -> vector<1x8x1xf32>
    %764 = vector.broadcast %763 : vector<1x8x1xf32> to vector<1x8x8xf32>
    %765 = arith.mulf %760, %764 : vector<1x8x8xf32>
    %766 = arith.truncf %765 : vector<1x8x8xf32> to vector<1x8x8xbf16>
    "tpu.trace_start"() <{level = 10 : i32, message = "gqk,gkd->gqd"}> : () -> ()
    %cst_186 = arith.constant dense<0.000000e+00> : vector<1x8x32xf32>
    %767 = tpu.matmul %766, %685, %cst_186 {dimension_numbers = #tpu.dot_dimension_numbers<[2], [1], [1], [2], [0, 0, 0, 1, 1, 2], [0], [0]>} : vector<1x8x8xbf16>, vector<1x8x32xbf16>, vector<1x8x32xf32> -> vector<1x8x32xf32>
    "tpu.trace_stop"() : () -> ()
    %768 = vector.broadcast %137 : vector<1x1x32xf32> to vector<1x8x32xf32>
    %769 = arith.mulf %767, %768 : vector<1x8x32xf32>
    %770 = arith.addf %749, %769 : vector<1x8x32xf32>
    %771 = vector.shape_cast %770 : vector<1x8x32xf32> to vector<8x32xf32>
    %772 = arith.truncf %771 : vector<8x32xf32> to vector<8x32xbf16>
    %cst_187 = arith.constant dense<0.000000e+00> : vector<8x32xf32>
    %773 = tpu.matmul %772, %103, %cst_187 {dimension_numbers = #tpu.dot_dimension_numbers<[1], [0], [0], [1], [0, 0, 1, 1], [], []>} : vector<8x32xbf16>, vector<32x32xbf16>, vector<8x32xf32> -> vector<8x32xf32>
    %774 = vector.broadcast %104 : vector<1x32xf32> to vector<8x32xf32>
    %775 = arith.addf %773, %774 : vector<8x32xf32>
    %776 = vector.shape_cast %775 : vector<8x32xf32> to vector<1x8x32xf32>
    %777 = arith.addf %645, %776 : vector<1x8x32xf32>
    %cst_188 = arith.constant dense<0.000000e+00> : vector<1x8xf32>
    %778 = vector.multi_reduction <add>, %777, %cst_188 [2] : vector<1x8x32xf32> to vector<1x8xf32>
    %779 = vector.shape_cast %778 : vector<1x8xf32> to vector<1x8x1xf32>
    %cst_189 = arith.constant 3.200000e+01 : f32
    %780 = vector.broadcast %cst_189 : f32 to vector<1x8x1xf32>
    %781 = arith.divf %779, %780 : vector<1x8x1xf32>
    %782 = vector.broadcast %781 : vector<1x8x1xf32> to vector<1x8x32xf32>
    %783 = arith.subf %777, %782 : vector<1x8x32xf32>
    %784 = arith.mulf %783, %783 : vector<1x8x32xf32>
    %cst_190 = arith.constant dense<0.000000e+00> : vector<1x8xf32>
    %785 = vector.multi_reduction <add>, %784, %cst_190 [2] : vector<1x8x32xf32> to vector<1x8xf32>
    %786 = vector.shape_cast %785 : vector<1x8xf32> to vector<1x8x1xf32>
    %cst_191 = arith.constant 3.200000e+01 : f32
    %787 = vector.broadcast %cst_191 : f32 to vector<1x8x1xf32>
    %788 = arith.divf %786, %787 : vector<1x8x1xf32>
    %789 = vector.broadcast %781 : vector<1x8x1xf32> to vector<1x8x32xf32>
    %790 = arith.subf %777, %789 : vector<1x8x32xf32>
    %cst_192 = arith.constant 9.99999974E-6 : f32
    %791 = vector.broadcast %cst_192 : f32 to vector<1x8x1xf32>
    %792 = arith.addf %788, %791 : vector<1x8x1xf32>
    %793 = math.rsqrt %792 : vector<1x8x1xf32>
    %794 = vector.broadcast %793 : vector<1x8x1xf32> to vector<1x8x32xf32>
    %795 = arith.mulf %790, %794 : vector<1x8x32xf32>
    %796 = vector.shape_cast %95 : vector<1x32xf32> to vector<1x1x32xf32>
    %797 = vector.broadcast %796 : vector<1x1x32xf32> to vector<1x8x32xf32>
    %798 = arith.mulf %795, %797 : vector<1x8x32xf32>
    %799 = vector.shape_cast %96 : vector<1x32xf32> to vector<1x1x32xf32>
    %800 = vector.broadcast %799 : vector<1x1x32xf32> to vector<1x8x32xf32>
    %801 = arith.addf %798, %800 : vector<1x8x32xf32>
    %802 = vector.shape_cast %801 : vector<1x8x32xf32> to vector<8x32xf32>
    %803 = arith.truncf %802 : vector<8x32xf32> to vector<8x32xbf16>
    %cst_193 = arith.constant dense<0.000000e+00> : vector<8x64xf32>
    %804 = tpu.matmul %803, %105, %cst_193 {dimension_numbers = #tpu.dot_dimension_numbers<[1], [0], [0], [1], [0, 0, 1, 1], [], []>} : vector<8x32xbf16>, vector<32x64xbf16>, vector<8x64xf32> -> vector<8x64xf32>
    %805 = vector.broadcast %106 : vector<1x64xf32> to vector<8x64xf32>
    %806 = arith.addf %804, %805 : vector<8x64xf32>
    %cst_194 = arith.constant 0.000000e+00 : f32
    %807 = vector.broadcast %cst_194 : f32 to vector<8x64xf32>
    %808 = arith.maximumf %806, %807 : vector<8x64xf32>
    %809 = arith.truncf %808 : vector<8x64xf32> to vector<8x64xbf16>
    %cst_195 = arith.constant dense<0.000000e+00> : vector<8x32xf32>
    %810 = tpu.matmul %809, %107, %cst_195 {dimension_numbers = #tpu.dot_dimension_numbers<[1], [0], [0], [1], [0, 0, 1, 1], [], []>} : vector<8x64xbf16>, vector<64x32xbf16>, vector<8x32xf32> -> vector<8x32xf32>
    %811 = vector.broadcast %108 : vector<1x32xf32> to vector<8x32xf32>
    %812 = arith.addf %810, %811 : vector<8x32xf32>
    %813 = vector.shape_cast %812 : vector<8x32xf32> to vector<1x8x32xf32>
    %814 = arith.addf %777, %813 : vector<1x8x32xf32>
    %815 = vector.extract_strided_slice %476 {offsets = [0, 0, 0], sizes = [1, 16, 32], strides = [1, 1, 1]} : vector<2x16x32xf32> to vector<1x16x32xf32>
    %816 = vector.extract_strided_slice %0 {offsets = [24, 0], sizes = [16, 1], strides = [1, 1]} : vector<88x64xf32> to vector<16x1xf32>
    %817 = vector.shape_cast %816 : vector<16x1xf32> to vector<1x16x1xf32>
    %818 = vector.broadcast %817 : vector<1x16x1xf32> to vector<1x16x32xf32>
    %819 = arith.mulf %815, %818 : vector<1x16x32xf32>
    %cst_196 = arith.constant dense<0.000000e+00> : vector<1x32xf32>
    %820 = vector.multi_reduction <add>, %819, %cst_196 [1] : vector<1x16x32xf32> to vector<1x32xf32>
    %821 = vector.extract_strided_slice %0 {offsets = [80, 0], sizes = [1, 1], strides = [1, 1]} : vector<88x64xf32> to vector<1x1xf32>
    %822 = vector.broadcast %821 : vector<1x1xf32> to vector<1x32xf32>
    %823 = arith.addf %820, %822 : vector<1x32xf32>
    %824 = vector.extract_strided_slice %476 {offsets = [1, 0, 0], sizes = [1, 16, 32], strides = [1, 1, 1]} : vector<2x16x32xf32> to vector<1x16x32xf32>
    %825 = vector.extract_strided_slice %0 {offsets = [40, 0], sizes = [16, 1], strides = [1, 1]} : vector<88x64xf32> to vector<16x1xf32>
    %826 = vector.shape_cast %825 : vector<16x1xf32> to vector<1x16x1xf32>
    %827 = vector.broadcast %826 : vector<1x16x1xf32> to vector<1x16x32xf32>
    %828 = arith.mulf %824, %827 : vector<1x16x32xf32>
    %cst_197 = arith.constant dense<0.000000e+00> : vector<1x32xf32>
    %829 = vector.multi_reduction <add>, %828, %cst_197 [1] : vector<1x16x32xf32> to vector<1x32xf32>
    %830 = vector.extract_strided_slice %0 {offsets = [81, 0], sizes = [1, 1], strides = [1, 1]} : vector<88x64xf32> to vector<1x1xf32>
    %831 = vector.broadcast %830 : vector<1x1xf32> to vector<1x32xf32>
    %832 = arith.addf %829, %831 : vector<1x32xf32>
    %833 = vector.extract_strided_slice %0 {offsets = [56, 0], sizes = [8, 1], strides = [1, 1]} : vector<88x64xf32> to vector<8x1xf32>
    %834 = vector.shape_cast %833 : vector<8x1xf32> to vector<1x8x1xf32>
    %835 = vector.broadcast %834 : vector<1x8x1xf32> to vector<1x8x32xf32>
    %836 = arith.mulf %814, %835 : vector<1x8x32xf32>
    %cst_198 = arith.constant dense<0.000000e+00> : vector<1x32xf32>
    %837 = vector.multi_reduction <add>, %836, %cst_198 [1] : vector<1x8x32xf32> to vector<1x32xf32>
    %838 = vector.extract_strided_slice %0 {offsets = [82, 0], sizes = [1, 1], strides = [1, 1]} : vector<88x64xf32> to vector<1x1xf32>
    %839 = vector.broadcast %838 : vector<1x1xf32> to vector<1x32xf32>
    %840 = arith.addf %837, %839 : vector<1x32xf32>
    %841 = arith.truncf %823 : vector<1x32xf32> to vector<1x32xbf16>
    %c224 = arith.constant 224 : index
    %c0_199 = arith.constant 0 : index
    %842 = vector.load %arg4[%c224, %c0_199] : memref<424x64xbf16, #tpu.memory_space<vmem>>, vector<32x32xbf16>
    %cst_200 = arith.constant dense<0.000000e+00> : vector<1x32xf32>
    %843 = tpu.matmul %841, %842, %cst_200 {dimension_numbers = #tpu.dot_dimension_numbers<[1], [0], [0], [1], [0, 0, 1, 1], [], []>} : vector<1x32xbf16>, vector<32x32xbf16>, vector<1x32xf32> -> vector<1x32xf32>
    %844 = arith.truncf %832 : vector<1x32xf32> to vector<1x32xbf16>
    %c256 = arith.constant 256 : index
    %c0_201 = arith.constant 0 : index
    %845 = vector.load %arg4[%c256, %c0_201] : memref<424x64xbf16, #tpu.memory_space<vmem>>, vector<32x32xbf16>
    %cst_202 = arith.constant dense<0.000000e+00> : vector<1x32xf32>
    %846 = tpu.matmul %844, %845, %cst_202 {dimension_numbers = #tpu.dot_dimension_numbers<[1], [0], [0], [1], [0, 0, 1, 1], [], []>} : vector<1x32xbf16>, vector<32x32xbf16>, vector<1x32xf32> -> vector<1x32xf32>
    %847 = arith.addf %843, %846 : vector<1x32xf32>
    %848 = vector.extract_strided_slice %0 {offsets = [77, 0], sizes = [1, 32], strides = [1, 1]} : vector<88x64xf32> to vector<1x32xf32>
    %849 = arith.addf %847, %848 : vector<1x32xf32>
    %cst_203 = arith.constant 0.000000e+00 : f32
    %850 = vector.broadcast %cst_203 : f32 to vector<1x32xf32>
    %851 = arith.maximumf %849, %850 : vector<1x32xf32>
    %852 = arith.truncf %851 : vector<1x32xf32> to vector<1x32xbf16>
    %c288 = arith.constant 288 : index
    %c0_204 = arith.constant 0 : index
    %853 = vector.load %arg4[%c288, %c0_204] : memref<424x64xbf16, #tpu.memory_space<vmem>>, vector<32x32xbf16>
    %cst_205 = arith.constant dense<0.000000e+00> : vector<1x32xf32>
    %854 = tpu.matmul %852, %853, %cst_205 {dimension_numbers = #tpu.dot_dimension_numbers<[1], [0], [0], [1], [0, 0, 1, 1], [], []>} : vector<1x32xbf16>, vector<32x32xbf16>, vector<1x32xf32> -> vector<1x32xf32>
    %855 = arith.truncf %840 : vector<1x32xf32> to vector<1x32xbf16>
    %c320 = arith.constant 320 : index
    %c0_206 = arith.constant 0 : index
    %856 = vector.load %arg4[%c320, %c0_206] : memref<424x64xbf16, #tpu.memory_space<vmem>>, vector<32x32xbf16>
    %cst_207 = arith.constant dense<0.000000e+00> : vector<1x32xf32>
    %857 = tpu.matmul %855, %856, %cst_207 {dimension_numbers = #tpu.dot_dimension_numbers<[1], [0], [0], [1], [0, 0, 1, 1], [], []>} : vector<1x32xbf16>, vector<32x32xbf16>, vector<1x32xf32> -> vector<1x32xf32>
    %858 = arith.addf %854, %857 : vector<1x32xf32>
    %859 = vector.extract_strided_slice %0 {offsets = [78, 0], sizes = [1, 32], strides = [1, 1]} : vector<88x64xf32> to vector<1x32xf32>
    %860 = arith.addf %858, %859 : vector<1x32xf32>
    %cst_208 = arith.constant 0.000000e+00 : f32
    %861 = vector.broadcast %cst_208 : f32 to vector<1x32xf32>
    %862 = arith.maximumf %860, %861 : vector<1x32xf32>
    %863 = arith.truncf %862 : vector<1x32xf32> to vector<1x32xbf16>
    %c352 = arith.constant 352 : index
    %c0_209 = arith.constant 0 : index
    %864 = vector.load %arg4[%c352, %c0_209] : memref<424x64xbf16, #tpu.memory_space<vmem>>, vector<32x8xbf16>
    %cst_210 = arith.constant dense<0.000000e+00> : vector<1x8xf32>
    %865 = tpu.matmul %863, %864, %cst_210 {dimension_numbers = #tpu.dot_dimension_numbers<[1], [0], [0], [1], [0, 0, 1, 1], [], []>} : vector<1x32xbf16>, vector<32x8xbf16>, vector<1x8xf32> -> vector<1x8xf32>
    %866 = vector.extract_strided_slice %0 {offsets = [79, 0], sizes = [1, 8], strides = [1, 1]} : vector<88x64xf32> to vector<1x8xf32>
    %867 = arith.addf %865, %866 : vector<1x8xf32>
    %868 = arith.negf %867 : vector<1x8xf32>
    %869 = math.exp %868 : vector<1x8xf32>
    %cst_211 = arith.constant 1.000000e+00 : f32
    %870 = vector.broadcast %cst_211 : f32 to vector<1x8xf32>
    %871 = arith.addf %870, %869 : vector<1x8xf32>
    %872 = arith.divf %870, %871 : vector<1x8xf32>
    %873 = vector.shape_cast %872 : vector<1x8xf32> to vector<1x1x8xf32>
    %c0_212 = arith.constant 0 : index
    %c0_213 = arith.constant 0 : index
    %c0_214 = arith.constant 0 : index
    %874 = vector.load %arg6[%c0_212, %c0_213, %c0_214] : memref<1x1x8xf32, #tpu.memory_space<vmem>>, vector<1x1x8xf32>
    tpu.vector_store %arg6[%c0_212, %c0_213, %c0_214], %873 {strides = array<i32>} : memref<1x1x8xf32, #tpu.memory_space<vmem>>, vector<1x1x8xf32>,
    return
  }
  func.func @transform_0(%arg0: i32) -> (i32, i32, i32) {
    %c0_i32 = arith.constant 0 : i32
    %c0_i32_0 = arith.constant 0 : i32
    %c0_i32_1 = arith.constant 0 : i32
    return %arg0, %c0_i32, %c0_i32_0 : i32, i32, i32
  }
  func.func @transform_1(%arg0: i32) -> (i32, i32, i32) {
    %c0_i32 = arith.constant 0 : i32
    %c0_i32_0 = arith.constant 0 : i32
    %c0_i32_1 = arith.constant 0 : i32
    return %arg0, %c0_i32, %c0_i32_0 : i32, i32, i32
  }
  func.func @transform_2(%arg0: i32) -> (i32, i32, i32) {
    %c0_i32 = arith.constant 0 : i32
    %c0_i32_0 = arith.constant 0 : i32
    %c0_i32_1 = arith.constant 0 : i32
    return %arg0, %c0_i32, %c0_i32_0 : i32, i32, i32
  }
  func.func @transform_3(%arg0: i32) -> (i32, i32) {
    %c0_i32 = arith.constant 0 : i32
    %c0_i32_0 = arith.constant 0 : i32
    %c0_i32_1 = arith.constant 0 : i32
    return %c0_i32, %c0_i32_0 : i32, i32
  }
  func.func @transform_4(%arg0: i32) -> (i32, i32) {
    %c0_i32 = arith.constant 0 : i32
    %c0_i32_0 = arith.constant 0 : i32
    %c0_i32_1 = arith.constant 0 : i32
    return %c0_i32, %c0_i32_0 : i32, i32
  }
  func.func @transform_5(%arg0: i32) -> (i32, i32, i32) {
    %c0_i32 = arith.constant 0 : i32
    %c0_i32_0 = arith.constant 0 : i32
    %c0_i32_1 = arith.constant 0 : i32
    return %arg0, %c0_i32, %c0_i32_0 : i32, i32, i32
  }
}

</mosaic_0001>

<llo_original>
// kernel: matnet_forward.1
$region0: #{matnet_forward.1}
  #allocation0 [shape = 'u32[]', space=smem, size = 0x4, offset = 0x4, fixed_abs, tag = 'smem constant byte address 0x4 - core index']
  #allocation1 [shape = 'u32[144,128]{1,0:T(1,128)}', space=vmem, size = 0x12000, scoped, tag = 'internal scratch']
  %s0 = inlined_call_operand.vmem [shape: f32[2,16,4], index: 0, kind: input, shape index: {}]
  %s1 = inlined_call_operand.vmem [shape: f32[2,16,8], index: 1, kind: input, shape index: {}]
  %s2 = inlined_call_operand.vmem [shape: f32[2,8,8], index: 2, kind: input, shape index: {}]
  %s3 = inlined_call_operand.vmem [shape: bf16[424,64], index: 3, kind: input, shape index: {}]
  %s4 = inlined_call_operand.vmem [shape: f32[88,64], index: 4, kind: input, shape index: {}]
  %s5 = inlined_call_operand.hbm [shape: f32[2,1,8], index: 5, kind: output, shape index: {}]
  %s6 = sld [smem:[#allocation0]]
  $region53: #{matnet_forward.1} parent=0
    _
  %s8 = ssub.s32 1, %s6
  %s9 = scalar_select 0, %s8, %s6
  $region1: #{matnet_forward.1} parent=0
    #allocation2 [shape = 'u8[1024]{0}', space=vmem, size = 0x400, scoped, tag = 'output window, operand 0']
    #allocation3 [shape = 's32[2]{0}', space=sflag, size = 0x8, scoped, tag = 'scoped memory for matnet_forward.1']
    %10 = vsyncpa [#allocation3], 0
    %s11 = scalar_lea.sflag [#allocation3], 1
    %12 = vsyncpa %s11, 0
    loop: start=0, step=1, limit=4
    $region2: #{matnet_forward.1} parent=1 // loop_pre_header
      _
    $region3: #{matnet_forward.1} parent=1 // loop_header
      %s14 = sphi 0, %s18
      %p15 = scmp.ge.s32.totalorder %s14, 4
      %s24 = sphi 0, %s26
      %s27 = sphi 0, %s24
      %s28 = sphi 0, %s27
      %s44 = sphi 0, %s28
      %s50 = sphi 0, %s52
      %s53 = sphi 0, %s50
      %s54 = sphi 0, %s53
      %s70 = sphi 0, %s54
      %s76 = sphi 0, %s78
      %s79 = sphi 0, %s76
      %s80 = sphi 0, %s79
      %s96 = sphi 0, %s80
      %s100 = sphi 0, %s100
      %s102 = sphi 0, %s100
      %s103 = sphi 0, %s102
      %s117 = sphi 0, %s103
      %s121 = sphi 0, %s121
      %s123 = sphi 0, %s121
      %s124 = sphi 0, %s123
      %s138 = sphi 0, %s124
      %s144 = sphi 0, %s146
      %s147 = sphi 0, %s144
      %s148 = sphi 0, %s147
      %s164 = sphi 0, %s148
    $region4: #{matnet_forward.1} parent=1 // loop_header_branch
      %17 = sbr.rel (%p15) target = $region8
    $region5: #{matnet_forward.1} parent=1 // loop_body
      %s19 = ssub.s32 %s14, 1
      %s20 = ssub.s32 %s14, 2
      %s21 = sadd.s32 %s14, 1
      %s22 = ssub.s32 %s14, %s21
      %p23 = scmp.eq.s32.totalorder %s22, 0
      %s25 = sadd.s32 %s24, 1
      %s26 = scalar_select %p23, %s24, %s25
      %p29 = pneg %p23
      %p30 = scmp.eq.s32.totalorder %s14, 1
      %p31 = por %p29, %p30
      %p32 = scmp.ne.s32.totalorder %s24, %s27
      %p33 = scmp.eq.s32.totalorder %s14, 0
      %p34 = por %p32, %p33
      %p35 = scmp.ne.s32.totalorder %s24, %s27
      %p36 = scmp.eq.s32.totalorder %s19, 1
      %p37 = por %p35, %p36
      %p38 = scmp.ne.s32.totalorder %s27, %s28
      %p39 = scmp.eq.s32.totalorder %s19, 0
      %p40 = por %p38, %p39
      %p41 = scmp.ne.s32.totalorder %s27, %s28
      %p42 = scmp.eq.s32.totalorder %s20, 1
      %p43 = por %p41, %p42
      %p45 = scmp.ne.s32.totalorder %s28, %s44
      %p46 = scmp.eq.s32.totalorder %s20, 0
      %p47 = por %p45, %p46
      %s48 = ssub.s32 %s14, %s21
      %p49 = scmp.eq.s32.totalorder %s48, 0
      %s51 = sadd.s32 %s50, 1
      %s52 = scalar_select %p49, %s50, %s51
      %p55 = pneg %p49
      %p56 = scmp.eq.s32.totalorder %s14, 1
      %p57 = por %p55, %p56
      %p58 = scmp.ne.s32.totalorder %s50, %s53
      %p59 = scmp.eq.s32.totalorder %s14, 0
      %p60 = por %p58, %p59
      %p61 = scmp.ne.s32.totalorder %s50, %s53
      %p62 = scmp.eq.s32.totalorder %s19, 1
      %p63 = por %p61, %p62
      %p64 = scmp.ne.s32.totalorder %s53, %s54
      %p65 = scmp.eq.s32.totalorder %s19, 0
      %p66 = por %p64, %p65
      %p67 = scmp.ne.s32.totalorder %s53, %s54
      %p68 = scmp.eq.s32.totalorder %s20, 1
      %p69 = por %p67, %p68
      %p71 = scmp.ne.s32.totalorder %s54, %s70
      %p72 = scmp.eq.s32.totalorder %s20, 0
      %p73 = por %p71, %p72
      %s74 = ssub.s32 %s14, %s21
      %p75 = scmp.eq.s32.totalorder %s74, 0
      %s77 = sadd.s32 %s76, 1
      %s78 = scalar_select %p75, %s76, %s77
      %p81 = pneg %p75
      %p82 = scmp.eq.s32.totalorder %s14, 1
      %p83 = por %p81, %p82
      %p84 = scmp.ne.s32.totalorder %s76, %s79
      %p85 = scmp.eq.s32.totalorder %s14, 0
      %p86 = por %p84, %p85
      %p87 = scmp.ne.s32.totalorder %s76, %s79
      %p88 = scmp.eq.s32.totalorder %s19, 1
      %p89 = por %p87, %p88
      %p90 = scmp.ne.s32.totalorder %s79, %s80
      %p91 = scmp.eq.s32.totalorder %s19, 0
      %p92 = por %p90, %p91
      %p93 = scmp.ne.s32.totalorder %s79, %s80
      %p94 = scmp.eq.s32.totalorder %s20, 1
      %p95 = por %p93, %p94
      %p97 = scmp.ne.s32.totalorder %s80, %s96
      %p98 = scmp.eq.s32.totalorder %s20, 0
      %p99 = por %p97, %p98
      %s101 = sadd.s32 %s100, 1
      %p104 = scmp.eq.s32.totalorder %s14, 1
      %p105 = scmp.ne.s32.totalorder %s100, %s102
      %p106 = scmp.eq.s32.totalorder %s14, 0
      %p107 = por %p105, %p106
      %p108 = scmp.ne.s32.totalorder %s100, %s102
      %p109 = scmp.eq.s32.totalorder %s19, 1
      %p110 = por %p108, %p109
      %p111 = scmp.ne.s32.totalorder %s102, %s103
      %p112 = scmp.eq.s32.totalorder %s19, 0
      %p113 = por %p111, %p112
      %p114 = scmp.ne.s32.totalorder %s102, %s103
      %p115 = scmp.eq.s32.totalorder %s20, 1
      %p116 = por %p114, %p115
      %p118 = scmp.ne.s32.totalorder %s103, %s117
      %p119 = scmp.eq.s32.totalorder %s20, 0
      %p120 = por %p118, %p119
      %s122 = sadd.s32 %s121, 1
      %p125 = scmp.eq.s32.totalorder %s14, 1
      %p126 = scmp.ne.s32.totalorder %s121, %s123
      %p127 = scmp.eq.s32.totalorder %s14, 0
      %p128 = por %p126, %p127
      %p129 = scmp.ne.s32.totalorder %s121, %s123
      %p130 = scmp.eq.s32.totalorder %s19, 1
      %p131 = por %p129, %p130
      %p132 = scmp.ne.s32.totalorder %s123, %s124
      %p133 = scmp.eq.s32.totalorder %s19, 0
      %p134 = por %p132, %p133
      %p135 = scmp.ne.s32.totalorder %s123, %s124
      %p136 = scmp.eq.s32.totalorder %s20, 1
      %p137 = por %p135, %p136
      %p139 = scmp.ne.s32.totalorder %s124, %s138
      %p140 = scmp.eq.s32.totalorder %s20, 0
      %p141 = por %p139, %p140
      %s142 = ssub.s32 %s14, %s21
      %p143 = scmp.eq.s32.totalorder %s142, 0
      %s145 = sadd.s32 %s144, 1
      %s146 = scalar_select %p143, %s144, %s145
      %p149 = pneg %p143
      %p150 = scmp.eq.s32.totalorder %s14, 1
      %p151 = por %p149, %p150
      %p152 = scmp.ne.s32.totalorder %s144, %s147
      %p153 = scmp.eq.s32.totalorder %s14, 0
      %p154 = por %p152, %p153
      %p155 = scmp.ne.s32.totalorder %s144, %s147
      %p156 = scmp.eq.s32.totalorder %s19, 1
      %p157 = por %p155, %p156
      %p158 = scmp.ne.s32.totalorder %s147, %s148
      %p159 = scmp.eq.s32.totalorder %s19, 0
      %p160 = por %p158, %p159
      %p161 = scmp.ne.s32.totalorder %s147, %s148
      %p162 = scmp.eq.s32.totalorder %s20, 1
      %p163 = por %p161, %p162
      %p165 = scmp.ne.s32.totalorder %s148, %s164
      %p166 = scmp.eq.s32.totalorder %s20, 0
      %p167 = por %p165, %p166
      %p168 = scmp.le.s32.totalorder 1, %s14
      %p169 = scmp.lt.s32.totalorder %s14, 3
      %p170 = pnand %p168, %p169
      %p171 = pneg %p170
      // Predicated region
      $region9: #{matnet_forward.1} parent=5 // pred_check
        _
      $region10: #{matnet_forward.1} parent=5 // pred_check_branch
        %173 = sbr.rel (%p170) target = $region12
      $region11: #{matnet_forward.1} parent=5 // pred_region
        %s174 = ssub.s32 %s14, 1
        // Predicated region
        $region13: #{matnet_forward.1} parent=11 // pred_check
          %p175 = pneg %p113
        $region14: #{matnet_forward.1} parent=11 // pred_check_branch
          %177 = sbr.rel (%p175) target = $region16
        $region15: #{matnet_forward.1} parent=11 // pred_region
          _
        $region16: #{matnet_forward.1} parent=11 // pred_fallthru
          _
        // Predicated region
        $region17: #{matnet_forward.1} parent=11 // pred_check
          %p178 = pneg %p134
        $region18: #{matnet_forward.1} parent=11 // pred_check_branch
          %180 = sbr.rel (%p178) target = $region20
        $region19: #{matnet_forward.1} parent=11 // pred_region
          _
        $region20: #{matnet_forward.1} parent=11 // pred_fallthru
          _
      $region12: #{matnet_forward.1} parent=5 // pred_fallthru
        _
      %p181 = scmp.lt.s32.totalorder %s14, 2
      // Predicated region
      $region21: #{matnet_forward.1} parent=5 // pred_check
        %p182 = pneg %p181
      $region22: #{matnet_forward.1} parent=5 // pred_check_branch
        %184 = sbr.rel (%p182) target = $region24
      $region23: #{matnet_forward.1} parent=5 // pred_region
        // Predicated region
        $region25: #{matnet_forward.1} parent=23 // pred_check
          %p185 = pneg %p34
        $region26: #{matnet_forward.1} parent=23 // pred_check_branch
          %187 = sbr.rel (%p185) target = $region28
        $region27: #{matnet_forward.1} parent=23 // pred_region
          %p188 = scmp.lt.s32.totalorder %s14, 1
          %s189 = scalar_select %p188, %s14, 1
          %s190 = smul.addr %s189, 2
          %s191 = smul.addr %s190, 8
          %s192 = scalar_lea.vmem %s0, %s191
        $region28: #{matnet_forward.1} parent=23 // pred_fallthru
          _
        // Predicated region
        $region29: #{matnet_forward.1} parent=23 // pred_check
          %p193 = pneg %p60
        $region30: #{matnet_forward.1} parent=23 // pred_check_branch
          %195 = sbr.rel (%p193) target = $region32
        $region31: #{matnet_forward.1} parent=23 // pred_region
          %p196 = scmp.lt.s32.totalorder %s14, 1
          %s197 = scalar_select %p196, %s14, 1
          %s198 = smul.addr %s197, 2
          %s199 = smul.addr %s198, 8
          %s200 = scalar_lea.vmem %s1, %s199
        $region32: #{matnet_forward.1} parent=23 // pred_fallthru
          _
        // Predicated region
        $region33: #{matnet_forward.1} parent=23 // pred_check
          %p201 = pneg %p86
        $region34: #{matnet_forward.1} parent=23 // pred_check_branch
          %203 = sbr.rel (%p201) target = $region36
        $region35: #{matnet_forward.1} parent=23 // pred_region
          %p204 = scmp.lt.s32.totalorder %s14, 1
          %s205 = scalar_select %p204, %s14, 1
          %s206 = smul.addr %s205, 8
          %s207 = scalar_lea.vmem %s2, %s206
        $region36: #{matnet_forward.1} parent=23 // pred_fallthru
          _
      $region24: #{matnet_forward.1} parent=5 // pred_fallthru
        _
      %p208 = scmp.le.s32.totalorder 1, %s14
      %p209 = scmp.lt.s32.totalorder %s14, 3
      %p210 = pnand %p208, %p209
      %p211 = pneg %p210
      // Predicated region
      $region37: #{matnet_forward.1} parent=5 // pred_check
        _
      $region38: #{matnet_forward.1} parent=5 // pred_check_branch
        %213 = sbr.rel (%p210) target = $region40
      $region39: #{matnet_forward.1} parent=5 // pred_region
        %s214 = ssub.s32 %s14, 1
        %p215 = scmp.lt.s32.totalorder %s19, 1
        %s216 = scalar_select %p215, %s19, 1
        %s217 = smul.addr %s216, 2
        %s218 = smul.addr %s217, 8
        %s219 = scalar_lea.vmem %s0, %s218
        %p220 = pneg %p40
        %p221 = pneg %p37
        %p222 = scmp.lt.s32.totalorder %s19, 1
        %s223 = scalar_select %p222, %s19, 1
        %s224 = smul.addr %s223, 2
        %s225 = smul.addr %s224, 8
        %s226 = scalar_lea.vmem %s1, %s225
        %p227 = pneg %p66
        %p228 = pneg %p63
        %p229 = scmp.lt.s32.totalorder %s19, 1
        %s230 = scalar_select %p229, %s19, 1
        %s231 = smul.addr %s230, 8
        %s232 = scalar_lea.vmem %s2, %s231
        %p233 = pneg %p92
        %p234 = pneg %p89
        %p235 = pneg %p113
        %p236 = pneg %p110
        %p237 = pneg %p134
        %p238 = pneg %p131
        %p239 = pneg %p160
        %p240 = pneg %p157
        %s241 = sand.u32 %s147, 1
        %s242 = scalar_lea.sflag [#allocation3], %s241
        %s243 = sand.u32 %s147, 1
        %s244 = scalar_lea.vmem [#allocation2], %s243
        %p245 = scmp.lt.s32.totalorder %s19, 1
        %s246 = scalar_select %p245, %s19, 1
        %s247 = smul.addr %s246, 2
        %s248 = smul.addr %s247, 8
        %s249 = scalar_lea.vmem %s0, %s248
        %p250 = scmp.lt.s32.totalorder %s19, 1
        %s251 = scalar_select %p250, %s19, 1
        %s252 = smul.addr %s251, 2
        %s253 = smul.addr %s252, 8
        %s254 = scalar_lea.vmem %s1, %s253
        %p255 = scmp.lt.s32.totalorder %s19, 1
        %s256 = scalar_select %p255, %s19, 1
        %s257 = smul.addr %s256, 8
        %s258 = scalar_lea.vmem %s2, %s257
        %v260 = vld [vmem:[%s4] sm:$0xff]
        %v261 = vld [vmem:[%s4 + $0x8] sm:$0xff]
        %v262 = vld [vmem:[%s4 + $0x10] sm:$0xff]
        %v263 = vld [vmem:[%s4 + $0x18] sm:$0xff]
        %v264 = vld [vmem:[%s4 + $0x20] sm:$0xff]
        %v265 = vld [vmem:[%s4 + $0x28] sm:$0xff]
        %v266 = vld [vmem:[%s4 + $0x30] sm:$0xff]
        %v267 = vld [vmem:[%s4 + $0x38] sm:$0xff]
        %v268 = vld [vmem:[%s4 + $0x40] sm:$0xff]
        %v269 = vld [vmem:[%s4 + $0x48] sm:$0xff]
        %v270 = vld [vmem:[%s4 + $0x50] sm:$0xff]
        %v271 = vld [vmem:[%s249] sm:$0xff]
        %v272 = vld [vmem:[%s249 + $0x8] sm:$0xff]
        %v273 = vlaneseq
        %v274 = vshrl.u32 %v273, 7
        %v275 = vadd.s32 %v274, 8
        %vm276 = vcmp.lt.s32.totalorder %v274, 0
        %v277 = vsub.s32 0, %v274
        %v278 = vsel %vm276, %v277, %v274
        %v279 = vshrl.u32 %v278, 4
        %v280 = vand.u32 %v278, 15
        %v281 = vsub.s32 0, %v280
        %v282 = vsel %vm276, %v281, %v280
        %vm283 = vcmp.lt.s32.totalorder %v275, 0
        %v284 = vsub.s32 0, %v275
        %v285 = vsel %vm283, %v284, %v275
        %v286 = vshrl.u32 %v285, 4
        %v287 = vand.u32 %v285, 15
        %v288 = vsub.s32 0, %v287
        %v289 = vsel %vm283, %v288, %v287
        %vm290 = vcmp.ne.s32.totalorder %v282, 0
        %vm291 = vcmp.ne.s32.totalorder %v289, 0
        %vm292 = vcmp.lt.s32.totalorder %v282, 0
        %vm293 = vcmp.lt.s32.totalorder %v289, 0
        %vm294 = vmand %vm292, %vm290
        %vm295 = vmand %vm293, %vm291
        %v296 = vadd.s32 %v282, 16
        %v297 = vadd.s32 %v289, 16
        %v298 = vsel %vm294, %v296, %v282
        %v299 = vsel %vm295, %v297, %v289
        %vm300 = vcmp.ne.s32.totalorder %v298, 0
        %vm301 = vcmp.ne.s32.totalorder %v299, 0
        %v302 = vsel %vm300, 1, 0
        %v303 = vsel %vm301, 1, 0
        %v304 = vcvt.s32.f32 %v302
        %v305 = vcvt.s32.f32 %v303
        %v306 = vadd.s32 %v274, 1
        %v307 = vadd.s32 %v275, 1
        %vm308 = vcmp.lt.s32.totalorder %v306, 0
        %v309 = vsub.s32 0, %v306
        %v310 = vsel %vm308, %v309, %v306
        %v311 = vshrl.u32 %v310, 4
        %v312 = vand.u32 %v310, 15
        %v313 = vsub.s32 0, %v312
        %v314 = vsel %vm308, %v313, %v312
        %vm315 = vcmp.lt.s32.totalorder %v307, 0
        %v316 = vsub.s32 0, %v307
        %v317 = vsel %vm315, %v316, %v307
        %v318 = vshrl.u32 %v317, 4
        %v319 = vand.u32 %v317, 15
        %v320 = vsub.s32 0, %v319
        %v321 = vsel %vm315, %v320, %v319
        %vm322 = vcmp.ne.s32.totalorder %v314, 0
        %vm323 = vcmp.ne.s32.totalorder %v321, 0
        %vm324 = vcmp.lt.s32.totalorder %v314, 0
        %vm325 = vcmp.lt.s32.totalorder %v321, 0
        %vm326 = vmand %vm324, %vm322
        %vm327 = vmand %vm325, %vm323
        %v328 = vadd.s32 %v314, 16
        %v329 = vadd.s32 %v321, 16
        %v330 = vsel %vm326, %v328, %v314
        %v331 = vsel %vm327, %v329, %v321
        %vm332 = vcmp.ne.s32.totalorder %v330, 0
        %vm333 = vcmp.ne.s32.totalorder %v331, 0
        %v334 = vsel %vm332, 1, 0
        %v335 = vsel %vm333, 1, 0
        %v336 = vcvt.s32.f32 %v334
        %v337 = vcvt.s32.f32 %v335
        %v338 = vrot.slane %v271, 7
        %v339 = vrot.slane %v272, 7
        %vm340 = vcmp.lt.s32.totalorder %v274, 1
        %v341 = vsel %vm340, %v338, %v339
        %v342 = vsel %vm340, %v339, %v338
        %v343 = vrot.slane %v271, 1
        %v344 = vrot.slane %v272, 1
        %vm345 = vcmp.lt.s32.totalorder %v274, 7
        %v346 = vsel %vm345, %v343, %v344
        %v347 = vsel %vm345, %v344, %v343
        %v348 = vpack.c.bf16 %v341, %v342
        %v349 = vld [vmem:[%s3 + $0xc0] sm:$0x3]
        %vm350 = vcmask 31744
        %v352 = vsel %vm350, %v348, 0
        %vm354 = vcmask 1041408
        %v356 = vsel %vm354, %v349, 0
        %358 = vmatprep.subr.bf16.mxu0 0
        %359 = vmatpush1.bf16.msra.mxu0 0
        %360 = vmatprep.subr.bf16.mxu0 0
        %361 = vmatpush1.bf16.msra.mxu0 0
        %362 = vmatprep.subr.bf16.mxu0 0
        %363 = vmatpush1.bf16.msra.mxu0 0
        %364 = vmatprep.subr.bf16.mxu0 0
        %365 = vmatpush1.bf16.msra.mxu0 0
        %366 = vmatprep.subr.bf16.mxu0 0
        %367 = vmatpush1.bf16.msra.mxu0 0
        %368 = vmatprep.subr.bf16.mxu0 0
        %369 = vmatpush1.bf16.msra.mxu0 0
        %370 = vmatprep.subr.bf16.mxu0 0
        %371 = vmatpush1.bf16.msra.mxu0 0
        %372 = vmatprep.subr.bf16.mxu0 0
        %373 = vmatpush1.bf16.msra.mxu0 %v356
        %374 = vmatprep.subr.bf16.mxu0 0
        %375 = vmatpush2.bf16.msra.mxu0 0
        %376 = vmatprep.subr.bf16.mxu0 0
        %377 = vmatpush2.bf16.msra.mxu0 0
        %378 = vmatprep.subr.bf16.mxu0 0
        %379 = vmatpush2.bf16.msra.mxu0 0
        %380 = vmatprep.subr.bf16.mxu0 0
        %381 = vmatpush2.bf16.msra.mxu0 0
        %382 = vmatprep.subr.bf16.mxu0 0
        %383 = vmatpush2.bf16.msra.mxu0 0
        %384 = vmatprep.subr.bf16.mxu0 0
        %385 = vmatpush2.bf16.msra.mxu0 0
        %386 = vmatprep.subr.bf16.mxu0 0
        %387 = vmatpush2.bf16.msra.mxu0 0
        %388 = vmatprep.subr.bf16.mxu0 0
        %389 = vmatpush2.bf16.msra.mxu0 0
        %390 = vmatprep.mubr.bf16.mxu0 0
        %391 = vmatmul.mubr.bf16.gmra.mxu0 %v352
        %v392 = vpop.f32.mrf.mxu0
        %v393 = vadd.f32 0.0, %v392
        %v394 = vpop.f32.mrf.mxu0
        %v395 = vpop.f32.mrf.mxu0
        %v396 = vadd.f32 0.0, %v395
        %v397 = vpop.f32.mrf.mxu0
        %398 = vdwg.mxu0
        %v399 = vmul.f32 %v393, %v304
        %v400 = vmul.f32 %v396, %v305
        %v401 = vpack.c.bf16 %v272, %v271
        %v402 = vld [vmem:[%s3 + $0xc4] sm:$0x3]
        %v404 = vsel %vm350, %v401, 0
        %v407 = vsel %vm354, %v402, 0
        %409 = vmatprep.subr.bf16.mxu0 0
        %410 = vmatpush1.bf16.msra.mxu0 0
        %411 = vmatprep.subr.bf16.mxu0 0
        %412 = vmatpush1.bf16.msra.mxu0 0
        %413 = vmatprep.subr.bf16.mxu0 0
        %414 = vmatpush1.bf16.msra.mxu0 0
        %415 = vmatprep.subr.bf16.mxu0 0
        %416 = vmatpush1.bf16.msra.mxu0 0
        %417 = vmatprep.subr.bf16.mxu0 0
        %418 = vmatpush1.bf16.msra.mxu0 0
        %419 = vmatprep.subr.bf16.mxu0 0
        %420 = vmatpush1.bf16.msra.mxu0 0
        %421 = vmatprep.subr.bf16.mxu0 0
        %422 = vmatpush1.bf16.msra.mxu0 0
        %423 = vmatprep.subr.bf16.mxu0 0
        %424 = vmatpush1.bf16.msra.mxu0 %v407
        %425 = vmatprep.subr.bf16.mxu0 0
        %426 = vmatpush2.bf16.msra.mxu0 0
        %427 = vmatprep.subr.bf16.mxu0 0
        %428 = vmatpush2.bf16.msra.mxu0 0
        %429 = vmatprep.subr.bf16.mxu0 0
        %430 = vmatpush2.bf16.msra.mxu0 0
        %431 = vmatprep.subr.bf16.mxu0 0
        %432 = vmatpush2.bf16.msra.mxu0 0
        %433 = vmatprep.subr.bf16.mxu0 0
        %434 = vmatpush2.bf16.msra.mxu0 0
        %435 = vmatprep.subr.bf16.mxu0 0
        %436 = vmatpush2.bf16.msra.mxu0 0
        %437 = vmatprep.subr.bf16.mxu0 0
        %438 = vmatpush2.bf16.msra.mxu0 0
        %439 = vmatprep.subr.bf16.mxu0 0
        %440 = vmatpush2.bf16.msra.mxu0 0
        %441 = vmatprep.mubr.bf16.mxu0 0
        %442 = vmatmul.mubr.bf16.gmra.mxu0 %v404
        %v443 = vpop.f32.mrf.mxu0
        %v444 = vadd.f32 0.0, %v443
        %v445 = vpop.f32.mrf.mxu0
        %v446 = vpop.f32.mrf.mxu0
        %v447 = vadd.f32 0.0, %v446
        %v448 = vpop.f32.mrf.mxu0
        %449 = vdwg.mxu0
        %v450 = vadd.f32 %v399, %v444
        %v451 = vadd.f32 %v400, %v447
        %v452 = vpack.c.bf16 %v347, %v346
        %v453 = vld [vmem:[%s3 + $0xc8] sm:$0x3]
        %v455 = vsel %vm350, %v452, 0
        %v458 = vsel %vm354, %v453, 0
        %460 = vmatprep.subr.bf16.mxu0 0
        %461 = vmatpush1.bf16.msra.mxu0 0
        %462 = vmatprep.subr.bf16.mxu0 0
        %463 = vmatpush1.bf16.msra.mxu0 0
        %464 = vmatprep.subr.bf16.mxu0 0
        %465 = vmatpush1.bf16.msra.mxu0 0
        %466 = vmatprep.subr.bf16.mxu0 0
        %467 = vmatpush1.bf16.msra.mxu0 0
        %468 = vmatprep.subr.bf16.mxu0 0
        %469 = vmatpush1.bf16.msra.mxu0 0
        %470 = vmatprep.subr.bf16.mxu0 0
        %471 = vmatpush1.bf16.msra.mxu0 0
        %472 = vmatprep.subr.bf16.mxu0 0
        %473 = vmatpush1.bf16.msra.mxu0 0
        %474 = vmatprep.subr.bf16.mxu0 0
        %475 = vmatpush1.bf16.msra.mxu0 %v458
        %476 = vmatprep.subr.bf16.mxu0 0
        %477 = vmatpush2.bf16.msra.mxu0 0
        %478 = vmatprep.subr.bf16.mxu0 0
        %479 = vmatpush2.bf16.msra.mxu0 0
        %480 = vmatprep.subr.bf16.mxu0 0
        %481 = vmatpush2.bf16.msra.mxu0 0
        %482 = vmatprep.subr.bf16.mxu0 0
        %483 = vmatpush2.bf16.msra.mxu0 0
        %484 = vmatprep.subr.bf16.mxu0 0
        %485 = vmatpush2.bf16.msra.mxu0 0
        %486 = vmatprep.subr.bf16.mxu0 0
        %487 = vmatpush2.bf16.msra.mxu0 0
        %488 = vmatprep.subr.bf16.mxu0 0
        %489 = vmatpush2.bf16.msra.mxu0 0
        %490 = vmatprep.subr.bf16.mxu0 0
        %491 = vmatpush2.bf16.msra.mxu0 0
        %492 = vmatprep.mubr.bf16.mxu0 0
        %493 = vmatmul.mubr.bf16.gmra.mxu0 %v455
        %v494 = vpop.f32.mrf.mxu0
        %v495 = vadd.f32 0.0, %v494
        %v496 = vpop.f32.mrf.mxu0
        %v497 = vpop.f32.mrf.mxu0
        %v498 = vadd.f32 0.0, %v497
        %v499 = vpop.f32.mrf.mxu0
        %500 = vdwg.mxu0
        %v501 = vmul.f32 %v495, %v336
        %v502 = vmul.f32 %v498, %v337
        %v503 = vadd.f32 %v450, %v501
        %v504 = vadd.f32 %v451, %v502
        %v505 = vlaneseq
        %v506 = vshrl.u32 %v505, 7
        %v507 = vsub.s32 0, %v506
        %v508 = vrot.slane %v268, %v507
        %v509 = vadd.f32 %v503, %v508
        %v510 = vadd.f32 %v504, %v508
        %v511 = vld [vmem:[%s254] sm:$0xff]
        %v512 = vld [vmem:[%s254 + $0x8] sm:$0xff]
        %v513 = vpack.c.bf16 %v512, %v511
        %v514 = vld [vmem:[%s3 + $0xcc] sm:$0xf]
        %v515 = vlaneseq
        %v516 = vshrl.u32 %v515, 7
        %v517 = vsub.s32 1, %v516
        %v518 = vrot.slane %v268, %v517
        %vm519 = vcmask 64512
        %v521 = vsel %vm519, %v513, 0
        %vm523 = vcmask 1043456
        %v525 = vsel %vm523, %v514, 0
        %527 = vmatprep.subr.bf16.mxu0 0
        %528 = vmatpush1.bf16.msra.mxu0 0
        %529 = vmatprep.subr.bf16.mxu0 0
        %530 = vmatpush1.bf16.msra.mxu0 0
        %531 = vmatprep.subr.bf16.mxu0 0
        %532 = vmatpush1.bf16.msra.mxu0 0
        %533 = vmatprep.subr.bf16.mxu0 0
        %534 = vmatpush1.bf16.msra.mxu0 0
        %535 = vmatprep.subr.bf16.mxu0 0
        %536 = vmatpush1.bf16.msra.mxu0 0
        %537 = vmatprep.subr.bf16.mxu0 0
        %538 = vmatpush1.bf16.msra.mxu0 0
        %539 = vmatprep.subr.bf16.mxu0 0
        %540 = vmatpush1.bf16.msra.mxu0 0
        %541 = vmatprep.subr.bf16.mxu0 0
        %542 = vmatpush1.bf16.msra.mxu0 %v525
        %543 = vmatprep.subr.bf16.mxu0 0
        %544 = vmatpush2.bf16.msra.mxu0 0
        %545 = vmatprep.subr.bf16.mxu0 0
        %546 = vmatpush2.bf16.msra.mxu0 0
        %547 = vmatprep.subr.bf16.mxu0 0
        %548 = vmatpush2.bf16.msra.mxu0 0
        %549 = vmatprep.subr.bf16.mxu0 0
        %550 = vmatpush2.bf16.msra.mxu0 0
        %551 = vmatprep.subr.bf16.mxu0 0
        %552 = vmatpush2.bf16.msra.mxu0 0
        %553 = vmatprep.subr.bf16.mxu0 0
        %554 = vmatpush2.bf16.msra.mxu0 0
        %555 = vmatprep.subr.bf16.mxu0 0
        %556 = vmatpush2.bf16.msra.mxu0 0
        %557 = vmatprep.subr.bf16.mxu0 0
        %558 = vmatpush2.bf16.msra.mxu0 0
        %559 = vmatprep.mubr.bf16.mxu0 0
        %560 = vmatmul.mubr.bf16.gmra.mxu0 %v521
        %v561 = vpop.f32.mrf.mxu0
        %v562 = vadd.f32 %v518, %v561
        %v563 = vpop.f32.mrf.mxu0
        %v564 = vpop.f32.mrf.mxu0
        %v565 = vadd.f32 %v518, %v564
        %v566 = vpop.f32.mrf.mxu0
        %567 = vdwg.mxu0
        %v568 = vld [vmem:[%s258] sm:$0xff]
        %v569 = vpack.c.bf16 %v568, %v568
        %v570 = vld [vmem:[%s3 + $0xd0] sm:$0xf]
        %v571 = vlaneseq
        %v572 = vshrl.u32 %v571, 7
        %v573 = vsub.s32 2, %v572
        %v574 = vrot.slane %v268, %v573
        %v576 = vsel %vm519, %v569, 0
        %v579 = vsel %vm523, %v570, 0
        %581 = vmatprep.subr.bf16.mxu0 0
        %582 = vmatpush1.bf16.msra.mxu0 0
        %583 = vmatprep.subr.bf16.mxu0 0
        %584 = vmatpush1.bf16.msra.mxu0 0
        %585 = vmatprep.subr.bf16.mxu0 0
        %586 = vmatpush1.bf16.msra.mxu0 0
        %587 = vmatprep.subr.bf16.mxu0 0
        %588 = vmatpush1.bf16.msra.mxu0 0
        %589 = vmatprep.subr.bf16.mxu0 0
        %590 = vmatpush1.bf16.msra.mxu0 0
        %591 = vmatprep.subr.bf16.mxu0 0
        %592 = vmatpush1.bf16.msra.mxu0 0
        %593 = vmatprep.subr.bf16.mxu0 0
        %594 = vmatpush1.bf16.msra.mxu0 0
        %595 = vmatprep.subr.bf16.mxu0 0
        %596 = vmatpush1.bf16.msra.mxu0 %v579
        %597 = vmatprep.subr.bf16.mxu0 0
        %598 = vmatpush2.bf16.msra.mxu0 0
        %599 = vmatprep.subr.bf16.mxu0 0
        %600 = vmatpush2.bf16.msra.mxu0 0
        %601 = vmatprep.subr.bf16.mxu0 0
        %602 = vmatpush2.bf16.msra.mxu0 0
        %603 = vmatprep.subr.bf16.mxu0 0
        %604 = vmatpush2.bf16.msra.mxu0 0
        %605 = vmatprep.subr.bf16.mxu0 0
        %606 = vmatpush2.bf16.msra.mxu0 0
        %607 = vmatprep.subr.bf16.mxu0 0
        %608 = vmatpush2.bf16.msra.mxu0 0
        %609 = vmatprep.subr.bf16.mxu0 0
        %610 = vmatpush2.bf16.msra.mxu0 0
        %611 = vmatprep.subr.bf16.mxu0 0
        %612 = vmatpush2.bf16.msra.mxu0 0
        %613 = vmatprep.mubr.bf16.mxu0 0
        %614 = vmatmul.mubr.bf16.gmra.mxu0 %v576
        %v615 = vpop.f32.mrf.mxu0
        %v616 = vadd.f32 %v574, %v615
        %v617 = vpop.f32.mrf.mxu0
        %v618 = vpop.f32.mrf.mxu0
        %v619 = vpop.f32.mrf.mxu0
        %620 = vdwg.mxu0
        %v621 = vadd.f32 %v509, %v260
        %v622 = vadd.f32 %v510, %v261
        %v623 = vadd.f32 %v562, %v260
        %v624 = vadd.f32 %v565, %v261
        %v625 = vadd.f32 %v616, %v262
        %v626 = vld [vmem:[%s3] sm:$0xf]
        %v627 = vld [vmem:[%s3 + $0x4] sm:$0xf]
        %v628 = vld [vmem:[%s3 + $0x8] sm:$0xf]
        %v629 = vld [vmem:[%s3 + $0xc] sm:$0xf]
        %v630 = vld [vmem:[%s3 + $0x10] sm:$0xf]
        %v631 = vld [vmem:[%s3 + $0x14] sm:$0xf]
        %v632 = vld [vmem:[%s3 + $0x18] sm:$0xf]
        %v633 = vld [vmem:[%s3 + $0x1c] sm:$0xf]
        %v634 = vld [vmem:[%s3 + $0x20] sm:$0xf]
        %v635 = vld [vmem:[%s3 + $0x24] sm:$0xf]
        %v636 = vld [vmem:[%s3 + $0x28] sm:$0xf]
        %v637 = vld [vmem:[%s3 + $0x2c] sm:$0xf]
        %v638 = vld [vmem:[%s3 + $0x30] sm:$0xf]
        %v639 = vld [vmem:[%s3 + $0x34] sm:$0xf]
        %v640 = vld [vmem:[%s3 + $0x38] sm:$0xf]
        %v641 = vld [vmem:[%s3 + $0x3c] sm:$0xf]
        %v642 = vld [vmem:[%s3 + $0x40] sm:$0xf]
        %v643 = vld [vmem:[%s3 + $0x44] sm:$0xf]
        %v644 = vld [vmem:[%s3 + $0x48] sm:$0xf]
        %v645 = vld [vmem:[%s3 + $0x4c] sm:$0xf]
        %v646 = vld [vmem:[%s3 + $0x50] sm:$0xf]
        %v647 = vld [vmem:[%s3 + $0x54] sm:$0xf]
        %v648 = vld [vmem:[%s3 + $0x58] sm:$0xf]
        %v649 = vld [vmem:[%s3 + $0x5c] sm:$0xf]
        %v650 = vld [vmem:[%s3 + $0x60] sm:$0xf]
        %v651 = vld [vmem:[%s3 + $0x64] sm:$0xf]
        %v652 = vld [vmem:[%s3 + $0x68] sm:$0xf]
        %v653 = vld [vmem:[%s3 + $0x6c] sm:$0xf]
        %v654 = vlaneseq
        %v655 = vand.u32 %v654, 127
        %vm656 = vcmp.ge.s32.totalorder %v655, 0
        %vm657 = vcmp.lt.s32.totalorder %v655, 8
        %vm658 = vmand %vm656, %vm657
        %v659 = vsel %vm658, 1, 0
        %v660 = vcvt.s32.f32 %v659
        %vm661 = vcmp.ge.s32.totalorder %v655, 8
        %vm662 = vcmp.lt.s32.totalorder %v655, 16
        %vm663 = vmand %vm661, %vm662
        %v664 = vsel %vm663, 1, 0
        %v665 = vcvt.s32.f32 %v664
        %vm666 = vcmp.ge.s32.totalorder %v655, 16
        %vm667 = vcmp.lt.s32.totalorder %v655, 24
        %vm668 = vmand %vm666, %vm667
        %v669 = vsel %vm668, 1, 0
        %v670 = vcvt.s32.f32 %v669
        %vm671 = vcmp.ge.s32.totalorder %v655, 24
        %vm672 = vcmp.lt.s32.totalorder %v655, 32
        %vm673 = vmand %vm671, %vm672
        %v674 = vsel %vm673, 1, 0
        %v675 = vcvt.s32.f32 %v674
        %vm676 = vcmask 261120
        %v677 = vsel %vm676, %v621, 0.0
        %678 = vadd.xlane.f32.xlu0 %v677
        %v679 = vpop.xlane.xlu0 %678
        %v680 = vsel %vm676, %v622, 0.0
        %681 = vadd.xlane.f32.xlu0 %v680
        %v682 = vpop.xlane.xlu0 %681
        %v683 = vsel %vm676, %v623, 0.0
        %684 = vadd.xlane.f32.xlu0 %v683
        %v685 = vpop.xlane.xlu0 %684
        %v686 = vsel %vm676, %v624, 0.0
        %687 = vadd.xlane.f32.xlu0 %v686
        %v688 = vpop.xlane.xlu0 %687
        %v689 = vrcp.pop 32.0
        %v690 = vmul.f32 %v679, %v689
        %v691 = vmul.f32 %v682, %v689
        %v692 = vmul.f32 %v685, %v689
        %v693 = vmul.f32 %v688, %v689
        %v694 = vsub.f32 %v621, %v690
        %v695 = vsub.f32 %v622, %v691
        %v696 = vsub.f32 %v623, %v692
        %v697 = vsub.f32 %v624, %v693
        %v698 = vmul.f32 %v694, %v694
        %v699 = vmul.f32 %v695, %v695
        %v700 = vmul.f32 %v696, %v696
        %v701 = vmul.f32 %v697, %v697
        %v702 = vsel %vm676, %v698, 0.0
        %703 = vadd.xlane.f32.xlu0 %v702
        %v704 = vpop.xlane.xlu0 %703
        %v705 = vsel %vm676, %v699, 0.0
        %706 = vadd.xlane.f32.xlu0 %v705
        %v707 = vpop.xlane.xlu0 %706
        %v708 = vsel %vm676, %v700, 0.0
        %709 = vadd.xlane.f32.xlu0 %v708
        %v710 = vpop.xlane.xlu0 %709
        %v711 = vsel %vm676, %v701, 0.0
        %712 = vadd.xlane.f32.xlu0 %v711
        %v713 = vpop.xlane.xlu0 %712
        %v714 = vmul.f32 %v704, %v689
        %v715 = vmul.f32 %v707, %v689
        %v716 = vmul.f32 %v710, %v689
        %v717 = vmul.f32 %v713, %v689
        %v718 = vadd.f32 %v714, 1e-05
        %v719 = vadd.f32 %v715, 1e-05
        %v720 = vadd.f32 %v716, 1e-05
        %v721 = vadd.f32 %v717, 1e-05
        %v722 = vrsqrt.pop %v718
        %v723 = vrsqrt.pop %v719
        %v724 = vrsqrt.pop %v720
        %v725 = vrsqrt.pop %v721
        %v726 = vmul.f32 %v694, %v722
        %v727 = vmul.f32 %v695, %v723
        %v728 = vmul.f32 %v696, %v724
        %v729 = vmul.f32 %v697, %v725
        %v730 = vlaneseq
        %v731 = vshrl.u32 %v730, 7
        %v732 = vsub.s32 1, %v731
        %v733 = vrot.slane %v269, %v732
        %v734 = vmul.f32 %v726, %v733
        %v735 = vmul.f32 %v727, %v733
        %v736 = vmul.f32 %v728, %v733
        %v737 = vmul.f32 %v729, %v733
        %v738 = vlaneseq
        %v739 = vshrl.u32 %v738, 7
        %v740 = vsub.s32 2, %v739
        %v741 = vrot.slane %v269, %v740
        %v742 = vadd.f32 %v734, %v741
        %v743 = vadd.f32 %v735, %v741
        %v744 = vadd.f32 %v736, %v741
        %v745 = vadd.f32 %v737, %v741
        %v746 = vpack.c.bf16 %v743, %v742
        %v747 = vpack.c.bf16 %v745, %v744
        %v748 = vlaneseq
        %v749 = vshrl.u32 %v748, 7
        %v750 = vsub.s32 3, %v749
        %v751 = vrot.slane %v268, %v750
        %v756 = vunpack.c.l.b16 %v626
        %v757 = vunpack.c.l.b16 %v627
        %v758 = vunpack.c.l.b16 %v628
        %v759 = vunpack.c.l.b16 %v629
        %v760 = vpack.c.b16 %v757, %v756
        %v761 = vpack.c.b16 %v759, %v758
        %v765 = vsel %vm676, %v746, 0
        %v768 = vsel %vm676, %v747, 0
        %770 = vmatprep.subr.bf16.mxu0 0
        %771 = vmatpush1.bf16.msra.mxu0 0
        %772 = vmatprep.subr.bf16.mxu0 0
        %773 = vmatpush1.bf16.msra.mxu0 0
        %774 = vmatprep.subr.bf16.mxu0 0
        %775 = vmatpush1.bf16.msra.mxu0 0
        %776 = vmatprep.subr.bf16.mxu0 0
        %777 = vmatpush1.bf16.msra.mxu0 0
        %778 = vmatprep.subr.bf16.mxu0 0
        %779 = vmatpush1.bf16.msra.mxu0 0
        %780 = vmatprep.subr.bf16.mxu0 0
        %781 = vmatpush1.bf16.msra.mxu0 0
        %782 = vmatprep.subr.bf16.mxu0 0
        %783 = vmatpush1.bf16.msra.mxu0 %v761
        %784 = vmatprep.subr.bf16.mxu0 0
        %785 = vmatpush1.bf16.msra.mxu0 %v760
        %786 = vmatprep.subr.bf16.mxu0 0
        %787 = vmatpush2.bf16.msra.mxu0 0
        %788 = vmatprep.subr.bf16.mxu0 0
        %789 = vmatpush2.bf16.msra.mxu0 0
        %790 = vmatprep.subr.bf16.mxu0 0
        %791 = vmatpush2.bf16.msra.mxu0 0
        %792 = vmatprep.subr.bf16.mxu0 0
        %793 = vmatpush2.bf16.msra.mxu0 0
        %794 = vmatprep.subr.bf16.mxu0 0
        %795 = vmatpush2.bf16.msra.mxu0 0
        %796 = vmatprep.subr.bf16.mxu0 0
        %797 = vmatpush2.bf16.msra.mxu0 0
        %798 = vmatprep.subr.bf16.mxu0 0
        %799 = vmatpush2.bf16.msra.mxu0 0
        %800 = vmatprep.subr.bf16.mxu0 0
        %801 = vmatpush2.bf16.msra.mxu0 0
        %802 = vmatprep.mubr.bf16.mxu0 0
        %803 = vmatmul.mubr.bf16.gmra.mxu0 %v765
        %v804 = vpop.f32.mrf.mxu0
        %v805 = vadd.f32 %v751, %v804
        %v806 = vpop.f32.mrf.mxu0
        %v807 = vpop.f32.mrf.mxu0
        %v808 = vadd.f32 %v751, %v807
        %v809 = vpop.f32.mrf.mxu0
        %810 = vmatprep.mubr.bf16.mxu0 0
        %811 = vmatmul.mubr.bf16.gmra.mxu0 %v768
        %v812 = vpop.f32.mrf.mxu0
        %v813 = vadd.f32 %v751, %v812
        %v814 = vpop.f32.mrf.mxu0
        %v815 = vpop.f32.mrf.mxu0
        %v816 = vadd.f32 %v751, %v815
        %v817 = vpop.f32.mrf.mxu0
        %818 = vdwg.mxu0
        %v819 = vlaneseq
        %v820 = vshrl.u32 %v819, 7
        %v821 = vsub.s32 4, %v820
        %v822 = vrot.slane %v268, %v821
        %v827 = vunpack.c.l.b16 %v630
        %v828 = vunpack.c.l.b16 %v631
        %v829 = vunpack.c.l.b16 %v632
        %v830 = vunpack.c.l.b16 %v633
        %v831 = vpack.c.b16 %v828, %v827
        %v832 = vpack.c.b16 %v830, %v829
        %835 = vmatprep.subr.bf16.mxu0 0
        %836 = vmatpush1.bf16.msra.mxu0 0
        %837 = vmatprep.subr.bf16.mxu0 0
        %838 = vmatpush1.bf16.msra.mxu0 0
        %839 = vmatprep.subr.bf16.mxu0 0
        %840 = vmatpush1.bf16.msra.mxu0 0
        %841 = vmatprep.subr.bf16.mxu0 0
        %842 = vmatpush1.bf16.msra.mxu0 0
        %843 = vmatprep.subr.bf16.mxu0 0
        %844 = vmatpush1.bf16.msra.mxu0 0
        %845 = vmatprep.subr.bf16.mxu0 0
        %846 = vmatpush1.bf16.msra.mxu0 0
        %847 = vmatprep.subr.bf16.mxu0 0
        %848 = vmatpush1.bf16.msra.mxu0 %v832
        %849 = vmatprep.subr.bf16.mxu0 0
        %850 = vmatpush1.bf16.msra.mxu0 %v831
        %851 = vmatprep.subr.bf16.mxu0 0
        %852 = vmatpush2.bf16.msra.mxu0 0
        %853 = vmatprep.subr.bf16.mxu0 0
        %854 = vmatpush2.bf16.msra.mxu0 0
        %855 = vmatprep.subr.bf16.mxu0 0
        %856 = vmatpush2.bf16.msra.mxu0 0
        %857 = vmatprep.subr.bf16.mxu0 0
        %858 = vmatpush2.bf16.msra.mxu0 0
        %859 = vmatprep.subr.bf16.mxu0 0
        %860 = vmatpush2.bf16.msra.mxu0 0
        %861 = vmatprep.subr.bf16.mxu0 0
        %862 = vmatpush2.bf16.msra.mxu0 0
        %863 = vmatprep.subr.bf16.mxu0 0
        %864 = vmatpush2.bf16.msra.mxu0 0
        %865 = vmatprep.subr.bf16.mxu0 0
        %866 = vmatpush2.bf16.msra.mxu0 0
        %867 = vmatprep.mubr.bf16.mxu0 0
        %868 = vmatmul.mubr.bf16.gmra.mxu0 %v765
        %v869 = vpop.f32.mrf.mxu0
        %v870 = vadd.f32 %v822, %v869
        %v871 = vpop.f32.mrf.mxu0
        %v872 = vpop.f32.mrf.mxu0
        %v873 = vadd.f32 %v822, %v872
        %v874 = vpop.f32.mrf.mxu0
        %875 = vmatprep.mubr.bf16.mxu0 0
        %876 = vmatmul.mubr.bf16.gmra.mxu0 %v768
        %v877 = vpop.f32.mrf.mxu0
        %v878 = vadd.f32 %v822, %v877
        %v879 = vpop.f32.mrf.mxu0
        %v880 = vpop.f32.mrf.mxu0
        %v881 = vadd.f32 %v822, %v880
        %v882 = vpop.f32.mrf.mxu0
        %883 = vdwg.mxu0
        %v884 = vlaneseq
        %v885 = vshrl.u32 %v884, 7
        %v886 = vsub.s32 5, %v885
        %v887 = vrot.slane %v268, %v886
        %v892 = vunpack.c.l.b16 %v634
        %v893 = vunpack.c.l.b16 %v635
        %v894 = vunpack.c.l.b16 %v636
        %v895 = vunpack.c.l.b16 %v637
        %v896 = vpack.c.b16 %v893, %v892
        %v897 = vpack.c.b16 %v895, %v894
        %900 = vmatprep.subr.bf16.mxu0 0
        %901 = vmatpush1.bf16.msra.mxu0 0
        %902 = vmatprep.subr.bf16.mxu0 0
        %903 = vmatpush1.bf16.msra.mxu0 0
        %904 = vmatprep.subr.bf16.mxu0 0
        %905 = vmatpush1.bf16.msra.mxu0 0
        %906 = vmatprep.subr.bf16.mxu0 0
        %907 = vmatpush1.bf16.msra.mxu0 0
        %908 = vmatprep.subr.bf16.mxu0 0
        %909 = vmatpush1.bf16.msra.mxu0 0
        %910 = vmatprep.subr.bf16.mxu0 0
        %911 = vmatpush1.bf16.msra.mxu0 0
        %912 = vmatprep.subr.bf16.mxu0 0
        %913 = vmatpush1.bf16.msra.mxu0 %v897
        %914 = vmatprep.subr.bf16.mxu0 0
        %915 = vmatpush1.bf16.msra.mxu0 %v896
        %916 = vmatprep.subr.bf16.mxu0 0
        %917 = vmatpush2.bf16.msra.mxu0 0
        %918 = vmatprep.subr.bf16.mxu0 0
        %919 = vmatpush2.bf16.msra.mxu0 0
        %920 = vmatprep.subr.bf16.mxu0 0
        %921 = vmatpush2.bf16.msra.mxu0 0
        %922 = vmatprep.subr.bf16.mxu0 0
        %923 = vmatpush2.bf16.msra.mxu0 0
        %924 = vmatprep.subr.bf16.mxu0 0
        %925 = vmatpush2.bf16.msra.mxu0 0
        %926 = vmatprep.subr.bf16.mxu0 0
        %927 = vmatpush2.bf16.msra.mxu0 0
        %928 = vmatprep.subr.bf16.mxu0 0
        %929 = vmatpush2.bf16.msra.mxu0 0
        %930 = vmatprep.subr.bf16.mxu0 0
        %931 = vmatpush2.bf16.msra.mxu0 0
        %932 = vmatprep.mubr.bf16.mxu0 0
        %933 = vmatmul.mubr.bf16.gmra.mxu0 %v765
        %v934 = vpop.f32.mrf.mxu0
        %v935 = vadd.f32 %v887, %v934
        %v936 = vpop.f32.mrf.mxu0
        %v937 = vpop.f32.mrf.mxu0
        %v938 = vadd.f32 %v887, %v937
        %v939 = vpop.f32.mrf.mxu0
        %940 = vmatprep.mubr.bf16.mxu0 0
        %941 = vmatmul.mubr.bf16.gmra.mxu0 %v768
        %v942 = vpop.f32.mrf.mxu0
        %v943 = vadd.f32 %v887, %v942
        %v944 = vpop.f32.mrf.mxu0
        %v945 = vpop.f32.mrf.mxu0
        %v946 = vadd.f32 %v887, %v945
        %v947 = vpop.f32.mrf.mxu0
        %948 = vdwg.mxu0
        %v949 = vpack.c.bf16 %v873, %v870
        %v950 = vpack.c.bf16 %v881, %v878
        %v951 = vpack.c.bf16 %v938, %v935
        %v952 = vpack.c.bf16 %v946, %v943
        %v953 = vmul.f32 %v805, %v660
        %v954 = vmul.f32 %v808, %v660
        %v955 = vmul.f32 %v813, %v660
        %v956 = vmul.f32 %v816, %v660
        %v957 = vpack.c.bf16 %v954, %v953
        %v958 = vpack.c.bf16 %v956, %v955
        %v960 = vsel %vm676, %v957, 0
        %v963 = vsel %vm676, %v949, 0
        %965 = vmatprep.subr.bf16.mxu0 0
        %966 = vmatpush1.bf16.xpose.msra.mxu0 0
        %967 = vmatprep.subr.bf16.mxu0 0
        %968 = vmatpush1.bf16.xpose.msra.mxu0 0
        %969 = vmatprep.subr.bf16.mxu0 0
        %970 = vmatpush1.bf16.xpose.msra.mxu0 0
        %971 = vmatprep.subr.bf16.mxu0 0
        %972 = vmatpush1.bf16.xpose.msra.mxu0 0
        %973 = vmatprep.subr.bf16.mxu0 0
        %974 = vmatpush1.bf16.xpose.msra.mxu0 0
        %975 = vmatprep.subr.bf16.mxu0 0
        %976 = vmatpush1.bf16.xpose.msra.mxu0 0
        %977 = vmatprep.subr.bf16.mxu0 0
        %978 = vmatpush1.bf16.xpose.msra.mxu0 0
        %979 = vmatprep.subr.bf16.mxu0 0
        %980 = vmatpush1.bf16.xpose.msra.mxu0 %v963
        %981 = vmatprep.subr.bf16.mxu0 0
        %982 = vmatpush2.bf16.xpose.msra.mxu0 0
        %983 = vmatprep.subr.bf16.mxu0 0
        %984 = vmatpush2.bf16.xpose.msra.mxu0 0
        %985 = vmatprep.subr.bf16.mxu0 0
        %986 = vmatpush2.bf16.xpose.msra.mxu0 0
        %987 = vmatprep.subr.bf16.mxu0 0
        %988 = vmatpush2.bf16.xpose.msra.mxu0 0
        %989 = vmatprep.subr.bf16.mxu0 0
        %990 = vmatpush2.bf16.xpose.msra.mxu0 0
        %991 = vmatprep.subr.bf16.mxu0 0
        %992 = vmatpush2.bf16.xpose.msra.mxu0 0
        %993 = vmatprep.subr.bf16.mxu0 0
        %994 = vmatpush2.bf16.xpose.msra.mxu0 0
        %995 = vmatprep.subr.bf16.mxu0 0
        %996 = vmatpush2.bf16.xpose.msra.mxu0 0
        %997 = vmatprep.mubr.bf16.mxu0 0
        %998 = vmatmul.mubr.bf16.gmra.mxu0 %v960
        %v999 = vpop.f32.mrf.mxu0
        %v1000 = vadd.f32 0.0, %v999
        %v1001 = vpop.f32.mrf.mxu0
        %v1002 = vpop.f32.mrf.mxu0
        %v1003 = vadd.f32 0.0, %v1002
        %v1004 = vpop.f32.mrf.mxu0
        %1005 = vdwg.mxu0
        %v1007 = vsel %vm676, %v958, 0
        %v1010 = vsel %vm676, %v950, 0
        %1012 = vmatprep.subr.bf16.mxu0 0
        %1013 = vmatpush1.bf16.xpose.msra.mxu0 0
        %1014 = vmatprep.subr.bf16.mxu0 0
        %1015 = vmatpush1.bf16.xpose.msra.mxu0 0
        %1016 = vmatprep.subr.bf16.mxu0 0
        %1017 = vmatpush1.bf16.xpose.msra.mxu0 0
        %1018 = vmatprep.subr.bf16.mxu0 0
        %1019 = vmatpush1.bf16.xpose.msra.mxu0 0
        %1020 = vmatprep.subr.bf16.mxu0 0
        %1021 = vmatpush1.bf16.xpose.msra.mxu0 0
        %1022 = vmatprep.subr.bf16.mxu0 0
        %1023 = vmatpush1.bf16.xpose.msra.mxu0 0
        %1024 = vmatprep.subr.bf16.mxu0 0
        %1025 = vmatpush1.bf16.xpose.msra.mxu0 0
        %1026 = vmatprep.subr.bf16.mxu0 0
        %1027 = vmatpush1.bf16.xpose.msra.mxu0 %v1010
        %1028 = vmatprep.subr.bf16.mxu0 0
        %1029 = vmatpush2.bf16.xpose.msra.mxu0 0
        %1030 = vmatprep.subr.bf16.mxu0 0
        %1031 = vmatpush2.bf16.xpose.msra.mxu0 0
        %1032 = vmatprep.subr.bf16.mxu0 0
        %1033 = vmatpush2.bf16.xpose.msra.mxu0 0
        %1034 = vmatprep.subr.bf16.mxu0 0
        %1035 = vmatpush2.bf16.xpose.msra.mxu0 0
        %1036 = vmatprep.subr.bf16.mxu0 0
        %1037 = vmatpush2.bf16.xpose.msra.mxu0 0
        %1038 = vmatprep.subr.bf16.mxu0 0
        %1039 = vmatpush2.bf16.xpose.msra.mxu0 0
        %1040 = vmatprep.subr.bf16.mxu0 0
        %1041 = vmatpush2.bf16.xpose.msra.mxu0 0
        %1042 = vmatprep.subr.bf16.mxu0 0
        %1043 = vmatpush2.bf16.xpose.msra.mxu0 0
        %1044 = vmatprep.mubr.bf16.mxu0 0
        %1045 = vmatmul.mubr.bf16.gmra.mxu0 %v1007
        %v1046 = vpop.f32.mrf.mxu0
        %v1047 = vadd.f32 0.0, %v1046
        %v1048 = vpop.f32.mrf.mxu0
        %v1049 = vpop.f32.mrf.mxu0
        %v1050 = vadd.f32 0.0, %v1049
        %v1051 = vpop.f32.mrf.mxu0
        %1052 = vdwg.mxu0
        %v1053 = vmul.f32 %v1000, 0.35355338
        %v1054 = vmul.f32 %v1003, 0.35355338
        %v1055 = vmul.f32 %v1047, 0.35355338
        %v1056 = vmul.f32 %v1050, 0.35355338
        %vm1057 = vcmask 130048
        %v1058 = vsel %vm1057, %v1053, -inf
        %1059 = vmax.xlane.f32.xlu0 %v1058
        %v1060 = vpop.xlane.xlu0 %1059
        %v1061 = vsel %vm1057, %v1054, -inf
        %1062 = vmax.xlane.f32.xlu0 %v1061
        %v1063 = vpop.xlane.xlu0 %1062
        %v1064 = vsel %vm1057, %v1055, -inf
        %1065 = vmax.xlane.f32.xlu0 %v1064
        %v1066 = vpop.xlane.xlu0 %1065
        %v1067 = vsel %vm1057, %v1056, -inf
        %1068 = vmax.xlane.f32.xlu0 %v1067
        %v1069 = vpop.xlane.xlu0 %1068
        %v1070 = vsub.f32 %v1053, %v1060
        %v1071 = vsub.f32 %v1054, %v1063
        %v1072 = vsub.f32 %v1055, %v1066
        %v1073 = vsub.f32 %v1056, %v1069
        %v1074 = vmul.f32 %v1070, 1.442695
        %v1075 = vpow.pop %v1074
        %v1076 = vmul.f32 %v1071, 1.442695
        %v1077 = vpow.pop %v1076
        %v1078 = vmul.f32 %v1072, 1.442695
        %v1079 = vpow.pop %v1078
        %v1080 = vmul.f32 %v1073, 1.442695
        %v1081 = vpow.pop %v1080
        %v1082 = vsel %vm1057, %v1075, 0.0
        %1083 = vadd.xlane.f32.xlu0 %v1082
        %v1084 = vpop.xlane.xlu0 %1083
        %v1085 = vsel %vm1057, %v1077, 0.0
        %1086 = vadd.xlane.f32.xlu0 %v1085
        %v1087 = vpop.xlane.xlu0 %1086
        %v1088 = vsel %vm1057, %v1079, 0.0
        %1089 = vadd.xlane.f32.xlu0 %v1088
        %v1090 = vpop.xlane.xlu0 %1089
        %v1091 = vsel %vm1057, %v1081, 0.0
        %1092 = vadd.xlane.f32.xlu0 %v1091
        %v1093 = vpop.xlane.xlu0 %1092
        %v1094 = vrcp.pop %v1084
        %v1095 = vrcp.pop %v1087
        %v1096 = vrcp.pop %v1090
        %v1097 = vrcp.pop %v1093
        %v1098 = vmul.f32 %v1075, %v1094
        %v1099 = vmul.f32 %v1077, %v1095
        %v1100 = vmul.f32 %v1079, %v1096
        %v1101 = vmul.f32 %v1081, %v1097
        %v1102 = vpack.c.bf16 %v1099, %v1098
        %v1103 = vpack.c.bf16 %v1101, %v1100
        %v1105 = vsel %vm1057, %v1102, 0
        %1107 = vmatprep.subr.bf16.mxu0 0
        %1108 = vmatpush1.bf16.msra.mxu0 0
        %1109 = vmatprep.subr.bf16.mxu0 0
        %1110 = vmatpush1.bf16.msra.mxu0 0
        %1111 = vmatprep.subr.bf16.mxu0 0
        %1112 = vmatpush1.bf16.msra.mxu0 0
        %1113 = vmatprep.subr.bf16.mxu0 0
        %1114 = vmatpush1.bf16.msra.mxu0 0
        %1115 = vmatprep.subr.bf16.mxu0 0
        %1116 = vmatpush1.bf16.msra.mxu0 0
        %1117 = vmatprep.subr.bf16.mxu0 0
        %1118 = vmatpush1.bf16.msra.mxu0 0
        %1119 = vmatprep.subr.bf16.mxu0 0
        %1120 = vmatpush1.bf16.msra.mxu0 0
        %1121 = vmatprep.subr.bf16.mxu0 0
        %1122 = vmatpush1.bf16.msra.mxu0 %v951
        %1123 = vmatprep.subr.bf16.mxu0 0
        %1124 = vmatpush2.bf16.msra.mxu0 0
        %1125 = vmatprep.subr.bf16.mxu0 0
        %1126 = vmatpush2.bf16.msra.mxu0 0
        %1127 = vmatprep.subr.bf16.mxu0 0
        %1128 = vmatpush2.bf16.msra.mxu0 0
        %1129 = vmatprep.subr.bf16.mxu0 0
        %1130 = vmatpush2.bf16.msra.mxu0 0
        %1131 = vmatprep.subr.bf16.mxu0 0
        %1132 = vmatpush2.bf16.msra.mxu0 0
        %1133 = vmatprep.subr.bf16.mxu0 0
        %1134 = vmatpush2.bf16.msra.mxu0 0
        %1135 = vmatprep.subr.bf16.mxu0 0
        %1136 = vmatpush2.bf16.msra.mxu0 0
        %1137 = vmatprep.subr.bf16.mxu0 0
        %1138 = vmatpush2.bf16.msra.mxu0 0
        %1139 = vmatprep.mubr.bf16.mxu0 0
        %1140 = vmatmul.mubr.bf16.gmra.mxu0 %v1105
        %v1141 = vpop.f32.mrf.mxu0
        %v1142 = vadd.f32 0.0, %v1141
        %v1143 = vpop.f32.mrf.mxu0
        %v1144 = vpop.f32.mrf.mxu0
        %v1145 = vadd.f32 0.0, %v1144
        %v1146 = vpop.f32.mrf.mxu0
        %1147 = vdwg.mxu0
        %v1149 = vsel %vm1057, %v1103, 0
        %1151 = vmatprep.subr.bf16.mxu0 0
        %1152 = vmatpush1.bf16.msra.mxu0 0
        %1153 = vmatprep.subr.bf16.mxu0 0
        %1154 = vmatpush1.bf16.msra.mxu0 0
        %1155 = vmatprep.subr.bf16.mxu0 0
        %1156 = vmatpush1.bf16.msra.mxu0 0
        %1157 = vmatprep.subr.bf16.mxu0 0
        %1158 = vmatpush1.bf16.msra.mxu0 0
        %1159 = vmatprep.subr.bf16.mxu0 0
        %1160 = vmatpush1.bf16.msra.mxu0 0
        %1161 = vmatprep.subr.bf16.mxu0 0
        %1162 = vmatpush1.bf16.msra.mxu0 0
        %1163 = vmatprep.subr.bf16.mxu0 0
        %1164 = vmatpush1.bf16.msra.mxu0 0
        %1165 = vmatprep.subr.bf16.mxu0 0
        %1166 = vmatpush1.bf16.msra.mxu0 %v952
        %1167 = vmatprep.subr.bf16.mxu0 0
        %1168 = vmatpush2.bf16.msra.mxu0 0
        %1169 = vmatprep.subr.bf16.mxu0 0
        %1170 = vmatpush2.bf16.msra.mxu0 0
        %1171 = vmatprep.subr.bf16.mxu0 0
        %1172 = vmatpush2.bf16.msra.mxu0 0
        %1173 = vmatprep.subr.bf16.mxu0 0
        %1174 = vmatpush2.bf16.msra.mxu0 0
        %1175 = vmatprep.subr.bf16.mxu0 0
        %1176 = vmatpush2.bf16.msra.mxu0 0
        %1177 = vmatprep.subr.bf16.mxu0 0
        %1178 = vmatpush2.bf16.msra.mxu0 0
        %1179 = vmatprep.subr.bf16.mxu0 0
        %1180 = vmatpush2.bf16.msra.mxu0 0
        %1181 = vmatprep.subr.bf16.mxu0 0
        %1182 = vmatpush2.bf16.msra.mxu0 0
        %1183 = vmatprep.mubr.bf16.mxu0 0
        %1184 = vmatmul.mubr.bf16.gmra.mxu0 %v1149
        %v1185 = vpop.f32.mrf.mxu0
        %v1186 = vadd.f32 0.0, %v1185
        %v1187 = vpop.f32.mrf.mxu0
        %v1188 = vpop.f32.mrf.mxu0
        %v1189 = vadd.f32 0.0, %v1188
        %v1190 = vpop.f32.mrf.mxu0
        %1191 = vdwg.mxu0
        %v1192 = vmul.f32 %v1142, %v660
        %v1193 = vmul.f32 %v1145, %v660
        %v1194 = vmul.f32 %v1186, %v660
        %v1195 = vmul.f32 %v1189, %v660
        %v1196 = vadd.f32 %v1192, 0.0
        %v1197 = vadd.f32 %v1193, 0.0
        %v1198 = vadd.f32 %v1194, 0.0
        %v1199 = vadd.f32 %v1195, 0.0
        %v1200 = vmul.f32 %v805, %v665
        %v1201 = vmul.f32 %v808, %v665
        %v1202 = vmul.f32 %v813, %v665
        %v1203 = vmul.f32 %v816, %v665
        %v1204 = vpack.c.bf16 %v1201, %v1200
        %v1205 = vpack.c.bf16 %v1203, %v1202
        %v1207 = vsel %vm676, %v1204, 0
        %1209 = vmatprep.subr.bf16.mxu0 0
        %1210 = vmatpush1.bf16.xpose.msra.mxu0 0
        %1211 = vmatprep.subr.bf16.mxu0 0
        %1212 = vmatpush1.bf16.xpose.msra.mxu0 0
        %1213 = vmatprep.subr.bf16.mxu0 0
        %1214 = vmatpush1.bf16.xpose.msra.mxu0 0
        %1215 = vmatprep.subr.bf16.mxu0 0
        %1216 = vmatpush1.bf16.xpose.msra.mxu0 0
        %1217 = vmatprep.subr.bf16.mxu0 0
        %1218 = vmatpush1.bf16.xpose.msra.mxu0 0
        %1219 = vmatprep.subr.bf16.mxu0 0
        %1220 = vmatpush1.bf16.xpose.msra.mxu0 0
        %1221 = vmatprep.subr.bf16.mxu0 0
        %1222 = vmatpush1.bf16.xpose.msra.mxu0 0
        %1223 = vmatprep.subr.bf16.mxu0 0
        %1224 = vmatpush1.bf16.xpose.msra.mxu0 %v963
        %1225 = vmatprep.subr.bf16.mxu0 0
        %1226 = vmatpush2.bf16.xpose.msra.mxu0 0
        %1227 = vmatprep.subr.bf16.mxu0 0
        %1228 = vmatpush2.bf16.xpose.msra.mxu0 0
        %1229 = vmatprep.subr.bf16.mxu0 0
        %1230 = vmatpush2.bf16.xpose.msra.mxu0 0
        %1231 = vmatprep.subr.bf16.mxu0 0
        %1232 = vmatpush2.bf16.xpose.msra.mxu0 0
        %1233 = vmatprep.subr.bf16.mxu0 0
        %1234 = vmatpush2.bf16.xpose.msra.mxu0 0
        %1235 = vmatprep.subr.bf16.mxu0 0
        %1236 = vmatpush2.bf16.xpose.msra.mxu0 0
        %1237 = vmatprep.subr.bf16.mxu0 0
        %1238 = vmatpush2.bf16.xpose.msra.mxu0 0
        %1239 = vmatprep.subr.bf16.mxu0 0
        %1240 = vmatpush2.bf16.xpose.msra.mxu0 0
        %1241 = vmatprep.mubr.bf16.mxu0 0
        %1242 = vmatmul.mubr.bf16.gmra.mxu0 %v1207
        %v1243 = vpop.f32.mrf.mxu0
        %v1244 = vadd.f32 0.0, %v1243
        %v1245 = vpop.f32.mrf.mxu0
        %v1246 = vpop.f32.mrf.mxu0
        %v1247 = vadd.f32 0.0, %v1246
        %v1248 = vpop.f32.mrf.mxu0
        %1249 = vdwg.mxu0
        %v1251 = vsel %vm676, %v1205, 0
        %1253 = vmatprep.subr.bf16.mxu0 0
        %1254 = vmatpush1.bf16.xpose.msra.mxu0 0
        %1255 = vmatprep.subr.bf16.mxu0 0
        %1256 = vmatpush1.bf16.xpose.msra.mxu0 0
        %1257 = vmatprep.subr.bf16.mxu0 0
        %1258 = vmatpush1.bf16.xpose.msra.mxu0 0
        %1259 = vmatprep.subr.bf16.mxu0 0
        %1260 = vmatpush1.bf16.xpose.msra.mxu0 0
        %1261 = vmatprep.subr.bf16.mxu0 0
        %1262 = vmatpush1.bf16.xpose.msra.mxu0 0
        %1263 = vmatprep.subr.bf16.mxu0 0
        %1264 = vmatpush1.bf16.xpose.msra.mxu0 0
        %1265 = vmatprep.subr.bf16.mxu0 0
        %1266 = vmatpush1.bf16.xpose.msra.mxu0 0
        %1267 = vmatprep.subr.bf16.mxu0 0
        %1268 = vmatpush1.bf16.xpose.msra.mxu0 %v1010
        %1269 = vmatprep.subr.bf16.mxu0 0
        %1270 = vmatpush2.bf16.xpose.msra.mxu0 0
        %1271 = vmatprep.subr.bf16.mxu0 0
        %1272 = vmatpush2.bf16.xpose.msra.mxu0 0
        %1273 = vmatprep.subr.bf16.mxu0 0
        %1274 = vmatpush2.bf16.xpose.msra.mxu0 0
        %1275 = vmatprep.subr.bf16.mxu0 0
        %1276 = vmatpush2.bf16.xpose.msra.mxu0 0
        %1277 = vmatprep.subr.bf16.mxu0 0
        %1278 = vmatpush2.bf16.xpose.msra.mxu0 0
        %1279 = vmatprep.subr.bf16.mxu0 0
        %1280 = vmatpush2.bf16.xpose.msra.mxu0 0
        %1281 = vmatprep.subr.bf16.mxu0 0
        %1282 = vmatpush2.bf16.xpose.msra.mxu0 0
        %1283 = vmatprep.subr.bf16.mxu0 0
        %1284 = vmatpush2.bf16.xpose.msra.mxu0 0
        %1285 = vmatprep.mubr.bf16.mxu0 0
        %1286 = vmatmul.mubr.bf16.gmra.mxu0 %v1251
        %v1287 = vpop.f32.mrf.mxu0
        %v1288 = vadd.f32 0.0, %v1287
        %v1289 = vpop.f32.mrf.mxu0
        %v1290 = vpop.f32.mrf.mxu0
        %v1291 = vadd.f32 0.0, %v1290
        %v1292 = vpop.f32.mrf.mxu0
        %1293 = vdwg.mxu0
        %v1294 = vmul.f32 %v1244, 0.35355338
        %v1295 = vmul.f32 %v1247, 0.35355338
        %v1296 = vmul.f32 %v1288, 0.35355338
        %v1297 = vmul.f32 %v1291, 0.35355338
        %v1298 = vsel %vm1057, %v1294, -inf
        %1299 = vmax.xlane.f32.xlu0 %v1298
        %v1300 = vpop.xlane.xlu0 %1299
        %v1301 = vsel %vm1057, %v1295, -inf
        %1302 = vmax.xlane.f32.xlu0 %v1301
        %v1303 = vpop.xlane.xlu0 %1302
        %v1304 = vsel %vm1057, %v1296, -inf
        %1305 = vmax.xlane.f32.xlu0 %v1304
        %v1306 = vpop.xlane.xlu0 %1305
        %v1307 = vsel %vm1057, %v1297, -inf
        %1308 = vmax.xlane.f32.xlu0 %v1307
        %v1309 = vpop.xlane.xlu0 %1308
        %v1310 = vsub.f32 %v1294, %v1300
        %v1311 = vsub.f32 %v1295, %v1303
        %v1312 = vsub.f32 %v1296, %v1306
        %v1313 = vsub.f32 %v1297, %v1309
        %v1314 = vmul.f32 %v1310, 1.442695
        %v1315 = vpow.pop %v1314
        %v1316 = vmul.f32 %v1311, 1.442695
        %v1317 = vpow.pop %v1316
        %v1318 = vmul.f32 %v1312, 1.442695
        %v1319 = vpow.pop %v1318
        %v1320 = vmul.f32 %v1313, 1.442695
        %v1321 = vpow.pop %v1320
        %v1322 = vsel %vm1057, %v1315, 0.0
        %1323 = vadd.xlane.f32.xlu0 %v1322
        %v1324 = vpop.xlane.xlu0 %1323
        %v1325 = vsel %vm1057, %v1317, 0.0
        %1326 = vadd.xlane.f32.xlu0 %v1325
        %v1327 = vpop.xlane.xlu0 %1326
        %v1328 = vsel %vm1057, %v1319, 0.0
        %1329 = vadd.xlane.f32.xlu0 %v1328
        %v1330 = vpop.xlane.xlu0 %1329
        %v1331 = vsel %vm1057, %v1321, 0.0
        %1332 = vadd.xlane.f32.xlu0 %v1331
        %v1333 = vpop.xlane.xlu0 %1332
        %v1334 = vrcp.pop %v1324
        %v1335 = vrcp.pop %v1327
        %v1336 = vrcp.pop %v1330
        %v1337 = vrcp.pop %v1333
        %v1338 = vmul.f32 %v1315, %v1334
        %v1339 = vmul.f32 %v1317, %v1335
        %v1340 = vmul.f32 %v1319, %v1336
        %v1341 = vmul.f32 %v1321, %v1337
        %v1342 = vpack.c.bf16 %v1339, %v1338
        %v1343 = vpack.c.bf16 %v1341, %v1340
        %v1345 = vsel %vm1057, %v1342, 0
        %1347 = vmatprep.subr.bf16.mxu0 0
        %1348 = vmatpush1.bf16.msra.mxu0 0
        %1349 = vmatprep.subr.bf16.mxu0 0
        %1350 = vmatpush1.bf16.msra.mxu0 0
        %1351 = vmatprep.subr.bf16.mxu0 0
        %1352 = vmatpush1.bf16.msra.mxu0 0
        %1353 = vmatprep.subr.bf16.mxu0 0
        %1354 = vmatpush1.bf16.msra.mxu0 0
        %1355 = vmatprep.subr.bf16.mxu0 0
        %1356 = vmatpush1.bf16.msra.mxu0 0
        %1357 = vmatprep.subr.bf16.mxu0 0
        %1358 = vmatpush1.bf16.msra.mxu0 0
        %1359 = vmatprep.subr.bf16.mxu0 0
        %1360 = vmatpush1.bf16.msra.mxu0 0
        %1361 = vmatprep.subr.bf16.mxu0 0
        %1362 = vmatpush1.bf16.msra.mxu0 %v951
        %1363 = vmatprep.subr.bf16.mxu0 0
        %1364 = vmatpush2.bf16.msra.mxu0 0
        %1365 = vmatprep.subr.bf16.mxu0 0
        %1366 = vmatpush2.bf16.msra.mxu0 0
        %1367 = vmatprep.subr.bf16.mxu0 0
        %1368 = vmatpush2.bf16.msra.mxu0 0
        %1369 = vmatprep.subr.bf16.mxu0 0
        %1370 = vmatpush2.bf16.msra.mxu0 0
        %1371 = vmatprep.subr.bf16.mxu0 0
        %1372 = vmatpush2.bf16.msra.mxu0 0
        %1373 = vmatprep.subr.bf16.mxu0 0
        %1374 = vmatpush2.bf16.msra.mxu0 0
        %1375 = vmatprep.subr.bf16.mxu0 0
        %1376 = vmatpush2.bf16.msra.mxu0 0
        %1377 = vmatprep.subr.bf16.mxu0 0
        %1378 = vmatpush2.bf16.msra.mxu0 0
        %1379 = vmatprep.mubr.bf16.mxu0 0
        %1380 = vmatmul.mubr.bf16.gmra.mxu0 %v1345
        %v1381 = vpop.f32.mrf.mxu0
        %v1382 = vadd.f32 0.0, %v1381
        %v1383 = vpop.f32.mrf.mxu0
        %v1384 = vpop.f32.mrf.mxu0
        %v1385 = vadd.f32 0.0, %v1384
        %v1386 = vpop.f32.mrf.mxu0
        %1387 = vdwg.mxu0
        %v1389 = vsel %vm1057, %v1343, 0
        %1391 = vmatprep.subr.bf16.mxu0 0
        %1392 = vmatpush1.bf16.msra.mxu0 0
        %1393 = vmatprep.subr.bf16.mxu0 0
        %1394 = vmatpush1.bf16.msra.mxu0 0
        %1395 = vmatprep.subr.bf16.mxu0 0
        %1396 = vmatpush1.bf16.msra.mxu0 0
        %1397 = vmatprep.subr.bf16.mxu0 0
        %1398 = vmatpush1.bf16.msra.mxu0 0
        %1399 = vmatprep.subr.bf16.mxu0 0
        %1400 = vmatpush1.bf16.msra.mxu0 0
        %1401 = vmatprep.subr.bf16.mxu0 0
        %1402 = vmatpush1.bf16.msra.mxu0 0
        %1403 = vmatprep.subr.bf16.mxu0 0
        %1404 = vmatpush1.bf16.msra.mxu0 0
        %1405 = vmatprep.subr.bf16.mxu0 0
        %1406 = vmatpush1.bf16.msra.mxu0 %v952
        %1407 = vmatprep.subr.bf16.mxu0 0
        %1408 = vmatpush2.bf16.msra.mxu0 0
        %1409 = vmatprep.subr.bf16.mxu0 0
        %1410 = vmatpush2.bf16.msra.mxu0 0
        %1411 = vmatprep.subr.bf16.mxu0 0
        %1412 = vmatpush2.bf16.msra.mxu0 0
        %1413 = vmatprep.subr.bf16.mxu0 0
        %1414 = vmatpush2.bf16.msra.mxu0 0
        %1415 = vmatprep.subr.bf16.mxu0 0
        %1416 = vmatpush2.bf16.msra.mxu0 0
        %1417 = vmatprep.subr.bf16.mxu0 0
        %1418 = vmatpush2.bf16.msra.mxu0 0
        %1419 = vmatprep.subr.bf16.mxu0 0
        %1420 = vmatpush2.bf16.msra.mxu0 0
        %1421 = vmatprep.subr.bf16.mxu0 0
        %1422 = vmatpush2.bf16.msra.mxu0 0
        %1423 = vmatprep.mubr.bf16.mxu0 0
        %1424 = vmatmul.mubr.bf16.gmra.mxu0 %v1389
        %v1425 = vpop.f32.mrf.mxu0
        %v1426 = vadd.f32 0.0, %v1425
        %v1427 = vpop.f32.mrf.mxu0
        %v1428 = vpop.f32.mrf.mxu0
        %v1429 = vadd.f32 0.0, %v1428
        %v1430 = vpop.f32.mrf.mxu0
        %1431 = vdwg.mxu0
        %v1432 = vmul.f32 %v1382, %v665
        %v1433 = vmul.f32 %v1385, %v665
        %v1434 = vmul.f32 %v1426, %v665
        %v1435 = vmul.f32 %v1429, %v665
        %v1436 = vadd.f32 %v1196, %v1432
        %v1437 = vadd.f32 %v1197, %v1433
        %v1438 = vadd.f32 %v1198, %v1434
        %v1439 = vadd.f32 %v1199, %v1435
        %v1440 = vmul.f32 %v805, %v670
        %v1441 = vmul.f32 %v808, %v670
        %v1442 = vmul.f32 %v813, %v670
        %v1443 = vmul.f32 %v816, %v670
        %v1444 = vpack.c.bf16 %v1441, %v1440
        %v1445 = vpack.c.bf16 %v1443, %v1442
        %v1447 = vsel %vm676, %v1444, 0
        %1449 = vmatprep.subr.bf16.mxu0 0
        %1450 = vmatpush1.bf16.xpose.msra.mxu0 0
        %1451 = vmatprep.subr.bf16.mxu0 0
        %1452 = vmatpush1.bf16.xpose.msra.mxu0 0
        %1453 = vmatprep.subr.bf16.mxu0 0
        %1454 = vmatpush1.bf16.xpose.msra.mxu0 0
        %1455 = vmatprep.subr.bf16.mxu0 0
        %1456 = vmatpush1.bf16.xpose.msra.mxu0 0
        %1457 = vmatprep.subr.bf16.mxu0 0
        %1458 = vmatpush1.bf16.xpose.msra.mxu0 0
        %1459 = vmatprep.subr.bf16.mxu0 0
        %1460 = vmatpush1.bf16.xpose.msra.mxu0 0
        %1461 = vmatprep.subr.bf16.mxu0 0
        %1462 = vmatpush1.bf16.xpose.msra.mxu0 0
        %1463 = vmatprep.subr.bf16.mxu0 0
        %1464 = vmatpush1.bf16.xpose.msra.mxu0 %v963
        %1465 = vmatprep.subr.bf16.mxu0 0
        %1466 = vmatpush2.bf16.xpose.msra.mxu0 0
        %1467 = vmatprep.subr.bf16.mxu0 0
        %1468 = vmatpush2.bf16.xpose.msra.mxu0 0
        %1469 = vmatprep.subr.bf16.mxu0 0
        %1470 = vmatpush2.bf16.xpose.msra.mxu0 0
        %1471 = vmatprep.subr.bf16.mxu0 0
        %1472 = vmatpush2.bf16.xpose.msra.mxu0 0
        %1473 = vmatprep.subr.bf16.mxu0 0
        %1474 = vmatpush2.bf16.xpose.msra.mxu0 0
        %1475 = vmatprep.subr.bf16.mxu0 0
        %1476 = vmatpush2.bf16.xpose.msra.mxu0 0
        %1477 = vmatprep.subr.bf16.mxu0 0
        %1478 = vmatpush2.bf16.xpose.msra.mxu0 0
        %1479 = vmatprep.subr.bf16.mxu0 0
        %1480 = vmatpush2.bf16.xpose.msra.mxu0 0
        %1481 = vmatprep.mubr.bf16.mxu0 0
        %1482 = vmatmul.mubr.bf16.gmra.mxu0 %v1447
        %v1483 = vpop.f32.mrf.mxu0
        %v1484 = vadd.f32 0.0, %v1483
        %v1485 = vpop.f32.mrf.mxu0
        %v1486 = vpop.f32.mrf.mxu0
        %v1487 = vadd.f32 0.0, %v1486
        %v1488 = vpop.f32.mrf.mxu0
        %1489 = vdwg.mxu0
        %v1491 = vsel %vm676, %v1445, 0
        %1493 = vmatprep.subr.bf16.mxu0 0
        %1494 = vmatpush1.bf16.xpose.msra.mxu0 0
        %1495 = vmatprep.subr.bf16.mxu0 0
        %1496 = vmatpush1.bf16.xpose.msra.mxu0 0
        %1497 = vmatprep.subr.bf16.mxu0 0
        %1498 = vmatpush1.bf16.xpose.msra.mxu0 0
        %1499 = vmatprep.subr.bf16.mxu0 0
        %1500 = vmatpush1.bf16.xpose.msra.mxu0 0
        %1501 = vmatprep.subr.bf16.mxu0 0
        %1502 = vmatpush1.bf16.xpose.msra.mxu0 0
        %1503 = vmatprep.subr.bf16.mxu0 0
        %1504 = vmatpush1.bf16.xpose.msra.mxu0 0
        %1505 = vmatprep.subr.bf16.mxu0 0
        %1506 = vmatpush1.bf16.xpose.msra.mxu0 0
        %1507 = vmatprep.subr.bf16.mxu0 0
        %1508 = vmatpush1.bf16.xpose.msra.mxu0 %v1010
        %1509 = vmatprep.subr.bf16.mxu0 0
        %1510 = vmatpush2.bf16.xpose.msra.mxu0 0
        %1511 = vmatprep.subr.bf16.mxu0 0
        %1512 = vmatpush2.bf16.xpose.msra.mxu0 0
        %1513 = vmatprep.subr.bf16.mxu0 0
        %1514 = vmatpush2.bf16.xpose.msra.mxu0 0
        %1515 = vmatprep.subr.bf16.mxu0 0
        %1516 = vmatpush2.bf16.xpose.msra.mxu0 0
        %1517 = vmatprep.subr.bf16.mxu0 0
        %1518 = vmatpush2.bf16.xpose.msra.mxu0 0
        %1519 = vmatprep.subr.bf16.mxu0 0
        %1520 = vmatpush2.bf16.xpose.msra.mxu0 0
        %1521 = vmatprep.subr.bf16.mxu0 0
        %1522 = vmatpush2.bf16.xpose.msra.mxu0 0
        %1523 = vmatprep.subr.bf16.mxu0 0
        %1524 = vmatpush2.bf16.xpose.msra.mxu0 0
        %1525 = vmatprep.mubr.bf16.mxu0 0
        %1526 = vmatmul.mubr.bf16.gmra.mxu0 %v1491
        %v1527 = vpop.f32.mrf.mxu0
        %v1528 = vadd.f32 0.0, %v1527
        %v1529 = vpop.f32.mrf.mxu0
        %v1530 = vpop.f32.mrf.mxu0
        %v1531 = vadd.f32 0.0, %v1530
        %v1532 = vpop.f32.mrf.mxu0
        %1533 = vdwg.mxu0
        %v1534 = vmul.f32 %v1484, 0.35355338
        %v1535 = vmul.f32 %v1487, 0.35355338
        %v1536 = vmul.f32 %v1528, 0.35355338
        %v1537 = vmul.f32 %v1531, 0.35355338
        %v1538 = vsel %vm1057, %v1534, -inf
        %1539 = vmax.xlane.f32.xlu0 %v1538
        %v1540 = vpop.xlane.xlu0 %1539
        %v1541 = vsel %vm1057, %v1535, -inf
        %1542 = vmax.xlane.f32.xlu0 %v1541
        %v1543 = vpop.xlane.xlu0 %1542
        %v1544 = vsel %vm1057, %v1536, -inf
        %1545 = vmax.xlane.f32.xlu0 %v1544
        %v1546 = vpop.xlane.xlu0 %1545
        %v1547 = vsel %vm1057, %v1537, -inf
        %1548 = vmax.xlane.f32.xlu0 %v1547
        %v1549 = vpop.xlane.xlu0 %1548
        %v1550 = vsub.f32 %v1534, %v1540
        %v1551 = vsub.f32 %v1535, %v1543
        %v1552 = vsub.f32 %v1536, %v1546
        %v1553 = vsub.f32 %v1537, %v1549
        %v1554 = vmul.f32 %v1550, 1.442695
        %v1555 = vpow.pop %v1554
        %v1556 = vmul.f32 %v1551, 1.442695
        %v1557 = vpow.pop %v1556
        %v1558 = vmul.f32 %v1552, 1.442695
        %v1559 = vpow.pop %v1558
        %v1560 = vmul.f32 %v1553, 1.442695
        %v1561 = vpow.pop %v1560
        %v1562 = vsel %vm1057, %v1555, 0.0
        %1563 = vadd.xlane.f32.xlu0 %v1562
        %v1564 = vpop.xlane.xlu0 %1563
        %v1565 = vsel %vm1057, %v1557, 0.0
        %1566 = vadd.xlane.f32.xlu0 %v1565
        %v1567 = vpop.xlane.xlu0 %1566
        %v1568 = vsel %vm1057, %v1559, 0.0
        %1569 = vadd.xlane.f32.xlu0 %v1568
        %v1570 = vpop.xlane.xlu0 %1569
        %v1571 = vsel %vm1057, %v1561, 0.0
        %1572 = vadd.xlane.f32.xlu0 %v1571
        %v1573 = vpop.xlane.xlu0 %1572
        %v1574 = vrcp.pop %v1564
        %v1575 = vrcp.pop %v1567
        %v1576 = vrcp.pop %v1570
        %v1577 = vrcp.pop %v1573
        %v1578 = vmul.f32 %v1555, %v1574
        %v1579 = vmul.f32 %v1557, %v1575
        %v1580 = vmul.f32 %v1559, %v1576
        %v1581 = vmul.f32 %v1561, %v1577
        %v1582 = vpack.c.bf16 %v1579, %v1578
        %v1583 = vpack.c.bf16 %v1581, %v1580
        %v1585 = vsel %vm1057, %v1582, 0
        %1587 = vmatprep.subr.bf16.mxu0 0
        %1588 = vmatpush1.bf16.msra.mxu0 0
        %1589 = vmatprep.subr.bf16.mxu0 0
        %1590 = vmatpush1.bf16.msra.mxu0 0
        %1591 = vmatprep.subr.bf16.mxu0 0
        %1592 = vmatpush1.bf16.msra.mxu0 0
        %1593 = vmatprep.subr.bf16.mxu0 0
        %1594 = vmatpush1.bf16.msra.mxu0 0
        %1595 = vmatprep.subr.bf16.mxu0 0
        %1596 = vmatpush1.bf16.msra.mxu0 0
        %1597 = vmatprep.subr.bf16.mxu0 0
        %1598 = vmatpush1.bf16.msra.mxu0 0
        %1599 = vmatprep.subr.bf16.mxu0 0
        %1600 = vmatpush1.bf16.msra.mxu0 0
        %1601 = vmatprep.subr.bf16.mxu0 0
        %1602 = vmatpush1.bf16.msra.mxu0 %v951
        %1603 = vmatprep.subr.bf16.mxu0 0
        %1604 = vmatpush2.bf16.msra.mxu0 0
        %1605 = vmatprep.subr.bf16.mxu0 0
        %1606 = vmatpush2.bf16.msra.mxu0 0
        %1607 = vmatprep.subr.bf16.mxu0 0
        %1608 = vmatpush2.bf16.msra.mxu0 0
        %1609 = vmatprep.subr.bf16.mxu0 0
        %1610 = vmatpush2.bf16.msra.mxu0 0
        %1611 = vmatprep.subr.bf16.mxu0 0
        %1612 = vmatpush2.bf16.msra.mxu0 0
        %1613 = vmatprep.subr.bf16.mxu0 0
        %1614 = vmatpush2.bf16.msra.mxu0 0
        %1615 = vmatprep.subr.bf16.mxu0 0
        %1616 = vmatpush2.bf16.msra.mxu0 0
        %1617 = vmatprep.subr.bf16.mxu0 0
        %1618 = vmatpush2.bf16.msra.mxu0 0
        %1619 = vmatprep.mubr.bf16.mxu0 0
        %1620 = vmatmul.mubr.bf16.gmra.mxu0 %v1585
        %v1621 = vpop.f32.mrf.mxu0
        %v1622 = vadd.f32 0.0, %v1621
        %v1623 = vpop.f32.mrf.mxu0
        %v1624 = vpop.f32.mrf.mxu0
        %v1625 = vadd.f32 0.0, %v1624
        %v1626 = vpop.f32.mrf.mxu0
        %1627 = vdwg.mxu0
        %v1629 = vsel %vm1057, %v1583, 0
        %1631 = vmatprep.subr.bf16.mxu0 0
        %1632 = vmatpush1.bf16.msra.mxu0 0
        %1633 = vmatprep.subr.bf16.mxu0 0
        %1634 = vmatpush1.bf16.msra.mxu0 0
        %1635 = vmatprep.subr.bf16.mxu0 0
        %1636 = vmatpush1.bf16.msra.mxu0 0
        %1637 = vmatprep.subr.bf16.mxu0 0
        %1638 = vmatpush1.bf16.msra.mxu0 0
        %1639 = vmatprep.subr.bf16.mxu0 0
        %1640 = vmatpush1.bf16.msra.mxu0 0
        %1641 = vmatprep.subr.bf16.mxu0 0
        %1642 = vmatpush1.bf16.msra.mxu0 0
        %1643 = vmatprep.subr.bf16.mxu0 0
        %1644 = vmatpush1.bf16.msra.mxu0 0
        %1645 = vmatprep.subr.bf16.mxu0 0
        %1646 = vmatpush1.bf16.msra.mxu0 %v952
        %1647 = vmatprep.subr.bf16.mxu0 0
        %1648 = vmatpush2.bf16.msra.mxu0 0
        %1649 = vmatprep.subr.bf16.mxu0 0
        %1650 = vmatpush2.bf16.msra.mxu0 0
        %1651 = vmatprep.subr.bf16.mxu0 0
        %1652 = vmatpush2.bf16.msra.mxu0 0
        %1653 = vmatprep.subr.bf16.mxu0 0
        %1654 = vmatpush2.bf16.msra.mxu0 0
        %1655 = vmatprep.subr.bf16.mxu0 0
        %1656 = vmatpush2.bf16.msra.mxu0 0
        %1657 = vmatprep.subr.bf16.mxu0 0
        %1658 = vmatpush2.bf16.msra.mxu0 0
        %1659 = vmatprep.subr.bf16.mxu0 0
        %1660 = vmatpush2.bf16.msra.mxu0 0
        %1661 = vmatprep.subr.bf16.mxu0 0
        %1662 = vmatpush2.bf16.msra.mxu0 0
        %1663 = vmatprep.mubr.bf16.mxu0 0
        %1664 = vmatmul.mubr.bf16.gmra.mxu0 %v1629
        %v1665 = vpop.f32.mrf.mxu0
        %v1666 = vadd.f32 0.0, %v1665
        %v1667 = vpop.f32.mrf.mxu0
        %v1668 = vpop.f32.mrf.mxu0
        %v1669 = vadd.f32 0.0, %v1668
        %v1670 = vpop.f32.mrf.mxu0
        %1671 = vdwg.mxu0
        %v1672 = vmul.f32 %v1622, %v670
        %v1673 = vmul.f32 %v1625, %v670
        %v1674 = vmul.f32 %v1666, %v670
        %v1675 = vmul.f32 %v1669, %v670
        %v1676 = vadd.f32 %v1436, %v1672
        %v1677 = vadd.f32 %v1437, %v1673
        %v1678 = vadd.f32 %v1438, %v1674
        %v1679 = vadd.f32 %v1439, %v1675
        %v1680 = vmul.f32 %v805, %v675
        %v1681 = vmul.f32 %v808, %v675
        %v1682 = vmul.f32 %v813, %v675
        %v1683 = vmul.f32 %v816, %v675
        %v1684 = vpack.c.bf16 %v1681, %v1680
        %v1685 = vpack.c.bf16 %v1683, %v1682
        %v1687 = vsel %vm676, %v1684, 0
        %1689 = vmatprep.subr.bf16.mxu0 0
        %1690 = vmatpush1.bf16.xpose.msra.mxu0 0
        %1691 = vmatprep.subr.bf16.mxu0 0
        %1692 = vmatpush1.bf16.xpose.msra.mxu0 0
        %1693 = vmatprep.subr.bf16.mxu0 0
        %1694 = vmatpush1.bf16.xpose.msra.mxu0 0
        %1695 = vmatprep.subr.bf16.mxu0 0
        %1696 = vmatpush1.bf16.xpose.msra.mxu0 0
        %1697 = vmatprep.subr.bf16.mxu0 0
        %1698 = vmatpush1.bf16.xpose.msra.mxu0 0
        %1699 = vmatprep.subr.bf16.mxu0 0
        %1700 = vmatpush1.bf16.xpose.msra.mxu0 0
        %1701 = vmatprep.subr.bf16.mxu0 0
        %1702 = vmatpush1.bf16.xpose.msra.mxu0 0
        %1703 = vmatprep.subr.bf16.mxu0 0
        %1704 = vmatpush1.bf16.xpose.msra.mxu0 %v963
        %1705 = vmatprep.subr.bf16.mxu0 0
        %1706 = vmatpush2.bf16.xpose.msra.mxu0 0
        %1707 = vmatprep.subr.bf16.mxu0 0
        %1708 = vmatpush2.bf16.xpose.msra.mxu0 0
        %1709 = vmatprep.subr.bf16.mxu0 0
        %1710 = vmatpush2.bf16.xpose.msra.mxu0 0
        %1711 = vmatprep.subr.bf16.mxu0 0
        %1712 = vmatpush2.bf16.xpose.msra.mxu0 0
        %1713 = vmatprep.subr.bf16.mxu0 0
        %1714 = vmatpush2.bf16.xpose.msra.mxu0 0
        %1715 = vmatprep.subr.bf16.mxu0 0
        %1716 = vmatpush2.bf16.xpose.msra.mxu0 0
        %1717 = vmatprep.subr.bf16.mxu0 0
        %1718 = vmatpush2.bf16.xpose.msra.mxu0 0
        %1719 = vmatprep.subr.bf16.mxu0 0
        %1720 = vmatpush2.bf16.xpose.msra.mxu0 0
        %1721 = vmatprep.mubr.bf16.mxu0 0
        %1722 = vmatmul.mubr.bf16.gmra.mxu0 %v1687
        %v1723 = vpop.f32.mrf.mxu0
        %v1724 = vadd.f32 0.0, %v1723
        %v1725 = vpop.f32.mrf.mxu0
        %v1726 = vpop.f32.mrf.mxu0
        %v1727 = vadd.f32 0.0, %v1726
        %v1728 = vpop.f32.mrf.mxu0
        %1729 = vdwg.mxu0
        %v1731 = vsel %vm676, %v1685, 0
        %1733 = vmatprep.subr.bf16.mxu0 0
        %1734 = vmatpush1.bf16.xpose.msra.mxu0 0
        %1735 = vmatprep.subr.bf16.mxu0 0
        %1736 = vmatpush1.bf16.xpose.msra.mxu0 0
        %1737 = vmatprep.subr.bf16.mxu0 0
        %1738 = vmatpush1.bf16.xpose.msra.mxu0 0
        %1739 = vmatprep.subr.bf16.mxu0 0
        %1740 = vmatpush1.bf16.xpose.msra.mxu0 0
        %1741 = vmatprep.subr.bf16.mxu0 0
        %1742 = vmatpush1.bf16.xpose.msra.mxu0 0
        %1743 = vmatprep.subr.bf16.mxu0 0
        %1744 = vmatpush1.bf16.xpose.msra.mxu0 0
        %1745 = vmatprep.subr.bf16.mxu0 0
        %1746 = vmatpush1.bf16.xpose.msra.mxu0 0
        %1747 = vmatprep.subr.bf16.mxu0 0
        %1748 = vmatpush1.bf16.xpose.msra.mxu0 %v1010
        %1749 = vmatprep.subr.bf16.mxu0 0
        %1750 = vmatpush2.bf16.xpose.msra.mxu0 0
        %1751 = vmatprep.subr.bf16.mxu0 0
        %1752 = vmatpush2.bf16.xpose.msra.mxu0 0
        %1753 = vmatprep.subr.bf16.mxu0 0
        %1754 = vmatpush2.bf16.xpose.msra.mxu0 0
        %1755 = vmatprep.subr.bf16.mxu0 0
        %1756 = vmatpush2.bf16.xpose.msra.mxu0 0
        %1757 = vmatprep.subr.bf16.mxu0 0
        %1758 = vmatpush2.bf16.xpose.msra.mxu0 0
        %1759 = vmatprep.subr.bf16.mxu0 0
        %1760 = vmatpush2.bf16.xpose.msra.mxu0 0
        %1761 = vmatprep.subr.bf16.mxu0 0
        %1762 = vmatpush2.bf16.xpose.msra.mxu0 0
        %1763 = vmatprep.subr.bf16.mxu0 0
        %1764 = vmatpush2.bf16.xpose.msra.mxu0 0
        %1765 = vmatprep.mubr.bf16.mxu0 0
        %1766 = vmatmul.mubr.bf16.gmra.mxu0 %v1731
        %v1767 = vpop.f32.mrf.mxu0
        %v1768 = vadd.f32 0.0, %v1767
        %v1769 = vpop.f32.mrf.mxu0
        %v1770 = vpop.f32.mrf.mxu0
        %v1771 = vadd.f32 0.0, %v1770
        %v1772 = vpop.f32.mrf.mxu0
        %1773 = vdwg.mxu0
        %v1774 = vmul.f32 %v1724, 0.35355338
        %v1775 = vmul.f32 %v1727, 0.35355338
        %v1776 = vmul.f32 %v1768, 0.35355338
        %v1777 = vmul.f32 %v1771, 0.35355338
        %v1778 = vsel %vm1057, %v1774, -inf
        %1779 = vmax.xlane.f32.xlu0 %v1778
        %v1780 = vpop.xlane.xlu0 %1779
        %v1781 = vsel %vm1057, %v1775, -inf
        %1782 = vmax.xlane.f32.xlu0 %v1781
        %v1783 = vpop.xlane.xlu0 %1782
        %v1784 = vsel %vm1057, %v1776, -inf
        %1785 = vmax.xlane.f32.xlu0 %v1784
        %v1786 = vpop.xlane.xlu0 %1785
        %v1787 = vsel %vm1057, %v1777, -inf
        %1788 = vmax.xlane.f32.xlu0 %v1787
        %v1789 = vpop.xlane.xlu0 %1788
        %v1790 = vsub.f32 %v1774, %v1780
        %v1791 = vsub.f32 %v1775, %v1783
        %v1792 = vsub.f32 %v1776, %v1786
        %v1793 = vsub.f32 %v1777, %v1789
        %v1794 = vmul.f32 %v1790, 1.442695
        %v1795 = vpow.pop %v1794
        %v1796 = vmul.f32 %v1791, 1.442695
        %v1797 = vpow.pop %v1796
        %v1798 = vmul.f32 %v1792, 1.442695
        %v1799 = vpow.pop %v1798
        %v1800 = vmul.f32 %v1793, 1.442695
        %v1801 = vpow.pop %v1800
        %v1802 = vsel %vm1057, %v1795, 0.0
        %1803 = vadd.xlane.f32.xlu0 %v1802
        %v1804 = vpop.xlane.xlu0 %1803
        %v1805 = vsel %vm1057, %v1797, 0.0
        %1806 = vadd.xlane.f32.xlu0 %v1805
        %v1807 = vpop.xlane.xlu0 %1806
        %v1808 = vsel %vm1057, %v1799, 0.0
        %1809 = vadd.xlane.f32.xlu0 %v1808
        %v1810 = vpop.xlane.xlu0 %1809
        %v1811 = vsel %vm1057, %v1801, 0.0
        %1812 = vadd.xlane.f32.xlu0 %v1811
        %v1813 = vpop.xlane.xlu0 %1812
        %v1814 = vrcp.pop %v1804
        %v1815 = vrcp.pop %v1807
        %v1816 = vrcp.pop %v1810
        %v1817 = vrcp.pop %v1813
        %v1818 = vmul.f32 %v1795, %v1814
        %v1819 = vmul.f32 %v1797, %v1815
        %v1820 = vmul.f32 %v1799, %v1816
        %v1821 = vmul.f32 %v1801, %v1817
        %v1822 = vpack.c.bf16 %v1819, %v1818
        %v1823 = vpack.c.bf16 %v1821, %v1820
        %v1825 = vsel %vm1057, %v1822, 0
        %1827 = vmatprep.subr.bf16.mxu0 0
        %1828 = vmatpush1.bf16.msra.mxu0 0
        %1829 = vmatprep.subr.bf16.mxu0 0
        %1830 = vmatpush1.bf16.msra.mxu0 0
        %1831 = vmatprep.subr.bf16.mxu0 0
        %1832 = vmatpush1.bf16.msra.mxu0 0
        %1833 = vmatprep.subr.bf16.mxu0 0
        %1834 = vmatpush1.bf16.msra.mxu0 0
        %1835 = vmatprep.subr.bf16.mxu0 0
        %1836 = vmatpush1.bf16.msra.mxu0 0
        %1837 = vmatprep.subr.bf16.mxu0 0
        %1838 = vmatpush1.bf16.msra.mxu0 0
        %1839 = vmatprep.subr.bf16.mxu0 0
        %1840 = vmatpush1.bf16.msra.mxu0 0
        %1841 = vmatprep.subr.bf16.mxu0 0
        %1842 = vmatpush1.bf16.msra.mxu0 %v951
        %1843 = vmatprep.subr.bf16.mxu0 0
        %1844 = vmatpush2.bf16.msra.mxu0 0
        %1845 = vmatprep.subr.bf16.mxu0 0
        %1846 = vmatpush2.bf16.msra.mxu0 0
        %1847 = vmatprep.subr.bf16.mxu0 0
        %1848 = vmatpush2.bf16.msra.mxu0 0
        %1849 = vmatprep.subr.bf16.mxu0 0
        %1850 = vmatpush2.bf16.msra.mxu0 0
        %1851 = vmatprep.subr.bf16.mxu0 0
        %1852 = vmatpush2.bf16.msra.mxu0 0
        %1853 = vmatprep.subr.bf16.mxu0 0
        %1854 = vmatpush2.bf16.msra.mxu0 0
        %1855 = vmatprep.subr.bf16.mxu0 0
        %1856 = vmatpush2.bf16.msra.mxu0 0
        %1857 = vmatprep.subr.bf16.mxu0 0
        %1858 = vmatpush2.bf16.msra.mxu0 0
        %1859 = vmatprep.mubr.bf16.mxu0 0
        %1860 = vmatmul.mubr.bf16.gmra.mxu0 %v1825
        %v1861 = vpop.f32.mrf.mxu0
        %v1862 = vadd.f32 0.0, %v1861
        %v1863 = vpop.f32.mrf.mxu0
        %v1864 = vpop.f32.mrf.mxu0
        %v1865 = vadd.f32 0.0, %v1864
        %v1866 = vpop.f32.mrf.mxu0
        %1867 = vdwg.mxu0
        %v1869 = vsel %vm1057, %v1823, 0
        %1871 = vmatprep.subr.bf16.mxu0 0
        %1872 = vmatpush1.bf16.msra.mxu0 0
        %1873 = vmatprep.subr.bf16.mxu0 0
        %1874 = vmatpush1.bf16.msra.mxu0 0
        %1875 = vmatprep.subr.bf16.mxu0 0
        %1876 = vmatpush1.bf16.msra.mxu0 0
        %1877 = vmatprep.subr.bf16.mxu0 0
        %1878 = vmatpush1.bf16.msra.mxu0 0
        %1879 = vmatprep.subr.bf16.mxu0 0
        %1880 = vmatpush1.bf16.msra.mxu0 0
        %1881 = vmatprep.subr.bf16.mxu0 0
        %1882 = vmatpush1.bf16.msra.mxu0 0
        %1883 = vmatprep.subr.bf16.mxu0 0
        %1884 = vmatpush1.bf16.msra.mxu0 0
        %1885 = vmatprep.subr.bf16.mxu0 0
        %1886 = vmatpush1.bf16.msra.mxu0 %v952
        %1887 = vmatprep.subr.bf16.mxu0 0
        %1888 = vmatpush2.bf16.msra.mxu0 0
        %1889 = vmatprep.subr.bf16.mxu0 0
        %1890 = vmatpush2.bf16.msra.mxu0 0
        %1891 = vmatprep.subr.bf16.mxu0 0
        %1892 = vmatpush2.bf16.msra.mxu0 0
        %1893 = vmatprep.subr.bf16.mxu0 0
        %1894 = vmatpush2.bf16.msra.mxu0 0
        %1895 = vmatprep.subr.bf16.mxu0 0
        %1896 = vmatpush2.bf16.msra.mxu0 0
        %1897 = vmatprep.subr.bf16.mxu0 0
        %1898 = vmatpush2.bf16.msra.mxu0 0
        %1899 = vmatprep.subr.bf16.mxu0 0
        %1900 = vmatpush2.bf16.msra.mxu0 0
        %1901 = vmatprep.subr.bf16.mxu0 0
        %1902 = vmatpush2.bf16.msra.mxu0 0
        %1903 = vmatprep.mubr.bf16.mxu0 0
        %1904 = vmatmul.mubr.bf16.gmra.mxu0 %v1869
        %v1905 = vpop.f32.mrf.mxu0
        %v1906 = vadd.f32 0.0, %v1905
        %v1907 = vpop.f32.mrf.mxu0
        %v1908 = vpop.f32.mrf.mxu0
        %v1909 = vadd.f32 0.0, %v1908
        %v1910 = vpop.f32.mrf.mxu0
        %1911 = vdwg.mxu0
        %v1912 = vmul.f32 %v1862, %v675
        %v1913 = vmul.f32 %v1865, %v675
        %v1914 = vmul.f32 %v1906, %v675
        %v1915 = vmul.f32 %v1909, %v675
        %v1916 = vadd.f32 %v1676, %v1912
        %v1917 = vadd.f32 %v1677, %v1913
        %v1918 = vadd.f32 %v1678, %v1914
        %v1919 = vadd.f32 %v1679, %v1915
        %v1920 = vpack.c.bf16 %v1917, %v1916
        %v1921 = vpack.c.bf16 %v1919, %v1918
        %v1922 = vlaneseq
        %v1923 = vshrl.u32 %v1922, 7
        %v1924 = vsub.s32 6, %v1923
        %v1925 = vrot.slane %v268, %v1924
        %v1930 = vunpack.c.l.b16 %v638
        %v1931 = vunpack.c.l.b16 %v639
        %v1932 = vunpack.c.l.b16 %v640
        %v1933 = vunpack.c.l.b16 %v641
        %v1934 = vpack.c.b16 %v1931, %v1930
        %v1935 = vpack.c.b16 %v1933, %v1932
        %v1939 = vsel %vm676, %v1920, 0
        %v1942 = vsel %vm676, %v1921, 0
        %1944 = vmatprep.subr.bf16.mxu0 0
        %1945 = vmatpush1.bf16.msra.mxu0 0
        %1946 = vmatprep.subr.bf16.mxu0 0
        %1947 = vmatpush1.bf16.msra.mxu0 0
        %1948 = vmatprep.subr.bf16.mxu0 0
        %1949 = vmatpush1.bf16.msra.mxu0 0
        %1950 = vmatprep.subr.bf16.mxu0 0
        %1951 = vmatpush1.bf16.msra.mxu0 0
        %1952 = vmatprep.subr.bf16.mxu0 0
        %1953 = vmatpush1.bf16.msra.mxu0 0
        %1954 = vmatprep.subr.bf16.mxu0 0
        %1955 = vmatpush1.bf16.msra.mxu0 0
        %1956 = vmatprep.subr.bf16.mxu0 0
        %1957 = vmatpush1.bf16.msra.mxu0 %v1935
        %1958 = vmatprep.subr.bf16.mxu0 0
        %1959 = vmatpush1.bf16.msra.mxu0 %v1934
        %1960 = vmatprep.subr.bf16.mxu0 0
        %1961 = vmatpush2.bf16.msra.mxu0 0
        %1962 = vmatprep.subr.bf16.mxu0 0
        %1963 = vmatpush2.bf16.msra.mxu0 0
        %1964 = vmatprep.subr.bf16.mxu0 0
        %1965 = vmatpush2.bf16.msra.mxu0 0
        %1966 = vmatprep.subr.bf16.mxu0 0
        %1967 = vmatpush2.bf16.msra.mxu0 0
        %1968 = vmatprep.subr.bf16.mxu0 0
        %1969 = vmatpush2.bf16.msra.mxu0 0
        %1970 = vmatprep.subr.bf16.mxu0 0
        %1971 = vmatpush2.bf16.msra.mxu0 0
        %1972 = vmatprep.subr.bf16.mxu0 0
        %1973 = vmatpush2.bf16.msra.mxu0 0
        %1974 = vmatprep.subr.bf16.mxu0 0
        %1975 = vmatpush2.bf16.msra.mxu0 0
        %1976 = vmatprep.mubr.bf16.mxu0 0
        %1977 = vmatmul.mubr.bf16.gmra.mxu0 %v1939
        %v1978 = vpop.f32.mrf.mxu0
        %v1979 = vadd.f32 %v1925, %v1978
        %v1980 = vpop.f32.mrf.mxu0
        %v1981 = vpop.f32.mrf.mxu0
        %v1982 = vadd.f32 %v1925, %v1981
        %v1983 = vpop.f32.mrf.mxu0
        %1984 = vmatprep.mubr.bf16.mxu0 0
        %1985 = vmatmul.mubr.bf16.gmra.mxu0 %v1942
        %v1986 = vpop.f32.mrf.mxu0
        %v1987 = vadd.f32 %v1925, %v1986
        %v1988 = vpop.f32.mrf.mxu0
        %v1989 = vpop.f32.mrf.mxu0
        %v1990 = vadd.f32 %v1925, %v1989
        %v1991 = vpop.f32.mrf.mxu0
        %1992 = vdwg.mxu0
        %v1993 = vadd.f32 %v621, %v1979
        %v1994 = vadd.f32 %v622, %v1982
        %v1995 = vadd.f32 %v623, %v1987
        %v1996 = vadd.f32 %v624, %v1990
        %v1997 = vsel %vm676, %v1993, 0.0
        %1998 = vadd.xlane.f32.xlu0 %v1997
        %v1999 = vpop.xlane.xlu0 %1998
        %v2000 = vsel %vm676, %v1994, 0.0
        %2001 = vadd.xlane.f32.xlu0 %v2000
        %v2002 = vpop.xlane.xlu0 %2001
        %v2003 = vsel %vm676, %v1995, 0.0
        %2004 = vadd.xlane.f32.xlu0 %v2003
        %v2005 = vpop.xlane.xlu0 %2004
        %v2006 = vsel %vm676, %v1996, 0.0
        %2007 = vadd.xlane.f32.xlu0 %v2006
        %v2008 = vpop.xlane.xlu0 %2007
        %v2009 = vmul.f32 %v1999, %v689
        %v2010 = vmul.f32 %v2002, %v689
        %v2011 = vmul.f32 %v2005, %v689
        %v2012 = vmul.f32 %v2008, %v689
        %v2013 = vsub.f32 %v1993, %v2009
        %v2014 = vsub.f32 %v1994, %v2010
        %v2015 = vsub.f32 %v1995, %v2011
        %v2016 = vsub.f32 %v1996, %v2012
        %v2017 = vmul.f32 %v2013, %v2013
        %v2018 = vmul.f32 %v2014, %v2014
        %v2019 = vmul.f32 %v2015, %v2015
        %v2020 = vmul.f32 %v2016, %v2016
        %v2021 = vsel %vm676, %v2017, 0.0
        %2022 = vadd.xlane.f32.xlu0 %v2021
        %v2023 = vpop.xlane.xlu0 %2022
        %v2024 = vsel %vm676, %v2018, 0.0
        %2025 = vadd.xlane.f32.xlu0 %v2024
        %v2026 = vpop.xlane.xlu0 %2025
        %v2027 = vsel %vm676, %v2019, 0.0
        %2028 = vadd.xlane.f32.xlu0 %v2027
        %v2029 = vpop.xlane.xlu0 %2028
        %v2030 = vsel %vm676, %v2020, 0.0
        %2031 = vadd.xlane.f32.xlu0 %v2030
        %v2032 = vpop.xlane.xlu0 %2031
        %v2033 = vmul.f32 %v2023, %v689
        %v2034 = vmul.f32 %v2026, %v689
        %v2035 = vmul.f32 %v2029, %v689
        %v2036 = vmul.f32 %v2032, %v689
        %v2037 = vadd.f32 %v2033, 1e-05
        %v2038 = vadd.f32 %v2034, 1e-05
        %v2039 = vadd.f32 %v2035, 1e-05
        %v2040 = vadd.f32 %v2036, 1e-05
        %v2041 = vrsqrt.pop %v2037
        %v2042 = vrsqrt.pop %v2038
        %v2043 = vrsqrt.pop %v2039
        %v2044 = vrsqrt.pop %v2040
        %v2045 = vmul.f32 %v2013, %v2041
        %v2046 = vmul.f32 %v2014, %v2042
        %v2047 = vmul.f32 %v2015, %v2043
        %v2048 = vmul.f32 %v2016, %v2044
        %v2049 = vlaneseq
        %v2050 = vshrl.u32 %v2049, 7
        %v2051 = vsub.s32 3, %v2050
        %v2052 = vrot.slane %v269, %v2051
        %v2053 = vmul.f32 %v2045, %v2052
        %v2054 = vmul.f32 %v2046, %v2052
        %v2055 = vmul.f32 %v2047, %v2052
        %v2056 = vmul.f32 %v2048, %v2052
        %v2057 = vlaneseq
        %v2058 = vshrl.u32 %v2057, 7
        %v2059 = vsub.s32 4, %v2058
        %v2060 = vrot.slane %v269, %v2059
        %v2061 = vadd.f32 %v2053, %v2060
        %v2062 = vadd.f32 %v2054, %v2060
        %v2063 = vadd.f32 %v2055, %v2060
        %v2064 = vadd.f32 %v2056, %v2060
        %v2065 = vpack.c.bf16 %v2062, %v2061
        %v2066 = vpack.c.bf16 %v2064, %v2063
        %v2067 = vlaneseq
        %v2068 = vshrl.u32 %v2067, 7
        %v2069 = vsub.s32 7, %v2068
        %v2070 = vrot.slane %v268, %v2069
        %v2075 = vunpack.c.l.b16 %v642
        %v2076 = vunpack.c.l.b16 %v643
        %v2077 = vunpack.c.l.b16 %v644
        %v2078 = vunpack.c.l.b16 %v645
        %v2079 = vpack.c.b16 %v2076, %v2075
        %v2080 = vpack.c.b16 %v2078, %v2077
        %v2084 = vsel %vm676, %v2065, 0
        %v2087 = vsel %vm676, %v2066, 0
        %2089 = vmatprep.subr.bf16.mxu0 0
        %2090 = vmatpush1.bf16.msra.mxu0 0
        %2091 = vmatprep.subr.bf16.mxu0 0
        %2092 = vmatpush1.bf16.msra.mxu0 0
        %2093 = vmatprep.subr.bf16.mxu0 0
        %2094 = vmatpush1.bf16.msra.mxu0 0
        %2095 = vmatprep.subr.bf16.mxu0 0
        %2096 = vmatpush1.bf16.msra.mxu0 0
        %2097 = vmatprep.subr.bf16.mxu0 0
        %2098 = vmatpush1.bf16.msra.mxu0 0
        %2099 = vmatprep.subr.bf16.mxu0 0
        %2100 = vmatpush1.bf16.msra.mxu0 0
        %2101 = vmatprep.subr.bf16.mxu0 0
        %2102 = vmatpush1.bf16.msra.mxu0 %v2080
        %2103 = vmatprep.subr.bf16.mxu0 0
        %2104 = vmatpush1.bf16.msra.mxu0 %v2079
        %2105 = vmatprep.subr.bf16.mxu0 0
        %2106 = vmatpush2.bf16.msra.mxu0 0
        %2107 = vmatprep.subr.bf16.mxu0 0
        %2108 = vmatpush2.bf16.msra.mxu0 0
        %2109 = vmatprep.subr.bf16.mxu0 0
        %2110 = vmatpush2.bf16.msra.mxu0 0
        %2111 = vmatprep.subr.bf16.mxu0 0
        %2112 = vmatpush2.bf16.msra.mxu0 0
        %2113 = vmatprep.subr.bf16.mxu0 0
        %2114 = vmatpush2.bf16.msra.mxu0 0
        %2115 = vmatprep.subr.bf16.mxu0 0
        %2116 = vmatpush2.bf16.msra.mxu0 0
        %2117 = vmatprep.subr.bf16.mxu0 0
        %2118 = vmatpush2.bf16.msra.mxu0 0
        %2119 = vmatprep.subr.bf16.mxu0 0
        %2120 = vmatpush2.bf16.msra.mxu0 0
        %2121 = vmatprep.mubr.bf16.mxu0 0
        %2122 = vmatmul.mubr.bf16.gmra.mxu0 %v2084
        %v2123 = vpop.f32.mrf.mxu0
        %v2124 = vadd.f32 %v2070, %v2123
        %v2125 = vpop.f32.mrf.mxu0
        %v2126 = vpop.f32.mrf.mxu0
        %v2127 = vadd.f32 %v2070, %v2126
        %v2128 = vpop.f32.mrf.mxu0
        %2129 = vmatprep.mubr.bf16.mxu0 0
        %2130 = vmatmul.mubr.bf16.gmra.mxu0 %v2087
        %v2131 = vpop.f32.mrf.mxu0
        %v2132 = vadd.f32 %v2070, %v2131
        %v2133 = vpop.f32.mrf.mxu0
        %v2134 = vpop.f32.mrf.mxu0
        %v2135 = vadd.f32 %v2070, %v2134
        %v2136 = vpop.f32.mrf.mxu0
        %2137 = vdwg.mxu0
        %v2138 = vmax.f32 %v2124, 0.0
        %v2139 = vmax.f32 %v2127, 0.0
        %v2140 = vmax.f32 %v2132, 0.0
        %v2141 = vmax.f32 %v2135, 0.0
        %v2142 = vpack.c.bf16 %v2139, %v2138
        %v2143 = vpack.c.bf16 %v2141, %v2140
        %v2144 = vlaneseq
        %v2145 = vshrl.u32 %v2144, 7
        %v2146 = vsub.s32 0, %v2145
        %v2147 = vrot.slane %v269, %v2146
        %v2156 = vunpack.c.l.b16 %v646
        %v2157 = vunpack.c.l.b16 %v647
        %v2158 = vunpack.c.l.b16 %v648
        %v2159 = vunpack.c.l.b16 %v649
        %v2160 = vunpack.c.l.b16 %v650
        %v2161 = vunpack.c.l.b16 %v651
        %v2162 = vunpack.c.l.b16 %v652
        %v2163 = vunpack.c.l.b16 %v653
        %v2164 = vpack.c.b16 %v2157, %v2156
        %v2165 = vpack.c.b16 %v2159, %v2158
        %v2166 = vpack.c.b16 %v2161, %v2160
        %v2167 = vpack.c.b16 %v2163, %v2162
        %vm2172 = vcmask 523264
        %v2174 = vsel %vm2172, %v2142, 0
        %v2177 = vsel %vm2172, %v2143, 0
        %2179 = vmatprep.subr.bf16.mxu0 0
        %2180 = vmatpush1.bf16.msra.mxu0 0
        %2181 = vmatprep.subr.bf16.mxu0 0
        %2182 = vmatpush1.bf16.msra.mxu0 0
        %2183 = vmatprep.subr.bf16.mxu0 0
        %2184 = vmatpush1.bf16.msra.mxu0 0
        %2185 = vmatprep.subr.bf16.mxu0 0
        %2186 = vmatpush1.bf16.msra.mxu0 0
        %2187 = vmatprep.subr.bf16.mxu0 0
        %2188 = vmatpush1.bf16.msra.mxu0 %v2167
        %2189 = vmatprep.subr.bf16.mxu0 0
        %2190 = vmatpush1.bf16.msra.mxu0 %v2166
        %2191 = vmatprep.subr.bf16.mxu0 0
        %2192 = vmatpush1.bf16.msra.mxu0 %v2165
        %2193 = vmatprep.subr.bf16.mxu0 0
        %2194 = vmatpush1.bf16.msra.mxu0 %v2164
        %2195 = vmatprep.subr.bf16.mxu0 0
        %2196 = vmatpush2.bf16.msra.mxu0 0
        %2197 = vmatprep.subr.bf16.mxu0 0
        %2198 = vmatpush2.bf16.msra.mxu0 0
        %2199 = vmatprep.subr.bf16.mxu0 0
        %2200 = vmatpush2.bf16.msra.mxu0 0
        %2201 = vmatprep.subr.bf16.mxu0 0
        %2202 = vmatpush2.bf16.msra.mxu0 0
        %2203 = vmatprep.subr.bf16.mxu0 0
        %2204 = vmatpush2.bf16.msra.mxu0 0
        %2205 = vmatprep.subr.bf16.mxu0 0
        %2206 = vmatpush2.bf16.msra.mxu0 0
        %2207 = vmatprep.subr.bf16.mxu0 0
        %2208 = vmatpush2.bf16.msra.mxu0 0
        %2209 = vmatprep.subr.bf16.mxu0 0
        %2210 = vmatpush2.bf16.msra.mxu0 0
        %2211 = vmatprep.mubr.bf16.mxu0 0
        %2212 = vmatmul.mubr.bf16.gmra.mxu0 %v2174
        %v2213 = vpop.f32.mrf.mxu0
        %v2214 = vadd.f32 %v2147, %v2213
        %v2215 = vpop.f32.mrf.mxu0
        %v2216 = vpop.f32.mrf.mxu0
        %v2217 = vadd.f32 %v2147, %v2216
        %v2218 = vpop.f32.mrf.mxu0
        %2219 = vmatprep.mubr.bf16.mxu0 0
        %2220 = vmatmul.mubr.bf16.gmra.mxu0 %v2177
        %v2221 = vpop.f32.mrf.mxu0
        %v2222 = vadd.f32 %v2147, %v2221
        %v2223 = vpop.f32.mrf.mxu0
        %v2224 = vpop.f32.mrf.mxu0
        %v2225 = vadd.f32 %v2147, %v2224
        %v2226 = vpop.f32.mrf.mxu0
        %2227 = vdwg.mxu0
        %v2228 = vadd.f32 %v1993, %v2214
        %v2229 = vadd.f32 %v1994, %v2217
        %v2230 = vadd.f32 %v1995, %v2222
        %v2231 = vadd.f32 %v1996, %v2225
        %v2232 = vsel %vm676, %v2228, 0.0
        %2233 = vadd.xlane.f32.xlu0 %v2232
        %v2234 = vpop.xlane.xlu0 %2233
        %v2235 = vsel %vm676, %v2229, 0.0
        %2236 = vadd.xlane.f32.xlu0 %v2235
        %v2237 = vpop.xlane.xlu0 %2236
        %v2238 = vsel %vm676, %v2230, 0.0
        %2239 = vadd.xlane.f32.xlu0 %v2238
        %v2240 = vpop.xlane.xlu0 %2239
        %v2241 = vsel %vm676, %v2231, 0.0
        %2242 = vadd.xlane.f32.xlu0 %v2241
        %v2243 = vpop.xlane.xlu0 %2242
        %v2244 = vmul.f32 %v2234, %v689
        %v2245 = vmul.f32 %v2237, %v689
        %v2246 = vmul.f32 %v2240, %v689
        %v2247 = vmul.f32 %v2243, %v689
        %v2248 = vsub.f32 %v2228, %v2244
        %v2249 = vsub.f32 %v2229, %v2245
        %v2250 = vsub.f32 %v2230, %v2246
        %v2251 = vsub.f32 %v2231, %v2247
        %v2252 = vmul.f32 %v2248, %v2248
        %v2253 = vmul.f32 %v2249, %v2249
        %v2254 = vmul.f32 %v2250, %v2250
        %v2255 = vmul.f32 %v2251, %v2251
        %v2256 = vsel %vm676, %v2252, 0.0
        %2257 = vadd.xlane.f32.xlu0 %v2256
        %v2258 = vpop.xlane.xlu0 %2257
        %v2259 = vsel %vm676, %v2253, 0.0
        %2260 = vadd.xlane.f32.xlu0 %v2259
        %v2261 = vpop.xlane.xlu0 %2260
        %v2262 = vsel %vm676, %v2254, 0.0
        %2263 = vadd.xlane.f32.xlu0 %v2262
        %v2264 = vpop.xlane.xlu0 %2263
        %v2265 = vsel %vm676, %v2255, 0.0
        %2266 = vadd.xlane.f32.xlu0 %v2265
        %v2267 = vpop.xlane.xlu0 %2266
        %v2268 = vmul.f32 %v2258, %v689
        %v2269 = vmul.f32 %v2261, %v689
        %v2270 = vmul.f32 %v2264, %v689
        %v2271 = vmul.f32 %v2267, %v689
        %v2272 = vadd.f32 %v2268, 1e-05
        %v2273 = vadd.f32 %v2269, 1e-05
        %v2274 = vadd.f32 %v2270, 1e-05
        %v2275 = vadd.f32 %v2271, 1e-05
        %v2276 = vrsqrt.pop %v2272
        %v2277 = vrsqrt.pop %v2273
        %v2278 = vrsqrt.pop %v2274
        %v2279 = vrsqrt.pop %v2275
        %v2280 = vmul.f32 %v2248, %v2276
        %v2281 = vmul.f32 %v2249, %v2277
        %v2282 = vmul.f32 %v2250, %v2278
        %v2283 = vmul.f32 %v2251, %v2279
        %v2284 = vmul.f32 %v2280, %v733
        %v2285 = vmul.f32 %v2281, %v733
        %v2286 = vmul.f32 %v2282, %v733
        %v2287 = vmul.f32 %v2283, %v733
        %v2288 = vadd.f32 %v2284, %v741
        %v2289 = vadd.f32 %v2285, %v741
        %v2290 = vadd.f32 %v2286, %v741
        %v2291 = vadd.f32 %v2287, %v741
        %v2292 = vpack.c.bf16 %v2289, %v2288
        %v2293 = vpack.c.bf16 %v2291, %v2290
        %v2295 = vsel %vm676, %v2292, 0
        %v2298 = vsel %vm676, %v2293, 0
        %2300 = vmatprep.subr.bf16.mxu0 0
        %2301 = vmatpush1.bf16.msra.mxu0 0
        %2302 = vmatprep.subr.bf16.mxu0 0
        %2303 = vmatpush1.bf16.msra.mxu0 0
        %2304 = vmatprep.subr.bf16.mxu0 0
        %2305 = vmatpush1.bf16.msra.mxu0 0
        %2306 = vmatprep.subr.bf16.mxu0 0
        %2307 = vmatpush1.bf16.msra.mxu0 0
        %2308 = vmatprep.subr.bf16.mxu0 0
        %2309 = vmatpush1.bf16.msra.mxu0 0
        %2310 = vmatprep.subr.bf16.mxu0 0
        %2311 = vmatpush1.bf16.msra.mxu0 0
        %2312 = vmatprep.subr.bf16.mxu0 0
        %2313 = vmatpush1.bf16.msra.mxu0 %v761
        %2314 = vmatprep.subr.bf16.mxu0 0
        %2315 = vmatpush1.bf16.msra.mxu0 %v760
        %2316 = vmatprep.subr.bf16.mxu0 0
        %2317 = vmatpush2.bf16.msra.mxu0 0
        %2318 = vmatprep.subr.bf16.mxu0 0
        %2319 = vmatpush2.bf16.msra.mxu0 0
        %2320 = vmatprep.subr.bf16.mxu0 0
        %2321 = vmatpush2.bf16.msra.mxu0 0
        %2322 = vmatprep.subr.bf16.mxu0 0
        %2323 = vmatpush2.bf16.msra.mxu0 0
        %2324 = vmatprep.subr.bf16.mxu0 0
        %2325 = vmatpush2.bf16.msra.mxu0 0
        %2326 = vmatprep.subr.bf16.mxu0 0
        %2327 = vmatpush2.bf16.msra.mxu0 0
        %2328 = vmatprep.subr.bf16.mxu0 0
        %2329 = vmatpush2.bf16.msra.mxu0 0
        %2330 = vmatprep.subr.bf16.mxu0 0
        %2331 = vmatpush2.bf16.msra.mxu0 0
        %2332 = vmatprep.mubr.bf16.mxu0 0
        %2333 = vmatmul.mubr.bf16.gmra.mxu0 %v2295
        %v2334 = vpop.f32.mrf.mxu0
        %v2335 = vadd.f32 %v751, %v2334
        %v2336 = vpop.f32.mrf.mxu0
        %v2337 = vpop.f32.mrf.mxu0
        %v2338 = vadd.f32 %v751, %v2337
        %v2339 = vpop.f32.mrf.mxu0
        %2340 = vmatprep.mubr.bf16.mxu0 0
        %2341 = vmatmul.mubr.bf16.gmra.mxu0 %v2298
        %v2342 = vpop.f32.mrf.mxu0
        %v2343 = vadd.f32 %v751, %v2342
        %v2344 = vpop.f32.mrf.mxu0
        %v2345 = vpop.f32.mrf.mxu0
        %v2346 = vadd.f32 %v751, %v2345
        %v2347 = vpop.f32.mrf.mxu0
        %2348 = vdwg.mxu0
        %2349 = vmatprep.subr.bf16.mxu0 0
        %2350 = vmatpush1.bf16.msra.mxu0 0
        %2351 = vmatprep.subr.bf16.mxu0 0
        %2352 = vmatpush1.bf16.msra.mxu0 0
        %2353 = vmatprep.subr.bf16.mxu0 0
        %2354 = vmatpush1.bf16.msra.mxu0 0
        %2355 = vmatprep.subr.bf16.mxu0 0
        %2356 = vmatpush1.bf16.msra.mxu0 0
        %2357 = vmatprep.subr.bf16.mxu0 0
        %2358 = vmatpush1.bf16.msra.mxu0 0
        %2359 = vmatprep.subr.bf16.mxu0 0
        %2360 = vmatpush1.bf16.msra.mxu0 0
        %2361 = vmatprep.subr.bf16.mxu0 0
        %2362 = vmatpush1.bf16.msra.mxu0 %v832
        %2363 = vmatprep.subr.bf16.mxu0 0
        %2364 = vmatpush1.bf16.msra.mxu0 %v831
        %2365 = vmatprep.subr.bf16.mxu0 0
        %2366 = vmatpush2.bf16.msra.mxu0 0
        %2367 = vmatprep.subr.bf16.mxu0 0
        %2368 = vmatpush2.bf16.msra.mxu0 0
        %2369 = vmatprep.subr.bf16.mxu0 0
        %2370 = vmatpush2.bf16.msra.mxu0 0
        %2371 = vmatprep.subr.bf16.mxu0 0
        %2372 = vmatpush2.bf16.msra.mxu0 0
        %2373 = vmatprep.subr.bf16.mxu0 0
        %2374 = vmatpush2.bf16.msra.mxu0 0
        %2375 = vmatprep.subr.bf16.mxu0 0
        %2376 = vmatpush2.bf16.msra.mxu0 0
        %2377 = vmatprep.subr.bf16.mxu0 0
        %2378 = vmatpush2.bf16.msra.mxu0 0
        %2379 = vmatprep.subr.bf16.mxu0 0
        %2380 = vmatpush2.bf16.msra.mxu0 0
        %2381 = vmatprep.mubr.bf16.mxu0 0
        %2382 = vmatmul.mubr.bf16.gmra.mxu0 %v2295
        %v2383 = vpop.f32.mrf.mxu0
        %v2384 = vadd.f32 %v822, %v2383
        %v2385 = vpop.f32.mrf.mxu0
        %v2386 = vpop.f32.mrf.mxu0
        %v2387 = vadd.f32 %v822, %v2386
        %v2388 = vpop.f32.mrf.mxu0
        %2389 = vmatprep.mubr.bf16.mxu0 0
        %2390 = vmatmul.mubr.bf16.gmra.mxu0 %v2298
        %v2391 = vpop.f32.mrf.mxu0
        %v2392 = vadd.f32 %v822, %v2391
        %v2393 = vpop.f32.mrf.mxu0
        %v2394 = vpop.f32.mrf.mxu0
        %v2395 = vadd.f32 %v822, %v2394
        %v2396 = vpop.f32.mrf.mxu0
        %2397 = vdwg.mxu0
        %2398 = vmatprep.subr.bf16.mxu0 0
        %2399 = vmatpush1.bf16.msra.mxu0 0
        %2400 = vmatprep.subr.bf16.mxu0 0
        %2401 = vmatpush1.bf16.msra.mxu0 0
        %2402 = vmatprep.subr.bf16.mxu0 0
        %2403 = vmatpush1.bf16.msra.mxu0 0
        %2404 = vmatprep.subr.bf16.mxu0 0
        %2405 = vmatpush1.bf16.msra.mxu0 0
        %2406 = vmatprep.subr.bf16.mxu0 0
        %2407 = vmatpush1.bf16.msra.mxu0 0
        %2408 = vmatprep.subr.bf16.mxu0 0
        %2409 = vmatpush1.bf16.msra.mxu0 0
        %2410 = vmatprep.subr.bf16.mxu0 0
        %2411 = vmatpush1.bf16.msra.mxu0 %v897
        %2412 = vmatprep.subr.bf16.mxu0 0
        %2413 = vmatpush1.bf16.msra.mxu0 %v896
        %2414 = vmatprep.subr.bf16.mxu0 0
        %2415 = vmatpush2.bf16.msra.mxu0 0
        %2416 = vmatprep.subr.bf16.mxu0 0
        %2417 = vmatpush2.bf16.msra.mxu0 0
        %2418 = vmatprep.subr.bf16.mxu0 0
        %2419 = vmatpush2.bf16.msra.mxu0 0
        %2420 = vmatprep.subr.bf16.mxu0 0
        %2421 = vmatpush2.bf16.msra.mxu0 0
        %2422 = vmatprep.subr.bf16.mxu0 0
        %2423 = vmatpush2.bf16.msra.mxu0 0
        %2424 = vmatprep.subr.bf16.mxu0 0
        %2425 = vmatpush2.bf16.msra.mxu0 0
        %2426 = vmatprep.subr.bf16.mxu0 0
        %2427 = vmatpush2.bf16.msra.mxu0 0
        %2428 = vmatprep.subr.bf16.mxu0 0
        %2429 = vmatpush2.bf16.msra.mxu0 0
        %2430 = vmatprep.mubr.bf16.mxu0 0
        %2431 = vmatmul.mubr.bf16.gmra.mxu0 %v2295
        %v2432 = vpop.f32.mrf.mxu0
        %v2433 = vadd.f32 %v887, %v2432
        %v2434 = vpop.f32.mrf.mxu0
        %v2435 = vpop.f32.mrf.mxu0
        %v2436 = vadd.f32 %v887, %v2435
        %v2437 = vpop.f32.mrf.mxu0
        %2438 = vmatprep.mubr.bf16.mxu0 0
        %2439 = vmatmul.mubr.bf16.gmra.mxu0 %v2298
        %v2440 = vpop.f32.mrf.mxu0
        %v2441 = vadd.f32 %v887, %v2440
        %v2442 = vpop.f32.mrf.mxu0
        %v2443 = vpop.f32.mrf.mxu0
        %v2444 = vadd.f32 %v887, %v2443
        %v2445 = vpop.f32.mrf.mxu0
        %2446 = vdwg.mxu0
        %v2447 = vpack.c.bf16 %v2387, %v2384
        %v2448 = vpack.c.bf16 %v2395, %v2392
        %v2449 = vpack.c.bf16 %v2436, %v2433
        %v2450 = vpack.c.bf16 %v2444, %v2441
        %v2451 = vmul.f32 %v2335, %v660
        %v2452 = vmul.f32 %v2338, %v660
        %v2453 = vmul.f32 %v2343, %v660
        %v2454 = vmul.f32 %v2346, %v660
        %v2455 = vpack.c.bf16 %v2452, %v2451
        %v2456 = vpack.c.bf16 %v2454, %v2453
        %v2458 = vsel %vm676, %v2455, 0
        %v2461 = vsel %vm676, %v2447, 0
        %2463 = vmatprep.subr.bf16.mxu0 0
        %2464 = vmatpush1.bf16.xpose.msra.mxu0 0
        %2465 = vmatprep.subr.bf16.mxu0 0
        %2466 = vmatpush1.bf16.xpose.msra.mxu0 0
        %2467 = vmatprep.subr.bf16.mxu0 0
        %2468 = vmatpush1.bf16.xpose.msra.mxu0 0
        %2469 = vmatprep.subr.bf16.mxu0 0
        %2470 = vmatpush1.bf16.xpose.msra.mxu0 0
        %2471 = vmatprep.subr.bf16.mxu0 0
        %2472 = vmatpush1.bf16.xpose.msra.mxu0 0
        %2473 = vmatprep.subr.bf16.mxu0 0
        %2474 = vmatpush1.bf16.xpose.msra.mxu0 0
        %2475 = vmatprep.subr.bf16.mxu0 0
        %2476 = vmatpush1.bf16.xpose.msra.mxu0 0
        %2477 = vmatprep.subr.bf16.mxu0 0
        %2478 = vmatpush1.bf16.xpose.msra.mxu0 %v2461
        %2479 = vmatprep.subr.bf16.mxu0 0
        %2480 = vmatpush2.bf16.xpose.msra.mxu0 0
        %2481 = vmatprep.subr.bf16.mxu0 0
        %2482 = vmatpush2.bf16.xpose.msra.mxu0 0
        %2483 = vmatprep.subr.bf16.mxu0 0
        %2484 = vmatpush2.bf16.xpose.msra.mxu0 0
        %2485 = vmatprep.subr.bf16.mxu0 0
        %2486 = vmatpush2.bf16.xpose.msra.mxu0 0
        %2487 = vmatprep.subr.bf16.mxu0 0
        %2488 = vmatpush2.bf16.xpose.msra.mxu0 0
        %2489 = vmatprep.subr.bf16.mxu0 0
        %2490 = vmatpush2.bf16.xpose.msra.mxu0 0
        %2491 = vmatprep.subr.bf16.mxu0 0
        %2492 = vmatpush2.bf16.xpose.msra.mxu0 0
        %2493 = vmatprep.subr.bf16.mxu0 0
        %2494 = vmatpush2.bf16.xpose.msra.mxu0 0
        %2495 = vmatprep.mubr.bf16.mxu0 0
        %2496 = vmatmul.mubr.bf16.gmra.mxu0 %v2458
        %v2497 = vpop.f32.mrf.mxu0
        %v2498 = vadd.f32 0.0, %v2497
        %v2499 = vpop.f32.mrf.mxu0
        %v2500 = vpop.f32.mrf.mxu0
        %v2501 = vadd.f32 0.0, %v2500
        %v2502 = vpop.f32.mrf.mxu0
        %2503 = vdwg.mxu0
        %v2505 = vsel %vm676, %v2456, 0
        %v2508 = vsel %vm676, %v2448, 0
        %2510 = vmatprep.subr.bf16.mxu0 0
        %2511 = vmatpush1.bf16.xpose.msra.mxu0 0
        %2512 = vmatprep.subr.bf16.mxu0 0
        %2513 = vmatpush1.bf16.xpose.msra.mxu0 0
        %2514 = vmatprep.subr.bf16.mxu0 0
        %2515 = vmatpush1.bf16.xpose.msra.mxu0 0
        %2516 = vmatprep.subr.bf16.mxu0 0
        %2517 = vmatpush1.bf16.xpose.msra.mxu0 0
        %2518 = vmatprep.subr.bf16.mxu0 0
        %2519 = vmatpush1.bf16.xpose.msra.mxu0 0
        %2520 = vmatprep.subr.bf16.mxu0 0
        %2521 = vmatpush1.bf16.xpose.msra.mxu0 0
        %2522 = vmatprep.subr.bf16.mxu0 0
        %2523 = vmatpush1.bf16.xpose.msra.mxu0 0
        %2524 = vmatprep.subr.bf16.mxu0 0
        %2525 = vmatpush1.bf16.xpose.msra.mxu0 %v2508
        %2526 = vmatprep.subr.bf16.mxu0 0
        %2527 = vmatpush2.bf16.xpose.msra.mxu0 0
        %2528 = vmatprep.subr.bf16.mxu0 0
        %2529 = vmatpush2.bf16.xpose.msra.mxu0 0
        %2530 = vmatprep.subr.bf16.mxu0 0
        %2531 = vmatpush2.bf16.xpose.msra.mxu0 0
        %2532 = vmatprep.subr.bf16.mxu0 0
        %2533 = vmatpush2.bf16.xpose.msra.mxu0 0
        %2534 = vmatprep.subr.bf16.mxu0 0
        %2535 = vmatpush2.bf16.xpose.msra.mxu0 0
        %2536 = vmatprep.subr.bf16.mxu0 0
        %2537 = vmatpush2.bf16.xpose.msra.mxu0 0
        %2538 = vmatprep.subr.bf16.mxu0 0
        %2539 = vmatpush2.bf16.xpose.msra.mxu0 0
        %2540 = vmatprep.subr.bf16.mxu0 0
        %2541 = vmatpush2.bf16.xpose.msra.mxu0 0
        %2542 = vmatprep.mubr.bf16.mxu0 0
        %2543 = vmatmul.mubr.bf16.gmra.mxu0 %v2505
        %v2544 = vpop.f32.mrf.mxu0
        %v2545 = vadd.f32 0.0, %v2544
        %v2546 = vpop.f32.mrf.mxu0
        %v2547 = vpop.f32.mrf.mxu0
        %v2548 = vadd.f32 0.0, %v2547
        %v2549 = vpop.f32.mrf.mxu0
        %2550 = vdwg.mxu0
        %v2551 = vmul.f32 %v2498, 0.35355338
        %v2552 = vmul.f32 %v2501, 0.35355338
        %v2553 = vmul.f32 %v2545, 0.35355338
        %v2554 = vmul.f32 %v2548, 0.35355338
        %v2555 = vsel %vm1057, %v2551, -inf
        %2556 = vmax.xlane.f32.xlu0 %v2555
        %v2557 = vpop.xlane.xlu0 %2556
        %v2558 = vsel %vm1057, %v2552, -inf
        %2559 = vmax.xlane.f32.xlu0 %v2558
        %v2560 = vpop.xlane.xlu0 %2559
        %v2561 = vsel %vm1057, %v2553, -inf
        %2562 = vmax.xlane.f32.xlu0 %v2561
        %v2563 = vpop.xlane.xlu0 %2562
        %v2564 = vsel %vm1057, %v2554, -inf
        %2565 = vmax.xlane.f32.xlu0 %v2564
        %v2566 = vpop.xlane.xlu0 %2565
        %v2567 = vsub.f32 %v2551, %v2557
        %v2568 = vsub.f32 %v2552, %v2560
        %v2569 = vsub.f32 %v2553, %v2563
        %v2570 = vsub.f32 %v2554, %v2566
        %v2571 = vmul.f32 %v2567, 1.442695
        %v2572 = vpow.pop %v2571
        %v2573 = vmul.f32 %v2568, 1.442695
        %v2574 = vpow.pop %v2573
        %v2575 = vmul.f32 %v2569, 1.442695
        %v2576 = vpow.pop %v2575
        %v2577 = vmul.f32 %v2570, 1.442695
        %v2578 = vpow.pop %v2577
        %v2579 = vsel %vm1057, %v2572, 0.0
        %2580 = vadd.xlane.f32.xlu0 %v2579
        %v2581 = vpop.xlane.xlu0 %2580
        %v2582 = vsel %vm1057, %v2574, 0.0
        %2583 = vadd.xlane.f32.xlu0 %v2582
        %v2584 = vpop.xlane.xlu0 %2583
        %v2585 = vsel %vm1057, %v2576, 0.0
        %2586 = vadd.xlane.f32.xlu0 %v2585
        %v2587 = vpop.xlane.xlu0 %2586
        %v2588 = vsel %vm1057, %v2578, 0.0
        %2589 = vadd.xlane.f32.xlu0 %v2588
        %v2590 = vpop.xlane.xlu0 %2589
        %v2591 = vrcp.pop %v2581
        %v2592 = vrcp.pop %v2584
        %v2593 = vrcp.pop %v2587
        %v2594 = vrcp.pop %v2590
        %v2595 = vmul.f32 %v2572, %v2591
        %v2596 = vmul.f32 %v2574, %v2592
        %v2597 = vmul.f32 %v2576, %v2593
        %v2598 = vmul.f32 %v2578, %v2594
        %v2599 = vpack.c.bf16 %v2596, %v2595
        %v2600 = vpack.c.bf16 %v2598, %v2597
        %v2602 = vsel %vm1057, %v2599, 0
        %2604 = vmatprep.subr.bf16.mxu0 0
        %2605 = vmatpush1.bf16.msra.mxu0 0
        %2606 = vmatprep.subr.bf16.mxu0 0
        %2607 = vmatpush1.bf16.msra.mxu0 0
        %2608 = vmatprep.subr.bf16.mxu0 0
        %2609 = vmatpush1.bf16.msra.mxu0 0
        %2610 = vmatprep.subr.bf16.mxu0 0
        %2611 = vmatpush1.bf16.msra.mxu0 0
        %2612 = vmatprep.subr.bf16.mxu0 0
        %2613 = vmatpush1.bf16.msra.mxu0 0
        %2614 = vmatprep.subr.bf16.mxu0 0
        %2615 = vmatpush1.bf16.msra.mxu0 0
        %2616 = vmatprep.subr.bf16.mxu0 0
        %2617 = vmatpush1.bf16.msra.mxu0 0
        %2618 = vmatprep.subr.bf16.mxu0 0
        %2619 = vmatpush1.bf16.msra.mxu0 %v2449
        %2620 = vmatprep.subr.bf16.mxu0 0
        %2621 = vmatpush2.bf16.msra.mxu0 0
        %2622 = vmatprep.subr.bf16.mxu0 0
        %2623 = vmatpush2.bf16.msra.mxu0 0
        %2624 = vmatprep.subr.bf16.mxu0 0
        %2625 = vmatpush2.bf16.msra.mxu0 0
        %2626 = vmatprep.subr.bf16.mxu0 0
        %2627 = vmatpush2.bf16.msra.mxu0 0
        %2628 = vmatprep.subr.bf16.mxu0 0
        %2629 = vmatpush2.bf16.msra.mxu0 0
        %2630 = vmatprep.subr.bf16.mxu0 0
        %2631 = vmatpush2.bf16.msra.mxu0 0
        %2632 = vmatprep.subr.bf16.mxu0 0
        %2633 = vmatpush2.bf16.msra.mxu0 0
        %2634 = vmatprep.subr.bf16.mxu0 0
        %2635 = vmatpush2.bf16.msra.mxu0 0
        %2636 = vmatprep.mubr.bf16.mxu0 0
        %2637 = vmatmul.mubr.bf16.gmra.mxu0 %v2602
        %v2638 = vpop.f32.mrf.mxu0
        %v2639 = vadd.f32 0.0, %v2638
        %v2640 = vpop.f32.mrf.mxu0
        %v2641 = vpop.f32.mrf.mxu0
        %v2642 = vadd.f32 0.0, %v2641
        %v2643 = vpop.f32.mrf.mxu0
        %2644 = vdwg.mxu0
        %v2646 = vsel %vm1057, %v2600, 0
        %2648 = vmatprep.subr.bf16.mxu0 0
        %2649 = vmatpush1.bf16.msra.mxu0 0
        %2650 = vmatprep.subr.bf16.mxu0 0
        %2651 = vmatpush1.bf16.msra.mxu0 0
        %2652 = vmatprep.subr.bf16.mxu0 0
        %2653 = vmatpush1.bf16.msra.mxu0 0
        %2654 = vmatprep.subr.bf16.mxu0 0
        %2655 = vmatpush1.bf16.msra.mxu0 0
        %2656 = vmatprep.subr.bf16.mxu0 0
        %2657 = vmatpush1.bf16.msra.mxu0 0
        %2658 = vmatprep.subr.bf16.mxu0 0
        %2659 = vmatpush1.bf16.msra.mxu0 0
        %2660 = vmatprep.subr.bf16.mxu0 0
        %2661 = vmatpush1.bf16.msra.mxu0 0
        %2662 = vmatprep.subr.bf16.mxu0 0
        %2663 = vmatpush1.bf16.msra.mxu0 %v2450
        %2664 = vmatprep.subr.bf16.mxu0 0
        %2665 = vmatpush2.bf16.msra.mxu0 0
        %2666 = vmatprep.subr.bf16.mxu0 0
        %2667 = vmatpush2.bf16.msra.mxu0 0
        %2668 = vmatprep.subr.bf16.mxu0 0
        %2669 = vmatpush2.bf16.msra.mxu0 0
        %2670 = vmatprep.subr.bf16.mxu0 0
        %2671 = vmatpush2.bf16.msra.mxu0 0
        %2672 = vmatprep.subr.bf16.mxu0 0
        %2673 = vmatpush2.bf16.msra.mxu0 0
        %2674 = vmatprep.subr.bf16.mxu0 0
        %2675 = vmatpush2.bf16.msra.mxu0 0
        %2676 = vmatprep.subr.bf16.mxu0 0
        %2677 = vmatpush2.bf16.msra.mxu0 0
        %2678 = vmatprep.subr.bf16.mxu0 0
        %2679 = vmatpush2.bf16.msra.mxu0 0
        %2680 = vmatprep.mubr.bf16.mxu0 0
        %2681 = vmatmul.mubr.bf16.gmra.mxu0 %v2646
        %v2682 = vpop.f32.mrf.mxu0
        %v2683 = vadd.f32 0.0, %v2682
        %v2684 = vpop.f32.mrf.mxu0
        %v2685 = vpop.f32.mrf.mxu0
        %v2686 = vadd.f32 0.0, %v2685
        %v2687 = vpop.f32.mrf.mxu0
        %2688 = vdwg.mxu0
        %v2689 = vmul.f32 %v2639, %v660
        %v2690 = vmul.f32 %v2642, %v660
        %v2691 = vmul.f32 %v2683, %v660
        %v2692 = vmul.f32 %v2686, %v660
        %v2693 = vadd.f32 %v2689, 0.0
        %v2694 = vadd.f32 %v2690, 0.0
        %v2695 = vadd.f32 %v2691, 0.0
        %v2696 = vadd.f32 %v2692, 0.0
        %v2697 = vmul.f32 %v2335, %v665
        %v2698 = vmul.f32 %v2338, %v665
        %v2699 = vmul.f32 %v2343, %v665
        %v2700 = vmul.f32 %v2346, %v665
        %v2701 = vpack.c.bf16 %v2698, %v2697
        %v2702 = vpack.c.bf16 %v2700, %v2699
        %v2704 = vsel %vm676, %v2701, 0
        %2706 = vmatprep.subr.bf16.mxu0 0
        %2707 = vmatpush1.bf16.xpose.msra.mxu0 0
        %2708 = vmatprep.subr.bf16.mxu0 0
        %2709 = vmatpush1.bf16.xpose.msra.mxu0 0
        %2710 = vmatprep.subr.bf16.mxu0 0
        %2711 = vmatpush1.bf16.xpose.msra.mxu0 0
        %2712 = vmatprep.subr.bf16.mxu0 0
        %2713 = vmatpush1.bf16.xpose.msra.mxu0 0
        %2714 = vmatprep.subr.bf16.mxu0 0
        %2715 = vmatpush1.bf16.xpose.msra.mxu0 0
        %2716 = vmatprep.subr.bf16.mxu0 0
        %2717 = vmatpush1.bf16.xpose.msra.mxu0 0
        %2718 = vmatprep.subr.bf16.mxu0 0
        %2719 = vmatpush1.bf16.xpose.msra.mxu0 0
        %2720 = vmatprep.subr.bf16.mxu0 0
        %2721 = vmatpush1.bf16.xpose.msra.mxu0 %v2461
        %2722 = vmatprep.subr.bf16.mxu0 0
        %2723 = vmatpush2.bf16.xpose.msra.mxu0 0
        %2724 = vmatprep.subr.bf16.mxu0 0
        %2725 = vmatpush2.bf16.xpose.msra.mxu0 0
        %2726 = vmatprep.subr.bf16.mxu0 0
        %2727 = vmatpush2.bf16.xpose.msra.mxu0 0
        %2728 = vmatprep.subr.bf16.mxu0 0
        %2729 = vmatpush2.bf16.xpose.msra.mxu0 0
        %2730 = vmatprep.subr.bf16.mxu0 0
        %2731 = vmatpush2.bf16.xpose.msra.mxu0 0
        %2732 = vmatprep.subr.bf16.mxu0 0
        %2733 = vmatpush2.bf16.xpose.msra.mxu0 0
        %2734 = vmatprep.subr.bf16.mxu0 0
        %2735 = vmatpush2.bf16.xpose.msra.mxu0 0
        %2736 = vmatprep.subr.bf16.mxu0 0
        %2737 = vmatpush2.bf16.xpose.msra.mxu0 0
        %2738 = vmatprep.mubr.bf16.mxu0 0
        %2739 = vmatmul.mubr.bf16.gmra.mxu0 %v2704
        %v2740 = vpop.f32.mrf.mxu0
        %v2741 = vadd.f32 0.0, %v2740
        %v2742 = vpop.f32.mrf.mxu0
        %v2743 = vpop.f32.mrf.mxu0
        %v2744 = vadd.f32 0.0, %v2743
        %v2745 = vpop.f32.mrf.mxu0
        %2746 = vdwg.mxu0
        %v2748 = vsel %vm676, %v2702, 0
        %2750 = vmatprep.subr.bf16.mxu0 0
        %2751 = vmatpush1.bf16.xpose.msra.mxu0 0
        %2752 = vmatprep.subr.bf16.mxu0 0
        %2753 = vmatpush1.bf16.xpose.msra.mxu0 0
        %2754 = vmatprep.subr.bf16.mxu0 0
        %2755 = vmatpush1.bf16.xpose.msra.mxu0 0
        %2756 = vmatprep.subr.bf16.mxu0 0
        %2757 = vmatpush1.bf16.xpose.msra.mxu0 0
        %2758 = vmatprep.subr.bf16.mxu0 0
        %2759 = vmatpush1.bf16.xpose.msra.mxu0 0
        %2760 = vmatprep.subr.bf16.mxu0 0
        %2761 = vmatpush1.bf16.xpose.msra.mxu0 0
        %2762 = vmatprep.subr.bf16.mxu0 0
        %2763 = vmatpush1.bf16.xpose.msra.mxu0 0
        %2764 = vmatprep.subr.bf16.mxu0 0
        %2765 = vmatpush1.bf16.xpose.msra.mxu0 %v2508
        %2766 = vmatprep.subr.bf16.mxu0 0
        %2767 = vmatpush2.bf16.xpose.msra.mxu0 0
        %2768 = vmatprep.subr.bf16.mxu0 0
        %2769 = vmatpush2.bf16.xpose.msra.mxu0 0
        %2770 = vmatprep.subr.bf16.mxu0 0
        %2771 = vmatpush2.bf16.xpose.msra.mxu0 0
        %2772 = vmatprep.subr.bf16.mxu0 0
        %2773 = vmatpush2.bf16.xpose.msra.mxu0 0
        %2774 = vmatprep.subr.bf16.mxu0 0
        %2775 = vmatpush2.bf16.xpose.msra.mxu0 0
        %2776 = vmatprep.subr.bf16.mxu0 0
        %2777 = vmatpush2.bf16.xpose.msra.mxu0 0
        %2778 = vmatprep.subr.bf16.mxu0 0
        %2779 = vmatpush2.bf16.xpose.msra.mxu0 0
        %2780 = vmatprep.subr.bf16.mxu0 0
        %2781 = vmatpush2.bf16.xpose.msra.mxu0 0
        %2782 = vmatprep.mubr.bf16.mxu0 0
        %2783 = vmatmul.mubr.bf16.gmra.mxu0 %v2748
        %v2784 = vpop.f32.mrf.mxu0
        %v2785 = vadd.f32 0.0, %v2784
        %v2786 = vpop.f32.mrf.mxu0
        %v2787 = vpop.f32.mrf.mxu0
        %v2788 = vadd.f32 0.0, %v2787
        %v2789 = vpop.f32.mrf.mxu0
        %2790 = vdwg.mxu0
        %v2791 = vmul.f32 %v2741, 0.35355338
        %v2792 = vmul.f32 %v2744, 0.35355338
        %v2793 = vmul.f32 %v2785, 0.35355338
        %v2794 = vmul.f32 %v2788, 0.35355338
        %v2795 = vsel %vm1057, %v2791, -inf
        %2796 = vmax.xlane.f32.xlu0 %v2795
        %v2797 = vpop.xlane.xlu0 %2796
        %v2798 = vsel %vm1057, %v2792, -inf
        %2799 = vmax.xlane.f32.xlu0 %v2798
        %v2800 = vpop.xlane.xlu0 %2799
        %v2801 = vsel %vm1057, %v2793, -inf
        %2802 = vmax.xlane.f32.xlu0 %v2801
        %v2803 = vpop.xlane.xlu0 %2802
        %v2804 = vsel %vm1057, %v2794, -inf
        %2805 = vmax.xlane.f32.xlu0 %v2804
        %v2806 = vpop.xlane.xlu0 %2805
        %v2807 = vsub.f32 %v2791, %v2797
        %v2808 = vsub.f32 %v2792, %v2800
        %v2809 = vsub.f32 %v2793, %v2803
        %v2810 = vsub.f32 %v2794, %v2806
        %v2811 = vmul.f32 %v2807, 1.442695
        %v2812 = vpow.pop %v2811
        %v2813 = vmul.f32 %v2808, 1.442695
        %v2814 = vpow.pop %v2813
        %v2815 = vmul.f32 %v2809, 1.442695
        %v2816 = vpow.pop %v2815
        %v2817 = vmul.f32 %v2810, 1.442695
        %v2818 = vpow.pop %v2817
        %v2819 = vsel %vm1057, %v2812, 0.0
        %2820 = vadd.xlane.f32.xlu0 %v2819
        %v2821 = vpop.xlane.xlu0 %2820
        %v2822 = vsel %vm1057, %v2814, 0.0
        %2823 = vadd.xlane.f32.xlu0 %v2822
        %v2824 = vpop.xlane.xlu0 %2823
        %v2825 = vsel %vm1057, %v2816, 0.0
        %2826 = vadd.xlane.f32.xlu0 %v2825
        %v2827 = vpop.xlane.xlu0 %2826
        %v2828 = vsel %vm1057, %v2818, 0.0
        %2829 = vadd.xlane.f32.xlu0 %v2828
        %v2830 = vpop.xlane.xlu0 %2829
        %v2831 = vrcp.pop %v2821
        %v2832 = vrcp.pop %v2824
        %v2833 = vrcp.pop %v2827
        %v2834 = vrcp.pop %v2830
        %v2835 = vmul.f32 %v2812, %v2831
        %v2836 = vmul.f32 %v2814, %v2832
        %v2837 = vmul.f32 %v2816, %v2833
        %v2838 = vmul.f32 %v2818, %v2834
        %v2839 = vpack.c.bf16 %v2836, %v2835
        %v2840 = vpack.c.bf16 %v2838, %v2837
        %v2842 = vsel %vm1057, %v2839, 0
        %2844 = vmatprep.subr.bf16.mxu0 0
        %2845 = vmatpush1.bf16.msra.mxu0 0
        %2846 = vmatprep.subr.bf16.mxu0 0
        %2847 = vmatpush1.bf16.msra.mxu0 0
        %2848 = vmatprep.subr.bf16.mxu0 0
        %2849 = vmatpush1.bf16.msra.mxu0 0
        %2850 = vmatprep.subr.bf16.mxu0 0
        %2851 = vmatpush1.bf16.msra.mxu0 0
        %2852 = vmatprep.subr.bf16.mxu0 0
        %2853 = vmatpush1.bf16.msra.mxu0 0
        %2854 = vmatprep.subr.bf16.mxu0 0
        %2855 = vmatpush1.bf16.msra.mxu0 0
        %2856 = vmatprep.subr.bf16.mxu0 0
        %2857 = vmatpush1.bf16.msra.mxu0 0
        %2858 = vmatprep.subr.bf16.mxu0 0
        %2859 = vmatpush1.bf16.msra.mxu0 %v2449
        %2860 = vmatprep.subr.bf16.mxu0 0
        %2861 = vmatpush2.bf16.msra.mxu0 0
        %2862 = vmatprep.subr.bf16.mxu0 0
        %2863 = vmatpush2.bf16.msra.mxu0 0
        %2864 = vmatprep.subr.bf16.mxu0 0
        %2865 = vmatpush2.bf16.msra.mxu0 0
        %2866 = vmatprep.subr.bf16.mxu0 0
        %2867 = vmatpush2.bf16.msra.mxu0 0
        %2868 = vmatprep.subr.bf16.mxu0 0
        %2869 = vmatpush2.bf16.msra.mxu0 0
        %2870 = vmatprep.subr.bf16.mxu0 0
        %2871 = vmatpush2.bf16.msra.mxu0 0
        %2872 = vmatprep.subr.bf16.mxu0 0
        %2873 = vmatpush2.bf16.msra.mxu0 0
        %2874 = vmatprep.subr.bf16.mxu0 0
        %2875 = vmatpush2.bf16.msra.mxu0 0
        %2876 = vmatprep.mubr.bf16.mxu0 0
        %2877 = vmatmul.mubr.bf16.gmra.mxu0 %v2842
        %v2878 = vpop.f32.mrf.mxu0
        %v2879 = vadd.f32 0.0, %v2878
        %v2880 = vpop.f32.mrf.mxu0
        %v2881 = vpop.f32.mrf.mxu0
        %v2882 = vadd.f32 0.0, %v2881
        %v2883 = vpop.f32.mrf.mxu0
        %2884 = vdwg.mxu0
        %v2886 = vsel %vm1057, %v2840, 0
        %2888 = vmatprep.subr.bf16.mxu0 0
        %2889 = vmatpush1.bf16.msra.mxu0 0
        %2890 = vmatprep.subr.bf16.mxu0 0
        %2891 = vmatpush1.bf16.msra.mxu0 0
        %2892 = vmatprep.subr.bf16.mxu0 0
        %2893 = vmatpush1.bf16.msra.mxu0 0
        %2894 = vmatprep.subr.bf16.mxu0 0
        %2895 = vmatpush1.bf16.msra.mxu0 0
        %2896 = vmatprep.subr.bf16.mxu0 0
        %2897 = vmatpush1.bf16.msra.mxu0 0
        %2898 = vmatprep.subr.bf16.mxu0 0
        %2899 = vmatpush1.bf16.msra.mxu0 0
        %2900 = vmatprep.subr.bf16.mxu0 0
        %2901 = vmatpush1.bf16.msra.mxu0 0
        %2902 = vmatprep.subr.bf16.mxu0 0
        %2903 = vmatpush1.bf16.msra.mxu0 %v2450
        %2904 = vmatprep.subr.bf16.mxu0 0
        %2905 = vmatpush2.bf16.msra.mxu0 0
        %2906 = vmatprep.subr.bf16.mxu0 0
        %2907 = vmatpush2.bf16.msra.mxu0 0
        %2908 = vmatprep.subr.bf16.mxu0 0
        %2909 = vmatpush2.bf16.msra.mxu0 0
        %2910 = vmatprep.subr.bf16.mxu0 0
        %2911 = vmatpush2.bf16.msra.mxu0 0
        %2912 = vmatprep.subr.bf16.mxu0 0
        %2913 = vmatpush2.bf16.msra.mxu0 0
        %2914 = vmatprep.subr.bf16.mxu0 0
        %2915 = vmatpush2.bf16.msra.mxu0 0
        %2916 = vmatprep.subr.bf16.mxu0 0
        %2917 = vmatpush2.bf16.msra.mxu0 0
        %2918 = vmatprep.subr.bf16.mxu0 0
        %2919 = vmatpush2.bf16.msra.mxu0 0
        %2920 = vmatprep.mubr.bf16.mxu0 0
        %2921 = vmatmul.mubr.bf16.gmra.mxu0 %v2886
        %v2922 = vpop.f32.mrf.mxu0
        %v2923 = vadd.f32 0.0, %v2922
        %v2924 = vpop.f32.mrf.mxu0
        %v2925 = vpop.f32.mrf.mxu0
        %v2926 = vadd.f32 0.0, %v2925
        %v2927 = vpop.f32.mrf.mxu0
        %2928 = vdwg.mxu0
        %v2929 = vmul.f32 %v2879, %v665
        %v2930 = vmul.f32 %v2882, %v665
        %v2931 = vmul.f32 %v2923, %v665
        %v2932 = vmul.f32 %v2926, %v665
        %v2933 = vadd.f32 %v2693, %v2929
        %v2934 = vadd.f32 %v2694, %v2930
        %v2935 = vadd.f32 %v2695, %v2931
        %v2936 = vadd.f32 %v2696, %v2932
        %v2937 = vmul.f32 %v2335, %v670
        %v2938 = vmul.f32 %v2338, %v670
        %v2939 = vmul.f32 %v2343, %v670
        %v2940 = vmul.f32 %v2346, %v670
        %v2941 = vpack.c.bf16 %v2938, %v2937
        %v2942 = vpack.c.bf16 %v2940, %v2939
        %v2944 = vsel %vm676, %v2941, 0
        %2946 = vmatprep.subr.bf16.mxu0 0
        %2947 = vmatpush1.bf16.xpose.msra.mxu0 0
        %2948 = vmatprep.subr.bf16.mxu0 0
        %2949 = vmatpush1.bf16.xpose.msra.mxu0 0
        %2950 = vmatprep.subr.bf16.mxu0 0
        %2951 = vmatpush1.bf16.xpose.msra.mxu0 0
        %2952 = vmatprep.subr.bf16.mxu0 0
        %2953 = vmatpush1.bf16.xpose.msra.mxu0 0
        %2954 = vmatprep.subr.bf16.mxu0 0
        %2955 = vmatpush1.bf16.xpose.msra.mxu0 0
        %2956 = vmatprep.subr.bf16.mxu0 0
        %2957 = vmatpush1.bf16.xpose.msra.mxu0 0
        %2958 = vmatprep.subr.bf16.mxu0 0
        %2959 = vmatpush1.bf16.xpose.msra.mxu0 0
        %2960 = vmatprep.subr.bf16.mxu0 0
        %2961 = vmatpush1.bf16.xpose.msra.mxu0 %v2461
        %2962 = vmatprep.subr.bf16.mxu0 0
        %2963 = vmatpush2.bf16.xpose.msra.mxu0 0
        %2964 = vmatprep.subr.bf16.mxu0 0
        %2965 = vmatpush2.bf16.xpose.msra.mxu0 0
        %2966 = vmatprep.subr.bf16.mxu0 0
        %2967 = vmatpush2.bf16.xpose.msra.mxu0 0
        %2968 = vmatprep.subr.bf16.mxu0 0
        %2969 = vmatpush2.bf16.xpose.msra.mxu0 0
        %2970 = vmatprep.subr.bf16.mxu0 0
        %2971 = vmatpush2.bf16.xpose.msra.mxu0 0
        %2972 = vmatprep.subr.bf16.mxu0 0
        %2973 = vmatpush2.bf16.xpose.msra.mxu0 0
        %2974 = vmatprep.subr.bf16.mxu0 0
        %2975 = vmatpush2.bf16.xpose.msra.mxu0 0
        %2976 = vmatprep.subr.bf16.mxu0 0
        %2977 = vmatpush2.bf16.xpose.msra.mxu0 0
        %2978 = vmatprep.mubr.bf16.mxu0 0
        %2979 = vmatmul.mubr.bf16.gmra.mxu0 %v2944
        %v2980 = vpop.f32.mrf.mxu0
        %v2981 = vadd.f32 0.0, %v2980
        %v2982 = vpop.f32.mrf.mxu0
        %v2983 = vpop.f32.mrf.mxu0
        %v2984 = vadd.f32 0.0, %v2983
        %v2985 = vpop.f32.mrf.mxu0
        %2986 = vdwg.mxu0
        %v2988 = vsel %vm676, %v2942, 0
        %2990 = vmatprep.subr.bf16.mxu0 0
        %2991 = vmatpush1.bf16.xpose.msra.mxu0 0
        %2992 = vmatprep.subr.bf16.mxu0 0
        %2993 = vmatpush1.bf16.xpose.msra.mxu0 0
        %2994 = vmatprep.subr.bf16.mxu0 0
        %2995 = vmatpush1.bf16.xpose.msra.mxu0 0
        %2996 = vmatprep.subr.bf16.mxu0 0
        %2997 = vmatpush1.bf16.xpose.msra.mxu0 0
        %2998 = vmatprep.subr.bf16.mxu0 0
        %2999 = vmatpush1.bf16.xpose.msra.mxu0 0
        %3000 = vmatprep.subr.bf16.mxu0 0
        %3001 = vmatpush1.bf16.xpose.msra.mxu0 0
        %3002 = vmatprep.subr.bf16.mxu0 0
        %3003 = vmatpush1.bf16.xpose.msra.mxu0 0
        %3004 = vmatprep.subr.bf16.mxu0 0
        %3005 = vmatpush1.bf16.xpose.msra.mxu0 %v2508
        %3006 = vmatprep.subr.bf16.mxu0 0
        %3007 = vmatpush2.bf16.xpose.msra.mxu0 0
        %3008 = vmatprep.subr.bf16.mxu0 0
        %3009 = vmatpush2.bf16.xpose.msra.mxu0 0
        %3010 = vmatprep.subr.bf16.mxu0 0
        %3011 = vmatpush2.bf16.xpose.msra.mxu0 0
        %3012 = vmatprep.subr.bf16.mxu0 0
        %3013 = vmatpush2.bf16.xpose.msra.mxu0 0
        %3014 = vmatprep.subr.bf16.mxu0 0
        %3015 = vmatpush2.bf16.xpose.msra.mxu0 0
        %3016 = vmatprep.subr.bf16.mxu0 0
        %3017 = vmatpush2.bf16.xpose.msra.mxu0 0
        %3018 = vmatprep.subr.bf16.mxu0 0
        %3019 = vmatpush2.bf16.xpose.msra.mxu0 0
        %3020 = vmatprep.subr.bf16.mxu0 0
        %3021 = vmatpush2.bf16.xpose.msra.mxu0 0
        %3022 = vmatprep.mubr.bf16.mxu0 0
        %3023 = vmatmul.mubr.bf16.gmra.mxu0 %v2988
        %v3024 = vpop.f32.mrf.mxu0
        %v3025 = vadd.f32 0.0, %v3024
        %v3026 = vpop.f32.mrf.mxu0
        %v3027 = vpop.f32.mrf.mxu0
        %v3028 = vadd.f32 0.0, %v3027
        %v3029 = vpop.f32.mrf.mxu0
        %3030 = vdwg.mxu0
        %v3031 = vmul.f32 %v2981, 0.35355338
        %v3032 = vmul.f32 %v2984, 0.35355338
        %v3033 = vmul.f32 %v3025, 0.35355338
        %v3034 = vmul.f32 %v3028, 0.35355338
        %v3035 = vsel %vm1057, %v3031, -inf
        %3036 = vmax.xlane.f32.xlu0 %v3035
        %v3037 = vpop.xlane.xlu0 %3036
        %v3038 = vsel %vm1057, %v3032, -inf
        %3039 = vmax.xlane.f32.xlu0 %v3038
        %v3040 = vpop.xlane.xlu0 %3039
        %v3041 = vsel %vm1057, %v3033, -inf
        %3042 = vmax.xlane.f32.xlu0 %v3041
        %v3043 = vpop.xlane.xlu0 %3042
        %v3044 = vsel %vm1057, %v3034, -inf
        %3045 = vmax.xlane.f32.xlu0 %v3044
        %v3046 = vpop.xlane.xlu0 %3045
        %v3047 = vsub.f32 %v3031, %v3037
        %v3048 = vsub.f32 %v3032, %v3040
        %v3049 = vsub.f32 %v3033, %v3043
        %v3050 = vsub.f32 %v3034, %v3046
        %v3051 = vmul.f32 %v3047, 1.442695
        %v3052 = vpow.pop %v3051
        %v3053 = vmul.f32 %v3048, 1.442695
        %v3054 = vpow.pop %v3053
        %v3055 = vmul.f32 %v3049, 1.442695
        %v3056 = vpow.pop %v3055
        %v3057 = vmul.f32 %v3050, 1.442695
        %v3058 = vpow.pop %v3057
        %v3059 = vsel %vm1057, %v3052, 0.0
        %3060 = vadd.xlane.f32.xlu0 %v3059
        %v3061 = vpop.xlane.xlu0 %3060
        %v3062 = vsel %vm1057, %v3054, 0.0
        %3063 = vadd.xlane.f32.xlu0 %v3062
        %v3064 = vpop.xlane.xlu0 %3063
        %v3065 = vsel %vm1057, %v3056, 0.0
        %3066 = vadd.xlane.f32.xlu0 %v3065
        %v3067 = vpop.xlane.xlu0 %3066
        %v3068 = vsel %vm1057, %v3058, 0.0
        %3069 = vadd.xlane.f32.xlu0 %v3068
        %v3070 = vpop.xlane.xlu0 %3069
        %v3071 = vrcp.pop %v3061
        %v3072 = vrcp.pop %v3064
        %v3073 = vrcp.pop %v3067
        %v3074 = vrcp.pop %v3070
        %v3075 = vmul.f32 %v3052, %v3071
        %v3076 = vmul.f32 %v3054, %v3072
        %v3077 = vmul.f32 %v3056, %v3073
        %v3078 = vmul.f32 %v3058, %v3074
        %v3079 = vpack.c.bf16 %v3076, %v3075
        %v3080 = vpack.c.bf16 %v3078, %v3077
        %v3082 = vsel %vm1057, %v3079, 0
        %3084 = vmatprep.subr.bf16.mxu0 0
        %3085 = vmatpush1.bf16.msra.mxu0 0
        %3086 = vmatprep.subr.bf16.mxu0 0
        %3087 = vmatpush1.bf16.msra.mxu0 0
        %3088 = vmatprep.subr.bf16.mxu0 0
        %3089 = vmatpush1.bf16.msra.mxu0 0
        %3090 = vmatprep.subr.bf16.mxu0 0
        %3091 = vmatpush1.bf16.msra.mxu0 0
        %3092 = vmatprep.subr.bf16.mxu0 0
        %3093 = vmatpush1.bf16.msra.mxu0 0
        %3094 = vmatprep.subr.bf16.mxu0 0
        %3095 = vmatpush1.bf16.msra.mxu0 0
        %3096 = vmatprep.subr.bf16.mxu0 0
        %3097 = vmatpush1.bf16.msra.mxu0 0
        %3098 = vmatprep.subr.bf16.mxu0 0
        %3099 = vmatpush1.bf16.msra.mxu0 %v2449
        %3100 = vmatprep.subr.bf16.mxu0 0
        %3101 = vmatpush2.bf16.msra.mxu0 0
        %3102 = vmatprep.subr.bf16.mxu0 0
        %3103 = vmatpush2.bf16.msra.mxu0 0
        %3104 = vmatprep.subr.bf16.mxu0 0
        %3105 = vmatpush2.bf16.msra.mxu0 0
        %3106 = vmatprep.subr.bf16.mxu0 0
        %3107 = vmatpush2.bf16.msra.mxu0 0
        %3108 = vmatprep.subr.bf16.mxu0 0
        %3109 = vmatpush2.bf16.msra.mxu0 0
        %3110 = vmatprep.subr.bf16.mxu0 0
        %3111 = vmatpush2.bf16.msra.mxu0 0
        %3112 = vmatprep.subr.bf16.mxu0 0
        %3113 = vmatpush2.bf16.msra.mxu0 0
        %3114 = vmatprep.subr.bf16.mxu0 0
        %3115 = vmatpush2.bf16.msra.mxu0 0
        %3116 = vmatprep.mubr.bf16.mxu0 0
        %3117 = vmatmul.mubr.bf16.gmra.mxu0 %v3082
        %v3118 = vpop.f32.mrf.mxu0
        %v3119 = vadd.f32 0.0, %v3118
        %v3120 = vpop.f32.mrf.mxu0
        %v3121 = vpop.f32.mrf.mxu0
        %v3122 = vadd.f32 0.0, %v3121
        %v3123 = vpop.f32.mrf.mxu0
        %3124 = vdwg.mxu0
        %v3126 = vsel %vm1057, %v3080, 0
        %3128 = vmatprep.subr.bf16.mxu0 0
        %3129 = vmatpush1.bf16.msra.mxu0 0
        %3130 = vmatprep.subr.bf16.mxu0 0
        %3131 = vmatpush1.bf16.msra.mxu0 0
        %3132 = vmatprep.subr.bf16.mxu0 0
        %3133 = vmatpush1.bf16.msra.mxu0 0
        %3134 = vmatprep.subr.bf16.mxu0 0
        %3135 = vmatpush1.bf16.msra.mxu0 0
        %3136 = vmatprep.subr.bf16.mxu0 0
        %3137 = vmatpush1.bf16.msra.mxu0 0
        %3138 = vmatprep.subr.bf16.mxu0 0
        %3139 = vmatpush1.bf16.msra.mxu0 0
        %3140 = vmatprep.subr.bf16.mxu0 0
        %3141 = vmatpush1.bf16.msra.mxu0 0
        %3142 = vmatprep.subr.bf16.mxu0 0
        %3143 = vmatpush1.bf16.msra.mxu0 %v2450
        %3144 = vmatprep.subr.bf16.mxu0 0
        %3145 = vmatpush2.bf16.msra.mxu0 0
        %3146 = vmatprep.subr.bf16.mxu0 0
        %3147 = vmatpush2.bf16.msra.mxu0 0
        %3148 = vmatprep.subr.bf16.mxu0 0
        %3149 = vmatpush2.bf16.msra.mxu0 0
        %3150 = vmatprep.subr.bf16.mxu0 0
        %3151 = vmatpush2.bf16.msra.mxu0 0
        %3152 = vmatprep.subr.bf16.mxu0 0
        %3153 = vmatpush2.bf16.msra.mxu0 0
        %3154 = vmatprep.subr.bf16.mxu0 0
        %3155 = vmatpush2.bf16.msra.mxu0 0
        %3156 = vmatprep.subr.bf16.mxu0 0
        %3157 = vmatpush2.bf16.msra.mxu0 0
        %3158 = vmatprep.subr.bf16.mxu0 0
        %3159 = vmatpush2.bf16.msra.mxu0 0
        %3160 = vmatprep.mubr.bf16.mxu0 0
        %3161 = vmatmul.mubr.bf16.gmra.mxu0 %v3126
        %v3162 = vpop.f32.mrf.mxu0
        %v3163 = vadd.f32 0.0, %v3162
        %v3164 = vpop.f32.mrf.mxu0
        %v3165 = vpop.f32.mrf.mxu0
        %v3166 = vadd.f32 0.0, %v3165
        %v3167 = vpop.f32.mrf.mxu0
        %3168 = vdwg.mxu0
        %v3169 = vmul.f32 %v3119, %v670
        %v3170 = vmul.f32 %v3122, %v670
        %v3171 = vmul.f32 %v3163, %v670
        %v3172 = vmul.f32 %v3166, %v670
        %v3173 = vadd.f32 %v2933, %v3169
        %v3174 = vadd.f32 %v2934, %v3170
        %v3175 = vadd.f32 %v2935, %v3171
        %v3176 = vadd.f32 %v2936, %v3172
        %v3177 = vmul.f32 %v2335, %v675
        %v3178 = vmul.f32 %v2338, %v675
        %v3179 = vmul.f32 %v2343, %v675
        %v3180 = vmul.f32 %v2346, %v675
        %v3181 = vpack.c.bf16 %v3178, %v3177
        %v3182 = vpack.c.bf16 %v3180, %v3179
        %v3184 = vsel %vm676, %v3181, 0
        %3186 = vmatprep.subr.bf16.mxu0 0
        %3187 = vmatpush1.bf16.xpose.msra.mxu0 0
        %3188 = vmatprep.subr.bf16.mxu0 0
        %3189 = vmatpush1.bf16.xpose.msra.mxu0 0
        %3190 = vmatprep.subr.bf16.mxu0 0
        %3191 = vmatpush1.bf16.xpose.msra.mxu0 0
        %3192 = vmatprep.subr.bf16.mxu0 0
        %3193 = vmatpush1.bf16.xpose.msra.mxu0 0
        %3194 = vmatprep.subr.bf16.mxu0 0
        %3195 = vmatpush1.bf16.xpose.msra.mxu0 0
        %3196 = vmatprep.subr.bf16.mxu0 0
        %3197 = vmatpush1.bf16.xpose.msra.mxu0 0
        %3198 = vmatprep.subr.bf16.mxu0 0
        %3199 = vmatpush1.bf16.xpose.msra.mxu0 0
        %3200 = vmatprep.subr.bf16.mxu0 0
        %3201 = vmatpush1.bf16.xpose.msra.mxu0 %v2461
        %3202 = vmatprep.subr.bf16.mxu0 0
        %3203 = vmatpush2.bf16.xpose.msra.mxu0 0
        %3204 = vmatprep.subr.bf16.mxu0 0
        %3205 = vmatpush2.bf16.xpose.msra.mxu0 0
        %3206 = vmatprep.subr.bf16.mxu0 0
        %3207 = vmatpush2.bf16.xpose.msra.mxu0 0
        %3208 = vmatprep.subr.bf16.mxu0 0
        %3209 = vmatpush2.bf16.xpose.msra.mxu0 0
        %3210 = vmatprep.subr.bf16.mxu0 0
        %3211 = vmatpush2.bf16.xpose.msra.mxu0 0
        %3212 = vmatprep.subr.bf16.mxu0 0
        %3213 = vmatpush2.bf16.xpose.msra.mxu0 0
        %3214 = vmatprep.subr.bf16.mxu0 0
        %3215 = vmatpush2.bf16.xpose.msra.mxu0 0
        %3216 = vmatprep.subr.bf16.mxu0 0
        %3217 = vmatpush2.bf16.xpose.msra.mxu0 0
        %3218 = vmatprep.mubr.bf16.mxu0 0
        %3219 = vmatmul.mubr.bf16.gmra.mxu0 %v3184
        %v3220 = vpop.f32.mrf.mxu0
        %v3221 = vadd.f32 0.0, %v3220
        %v3222 = vpop.f32.mrf.mxu0
        %v3223 = vpop.f32.mrf.mxu0
        %v3224 = vadd.f32 0.0, %v3223
        %v3225 = vpop.f32.mrf.mxu0
        %3226 = vdwg.mxu0
        %v3228 = vsel %vm676, %v3182, 0
        %3230 = vmatprep.subr.bf16.mxu0 0
        %3231 = vmatpush1.bf16.xpose.msra.mxu0 0
        %3232 = vmatprep.subr.bf16.mxu0 0
        %3233 = vmatpush1.bf16.xpose.msra.mxu0 0
        %3234 = vmatprep.subr.bf16.mxu0 0
        %3235 = vmatpush1.bf16.xpose.msra.mxu0 0
        %3236 = vmatprep.subr.bf16.mxu0 0
        %3237 = vmatpush1.bf16.xpose.msra.mxu0 0
        %3238 = vmatprep.subr.bf16.mxu0 0
        %3239 = vmatpush1.bf16.xpose.msra.mxu0 0
        %3240 = vmatprep.subr.bf16.mxu0 0
        %3241 = vmatpush1.bf16.xpose.msra.mxu0 0
        %3242 = vmatprep.subr.bf16.mxu0 0
        %3243 = vmatpush1.bf16.xpose.msra.mxu0 0
        %3244 = vmatprep.subr.bf16.mxu0 0
        %3245 = vmatpush1.bf16.xpose.msra.mxu0 %v2508
        %3246 = vmatprep.subr.bf16.mxu0 0
        %3247 = vmatpush2.bf16.xpose.msra.mxu0 0
        %3248 = vmatprep.subr.bf16.mxu0 0
        %3249 = vmatpush2.bf16.xpose.msra.mxu0 0
        %3250 = vmatprep.subr.bf16.mxu0 0
        %3251 = vmatpush2.bf16.xpose.msra.mxu0 0
        %3252 = vmatprep.subr.bf16.mxu0 0
        %3253 = vmatpush2.bf16.xpose.msra.mxu0 0
        %3254 = vmatprep.subr.bf16.mxu0 0
        %3255 = vmatpush2.bf16.xpose.msra.mxu0 0
        %3256 = vmatprep.subr.bf16.mxu0 0
        %3257 = vmatpush2.bf16.xpose.msra.mxu0 0
        %3258 = vmatprep.subr.bf16.mxu0 0
        %3259 = vmatpush2.bf16.xpose.msra.mxu0 0
        %3260 = vmatprep.subr.bf16.mxu0 0
        %3261 = vmatpush2.bf16.xpose.msra.mxu0 0
        %3262 = vmatprep.mubr.bf16.mxu0 0
        %3263 = vmatmul.mubr.bf16.gmra.mxu0 %v3228
        %v3264 = vpop.f32.mrf.mxu0
        %v3265 = vadd.f32 0.0, %v3264
        %v3266 = vpop.f32.mrf.mxu0
        %v3267 = vpop.f32.mrf.mxu0
        %v3268 = vadd.f32 0.0, %v3267
        %v3269 = vpop.f32.mrf.mxu0
        %3270 = vdwg.mxu0
        %v3271 = vmul.f32 %v3221, 0.35355338
        %v3272 = vmul.f32 %v3224, 0.35355338
        %v3273 = vmul.f32 %v3265, 0.35355338
        %v3274 = vmul.f32 %v3268, 0.35355338
        %v3275 = vsel %vm1057, %v3271, -inf
        %3276 = vmax.xlane.f32.xlu0 %v3275
        %v3277 = vpop.xlane.xlu0 %3276
        %v3278 = vsel %vm1057, %v3272, -inf
        %3279 = vmax.xlane.f32.xlu0 %v3278
        %v3280 = vpop.xlane.xlu0 %3279
        %v3281 = vsel %vm1057, %v3273, -inf
        %3282 = vmax.xlane.f32.xlu0 %v3281
        %v3283 = vpop.xlane.xlu0 %3282
        %v3284 = vsel %vm1057, %v3274, -inf
        %3285 = vmax.xlane.f32.xlu0 %v3284
        %v3286 = vpop.xlane.xlu0 %3285
        %v3287 = vsub.f32 %v3271, %v3277
        %v3288 = vsub.f32 %v3272, %v3280
        %v3289 = vsub.f32 %v3273, %v3283
        %v3290 = vsub.f32 %v3274, %v3286
        %v3291 = vmul.f32 %v3287, 1.442695
        %v3292 = vpow.pop %v3291
        %v3293 = vmul.f32 %v3288, 1.442695
        %v3294 = vpow.pop %v3293
        %v3295 = vmul.f32 %v3289, 1.442695
        %v3296 = vpow.pop %v3295
        %v3297 = vmul.f32 %v3290, 1.442695
        %v3298 = vpow.pop %v3297
        %v3299 = vsel %vm1057, %v3292, 0.0
        %3300 = vadd.xlane.f32.xlu0 %v3299
        %v3301 = vpop.xlane.xlu0 %3300
        %v3302 = vsel %vm1057, %v3294, 0.0
        %3303 = vadd.xlane.f32.xlu0 %v3302
        %v3304 = vpop.xlane.xlu0 %3303
        %v3305 = vsel %vm1057, %v3296, 0.0
        %3306 = vadd.xlane.f32.xlu0 %v3305
        %v3307 = vpop.xlane.xlu0 %3306
        %v3308 = vsel %vm1057, %v3298, 0.0
        %3309 = vadd.xlane.f32.xlu0 %v3308
        %v3310 = vpop.xlane.xlu0 %3309
        %v3311 = vrcp.pop %v3301
        %v3312 = vrcp.pop %v3304
        %v3313 = vrcp.pop %v3307
        %v3314 = vrcp.pop %v3310
        %v3315 = vmul.f32 %v3292, %v3311
        %v3316 = vmul.f32 %v3294, %v3312
        %v3317 = vmul.f32 %v3296, %v3313
        %v3318 = vmul.f32 %v3298, %v3314
        %v3319 = vpack.c.bf16 %v3316, %v3315
        %v3320 = vpack.c.bf16 %v3318, %v3317
        %v3322 = vsel %vm1057, %v3319, 0
        %3324 = vmatprep.subr.bf16.mxu0 0
        %3325 = vmatpush1.bf16.msra.mxu0 0
        %3326 = vmatprep.subr.bf16.mxu0 0
        %3327 = vmatpush1.bf16.msra.mxu0 0
        %3328 = vmatprep.subr.bf16.mxu0 0
        %3329 = vmatpush1.bf16.msra.mxu0 0
        %3330 = vmatprep.subr.bf16.mxu0 0
        %3331 = vmatpush1.bf16.msra.mxu0 0
        %3332 = vmatprep.subr.bf16.mxu0 0
        %3333 = vmatpush1.bf16.msra.mxu0 0
        %3334 = vmatprep.subr.bf16.mxu0 0
        %3335 = vmatpush1.bf16.msra.mxu0 0
        %3336 = vmatprep.subr.bf16.mxu0 0
        %3337 = vmatpush1.bf16.msra.mxu0 0
        %3338 = vmatprep.subr.bf16.mxu0 0
        %3339 = vmatpush1.bf16.msra.mxu0 %v2449
        %3340 = vmatprep.subr.bf16.mxu0 0
        %3341 = vmatpush2.bf16.msra.mxu0 0
        %3342 = vmatprep.subr.bf16.mxu0 0
        %3343 = vmatpush2.bf16.msra.mxu0 0
        %3344 = vmatprep.subr.bf16.mxu0 0
        %3345 = vmatpush2.bf16.msra.mxu0 0
        %3346 = vmatprep.subr.bf16.mxu0 0
        %3347 = vmatpush2.bf16.msra.mxu0 0
        %3348 = vmatprep.subr.bf16.mxu0 0
        %3349 = vmatpush2.bf16.msra.mxu0 0
        %3350 = vmatprep.subr.bf16.mxu0 0
        %3351 = vmatpush2.bf16.msra.mxu0 0
        %3352 = vmatprep.subr.bf16.mxu0 0
        %3353 = vmatpush2.bf16.msra.mxu0 0
        %3354 = vmatprep.subr.bf16.mxu0 0
        %3355 = vmatpush2.bf16.msra.mxu0 0
        %3356 = vmatprep.mubr.bf16.mxu0 0
        %3357 = vmatmul.mubr.bf16.gmra.mxu0 %v3322
        %v3358 = vpop.f32.mrf.mxu0
        %v3359 = vadd.f32 0.0, %v3358
        %v3360 = vpop.f32.mrf.mxu0
        %v3361 = vpop.f32.mrf.mxu0
        %v3362 = vadd.f32 0.0, %v3361
        %v3363 = vpop.f32.mrf.mxu0
        %3364 = vdwg.mxu0
        %v3366 = vsel %vm1057, %v3320, 0
        %3368 = vmatprep.subr.bf16.mxu0 0
        %3369 = vmatpush1.bf16.msra.mxu0 0
        %3370 = vmatprep.subr.bf16.mxu0 0
        %3371 = vmatpush1.bf16.msra.mxu0 0
        %3372 = vmatprep.subr.bf16.mxu0 0
        %3373 = vmatpush1.bf16.msra.mxu0 0
        %3374 = vmatprep.subr.bf16.mxu0 0
        %3375 = vmatpush1.bf16.msra.mxu0 0
        %3376 = vmatprep.subr.bf16.mxu0 0
        %3377 = vmatpush1.bf16.msra.mxu0 0
        %3378 = vmatprep.subr.bf16.mxu0 0
        %3379 = vmatpush1.bf16.msra.mxu0 0
        %3380 = vmatprep.subr.bf16.mxu0 0
        %3381 = vmatpush1.bf16.msra.mxu0 0
        %3382 = vmatprep.subr.bf16.mxu0 0
        %3383 = vmatpush1.bf16.msra.mxu0 %v2450
        %3384 = vmatprep.subr.bf16.mxu0 0
        %3385 = vmatpush2.bf16.msra.mxu0 0
        %3386 = vmatprep.subr.bf16.mxu0 0
        %3387 = vmatpush2.bf16.msra.mxu0 0
        %3388 = vmatprep.subr.bf16.mxu0 0
        %3389 = vmatpush2.bf16.msra.mxu0 0
        %3390 = vmatprep.subr.bf16.mxu0 0
        %3391 = vmatpush2.bf16.msra.mxu0 0
        %3392 = vmatprep.subr.bf16.mxu0 0
        %3393 = vmatpush2.bf16.msra.mxu0 0
        %3394 = vmatprep.subr.bf16.mxu0 0
        %3395 = vmatpush2.bf16.msra.mxu0 0
        %3396 = vmatprep.subr.bf16.mxu0 0
        %3397 = vmatpush2.bf16.msra.mxu0 0
        %3398 = vmatprep.subr.bf16.mxu0 0
        %3399 = vmatpush2.bf16.msra.mxu0 0
        %3400 = vmatprep.mubr.bf16.mxu0 0
        %3401 = vmatmul.mubr.bf16.gmra.mxu0 %v3366
        %v3402 = vpop.f32.mrf.mxu0
        %v3403 = vadd.f32 0.0, %v3402
        %v3404 = vpop.f32.mrf.mxu0
        %v3405 = vpop.f32.mrf.mxu0
        %v3406 = vadd.f32 0.0, %v3405
        %v3407 = vpop.f32.mrf.mxu0
        %3408 = vdwg.mxu0
        %v3409 = vmul.f32 %v3359, %v675
        %v3410 = vmul.f32 %v3362, %v675
        %v3411 = vmul.f32 %v3403, %v675
        %v3412 = vmul.f32 %v3406, %v675
        %v3413 = vadd.f32 %v3173, %v3409
        %v3414 = vadd.f32 %v3174, %v3410
        %v3415 = vadd.f32 %v3175, %v3411
        %v3416 = vadd.f32 %v3176, %v3412
        %v3417 = vpack.c.bf16 %v3414, %v3413
        %v3418 = vpack.c.bf16 %v3416, %v3415
        %v3420 = vsel %vm676, %v3417, 0
        %v3423 = vsel %vm676, %v3418, 0
        %3425 = vmatprep.subr.bf16.mxu0 0
        %3426 = vmatpush1.bf16.msra.mxu0 0
        %3427 = vmatprep.subr.bf16.mxu0 0
        %3428 = vmatpush1.bf16.msra.mxu0 0
        %3429 = vmatprep.subr.bf16.mxu0 0
        %3430 = vmatpush1.bf16.msra.mxu0 0
        %3431 = vmatprep.subr.bf16.mxu0 0
        %3432 = vmatpush1.bf16.msra.mxu0 0
        %3433 = vmatprep.subr.bf16.mxu0 0
        %3434 = vmatpush1.bf16.msra.mxu0 0
        %3435 = vmatprep.subr.bf16.mxu0 0
        %3436 = vmatpush1.bf16.msra.mxu0 0
        %3437 = vmatprep.subr.bf16.mxu0 0
        %3438 = vmatpush1.bf16.msra.mxu0 %v1935
        %3439 = vmatprep.subr.bf16.mxu0 0
        %3440 = vmatpush1.bf16.msra.mxu0 %v1934
        %3441 = vmatprep.subr.bf16.mxu0 0
        %3442 = vmatpush2.bf16.msra.mxu0 0
        %3443 = vmatprep.subr.bf16.mxu0 0
        %3444 = vmatpush2.bf16.msra.mxu0 0
        %3445 = vmatprep.subr.bf16.mxu0 0
        %3446 = vmatpush2.bf16.msra.mxu0 0
        %3447 = vmatprep.subr.bf16.mxu0 0
        %3448 = vmatpush2.bf16.msra.mxu0 0
        %3449 = vmatprep.subr.bf16.mxu0 0
        %3450 = vmatpush2.bf16.msra.mxu0 0
        %3451 = vmatprep.subr.bf16.mxu0 0
        %3452 = vmatpush2.bf16.msra.mxu0 0
        %3453 = vmatprep.subr.bf16.mxu0 0
        %3454 = vmatpush2.bf16.msra.mxu0 0
        %3455 = vmatprep.subr.bf16.mxu0 0
        %3456 = vmatpush2.bf16.msra.mxu0 0
        %3457 = vmatprep.mubr.bf16.mxu0 0
        %3458 = vmatmul.mubr.bf16.gmra.mxu0 %v3420
        %v3459 = vpop.f32.mrf.mxu0
        %v3460 = vadd.f32 %v1925, %v3459
        %v3461 = vpop.f32.mrf.mxu0
        %v3462 = vpop.f32.mrf.mxu0
        %v3463 = vadd.f32 %v1925, %v3462
        %v3464 = vpop.f32.mrf.mxu0
        %3465 = vmatprep.mubr.bf16.mxu0 0
        %3466 = vmatmul.mubr.bf16.gmra.mxu0 %v3423
        %v3467 = vpop.f32.mrf.mxu0
        %v3468 = vadd.f32 %v1925, %v3467
        %v3469 = vpop.f32.mrf.mxu0
        %v3470 = vpop.f32.mrf.mxu0
        %v3471 = vadd.f32 %v1925, %v3470
        %v3472 = vpop.f32.mrf.mxu0
        %3473 = vdwg.mxu0
        %v3474 = vadd.f32 %v2228, %v3460
        %v3475 = vadd.f32 %v2229, %v3463
        %v3476 = vadd.f32 %v2230, %v3468
        %v3477 = vadd.f32 %v2231, %v3471
        %v3478 = vsel %vm676, %v3474, 0.0
        %3479 = vadd.xlane.f32.xlu0 %v3478
        %v3480 = vpop.xlane.xlu0 %3479
        %v3481 = vsel %vm676, %v3475, 0.0
        %3482 = vadd.xlane.f32.xlu0 %v3481
        %v3483 = vpop.xlane.xlu0 %3482
        %v3484 = vsel %vm676, %v3476, 0.0
        %3485 = vadd.xlane.f32.xlu0 %v3484
        %v3486 = vpop.xlane.xlu0 %3485
        %v3487 = vsel %vm676, %v3477, 0.0
        %3488 = vadd.xlane.f32.xlu0 %v3487
        %v3489 = vpop.xlane.xlu0 %3488
        %v3490 = vmul.f32 %v3480, %v689
        %v3491 = vmul.f32 %v3483, %v689
        %v3492 = vmul.f32 %v3486, %v689
        %v3493 = vmul.f32 %v3489, %v689
        %v3494 = vsub.f32 %v3474, %v3490
        %v3495 = vsub.f32 %v3475, %v3491
        %v3496 = vsub.f32 %v3476, %v3492
        %v3497 = vsub.f32 %v3477, %v3493
        %v3498 = vmul.f32 %v3494, %v3494
        %v3499 = vmul.f32 %v3495, %v3495
        %v3500 = vmul.f32 %v3496, %v3496
        %v3501 = vmul.f32 %v3497, %v3497
        %v3502 = vsel %vm676, %v3498, 0.0
        %3503 = vadd.xlane.f32.xlu0 %v3502
        %v3504 = vpop.xlane.xlu0 %3503
        %v3505 = vsel %vm676, %v3499, 0.0
        %3506 = vadd.xlane.f32.xlu0 %v3505
        %v3507 = vpop.xlane.xlu0 %3506
        %v3508 = vsel %vm676, %v3500, 0.0
        %3509 = vadd.xlane.f32.xlu0 %v3508
        %v3510 = vpop.xlane.xlu0 %3509
        %v3511 = vsel %vm676, %v3501, 0.0
        %3512 = vadd.xlane.f32.xlu0 %v3511
        %v3513 = vpop.xlane.xlu0 %3512
        %v3514 = vmul.f32 %v3504, %v689
        %v3515 = vmul.f32 %v3507, %v689
        %v3516 = vmul.f32 %v3510, %v689
        %v3517 = vmul.f32 %v3513, %v689
        %v3518 = vadd.f32 %v3514, 1e-05
        %v3519 = vadd.f32 %v3515, 1e-05
        %v3520 = vadd.f32 %v3516, 1e-05
        %v3521 = vadd.f32 %v3517, 1e-05
        %v3522 = vrsqrt.pop %v3518
        %v3523 = vrsqrt.pop %v3519
        %v3524 = vrsqrt.pop %v3520
        %v3525 = vrsqrt.pop %v3521
        %v3526 = vmul.f32 %v3494, %v3522
        %v3527 = vmul.f32 %v3495, %v3523
        %v3528 = vmul.f32 %v3496, %v3524
        %v3529 = vmul.f32 %v3497, %v3525
        %v3530 = vmul.f32 %v3526, %v2052
        %v3531 = vmul.f32 %v3527, %v2052
        %v3532 = vmul.f32 %v3528, %v2052
        %v3533 = vmul.f32 %v3529, %v2052
        %v3534 = vadd.f32 %v3530, %v2060
        %v3535 = vadd.f32 %v3531, %v2060
        %v3536 = vadd.f32 %v3532, %v2060
        %v3537 = vadd.f32 %v3533, %v2060
        %v3538 = vpack.c.bf16 %v3535, %v3534
        %v3539 = vpack.c.bf16 %v3537, %v3536
        %v3541 = vsel %vm676, %v3538, 0
        %v3544 = vsel %vm676, %v3539, 0
        %3546 = vmatprep.subr.bf16.mxu0 0
        %3547 = vmatpush1.bf16.msra.mxu0 0
        %3548 = vmatprep.subr.bf16.mxu0 0
        %3549 = vmatpush1.bf16.msra.mxu0 0
        %3550 = vmatprep.subr.bf16.mxu0 0
        %3551 = vmatpush1.bf16.msra.mxu0 0
        %3552 = vmatprep.subr.bf16.mxu0 0
        %3553 = vmatpush1.bf16.msra.mxu0 0
        %3554 = vmatprep.subr.bf16.mxu0 0
        %3555 = vmatpush1.bf16.msra.mxu0 0
        %3556 = vmatprep.subr.bf16.mxu0 0
        %3557 = vmatpush1.bf16.msra.mxu0 0
        %3558 = vmatprep.subr.bf16.mxu0 0
        %3559 = vmatpush1.bf16.msra.mxu0 %v2080
        %3560 = vmatprep.subr.bf16.mxu0 0
        %3561 = vmatpush1.bf16.msra.mxu0 %v2079
        %3562 = vmatprep.subr.bf16.mxu0 0
        %3563 = vmatpush2.bf16.msra.mxu0 0
        %3564 = vmatprep.subr.bf16.mxu0 0
        %3565 = vmatpush2.bf16.msra.mxu0 0
        %3566 = vmatprep.subr.bf16.mxu0 0
        %3567 = vmatpush2.bf16.msra.mxu0 0
        %3568 = vmatprep.subr.bf16.mxu0 0
        %3569 = vmatpush2.bf16.msra.mxu0 0
        %3570 = vmatprep.subr.bf16.mxu0 0
        %3571 = vmatpush2.bf16.msra.mxu0 0
        %3572 = vmatprep.subr.bf16.mxu0 0
        %3573 = vmatpush2.bf16.msra.mxu0 0
        %3574 = vmatprep.subr.bf16.mxu0 0
        %3575 = vmatpush2.bf16.msra.mxu0 0
        %3576 = vmatprep.subr.bf16.mxu0 0
        %3577 = vmatpush2.bf16.msra.mxu0 0
        %3578 = vmatprep.mubr.bf16.mxu0 0
        %3579 = vmatmul.mubr.bf16.gmra.mxu0 %v3541
        %v3580 = vpop.f32.mrf.mxu0
        %v3581 = vadd.f32 %v2070, %v3580
        %v3582 = vpop.f32.mrf.mxu0
        %v3583 = vpop.f32.mrf.mxu0
        %v3584 = vadd.f32 %v2070, %v3583
        %v3585 = vpop.f32.mrf.mxu0
        %3586 = vmatprep.mubr.bf16.mxu0 0
        %3587 = vmatmul.mubr.bf16.gmra.mxu0 %v3544
        %v3588 = vpop.f32.mrf.mxu0
        %v3589 = vadd.f32 %v2070, %v3588
        %v3590 = vpop.f32.mrf.mxu0
        %v3591 = vpop.f32.mrf.mxu0
        %v3592 = vadd.f32 %v2070, %v3591
        %v3593 = vpop.f32.mrf.mxu0
        %3594 = vdwg.mxu0
        %v3595 = vmax.f32 %v3581, 0.0
        %v3596 = vmax.f32 %v3584, 0.0
        %v3597 = vmax.f32 %v3589, 0.0
        %v3598 = vmax.f32 %v3592, 0.0
        %v3599 = vpack.c.bf16 %v3596, %v3595
        %v3600 = vpack.c.bf16 %v3598, %v3597
        %v3602 = vsel %vm2172, %v3599, 0
        %v3605 = vsel %vm2172, %v3600, 0
        %3607 = vmatprep.subr.bf16.mxu0 0
        %3608 = vmatpush1.bf16.msra.mxu0 0
        %3609 = vmatprep.subr.bf16.mxu0 0
        %3610 = vmatpush1.bf16.msra.mxu0 0
        %3611 = vmatprep.subr.bf16.mxu0 0
        %3612 = vmatpush1.bf16.msra.mxu0 0
        %3613 = vmatprep.subr.bf16.mxu0 0
        %3614 = vmatpush1.bf16.msra.mxu0 0
        %3615 = vmatprep.subr.bf16.mxu0 0
        %3616 = vmatpush1.bf16.msra.mxu0 %v2167
        %3617 = vmatprep.subr.bf16.mxu0 0
        %3618 = vmatpush1.bf16.msra.mxu0 %v2166
        %3619 = vmatprep.subr.bf16.mxu0 0
        %3620 = vmatpush1.bf16.msra.mxu0 %v2165
        %3621 = vmatprep.subr.bf16.mxu0 0
        %3622 = vmatpush1.bf16.msra.mxu0 %v2164
        %3623 = vmatprep.subr.bf16.mxu0 0
        %3624 = vmatpush2.bf16.msra.mxu0 0
        %3625 = vmatprep.subr.bf16.mxu0 0
        %3626 = vmatpush2.bf16.msra.mxu0 0
        %3627 = vmatprep.subr.bf16.mxu0 0
        %3628 = vmatpush2.bf16.msra.mxu0 0
        %3629 = vmatprep.subr.bf16.mxu0 0
        %3630 = vmatpush2.bf16.msra.mxu0 0
        %3631 = vmatprep.subr.bf16.mxu0 0
        %3632 = vmatpush2.bf16.msra.mxu0 0
        %3633 = vmatprep.subr.bf16.mxu0 0
        %3634 = vmatpush2.bf16.msra.mxu0 0
        %3635 = vmatprep.subr.bf16.mxu0 0
        %3636 = vmatpush2.bf16.msra.mxu0 0
        %3637 = vmatprep.subr.bf16.mxu0 0
        %3638 = vmatpush2.bf16.msra.mxu0 0
        %3639 = vmatprep.mubr.bf16.mxu0 0
        %3640 = vmatmul.mubr.bf16.gmra.mxu0 %v3602
        %v3641 = vpop.f32.mrf.mxu0
        %v3642 = vadd.f32 %v2147, %v3641
        %v3643 = vpop.f32.mrf.mxu0
        %v3644 = vpop.f32.mrf.mxu0
        %v3645 = vadd.f32 %v2147, %v3644
        %v3646 = vpop.f32.mrf.mxu0
        %3647 = vmatprep.mubr.bf16.mxu0 0
        %3648 = vmatmul.mubr.bf16.gmra.mxu0 %v3605
        %v3649 = vpop.f32.mrf.mxu0
        %v3650 = vadd.f32 %v2147, %v3649
        %v3651 = vpop.f32.mrf.mxu0
        %v3652 = vpop.f32.mrf.mxu0
        %v3653 = vadd.f32 %v2147, %v3652
        %v3654 = vpop.f32.mrf.mxu0
        %3655 = vdwg.mxu0
        %v3656 = vadd.f32 %v3474, %v3642
        %v3657 = vadd.f32 %v3475, %v3645
        %v3658 = vadd.f32 %v3476, %v3650
        %v3659 = vadd.f32 %v3477, %v3653
        %v3660 = vsel %vm676, %v625, 0.0
        %3661 = vadd.xlane.f32.xlu0 %v3660
        %v3662 = vpop.xlane.xlu0 %3661
        %v3663 = vmul.f32 %v3662, %v689
        %v3664 = vsub.f32 %v625, %v3663
        %v3665 = vmul.f32 %v3664, %v3664
        %v3666 = vsel %vm676, %v3665, 0.0
        %3667 = vadd.xlane.f32.xlu0 %v3666
        %v3668 = vpop.xlane.xlu0 %3667
        %v3669 = vmul.f32 %v3668, %v689
        %v3670 = vadd.f32 %v3669, 1e-05
        %v3671 = vrsqrt.pop %v3670
        %v3672 = vmul.f32 %v3664, %v3671
        %v3673 = vmul.f32 %v3672, %v733
        %v3674 = vadd.f32 %v3673, %v741
        %v3675 = vpack.c.bf16 %v3674, %v3674
        %v3677 = vsel %vm676, %v3675, 0
        %3679 = vmatprep.subr.bf16.mxu0 0
        %3680 = vmatpush1.bf16.msra.mxu0 0
        %3681 = vmatprep.subr.bf16.mxu0 0
        %3682 = vmatpush1.bf16.msra.mxu0 0
        %3683 = vmatprep.subr.bf16.mxu0 0
        %3684 = vmatpush1.bf16.msra.mxu0 0
        %3685 = vmatprep.subr.bf16.mxu0 0
        %3686 = vmatpush1.bf16.msra.mxu0 0
        %3687 = vmatprep.subr.bf16.mxu0 0
        %3688 = vmatpush1.bf16.msra.mxu0 0
        %3689 = vmatprep.subr.bf16.mxu0 0
        %3690 = vmatpush1.bf16.msra.mxu0 0
        %3691 = vmatprep.subr.bf16.mxu0 0
        %3692 = vmatpush1.bf16.msra.mxu0 %v761
        %3693 = vmatprep.subr.bf16.mxu0 0
        %3694 = vmatpush1.bf16.msra.mxu0 %v760
        %3695 = vmatprep.subr.bf16.mxu0 0
        %3696 = vmatpush2.bf16.msra.mxu0 0
        %3697 = vmatprep.subr.bf16.mxu0 0
        %3698 = vmatpush2.bf16.msra.mxu0 0
        %3699 = vmatprep.subr.bf16.mxu0 0
        %3700 = vmatpush2.bf16.msra.mxu0 0
        %3701 = vmatprep.subr.bf16.mxu0 0
        %3702 = vmatpush2.bf16.msra.mxu0 0
        %3703 = vmatprep.subr.bf16.mxu0 0
        %3704 = vmatpush2.bf16.msra.mxu0 0
        %3705 = vmatprep.subr.bf16.mxu0 0
        %3706 = vmatpush2.bf16.msra.mxu0 0
        %3707 = vmatprep.subr.bf16.mxu0 0
        %3708 = vmatpush2.bf16.msra.mxu0 0
        %3709 = vmatprep.subr.bf16.mxu0 0
        %3710 = vmatpush2.bf16.msra.mxu0 0
        %3711 = vmatprep.mubr.bf16.mxu0 0
        %3712 = vmatmul.mubr.bf16.gmra.mxu0 %v3677
        %v3713 = vpop.f32.mrf.mxu0
        %v3714 = vadd.f32 %v751, %v3713
        %v3715 = vpop.f32.mrf.mxu0
        %v3716 = vpop.f32.mrf.mxu0
        %v3717 = vpop.f32.mrf.mxu0
        %3718 = vdwg.mxu0
        %3719 = vmatprep.subr.bf16.mxu0 0
        %3720 = vmatpush1.bf16.msra.mxu0 0
        %3721 = vmatprep.subr.bf16.mxu0 0
        %3722 = vmatpush1.bf16.msra.mxu0 0
        %3723 = vmatprep.subr.bf16.mxu0 0
        %3724 = vmatpush1.bf16.msra.mxu0 0
        %3725 = vmatprep.subr.bf16.mxu0 0
        %3726 = vmatpush1.bf16.msra.mxu0 0
        %3727 = vmatprep.subr.bf16.mxu0 0
        %3728 = vmatpush1.bf16.msra.mxu0 0
        %3729 = vmatprep.subr.bf16.mxu0 0
        %3730 = vmatpush1.bf16.msra.mxu0 0
        %3731 = vmatprep.subr.bf16.mxu0 0
        %3732 = vmatpush1.bf16.msra.mxu0 %v832
        %3733 = vmatprep.subr.bf16.mxu0 0
        %3734 = vmatpush1.bf16.msra.mxu0 %v831
        %3735 = vmatprep.subr.bf16.mxu0 0
        %3736 = vmatpush2.bf16.msra.mxu0 0
        %3737 = vmatprep.subr.bf16.mxu0 0
        %3738 = vmatpush2.bf16.msra.mxu0 0
        %3739 = vmatprep.subr.bf16.mxu0 0
        %3740 = vmatpush2.bf16.msra.mxu0 0
        %3741 = vmatprep.subr.bf16.mxu0 0
        %3742 = vmatpush2.bf16.msra.mxu0 0
        %3743 = vmatprep.subr.bf16.mxu0 0
        %3744 = vmatpush2.bf16.msra.mxu0 0
        %3745 = vmatprep.subr.bf16.mxu0 0
        %3746 = vmatpush2.bf16.msra.mxu0 0
        %3747 = vmatprep.subr.bf16.mxu0 0
        %3748 = vmatpush2.bf16.msra.mxu0 0
        %3749 = vmatprep.subr.bf16.mxu0 0
        %3750 = vmatpush2.bf16.msra.mxu0 0
        %3751 = vmatprep.mubr.bf16.mxu0 0
        %3752 = vmatmul.mubr.bf16.gmra.mxu0 %v3677
        %v3753 = vpop.f32.mrf.mxu0
        %v3754 = vadd.f32 %v822, %v3753
        %v3755 = vpop.f32.mrf.mxu0
        %v3756 = vpop.f32.mrf.mxu0
        %v3757 = vpop.f32.mrf.mxu0
        %3758 = vdwg.mxu0
        %3759 = vmatprep.subr.bf16.mxu0 0
        %3760 = vmatpush1.bf16.msra.mxu0 0
        %3761 = vmatprep.subr.bf16.mxu0 0
        %3762 = vmatpush1.bf16.msra.mxu0 0
        %3763 = vmatprep.subr.bf16.mxu0 0
        %3764 = vmatpush1.bf16.msra.mxu0 0
        %3765 = vmatprep.subr.bf16.mxu0 0
        %3766 = vmatpush1.bf16.msra.mxu0 0
        %3767 = vmatprep.subr.bf16.mxu0 0
        %3768 = vmatpush1.bf16.msra.mxu0 0
        %3769 = vmatprep.subr.bf16.mxu0 0
        %3770 = vmatpush1.bf16.msra.mxu0 0
        %3771 = vmatprep.subr.bf16.mxu0 0
        %3772 = vmatpush1.bf16.msra.mxu0 %v897
        %3773 = vmatprep.subr.bf16.mxu0 0
        %3774 = vmatpush1.bf16.msra.mxu0 %v896
        %3775 = vmatprep.subr.bf16.mxu0 0
        %3776 = vmatpush2.bf16.msra.mxu0 0
        %3777 = vmatprep.subr.bf16.mxu0 0
        %3778 = vmatpush2.bf16.msra.mxu0 0
        %3779 = vmatprep.subr.bf16.mxu0 0
        %3780 = vmatpush2.bf16.msra.mxu0 0
        %3781 = vmatprep.subr.bf16.mxu0 0
        %3782 = vmatpush2.bf16.msra.mxu0 0
        %3783 = vmatprep.subr.bf16.mxu0 0
        %3784 = vmatpush2.bf16.msra.mxu0 0
        %3785 = vmatprep.subr.bf16.mxu0 0
        %3786 = vmatpush2.bf16.msra.mxu0 0
        %3787 = vmatprep.subr.bf16.mxu0 0
        %3788 = vmatpush2.bf16.msra.mxu0 0
        %3789 = vmatprep.subr.bf16.mxu0 0
        %3790 = vmatpush2.bf16.msra.mxu0 0
        %3791 = vmatprep.mubr.bf16.mxu0 0
        %3792 = vmatmul.mubr.bf16.gmra.mxu0 %v3677
        %v3793 = vpop.f32.mrf.mxu0
        %v3794 = vadd.f32 %v887, %v3793
        %v3795 = vpop.f32.mrf.mxu0
        %v3796 = vpop.f32.mrf.mxu0
        %v3797 = vpop.f32.mrf.mxu0
        %3798 = vdwg.mxu0
        %v3799 = vpack.c.bf16 %v3754, %v3754
        %v3800 = vpack.c.bf16 %v3794, %v3794
        %v3801 = vmul.f32 %v3714, %v660
        %v3802 = vpack.c.bf16 %v3801, %v3801
        %v3804 = vsel %vm676, %v3802, 0
        %v3807 = vsel %vm676, %v3799, 0
        %3809 = vmatprep.subr.bf16.mxu0 0
        %3810 = vmatpush1.bf16.xpose.msra.mxu0 0
        %3811 = vmatprep.subr.bf16.mxu0 0
        %3812 = vmatpush1.bf16.xpose.msra.mxu0 0
        %3813 = vmatprep.subr.bf16.mxu0 0
        %3814 = vmatpush1.bf16.xpose.msra.mxu0 0
        %3815 = vmatprep.subr.bf16.mxu0 0
        %3816 = vmatpush1.bf16.xpose.msra.mxu0 0
        %3817 = vmatprep.subr.bf16.mxu0 0
        %3818 = vmatpush1.bf16.xpose.msra.mxu0 0
        %3819 = vmatprep.subr.bf16.mxu0 0
        %3820 = vmatpush1.bf16.xpose.msra.mxu0 0
        %3821 = vmatprep.subr.bf16.mxu0 0
        %3822 = vmatpush1.bf16.xpose.msra.mxu0 0
        %3823 = vmatprep.subr.bf16.mxu0 0
        %3824 = vmatpush1.bf16.xpose.msra.mxu0 %v3807
        %3825 = vmatprep.subr.bf16.mxu0 0
        %3826 = vmatpush2.bf16.xpose.msra.mxu0 0
        %3827 = vmatprep.subr.bf16.mxu0 0
        %3828 = vmatpush2.bf16.xpose.msra.mxu0 0
        %3829 = vmatprep.subr.bf16.mxu0 0
        %3830 = vmatpush2.bf16.xpose.msra.mxu0 0
        %3831 = vmatprep.subr.bf16.mxu0 0
        %3832 = vmatpush2.bf16.xpose.msra.mxu0 0
        %3833 = vmatprep.subr.bf16.mxu0 0
        %3834 = vmatpush2.bf16.xpose.msra.mxu0 0
        %3835 = vmatprep.subr.bf16.mxu0 0
        %3836 = vmatpush2.bf16.xpose.msra.mxu0 0
        %3837 = vmatprep.subr.bf16.mxu0 0
        %3838 = vmatpush2.bf16.xpose.msra.mxu0 0
        %3839 = vmatprep.subr.bf16.mxu0 0
        %3840 = vmatpush2.bf16.xpose.msra.mxu0 0
        %3841 = vmatprep.mubr.bf16.mxu0 0
        %3842 = vmatmul.mubr.bf16.gmra.mxu0 %v3804
        %v3843 = vpop.f32.mrf.mxu0
        %v3844 = vadd.f32 0.0, %v3843
        %v3845 = vpop.f32.mrf.mxu0
        %v3846 = vpop.f32.mrf.mxu0
        %v3847 = vpop.f32.mrf.mxu0
        %3848 = vdwg.mxu0
        %v3849 = vmul.f32 %v3844, 0.35355338
        %v3850 = vsel %vm519, %v3849, -inf
        %3851 = vmax.xlane.f32.xlu0 %v3850
        %v3852 = vpop.xlane.xlu0 %3851
        %v3853 = vsub.f32 %v3849, %v3852
        %v3854 = vmul.f32 %v3853, 1.442695
        %v3855 = vpow.pop %v3854
        %v3856 = vsel %vm519, %v3855, 0.0
        %3857 = vadd.xlane.f32.xlu0 %v3856
        %v3858 = vpop.xlane.xlu0 %3857
        %v3859 = vrcp.pop %v3858
        %v3860 = vmul.f32 %v3855, %v3859
        %v3861 = vpack.c.bf16 %v3860, %v3860
        %v3863 = vsel %vm519, %v3861, 0
        %v3866 = vsel %vm523, %v3800, 0
        %3868 = vmatprep.subr.bf16.mxu0 0
        %3869 = vmatpush1.bf16.msra.mxu0 0
        %3870 = vmatprep.subr.bf16.mxu0 0
        %3871 = vmatpush1.bf16.msra.mxu0 0
        %3872 = vmatprep.subr.bf16.mxu0 0
        %3873 = vmatpush1.bf16.msra.mxu0 0
        %3874 = vmatprep.subr.bf16.mxu0 0
        %3875 = vmatpush1.bf16.msra.mxu0 0
        %3876 = vmatprep.subr.bf16.mxu0 0
        %3877 = vmatpush1.bf16.msra.mxu0 0
        %3878 = vmatprep.subr.bf16.mxu0 0
        %3879 = vmatpush1.bf16.msra.mxu0 0
        %3880 = vmatprep.subr.bf16.mxu0 0
        %3881 = vmatpush1.bf16.msra.mxu0 0
        %3882 = vmatprep.subr.bf16.mxu0 0
        %3883 = vmatpush1.bf16.msra.mxu0 %v3866
        %3884 = vmatprep.subr.bf16.mxu0 0
        %3885 = vmatpush2.bf16.msra.mxu0 0
        %3886 = vmatprep.subr.bf16.mxu0 0
        %3887 = vmatpush2.bf16.msra.mxu0 0
        %3888 = vmatprep.subr.bf16.mxu0 0
        %3889 = vmatpush2.bf16.msra.mxu0 0
        %3890 = vmatprep.subr.bf16.mxu0 0
        %3891 = vmatpush2.bf16.msra.mxu0 0
        %3892 = vmatprep.subr.bf16.mxu0 0
        %3893 = vmatpush2.bf16.msra.mxu0 0
        %3894 = vmatprep.subr.bf16.mxu0 0
        %3895 = vmatpush2.bf16.msra.mxu0 0
        %3896 = vmatprep.subr.bf16.mxu0 0
        %3897 = vmatpush2.bf16.msra.mxu0 0
        %3898 = vmatprep.subr.bf16.mxu0 0
        %3899 = vmatpush2.bf16.msra.mxu0 0
        %3900 = vmatprep.mubr.bf16.mxu0 0
        %3901 = vmatmul.mubr.bf16.gmra.mxu0 %v3863
        %v3902 = vpop.f32.mrf.mxu0
        %v3903 = vadd.f32 0.0, %v3902
        %v3904 = vpop.f32.mrf.mxu0
        %v3905 = vpop.f32.mrf.mxu0
        %v3906 = vpop.f32.mrf.mxu0
        %3907 = vdwg.mxu0
        %v3908 = vmul.f32 %v3903, %v660
        %v3909 = vadd.f32 %v3908, 0.0
        %v3910 = vmul.f32 %v3714, %v665
        %v3911 = vpack.c.bf16 %v3910, %v3910
        %v3913 = vsel %vm676, %v3911, 0
        %3915 = vmatprep.subr.bf16.mxu0 0
        %3916 = vmatpush1.bf16.xpose.msra.mxu0 0
        %3917 = vmatprep.subr.bf16.mxu0 0
        %3918 = vmatpush1.bf16.xpose.msra.mxu0 0
        %3919 = vmatprep.subr.bf16.mxu0 0
        %3920 = vmatpush1.bf16.xpose.msra.mxu0 0
        %3921 = vmatprep.subr.bf16.mxu0 0
        %3922 = vmatpush1.bf16.xpose.msra.mxu0 0
        %3923 = vmatprep.subr.bf16.mxu0 0
        %3924 = vmatpush1.bf16.xpose.msra.mxu0 0
        %3925 = vmatprep.subr.bf16.mxu0 0
        %3926 = vmatpush1.bf16.xpose.msra.mxu0 0
        %3927 = vmatprep.subr.bf16.mxu0 0
        %3928 = vmatpush1.bf16.xpose.msra.mxu0 0
        %3929 = vmatprep.subr.bf16.mxu0 0
        %3930 = vmatpush1.bf16.xpose.msra.mxu0 %v3807
        %3931 = vmatprep.subr.bf16.mxu0 0
        %3932 = vmatpush2.bf16.xpose.msra.mxu0 0
        %3933 = vmatprep.subr.bf16.mxu0 0
        %3934 = vmatpush2.bf16.xpose.msra.mxu0 0
        %3935 = vmatprep.subr.bf16.mxu0 0
        %3936 = vmatpush2.bf16.xpose.msra.mxu0 0
        %3937 = vmatprep.subr.bf16.mxu0 0
        %3938 = vmatpush2.bf16.xpose.msra.mxu0 0
        %3939 = vmatprep.subr.bf16.mxu0 0
        %3940 = vmatpush2.bf16.xpose.msra.mxu0 0
        %3941 = vmatprep.subr.bf16.mxu0 0
        %3942 = vmatpush2.bf16.xpose.msra.mxu0 0
        %3943 = vmatprep.subr.bf16.mxu0 0
        %3944 = vmatpush2.bf16.xpose.msra.mxu0 0
        %3945 = vmatprep.subr.bf16.mxu0 0
        %3946 = vmatpush2.bf16.xpose.msra.mxu0 0
        %3947 = vmatprep.mubr.bf16.mxu0 0
        %3948 = vmatmul.mubr.bf16.gmra.mxu0 %v3913
        %v3949 = vpop.f32.mrf.mxu0
        %v3950 = vadd.f32 0.0, %v3949
        %v3951 = vpop.f32.mrf.mxu0
        %v3952 = vpop.f32.mrf.mxu0
        %v3953 = vpop.f32.mrf.mxu0
        %3954 = vdwg.mxu0
        %v3955 = vmul.f32 %v3950, 0.35355338
        %v3956 = vsel %vm519, %v3955, -inf
        %3957 = vmax.xlane.f32.xlu0 %v3956
        %v3958 = vpop.xlane.xlu0 %3957
        %v3959 = vsub.f32 %v3955, %v3958
        %v3960 = vmul.f32 %v3959, 1.442695
        %v3961 = vpow.pop %v3960
        %v3962 = vsel %vm519, %v3961, 0.0
        %3963 = vadd.xlane.f32.xlu0 %v3962
        %v3964 = vpop.xlane.xlu0 %3963
        %v3965 = vrcp.pop %v3964
        %v3966 = vmul.f32 %v3961, %v3965
        %v3967 = vpack.c.bf16 %v3966, %v3966
        %v3969 = vsel %vm519, %v3967, 0
        %3971 = vmatprep.subr.bf16.mxu0 0
        %3972 = vmatpush1.bf16.msra.mxu0 0
        %3973 = vmatprep.subr.bf16.mxu0 0
        %3974 = vmatpush1.bf16.msra.mxu0 0
        %3975 = vmatprep.subr.bf16.mxu0 0
        %3976 = vmatpush1.bf16.msra.mxu0 0
        %3977 = vmatprep.subr.bf16.mxu0 0
        %3978 = vmatpush1.bf16.msra.mxu0 0
        %3979 = vmatprep.subr.bf16.mxu0 0
        %3980 = vmatpush1.bf16.msra.mxu0 0
        %3981 = vmatprep.subr.bf16.mxu0 0
        %3982 = vmatpush1.bf16.msra.mxu0 0
        %3983 = vmatprep.subr.bf16.mxu0 0
        %3984 = vmatpush1.bf16.msra.mxu0 0
        %3985 = vmatprep.subr.bf16.mxu0 0
        %3986 = vmatpush1.bf16.msra.mxu0 %v3866
        %3987 = vmatprep.subr.bf16.mxu0 0
        %3988 = vmatpush2.bf16.msra.mxu0 0
        %3989 = vmatprep.subr.bf16.mxu0 0
        %3990 = vmatpush2.bf16.msra.mxu0 0
        %3991 = vmatprep.subr.bf16.mxu0 0
        %3992 = vmatpush2.bf16.msra.mxu0 0
        %3993 = vmatprep.subr.bf16.mxu0 0
        %3994 = vmatpush2.bf16.msra.mxu0 0
        %3995 = vmatprep.subr.bf16.mxu0 0
        %3996 = vmatpush2.bf16.msra.mxu0 0
        %3997 = vmatprep.subr.bf16.mxu0 0
        %3998 = vmatpush2.bf16.msra.mxu0 0
        %3999 = vmatprep.subr.bf16.mxu0 0
        %4000 = vmatpush2.bf16.msra.mxu0 0
        %4001 = vmatprep.subr.bf16.mxu0 0
        %4002 = vmatpush2.bf16.msra.mxu0 0
        %4003 = vmatprep.mubr.bf16.mxu0 0
        %4004 = vmatmul.mubr.bf16.gmra.mxu0 %v3969
        %v4005 = vpop.f32.mrf.mxu0
        %v4006 = vadd.f32 0.0, %v4005
        %v4007 = vpop.f32.mrf.mxu0
        %v4008 = vpop.f32.mrf.mxu0
        %v4009 = vpop.f32.mrf.mxu0
        %4010 = vdwg.mxu0
        %v4011 = vmul.f32 %v4006, %v665
        %v4012 = vadd.f32 %v3909, %v4011
        %v4013 = vmul.f32 %v3714, %v670
        %v4014 = vpack.c.bf16 %v4013, %v4013
        %v4016 = vsel %vm676, %v4014, 0
        %4018 = vmatprep.subr.bf16.mxu0 0
        %4019 = vmatpush1.bf16.xpose.msra.mxu0 0
        %4020 = vmatprep.subr.bf16.mxu0 0
        %4021 = vmatpush1.bf16.xpose.msra.mxu0 0
        %4022 = vmatprep.subr.bf16.mxu0 0
        %4023 = vmatpush1.bf16.xpose.msra.mxu0 0
        %4024 = vmatprep.subr.bf16.mxu0 0
        %4025 = vmatpush1.bf16.xpose.msra.mxu0 0
        %4026 = vmatprep.subr.bf16.mxu0 0
        %4027 = vmatpush1.bf16.xpose.msra.mxu0 0
        %4028 = vmatprep.subr.bf16.mxu0 0
        %4029 = vmatpush1.bf16.xpose.msra.mxu0 0
        %4030 = vmatprep.subr.bf16.mxu0 0
        %4031 = vmatpush1.bf16.xpose.msra.mxu0 0
        %4032 = vmatprep.subr.bf16.mxu0 0
        %4033 = vmatpush1.bf16.xpose.msra.mxu0 %v3807
        %4034 = vmatprep.subr.bf16.mxu0 0
        %4035 = vmatpush2.bf16.xpose.msra.mxu0 0
        %4036 = vmatprep.subr.bf16.mxu0 0
        %4037 = vmatpush2.bf16.xpose.msra.mxu0 0
        %4038 = vmatprep.subr.bf16.mxu0 0
        %4039 = vmatpush2.bf16.xpose.msra.mxu0 0
        %4040 = vmatprep.subr.bf16.mxu0 0
        %4041 = vmatpush2.bf16.xpose.msra.mxu0 0
        %4042 = vmatprep.subr.bf16.mxu0 0
        %4043 = vmatpush2.bf16.xpose.msra.mxu0 0
        %4044 = vmatprep.subr.bf16.mxu0 0
        %4045 = vmatpush2.bf16.xpose.msra.mxu0 0
        %4046 = vmatprep.subr.bf16.mxu0 0
        %4047 = vmatpush2.bf16.xpose.msra.mxu0 0
        %4048 = vmatprep.subr.bf16.mxu0 0
        %4049 = vmatpush2.bf16.xpose.msra.mxu0 0
        %4050 = vmatprep.mubr.bf16.mxu0 0
        %4051 = vmatmul.mubr.bf16.gmra.mxu0 %v4016
        %v4052 = vpop.f32.mrf.mxu0
        %v4053 = vadd.f32 0.0, %v4052
        %v4054 = vpop.f32.mrf.mxu0
        %v4055 = vpop.f32.mrf.mxu0
        %v4056 = vpop.f32.mrf.mxu0
        %4057 = vdwg.mxu0
        %v4058 = vmul.f32 %v4053, 0.35355338
        %v4059 = vsel %vm519, %v4058, -inf
        %4060 = vmax.xlane.f32.xlu0 %v4059
        %v4061 = vpop.xlane.xlu0 %4060
        %v4062 = vsub.f32 %v4058, %v4061
        %v4063 = vmul.f32 %v4062, 1.442695
        %v4064 = vpow.pop %v4063
        %v4065 = vsel %vm519, %v4064, 0.0
        %4066 = vadd.xlane.f32.xlu0 %v4065
        %v4067 = vpop.xlane.xlu0 %4066
        %v4068 = vrcp.pop %v4067
        %v4069 = vmul.f32 %v4064, %v4068
        %v4070 = vpack.c.bf16 %v4069, %v4069
        %v4072 = vsel %vm519, %v4070, 0
        %4074 = vmatprep.subr.bf16.mxu0 0
        %4075 = vmatpush1.bf16.msra.mxu0 0
        %4076 = vmatprep.subr.bf16.mxu0 0
        %4077 = vmatpush1.bf16.msra.mxu0 0
        %4078 = vmatprep.subr.bf16.mxu0 0
        %4079 = vmatpush1.bf16.msra.mxu0 0
        %4080 = vmatprep.subr.bf16.mxu0 0
        %4081 = vmatpush1.bf16.msra.mxu0 0
        %4082 = vmatprep.subr.bf16.mxu0 0
        %4083 = vmatpush1.bf16.msra.mxu0 0
        %4084 = vmatprep.subr.bf16.mxu0 0
        %4085 = vmatpush1.bf16.msra.mxu0 0
        %4086 = vmatprep.subr.bf16.mxu0 0
        %4087 = vmatpush1.bf16.msra.mxu0 0
        %4088 = vmatprep.subr.bf16.mxu0 0
        %4089 = vmatpush1.bf16.msra.mxu0 %v3866
        %4090 = vmatprep.subr.bf16.mxu0 0
        %4091 = vmatpush2.bf16.msra.mxu0 0
        %4092 = vmatprep.subr.bf16.mxu0 0
        %4093 = vmatpush2.bf16.msra.mxu0 0
        %4094 = vmatprep.subr.bf16.mxu0 0
        %4095 = vmatpush2.bf16.msra.mxu0 0
        %4096 = vmatprep.subr.bf16.mxu0 0
        %4097 = vmatpush2.bf16.msra.mxu0 0
        %4098 = vmatprep.subr.bf16.mxu0 0
        %4099 = vmatpush2.bf16.msra.mxu0 0
        %4100 = vmatprep.subr.bf16.mxu0 0
        %4101 = vmatpush2.bf16.msra.mxu0 0
        %4102 = vmatprep.subr.bf16.mxu0 0
        %4103 = vmatpush2.bf16.msra.mxu0 0
        %4104 = vmatprep.subr.bf16.mxu0 0
        %4105 = vmatpush2.bf16.msra.mxu0 0
        %4106 = vmatprep.mubr.bf16.mxu0 0
        %4107 = vmatmul.mubr.bf16.gmra.mxu0 %v4072
        %v4108 = vpop.f32.mrf.mxu0
        %v4109 = vadd.f32 0.0, %v4108
        %v4110 = vpop.f32.mrf.mxu0
        %v4111 = vpop.f32.mrf.mxu0
        %v4112 = vpop.f32.mrf.mxu0
        %4113 = vdwg.mxu0
        %v4114 = vmul.f32 %v4109, %v670
        %v4115 = vadd.f32 %v4012, %v4114
        %v4116 = vmul.f32 %v3714, %v675
        %v4117 = vpack.c.bf16 %v4116, %v4116
        %v4119 = vsel %vm676, %v4117, 0
        %4121 = vmatprep.subr.bf16.mxu0 0
        %4122 = vmatpush1.bf16.xpose.msra.mxu0 0
        %4123 = vmatprep.subr.bf16.mxu0 0
        %4124 = vmatpush1.bf16.xpose.msra.mxu0 0
        %4125 = vmatprep.subr.bf16.mxu0 0
        %4126 = vmatpush1.bf16.xpose.msra.mxu0 0
        %4127 = vmatprep.subr.bf16.mxu0 0
        %4128 = vmatpush1.bf16.xpose.msra.mxu0 0
        %4129 = vmatprep.subr.bf16.mxu0 0
        %4130 = vmatpush1.bf16.xpose.msra.mxu0 0
        %4131 = vmatprep.subr.bf16.mxu0 0
        %4132 = vmatpush1.bf16.xpose.msra.mxu0 0
        %4133 = vmatprep.subr.bf16.mxu0 0
        %4134 = vmatpush1.bf16.xpose.msra.mxu0 0
        %4135 = vmatprep.subr.bf16.mxu0 0
        %4136 = vmatpush1.bf16.xpose.msra.mxu0 %v3807
        %4137 = vmatprep.subr.bf16.mxu0 0
        %4138 = vmatpush2.bf16.xpose.msra.mxu0 0
        %4139 = vmatprep.subr.bf16.mxu0 0
        %4140 = vmatpush2.bf16.xpose.msra.mxu0 0
        %4141 = vmatprep.subr.bf16.mxu0 0
        %4142 = vmatpush2.bf16.xpose.msra.mxu0 0
        %4143 = vmatprep.subr.bf16.mxu0 0
        %4144 = vmatpush2.bf16.xpose.msra.mxu0 0
        %4145 = vmatprep.subr.bf16.mxu0 0
        %4146 = vmatpush2.bf16.xpose.msra.mxu0 0
        %4147 = vmatprep.subr.bf16.mxu0 0
        %4148 = vmatpush2.bf16.xpose.msra.mxu0 0
        %4149 = vmatprep.subr.bf16.mxu0 0
        %4150 = vmatpush2.bf16.xpose.msra.mxu0 0
        %4151 = vmatprep.subr.bf16.mxu0 0
        %4152 = vmatpush2.bf16.xpose.msra.mxu0 0
        %4153 = vmatprep.mubr.bf16.mxu0 0
        %4154 = vmatmul.mubr.bf16.gmra.mxu0 %v4119
        %v4155 = vpop.f32.mrf.mxu0
        %v4156 = vadd.f32 0.0, %v4155
        %v4157 = vpop.f32.mrf.mxu0
        %v4158 = vpop.f32.mrf.mxu0
        %v4159 = vpop.f32.mrf.mxu0
        %4160 = vdwg.mxu0
        %v4161 = vmul.f32 %v4156, 0.35355338
        %v4162 = vsel %vm519, %v4161, -inf
        %4163 = vmax.xlane.f32.xlu0 %v4162
        %v4164 = vpop.xlane.xlu0 %4163
        %v4165 = vsub.f32 %v4161, %v4164
        %v4166 = vmul.f32 %v4165, 1.442695
        %v4167 = vpow.pop %v4166
        %v4168 = vsel %vm519, %v4167, 0.0
        %4169 = vadd.xlane.f32.xlu0 %v4168
        %v4170 = vpop.xlane.xlu0 %4169
        %v4171 = vrcp.pop %v4170
        %v4172 = vmul.f32 %v4167, %v4171
        %v4173 = vpack.c.bf16 %v4172, %v4172
        %v4175 = vsel %vm519, %v4173, 0
        %4177 = vmatprep.subr.bf16.mxu0 0
        %4178 = vmatpush1.bf16.msra.mxu0 0
        %4179 = vmatprep.subr.bf16.mxu0 0
        %4180 = vmatpush1.bf16.msra.mxu0 0
        %4181 = vmatprep.subr.bf16.mxu0 0
        %4182 = vmatpush1.bf16.msra.mxu0 0
        %4183 = vmatprep.subr.bf16.mxu0 0
        %4184 = vmatpush1.bf16.msra.mxu0 0
        %4185 = vmatprep.subr.bf16.mxu0 0
        %4186 = vmatpush1.bf16.msra.mxu0 0
        %4187 = vmatprep.subr.bf16.mxu0 0
        %4188 = vmatpush1.bf16.msra.mxu0 0
        %4189 = vmatprep.subr.bf16.mxu0 0
        %4190 = vmatpush1.bf16.msra.mxu0 0
        %4191 = vmatprep.subr.bf16.mxu0 0
        %4192 = vmatpush1.bf16.msra.mxu0 %v3866
        %4193 = vmatprep.subr.bf16.mxu0 0
        %4194 = vmatpush2.bf16.msra.mxu0 0
        %4195 = vmatprep.subr.bf16.mxu0 0
        %4196 = vmatpush2.bf16.msra.mxu0 0
        %4197 = vmatprep.subr.bf16.mxu0 0
        %4198 = vmatpush2.bf16.msra.mxu0 0
        %4199 = vmatprep.subr.bf16.mxu0 0
        %4200 = vmatpush2.bf16.msra.mxu0 0
        %4201 = vmatprep.subr.bf16.mxu0 0
        %4202 = vmatpush2.bf16.msra.mxu0 0
        %4203 = vmatprep.subr.bf16.mxu0 0
        %4204 = vmatpush2.bf16.msra.mxu0 0
        %4205 = vmatprep.subr.bf16.mxu0 0
        %4206 = vmatpush2.bf16.msra.mxu0 0
        %4207 = vmatprep.subr.bf16.mxu0 0
        %4208 = vmatpush2.bf16.msra.mxu0 0
        %4209 = vmatprep.mubr.bf16.mxu0 0
        %4210 = vmatmul.mubr.bf16.gmra.mxu0 %v4175
        %v4211 = vpop.f32.mrf.mxu0
        %v4212 = vadd.f32 0.0, %v4211
        %v4213 = vpop.f32.mrf.mxu0
        %v4214 = vpop.f32.mrf.mxu0
        %v4215 = vpop.f32.mrf.mxu0
        %4216 = vdwg.mxu0
        %v4217 = vmul.f32 %v4212, %v675
        %v4218 = vadd.f32 %v4115, %v4217
        %v4219 = vpack.c.bf16 %v4218, %v4218
        %v4221 = vsel %vm676, %v4219, 0
        %4223 = vmatprep.subr.bf16.mxu0 0
        %4224 = vmatpush1.bf16.msra.mxu0 0
        %4225 = vmatprep.subr.bf16.mxu0 0
        %4226 = vmatpush1.bf16.msra.mxu0 0
        %4227 = vmatprep.subr.bf16.mxu0 0
        %4228 = vmatpush1.bf16.msra.mxu0 0
        %4229 = vmatprep.subr.bf16.mxu0 0
        %4230 = vmatpush1.bf16.msra.mxu0 0
        %4231 = vmatprep.subr.bf16.mxu0 0
        %4232 = vmatpush1.bf16.msra.mxu0 0
        %4233 = vmatprep.subr.bf16.mxu0 0
        %4234 = vmatpush1.bf16.msra.mxu0 0
        %4235 = vmatprep.subr.bf16.mxu0 0
        %4236 = vmatpush1.bf16.msra.mxu0 %v1935
        %4237 = vmatprep.subr.bf16.mxu0 0
        %4238 = vmatpush1.bf16.msra.mxu0 %v1934
        %4239 = vmatprep.subr.bf16.mxu0 0
        %4240 = vmatpush2.bf16.msra.mxu0 0
        %4241 = vmatprep.subr.bf16.mxu0 0
        %4242 = vmatpush2.bf16.msra.mxu0 0
        %4243 = vmatprep.subr.bf16.mxu0 0
        %4244 = vmatpush2.bf16.msra.mxu0 0
        %4245 = vmatprep.subr.bf16.mxu0 0
        %4246 = vmatpush2.bf16.msra.mxu0 0
        %4247 = vmatprep.subr.bf16.mxu0 0
        %4248 = vmatpush2.bf16.msra.mxu0 0
        %4249 = vmatprep.subr.bf16.mxu0 0
        %4250 = vmatpush2.bf16.msra.mxu0 0
        %4251 = vmatprep.subr.bf16.mxu0 0
        %4252 = vmatpush2.bf16.msra.mxu0 0
        %4253 = vmatprep.subr.bf16.mxu0 0
        %4254 = vmatpush2.bf16.msra.mxu0 0
        %4255 = vmatprep.mubr.bf16.mxu0 0
        %4256 = vmatmul.mubr.bf16.gmra.mxu0 %v4221
        %v4257 = vpop.f32.mrf.mxu0
        %v4258 = vadd.f32 %v1925, %v4257
        %v4259 = vpop.f32.mrf.mxu0
        %v4260 = vpop.f32.mrf.mxu0
        %v4261 = vpop.f32.mrf.mxu0
        %4262 = vdwg.mxu0
        %v4263 = vadd.f32 %v625, %v4258
        %v4264 = vsel %vm676, %v4263, 0.0
        %4265 = vadd.xlane.f32.xlu0 %v4264
        %v4266 = vpop.xlane.xlu0 %4265
        %v4267 = vmul.f32 %v4266, %v689
        %v4268 = vsub.f32 %v4263, %v4267
        %v4269 = vmul.f32 %v4268, %v4268
        %v4270 = vsel %vm676, %v4269, 0.0
        %4271 = vadd.xlane.f32.xlu0 %v4270
        %v4272 = vpop.xlane.xlu0 %4271
        %v4273 = vmul.f32 %v4272, %v689
        %v4274 = vadd.f32 %v4273, 1e-05
        %v4275 = vrsqrt.pop %v4274
        %v4276 = vmul.f32 %v4268, %v4275
        %v4277 = vmul.f32 %v4276, %v2052
        %v4278 = vadd.f32 %v4277, %v2060
        %v4279 = vpack.c.bf16 %v4278, %v4278
        %v4281 = vsel %vm676, %v4279, 0
        %4283 = vmatprep.subr.bf16.mxu0 0
        %4284 = vmatpush1.bf16.msra.mxu0 0
        %4285 = vmatprep.subr.bf16.mxu0 0
        %4286 = vmatpush1.bf16.msra.mxu0 0
        %4287 = vmatprep.subr.bf16.mxu0 0
        %4288 = vmatpush1.bf16.msra.mxu0 0
        %4289 = vmatprep.subr.bf16.mxu0 0
        %4290 = vmatpush1.bf16.msra.mxu0 0
        %4291 = vmatprep.subr.bf16.mxu0 0
        %4292 = vmatpush1.bf16.msra.mxu0 0
        %4293 = vmatprep.subr.bf16.mxu0 0
        %4294 = vmatpush1.bf16.msra.mxu0 0
        %4295 = vmatprep.subr.bf16.mxu0 0
        %4296 = vmatpush1.bf16.msra.mxu0 %v2080
        %4297 = vmatprep.subr.bf16.mxu0 0
        %4298 = vmatpush1.bf16.msra.mxu0 %v2079
        %4299 = vmatprep.subr.bf16.mxu0 0
        %4300 = vmatpush2.bf16.msra.mxu0 0
        %4301 = vmatprep.subr.bf16.mxu0 0
        %4302 = vmatpush2.bf16.msra.mxu0 0
        %4303 = vmatprep.subr.bf16.mxu0 0
        %4304 = vmatpush2.bf16.msra.mxu0 0
        %4305 = vmatprep.subr.bf16.mxu0 0
        %4306 = vmatpush2.bf16.msra.mxu0 0
        %4307 = vmatprep.subr.bf16.mxu0 0
        %4308 = vmatpush2.bf16.msra.mxu0 0
        %4309 = vmatprep.subr.bf16.mxu0 0
        %4310 = vmatpush2.bf16.msra.mxu0 0
        %4311 = vmatprep.subr.bf16.mxu0 0
        %4312 = vmatpush2.bf16.msra.mxu0 0
        %4313 = vmatprep.subr.bf16.mxu0 0
        %4314 = vmatpush2.bf16.msra.mxu0 0
        %4315 = vmatprep.mubr.bf16.mxu0 0
        %4316 = vmatmul.mubr.bf16.gmra.mxu0 %v4281
        %v4317 = vpop.f32.mrf.mxu0
        %v4318 = vadd.f32 %v2070, %v4317
        %v4319 = vpop.f32.mrf.mxu0
        %v4320 = vpop.f32.mrf.mxu0
        %v4321 = vpop.f32.mrf.mxu0
        %4322 = vdwg.mxu0
        %v4323 = vmax.f32 %v4318, 0.0
        %v4324 = vpack.c.bf16 %v4323, %v4323
        %v4326 = vsel %vm2172, %v4324, 0
        %4328 = vmatprep.subr.bf16.mxu0 0
        %4329 = vmatpush1.bf16.msra.mxu0 0
        %4330 = vmatprep.subr.bf16.mxu0 0
        %4331 = vmatpush1.bf16.msra.mxu0 0
        %4332 = vmatprep.subr.bf16.mxu0 0
        %4333 = vmatpush1.bf16.msra.mxu0 0
        %4334 = vmatprep.subr.bf16.mxu0 0
        %4335 = vmatpush1.bf16.msra.mxu0 0
        %4336 = vmatprep.subr.bf16.mxu0 0
        %4337 = vmatpush1.bf16.msra.mxu0 %v2167
        %4338 = vmatprep.subr.bf16.mxu0 0
        %4339 = vmatpush1.bf16.msra.mxu0 %v2166
        %4340 = vmatprep.subr.bf16.mxu0 0
        %4341 = vmatpush1.bf16.msra.mxu0 %v2165
        %4342 = vmatprep.subr.bf16.mxu0 0
        %4343 = vmatpush1.bf16.msra.mxu0 %v2164
        %4344 = vmatprep.subr.bf16.mxu0 0
        %4345 = vmatpush2.bf16.msra.mxu0 0
        %4346 = vmatprep.subr.bf16.mxu0 0
        %4347 = vmatpush2.bf16.msra.mxu0 0
        %4348 = vmatprep.subr.bf16.mxu0 0
        %4349 = vmatpush2.bf16.msra.mxu0 0
        %4350 = vmatprep.subr.bf16.mxu0 0
        %4351 = vmatpush2.bf16.msra.mxu0 0
        %4352 = vmatprep.subr.bf16.mxu0 0
        %4353 = vmatpush2.bf16.msra.mxu0 0
        %4354 = vmatprep.subr.bf16.mxu0 0
        %4355 = vmatpush2.bf16.msra.mxu0 0
        %4356 = vmatprep.subr.bf16.mxu0 0
        %4357 = vmatpush2.bf16.msra.mxu0 0
        %4358 = vmatprep.subr.bf16.mxu0 0
        %4359 = vmatpush2.bf16.msra.mxu0 0
        %4360 = vmatprep.mubr.bf16.mxu0 0
        %4361 = vmatmul.mubr.bf16.gmra.mxu0 %v4326
        %v4362 = vpop.f32.mrf.mxu0
        %v4363 = vadd.f32 %v2147, %v4362
        %v4364 = vpop.f32.mrf.mxu0
        %v4365 = vpop.f32.mrf.mxu0
        %v4366 = vpop.f32.mrf.mxu0
        %4367 = vdwg.mxu0
        %v4368 = vadd.f32 %v4263, %v4363
        %v4369 = vsel %vm676, %v4368, 0.0
        %4370 = vadd.xlane.f32.xlu0 %v4369
        %v4371 = vpop.xlane.xlu0 %4370
        %v4372 = vmul.f32 %v4371, %v689
        %v4373 = vsub.f32 %v4368, %v4372
        %v4374 = vmul.f32 %v4373, %v4373
        %v4375 = vsel %vm676, %v4374, 0.0
        %4376 = vadd.xlane.f32.xlu0 %v4375
        %v4377 = vpop.xlane.xlu0 %4376
        %v4378 = vmul.f32 %v4377, %v689
        %v4379 = vadd.f32 %v4378, 1e-05
        %v4380 = vrsqrt.pop %v4379
        %v4381 = vmul.f32 %v4373, %v4380
        %v4382 = vmul.f32 %v4381, %v733
        %v4383 = vadd.f32 %v4382, %v741
        %v4384 = vpack.c.bf16 %v4383, %v4383
        %v4386 = vsel %vm676, %v4384, 0
        %4388 = vmatprep.subr.bf16.mxu0 0
        %4389 = vmatpush1.bf16.msra.mxu0 0
        %4390 = vmatprep.subr.bf16.mxu0 0
        %4391 = vmatpush1.bf16.msra.mxu0 0
        %4392 = vmatprep.subr.bf16.mxu0 0
        %4393 = vmatpush1.bf16.msra.mxu0 0
        %4394 = vmatprep.subr.bf16.mxu0 0
        %4395 = vmatpush1.bf16.msra.mxu0 0
        %4396 = vmatprep.subr.bf16.mxu0 0
        %4397 = vmatpush1.bf16.msra.mxu0 0
        %4398 = vmatprep.subr.bf16.mxu0 0
        %4399 = vmatpush1.bf16.msra.mxu0 0
        %4400 = vmatprep.subr.bf16.mxu0 0
        %4401 = vmatpush1.bf16.msra.mxu0 %v761
        %4402 = vmatprep.subr.bf16.mxu0 0
        %4403 = vmatpush1.bf16.msra.mxu0 %v760
        %4404 = vmatprep.subr.bf16.mxu0 0
        %4405 = vmatpush2.bf16.msra.mxu0 0
        %4406 = vmatprep.subr.bf16.mxu0 0
        %4407 = vmatpush2.bf16.msra.mxu0 0
        %4408 = vmatprep.subr.bf16.mxu0 0
        %4409 = vmatpush2.bf16.msra.mxu0 0
        %4410 = vmatprep.subr.bf16.mxu0 0
        %4411 = vmatpush2.bf16.msra.mxu0 0
        %4412 = vmatprep.subr.bf16.mxu0 0
        %4413 = vmatpush2.bf16.msra.mxu0 0
        %4414 = vmatprep.subr.bf16.mxu0 0
        %4415 = vmatpush2.bf16.msra.mxu0 0
        %4416 = vmatprep.subr.bf16.mxu0 0
        %4417 = vmatpush2.bf16.msra.mxu0 0
        %4418 = vmatprep.subr.bf16.mxu0 0
        %4419 = vmatpush2.bf16.msra.mxu0 0
        %4420 = vmatprep.mubr.bf16.mxu0 0
        %4421 = vmatmul.mubr.bf16.gmra.mxu0 %v4386
        %v4422 = vpop.f32.mrf.mxu0
        %v4423 = vadd.f32 %v751, %v4422
        %v4424 = vpop.f32.mrf.mxu0
        %v4425 = vpop.f32.mrf.mxu0
        %v4426 = vpop.f32.mrf.mxu0
        %4427 = vdwg.mxu0
        %4428 = vmatprep.subr.bf16.mxu0 0
        %4429 = vmatpush1.bf16.msra.mxu0 0
        %4430 = vmatprep.subr.bf16.mxu0 0
        %4431 = vmatpush1.bf16.msra.mxu0 0
        %4432 = vmatprep.subr.bf16.mxu0 0
        %4433 = vmatpush1.bf16.msra.mxu0 0
        %4434 = vmatprep.subr.bf16.mxu0 0
        %4435 = vmatpush1.bf16.msra.mxu0 0
        %4436 = vmatprep.subr.bf16.mxu0 0
        %4437 = vmatpush1.bf16.msra.mxu0 0
        %4438 = vmatprep.subr.bf16.mxu0 0
        %4439 = vmatpush1.bf16.msra.mxu0 0
        %4440 = vmatprep.subr.bf16.mxu0 0
        %4441 = vmatpush1.bf16.msra.mxu0 %v832
        %4442 = vmatprep.subr.bf16.mxu0 0
        %4443 = vmatpush1.bf16.msra.mxu0 %v831
        %4444 = vmatprep.subr.bf16.mxu0 0
        %4445 = vmatpush2.bf16.msra.mxu0 0
        %4446 = vmatprep.subr.bf16.mxu0 0
        %4447 = vmatpush2.bf16.msra.mxu0 0
        %4448 = vmatprep.subr.bf16.mxu0 0
        %4449 = vmatpush2.bf16.msra.mxu0 0
        %4450 = vmatprep.subr.bf16.mxu0 0
        %4451 = vmatpush2.bf16.msra.mxu0 0
        %4452 = vmatprep.subr.bf16.mxu0 0
        %4453 = vmatpush2.bf16.msra.mxu0 0
        %4454 = vmatprep.subr.bf16.mxu0 0
        %4455 = vmatpush2.bf16.msra.mxu0 0
        %4456 = vmatprep.subr.bf16.mxu0 0
        %4457 = vmatpush2.bf16.msra.mxu0 0
        %4458 = vmatprep.subr.bf16.mxu0 0
        %4459 = vmatpush2.bf16.msra.mxu0 0
        %4460 = vmatprep.mubr.bf16.mxu0 0
        %4461 = vmatmul.mubr.bf16.gmra.mxu0 %v4386
        %v4462 = vpop.f32.mrf.mxu0
        %v4463 = vadd.f32 %v822, %v4462
        %v4464 = vpop.f32.mrf.mxu0
        %v4465 = vpop.f32.mrf.mxu0
        %v4466 = vpop.f32.mrf.mxu0
        %4467 = vdwg.mxu0
        %4468 = vmatprep.subr.bf16.mxu0 0
        %4469 = vmatpush1.bf16.msra.mxu0 0
        %4470 = vmatprep.subr.bf16.mxu0 0
        %4471 = vmatpush1.bf16.msra.mxu0 0
        %4472 = vmatprep.subr.bf16.mxu0 0
        %4473 = vmatpush1.bf16.msra.mxu0 0
        %4474 = vmatprep.subr.bf16.mxu0 0
        %4475 = vmatpush1.bf16.msra.mxu0 0
        %4476 = vmatprep.subr.bf16.mxu0 0
        %4477 = vmatpush1.bf16.msra.mxu0 0
        %4478 = vmatprep.subr.bf16.mxu0 0
        %4479 = vmatpush1.bf16.msra.mxu0 0
        %4480 = vmatprep.subr.bf16.mxu0 0
        %4481 = vmatpush1.bf16.msra.mxu0 %v897
        %4482 = vmatprep.subr.bf16.mxu0 0
        %4483 = vmatpush1.bf16.msra.mxu0 %v896
        %4484 = vmatprep.subr.bf16.mxu0 0
        %4485 = vmatpush2.bf16.msra.mxu0 0
        %4486 = vmatprep.subr.bf16.mxu0 0
        %4487 = vmatpush2.bf16.msra.mxu0 0
        %4488 = vmatprep.subr.bf16.mxu0 0
        %4489 = vmatpush2.bf16.msra.mxu0 0
        %4490 = vmatprep.subr.bf16.mxu0 0
        %4491 = vmatpush2.bf16.msra.mxu0 0
        %4492 = vmatprep.subr.bf16.mxu0 0
        %4493 = vmatpush2.bf16.msra.mxu0 0
        %4494 = vmatprep.subr.bf16.mxu0 0
        %4495 = vmatpush2.bf16.msra.mxu0 0
        %4496 = vmatprep.subr.bf16.mxu0 0
        %4497 = vmatpush2.bf16.msra.mxu0 0
        %4498 = vmatprep.subr.bf16.mxu0 0
        %4499 = vmatpush2.bf16.msra.mxu0 0
        %4500 = vmatprep.mubr.bf16.mxu0 0
        %4501 = vmatmul.mubr.bf16.gmra.mxu0 %v4386
        %v4502 = vpop.f32.mrf.mxu0
        %v4503 = vadd.f32 %v887, %v4502
        %v4504 = vpop.f32.mrf.mxu0
        %v4505 = vpop.f32.mrf.mxu0
        %v4506 = vpop.f32.mrf.mxu0
        %4507 = vdwg.mxu0
        %v4508 = vpack.c.bf16 %v4463, %v4463
        %v4509 = vpack.c.bf16 %v4503, %v4503
        %v4510 = vmul.f32 %v4423, %v660
        %v4511 = vpack.c.bf16 %v4510, %v4510
        %v4513 = vsel %vm676, %v4511, 0
        %v4516 = vsel %vm676, %v4508, 0
        %4518 = vmatprep.subr.bf16.mxu0 0
        %4519 = vmatpush1.bf16.xpose.msra.mxu0 0
        %4520 = vmatprep.subr.bf16.mxu0 0
        %4521 = vmatpush1.bf16.xpose.msra.mxu0 0
        %4522 = vmatprep.subr.bf16.mxu0 0
        %4523 = vmatpush1.bf16.xpose.msra.mxu0 0
        %4524 = vmatprep.subr.bf16.mxu0 0
        %4525 = vmatpush1.bf16.xpose.msra.mxu0 0
        %4526 = vmatprep.subr.bf16.mxu0 0
        %4527 = vmatpush1.bf16.xpose.msra.mxu0 0
        %4528 = vmatprep.subr.bf16.mxu0 0
        %4529 = vmatpush1.bf16.xpose.msra.mxu0 0
        %4530 = vmatprep.subr.bf16.mxu0 0
        %4531 = vmatpush1.bf16.xpose.msra.mxu0 0
        %4532 = vmatprep.subr.bf16.mxu0 0
        %4533 = vmatpush1.bf16.xpose.msra.mxu0 %v4516
        %4534 = vmatprep.subr.bf16.mxu0 0
        %4535 = vmatpush2.bf16.xpose.msra.mxu0 0
        %4536 = vmatprep.subr.bf16.mxu0 0
        %4537 = vmatpush2.bf16.xpose.msra.mxu0 0
        %4538 = vmatprep.subr.bf16.mxu0 0
        %4539 = vmatpush2.bf16.xpose.msra.mxu0 0
        %4540 = vmatprep.subr.bf16.mxu0 0
        %4541 = vmatpush2.bf16.xpose.msra.mxu0 0
        %4542 = vmatprep.subr.bf16.mxu0 0
        %4543 = vmatpush2.bf16.xpose.msra.mxu0 0
        %4544 = vmatprep.subr.bf16.mxu0 0
        %4545 = vmatpush2.bf16.xpose.msra.mxu0 0
        %4546 = vmatprep.subr.bf16.mxu0 0
        %4547 = vmatpush2.bf16.xpose.msra.mxu0 0
        %4548 = vmatprep.subr.bf16.mxu0 0
        %4549 = vmatpush2.bf16.xpose.msra.mxu0 0
        %4550 = vmatprep.mubr.bf16.mxu0 0
        %4551 = vmatmul.mubr.bf16.gmra.mxu0 %v4513
        %v4552 = vpop.f32.mrf.mxu0
        %v4553 = vadd.f32 0.0, %v4552
        %v4554 = vpop.f32.mrf.mxu0
        %v4555 = vpop.f32.mrf.mxu0
        %v4556 = vpop.f32.mrf.mxu0
        %4557 = vdwg.mxu0
        %v4558 = vmul.f32 %v4553, 0.35355338
        %v4559 = vsel %vm519, %v4558, -inf
        %4560 = vmax.xlane.f32.xlu0 %v4559
        %v4561 = vpop.xlane.xlu0 %4560
        %v4562 = vsub.f32 %v4558, %v4561
        %v4563 = vmul.f32 %v4562, 1.442695
        %v4564 = vpow.pop %v4563
        %v4565 = vsel %vm519, %v4564, 0.0
        %4566 = vadd.xlane.f32.xlu0 %v4565
        %v4567 = vpop.xlane.xlu0 %4566
        %v4568 = vrcp.pop %v4567
        %v4569 = vmul.f32 %v4564, %v4568
        %v4570 = vpack.c.bf16 %v4569, %v4569
        %v4572 = vsel %vm519, %v4570, 0
        %v4575 = vsel %vm523, %v4509, 0
        %4577 = vmatprep.subr.bf16.mxu0 0
        %4578 = vmatpush1.bf16.msra.mxu0 0
        %4579 = vmatprep.subr.bf16.mxu0 0
        %4580 = vmatpush1.bf16.msra.mxu0 0
        %4581 = vmatprep.subr.bf16.mxu0 0
        %4582 = vmatpush1.bf16.msra.mxu0 0
        %4583 = vmatprep.subr.bf16.mxu0 0
        %4584 = vmatpush1.bf16.msra.mxu0 0
        %4585 = vmatprep.subr.bf16.mxu0 0
        %4586 = vmatpush1.bf16.msra.mxu0 0
        %4587 = vmatprep.subr.bf16.mxu0 0
        %4588 = vmatpush1.bf16.msra.mxu0 0
        %4589 = vmatprep.subr.bf16.mxu0 0
        %4590 = vmatpush1.bf16.msra.mxu0 0
        %4591 = vmatprep.subr.bf16.mxu0 0
        %4592 = vmatpush1.bf16.msra.mxu0 %v4575
        %4593 = vmatprep.subr.bf16.mxu0 0
        %4594 = vmatpush2.bf16.msra.mxu0 0
        %4595 = vmatprep.subr.bf16.mxu0 0
        %4596 = vmatpush2.bf16.msra.mxu0 0
        %4597 = vmatprep.subr.bf16.mxu0 0
        %4598 = vmatpush2.bf16.msra.mxu0 0
        %4599 = vmatprep.subr.bf16.mxu0 0
        %4600 = vmatpush2.bf16.msra.mxu0 0
        %4601 = vmatprep.subr.bf16.mxu0 0
        %4602 = vmatpush2.bf16.msra.mxu0 0
        %4603 = vmatprep.subr.bf16.mxu0 0
        %4604 = vmatpush2.bf16.msra.mxu0 0
        %4605 = vmatprep.subr.bf16.mxu0 0
        %4606 = vmatpush2.bf16.msra.mxu0 0
        %4607 = vmatprep.subr.bf16.mxu0 0
        %4608 = vmatpush2.bf16.msra.mxu0 0
        %4609 = vmatprep.mubr.bf16.mxu0 0
        %4610 = vmatmul.mubr.bf16.gmra.mxu0 %v4572
        %v4611 = vpop.f32.mrf.mxu0
        %v4612 = vadd.f32 0.0, %v4611
        %v4613 = vpop.f32.mrf.mxu0
        %v4614 = vpop.f32.mrf.mxu0
        %v4615 = vpop.f32.mrf.mxu0
        %4616 = vdwg.mxu0
        %v4617 = vmul.f32 %v4612, %v660
        %v4618 = vadd.f32 %v4617, 0.0
        %v4619 = vmul.f32 %v4423, %v665
        %v4620 = vpack.c.bf16 %v4619, %v4619
        %v4622 = vsel %vm676, %v4620, 0
        %4624 = vmatprep.subr.bf16.mxu0 0
        %4625 = vmatpush1.bf16.xpose.msra.mxu0 0
        %4626 = vmatprep.subr.bf16.mxu0 0
        %4627 = vmatpush1.bf16.xpose.msra.mxu0 0
        %4628 = vmatprep.subr.bf16.mxu0 0
        %4629 = vmatpush1.bf16.xpose.msra.mxu0 0
        %4630 = vmatprep.subr.bf16.mxu0 0
        %4631 = vmatpush1.bf16.xpose.msra.mxu0 0
        %4632 = vmatprep.subr.bf16.mxu0 0
        %4633 = vmatpush1.bf16.xpose.msra.mxu0 0
        %4634 = vmatprep.subr.bf16.mxu0 0
        %4635 = vmatpush1.bf16.xpose.msra.mxu0 0
        %4636 = vmatprep.subr.bf16.mxu0 0
        %4637 = vmatpush1.bf16.xpose.msra.mxu0 0
        %4638 = vmatprep.subr.bf16.mxu0 0
        %4639 = vmatpush1.bf16.xpose.msra.mxu0 %v4516
        %4640 = vmatprep.subr.bf16.mxu0 0
        %4641 = vmatpush2.bf16.xpose.msra.mxu0 0
        %4642 = vmatprep.subr.bf16.mxu0 0
        %4643 = vmatpush2.bf16.xpose.msra.mxu0 0
        %4644 = vmatprep.subr.bf16.mxu0 0
        %4645 = vmatpush2.bf16.xpose.msra.mxu0 0
        %4646 = vmatprep.subr.bf16.mxu0 0
        %4647 = vmatpush2.bf16.xpose.msra.mxu0 0
        %4648 = vmatprep.subr.bf16.mxu0 0
        %4649 = vmatpush2.bf16.xpose.msra.mxu0 0
        %4650 = vmatprep.subr.bf16.mxu0 0
        %4651 = vmatpush2.bf16.xpose.msra.mxu0 0
        %4652 = vmatprep.subr.bf16.mxu0 0
        %4653 = vmatpush2.bf16.xpose.msra.mxu0 0
        %4654 = vmatprep.subr.bf16.mxu0 0
        %4655 = vmatpush2.bf16.xpose.msra.mxu0 0
        %4656 = vmatprep.mubr.bf16.mxu0 0
        %4657 = vmatmul.mubr.bf16.gmra.mxu0 %v4622
        %v4658 = vpop.f32.mrf.mxu0
        %v4659 = vadd.f32 0.0, %v4658
        %v4660 = vpop.f32.mrf.mxu0
        %v4661 = vpop.f32.mrf.mxu0
        %v4662 = vpop.f32.mrf.mxu0
        %4663 = vdwg.mxu0
        %v4664 = vmul.f32 %v4659, 0.35355338
        %v4665 = vsel %vm519, %v4664, -inf
        %4666 = vmax.xlane.f32.xlu0 %v4665
        %v4667 = vpop.xlane.xlu0 %4666
        %v4668 = vsub.f32 %v4664, %v4667
        %v4669 = vmul.f32 %v4668, 1.442695
        %v4670 = vpow.pop %v4669
        %v4671 = vsel %vm519, %v4670, 0.0
        %4672 = vadd.xlane.f32.xlu0 %v4671
        %v4673 = vpop.xlane.xlu0 %4672
        %v4674 = vrcp.pop %v4673
        %v4675 = vmul.f32 %v4670, %v4674
        %v4676 = vpack.c.bf16 %v4675, %v4675
        %v4678 = vsel %vm519, %v4676, 0
        %4680 = vmatprep.subr.bf16.mxu0 0
        %4681 = vmatpush1.bf16.msra.mxu0 0
        %4682 = vmatprep.subr.bf16.mxu0 0
        %4683 = vmatpush1.bf16.msra.mxu0 0
        %4684 = vmatprep.subr.bf16.mxu0 0
        %4685 = vmatpush1.bf16.msra.mxu0 0
        %4686 = vmatprep.subr.bf16.mxu0 0
        %4687 = vmatpush1.bf16.msra.mxu0 0
        %4688 = vmatprep.subr.bf16.mxu0 0
        %4689 = vmatpush1.bf16.msra.mxu0 0
        %4690 = vmatprep.subr.bf16.mxu0 0
        %4691 = vmatpush1.bf16.msra.mxu0 0
        %4692 = vmatprep.subr.bf16.mxu0 0
        %4693 = vmatpush1.bf16.msra.mxu0 0
        %4694 = vmatprep.subr.bf16.mxu0 0
        %4695 = vmatpush1.bf16.msra.mxu0 %v4575
        %4696 = vmatprep.subr.bf16.mxu0 0
        %4697 = vmatpush2.bf16.msra.mxu0 0
        %4698 = vmatprep.subr.bf16.mxu0 0
        %4699 = vmatpush2.bf16.msra.mxu0 0
        %4700 = vmatprep.subr.bf16.mxu0 0
        %4701 = vmatpush2.bf16.msra.mxu0 0
        %4702 = vmatprep.subr.bf16.mxu0 0
        %4703 = vmatpush2.bf16.msra.mxu0 0
        %4704 = vmatprep.subr.bf16.mxu0 0
        %4705 = vmatpush2.bf16.msra.mxu0 0
        %4706 = vmatprep.subr.bf16.mxu0 0
        %4707 = vmatpush2.bf16.msra.mxu0 0
        %4708 = vmatprep.subr.bf16.mxu0 0
        %4709 = vmatpush2.bf16.msra.mxu0 0
        %4710 = vmatprep.subr.bf16.mxu0 0
        %4711 = vmatpush2.bf16.msra.mxu0 0
        %4712 = vmatprep.mubr.bf16.mxu0 0
        %4713 = vmatmul.mubr.bf16.gmra.mxu0 %v4678
        %v4714 = vpop.f32.mrf.mxu0
        %v4715 = vadd.f32 0.0, %v4714
        %v4716 = vpop.f32.mrf.mxu0
        %v4717 = vpop.f32.mrf.mxu0
        %v4718 = vpop.f32.mrf.mxu0
        %4719 = vdwg.mxu0
        %v4720 = vmul.f32 %v4715, %v665
        %v4721 = vadd.f32 %v4618, %v4720
        %v4722 = vmul.f32 %v4423, %v670
        %v4723 = vpack.c.bf16 %v4722, %v4722
        %v4725 = vsel %vm676, %v4723, 0
        %4727 = vmatprep.subr.bf16.mxu0 0
        %4728 = vmatpush1.bf16.xpose.msra.mxu0 0
        %4729 = vmatprep.subr.bf16.mxu0 0
        %4730 = vmatpush1.bf16.xpose.msra.mxu0 0
        %4731 = vmatprep.subr.bf16.mxu0 0
        %4732 = vmatpush1.bf16.xpose.msra.mxu0 0
        %4733 = vmatprep.subr.bf16.mxu0 0
        %4734 = vmatpush1.bf16.xpose.msra.mxu0 0
        %4735 = vmatprep.subr.bf16.mxu0 0
        %4736 = vmatpush1.bf16.xpose.msra.mxu0 0
        %4737 = vmatprep.subr.bf16.mxu0 0
        %4738 = vmatpush1.bf16.xpose.msra.mxu0 0
        %4739 = vmatprep.subr.bf16.mxu0 0
        %4740 = vmatpush1.bf16.xpose.msra.mxu0 0
        %4741 = vmatprep.subr.bf16.mxu0 0
        %4742 = vmatpush1.bf16.xpose.msra.mxu0 %v4516
        %4743 = vmatprep.subr.bf16.mxu0 0
        %4744 = vmatpush2.bf16.xpose.msra.mxu0 0
        %4745 = vmatprep.subr.bf16.mxu0 0
        %4746 = vmatpush2.bf16.xpose.msra.mxu0 0
        %4747 = vmatprep.subr.bf16.mxu0 0
        %4748 = vmatpush2.bf16.xpose.msra.mxu0 0
        %4749 = vmatprep.subr.bf16.mxu0 0
        %4750 = vmatpush2.bf16.xpose.msra.mxu0 0
        %4751 = vmatprep.subr.bf16.mxu0 0
        %4752 = vmatpush2.bf16.xpose.msra.mxu0 0
        %4753 = vmatprep.subr.bf16.mxu0 0
        %4754 = vmatpush2.bf16.xpose.msra.mxu0 0
        %4755 = vmatprep.subr.bf16.mxu0 0
        %4756 = vmatpush2.bf16.xpose.msra.mxu0 0
        %4757 = vmatprep.subr.bf16.mxu0 0
        %4758 = vmatpush2.bf16.xpose.msra.mxu0 0
        %4759 = vmatprep.mubr.bf16.mxu0 0
        %4760 = vmatmul.mubr.bf16.gmra.mxu0 %v4725
        %v4761 = vpop.f32.mrf.mxu0
        %v4762 = vadd.f32 0.0, %v4761
        %v4763 = vpop.f32.mrf.mxu0
        %v4764 = vpop.f32.mrf.mxu0
        %v4765 = vpop.f32.mrf.mxu0
        %4766 = vdwg.mxu0
        %v4767 = vmul.f32 %v4762, 0.35355338
        %v4768 = vsel %vm519, %v4767, -inf
        %4769 = vmax.xlane.f32.xlu0 %v4768
        %v4770 = vpop.xlane.xlu0 %4769
        %v4771 = vsub.f32 %v4767, %v4770
        %v4772 = vmul.f32 %v4771, 1.442695
        %v4773 = vpow.pop %v4772
        %v4774 = vsel %vm519, %v4773, 0.0
        %4775 = vadd.xlane.f32.xlu0 %v4774
        %v4776 = vpop.xlane.xlu0 %4775
        %v4777 = vrcp.pop %v4776
        %v4778 = vmul.f32 %v4773, %v4777
        %v4779 = vpack.c.bf16 %v4778, %v4778
        %v4781 = vsel %vm519, %v4779, 0
        %4783 = vmatprep.subr.bf16.mxu0 0
        %4784 = vmatpush1.bf16.msra.mxu0 0
        %4785 = vmatprep.subr.bf16.mxu0 0
        %4786 = vmatpush1.bf16.msra.mxu0 0
        %4787 = vmatprep.subr.bf16.mxu0 0
        %4788 = vmatpush1.bf16.msra.mxu0 0
        %4789 = vmatprep.subr.bf16.mxu0 0
        %4790 = vmatpush1.bf16.msra.mxu0 0
        %4791 = vmatprep.subr.bf16.mxu0 0
        %4792 = vmatpush1.bf16.msra.mxu0 0
        %4793 = vmatprep.subr.bf16.mxu0 0
        %4794 = vmatpush1.bf16.msra.mxu0 0
        %4795 = vmatprep.subr.bf16.mxu0 0
        %4796 = vmatpush1.bf16.msra.mxu0 0
        %4797 = vmatprep.subr.bf16.mxu0 0
        %4798 = vmatpush1.bf16.msra.mxu0 %v4575
        %4799 = vmatprep.subr.bf16.mxu0 0
        %4800 = vmatpush2.bf16.msra.mxu0 0
        %4801 = vmatprep.subr.bf16.mxu0 0
        %4802 = vmatpush2.bf16.msra.mxu0 0
        %4803 = vmatprep.subr.bf16.mxu0 0
        %4804 = vmatpush2.bf16.msra.mxu0 0
        %4805 = vmatprep.subr.bf16.mxu0 0
        %4806 = vmatpush2.bf16.msra.mxu0 0
        %4807 = vmatprep.subr.bf16.mxu0 0
        %4808 = vmatpush2.bf16.msra.mxu0 0
        %4809 = vmatprep.subr.bf16.mxu0 0
        %4810 = vmatpush2.bf16.msra.mxu0 0
        %4811 = vmatprep.subr.bf16.mxu0 0
        %4812 = vmatpush2.bf16.msra.mxu0 0
        %4813 = vmatprep.subr.bf16.mxu0 0
        %4814 = vmatpush2.bf16.msra.mxu0 0
        %4815 = vmatprep.mubr.bf16.mxu0 0
        %4816 = vmatmul.mubr.bf16.gmra.mxu0 %v4781
        %v4817 = vpop.f32.mrf.mxu0
        %v4818 = vadd.f32 0.0, %v4817
        %v4819 = vpop.f32.mrf.mxu0
        %v4820 = vpop.f32.mrf.mxu0
        %v4821 = vpop.f32.mrf.mxu0
        %4822 = vdwg.mxu0
        %v4823 = vmul.f32 %v4818, %v670
        %v4824 = vadd.f32 %v4721, %v4823
        %v4825 = vmul.f32 %v4423, %v675
        %v4826 = vpack.c.bf16 %v4825, %v4825
        %v4828 = vsel %vm676, %v4826, 0
        %4830 = vmatprep.subr.bf16.mxu0 0
        %4831 = vmatpush1.bf16.xpose.msra.mxu0 0
        %4832 = vmatprep.subr.bf16.mxu0 0
        %4833 = vmatpush1.bf16.xpose.msra.mxu0 0
        %4834 = vmatprep.subr.bf16.mxu0 0
        %4835 = vmatpush1.bf16.xpose.msra.mxu0 0
        %4836 = vmatprep.subr.bf16.mxu0 0
        %4837 = vmatpush1.bf16.xpose.msra.mxu0 0
        %4838 = vmatprep.subr.bf16.mxu0 0
        %4839 = vmatpush1.bf16.xpose.msra.mxu0 0
        %4840 = vmatprep.subr.bf16.mxu0 0
        %4841 = vmatpush1.bf16.xpose.msra.mxu0 0
        %4842 = vmatprep.subr.bf16.mxu0 0
        %4843 = vmatpush1.bf16.xpose.msra.mxu0 0
        %4844 = vmatprep.subr.bf16.mxu0 0
        %4845 = vmatpush1.bf16.xpose.msra.mxu0 %v4516
        %4846 = vmatprep.subr.bf16.mxu0 0
        %4847 = vmatpush2.bf16.xpose.msra.mxu0 0
        %4848 = vmatprep.subr.bf16.mxu0 0
        %4849 = vmatpush2.bf16.xpose.msra.mxu0 0
        %4850 = vmatprep.subr.bf16.mxu0 0
        %4851 = vmatpush2.bf16.xpose.msra.mxu0 0
        %4852 = vmatprep.subr.bf16.mxu0 0
        %4853 = vmatpush2.bf16.xpose.msra.mxu0 0
        %4854 = vmatprep.subr.bf16.mxu0 0
        %4855 = vmatpush2.bf16.xpose.msra.mxu0 0
        %4856 = vmatprep.subr.bf16.mxu0 0
        %4857 = vmatpush2.bf16.xpose.msra.mxu0 0
        %4858 = vmatprep.subr.bf16.mxu0 0
        %4859 = vmatpush2.bf16.xpose.msra.mxu0 0
        %4860 = vmatprep.subr.bf16.mxu0 0
        %4861 = vmatpush2.bf16.xpose.msra.mxu0 0
        %4862 = vmatprep.mubr.bf16.mxu0 0
        %4863 = vmatmul.mubr.bf16.gmra.mxu0 %v4828
        %v4864 = vpop.f32.mrf.mxu0
        %v4865 = vadd.f32 0.0, %v4864
        %v4866 = vpop.f32.mrf.mxu0
        %v4867 = vpop.f32.mrf.mxu0
        %v4868 = vpop.f32.mrf.mxu0
        %4869 = vdwg.mxu0
        %v4870 = vmul.f32 %v4865, 0.35355338
        %v4871 = vsel %vm519, %v4870, -inf
        %4872 = vmax.xlane.f32.xlu0 %v4871
        %v4873 = vpop.xlane.xlu0 %4872
        %v4874 = vsub.f32 %v4870, %v4873
        %v4875 = vmul.f32 %v4874, 1.442695
        %v4876 = vpow.pop %v4875
        %v4877 = vsel %vm519, %v4876, 0.0
        %4878 = vadd.xlane.f32.xlu0 %v4877
        %v4879 = vpop.xlane.xlu0 %4878
        %v4880 = vrcp.pop %v4879
        %v4881 = vmul.f32 %v4876, %v4880
        %v4882 = vpack.c.bf16 %v4881, %v4881
        %v4884 = vsel %vm519, %v4882, 0
        %4886 = vmatprep.subr.bf16.mxu0 0
        %4887 = vmatpush1.bf16.msra.mxu0 0
        %4888 = vmatprep.subr.bf16.mxu0 0
        %4889 = vmatpush1.bf16.msra.mxu0 0
        %4890 = vmatprep.subr.bf16.mxu0 0
        %4891 = vmatpush1.bf16.msra.mxu0 0
        %4892 = vmatprep.subr.bf16.mxu0 0
        %4893 = vmatpush1.bf16.msra.mxu0 0
        %4894 = vmatprep.subr.bf16.mxu0 0
        %4895 = vmatpush1.bf16.msra.mxu0 0
        %4896 = vmatprep.subr.bf16.mxu0 0
        %4897 = vmatpush1.bf16.msra.mxu0 0
        %4898 = vmatprep.subr.bf16.mxu0 0
        %4899 = vmatpush1.bf16.msra.mxu0 0
        %4900 = vmatprep.subr.bf16.mxu0 0
        %4901 = vmatpush1.bf16.msra.mxu0 %v4575
        %4902 = vmatprep.subr.bf16.mxu0 0
        %4903 = vmatpush2.bf16.msra.mxu0 0
        %4904 = vmatprep.subr.bf16.mxu0 0
        %4905 = vmatpush2.bf16.msra.mxu0 0
        %4906 = vmatprep.subr.bf16.mxu0 0
        %4907 = vmatpush2.bf16.msra.mxu0 0
        %4908 = vmatprep.subr.bf16.mxu0 0
        %4909 = vmatpush2.bf16.msra.mxu0 0
        %4910 = vmatprep.subr.bf16.mxu0 0
        %4911 = vmatpush2.bf16.msra.mxu0 0
        %4912 = vmatprep.subr.bf16.mxu0 0
        %4913 = vmatpush2.bf16.msra.mxu0 0
        %4914 = vmatprep.subr.bf16.mxu0 0
        %4915 = vmatpush2.bf16.msra.mxu0 0
        %4916 = vmatprep.subr.bf16.mxu0 0
        %4917 = vmatpush2.bf16.msra.mxu0 0
        %4918 = vmatprep.mubr.bf16.mxu0 0
        %4919 = vmatmul.mubr.bf16.gmra.mxu0 %v4884
        %v4920 = vpop.f32.mrf.mxu0
        %v4921 = vadd.f32 0.0, %v4920
        %v4922 = vpop.f32.mrf.mxu0
        %v4923 = vpop.f32.mrf.mxu0
        %v4924 = vpop.f32.mrf.mxu0
        %4925 = vdwg.mxu0
        %v4926 = vmul.f32 %v4921, %v675
        %v4927 = vadd.f32 %v4824, %v4926
        %v4928 = vpack.c.bf16 %v4927, %v4927
        %v4930 = vsel %vm676, %v4928, 0
        %4932 = vmatprep.subr.bf16.mxu0 0
        %4933 = vmatpush1.bf16.msra.mxu0 0
        %4934 = vmatprep.subr.bf16.mxu0 0
        %4935 = vmatpush1.bf16.msra.mxu0 0
        %4936 = vmatprep.subr.bf16.mxu0 0
        %4937 = vmatpush1.bf16.msra.mxu0 0
        %4938 = vmatprep.subr.bf16.mxu0 0
        %4939 = vmatpush1.bf16.msra.mxu0 0
        %4940 = vmatprep.subr.bf16.mxu0 0
        %4941 = vmatpush1.bf16.msra.mxu0 0
        %4942 = vmatprep.subr.bf16.mxu0 0
        %4943 = vmatpush1.bf16.msra.mxu0 0
        %4944 = vmatprep.subr.bf16.mxu0 0
        %4945 = vmatpush1.bf16.msra.mxu0 %v1935
        %4946 = vmatprep.subr.bf16.mxu0 0
        %4947 = vmatpush1.bf16.msra.mxu0 %v1934
        %4948 = vmatprep.subr.bf16.mxu0 0
        %4949 = vmatpush2.bf16.msra.mxu0 0
        %4950 = vmatprep.subr.bf16.mxu0 0
        %4951 = vmatpush2.bf16.msra.mxu0 0
        %4952 = vmatprep.subr.bf16.mxu0 0
        %4953 = vmatpush2.bf16.msra.mxu0 0
        %4954 = vmatprep.subr.bf16.mxu0 0
        %4955 = vmatpush2.bf16.msra.mxu0 0
        %4956 = vmatprep.subr.bf16.mxu0 0
        %4957 = vmatpush2.bf16.msra.mxu0 0
        %4958 = vmatprep.subr.bf16.mxu0 0
        %4959 = vmatpush2.bf16.msra.mxu0 0
        %4960 = vmatprep.subr.bf16.mxu0 0
        %4961 = vmatpush2.bf16.msra.mxu0 0
        %4962 = vmatprep.subr.bf16.mxu0 0
        %4963 = vmatpush2.bf16.msra.mxu0 0
        %4964 = vmatprep.mubr.bf16.mxu0 0
        %4965 = vmatmul.mubr.bf16.gmra.mxu0 %v4930
        %v4966 = vpop.f32.mrf.mxu0
        %v4967 = vadd.f32 %v1925, %v4966
        %v4968 = vpop.f32.mrf.mxu0
        %v4969 = vpop.f32.mrf.mxu0
        %v4970 = vpop.f32.mrf.mxu0
        %4971 = vdwg.mxu0
        %v4972 = vadd.f32 %v4368, %v4967
        %v4973 = vsel %vm676, %v4972, 0.0
        %4974 = vadd.xlane.f32.xlu0 %v4973
        %v4975 = vpop.xlane.xlu0 %4974
        %v4976 = vmul.f32 %v4975, %v689
        %v4977 = vsub.f32 %v4972, %v4976
        %v4978 = vmul.f32 %v4977, %v4977
        %v4979 = vsel %vm676, %v4978, 0.0
        %4980 = vadd.xlane.f32.xlu0 %v4979
        %v4981 = vpop.xlane.xlu0 %4980
        %v4982 = vmul.f32 %v4981, %v689
        %v4983 = vadd.f32 %v4982, 1e-05
        %v4984 = vrsqrt.pop %v4983
        %v4985 = vmul.f32 %v4977, %v4984
        %v4986 = vmul.f32 %v4985, %v2052
        %v4987 = vadd.f32 %v4986, %v2060
        %v4988 = vpack.c.bf16 %v4987, %v4987
        %v4990 = vsel %vm676, %v4988, 0
        %4992 = vmatprep.subr.bf16.mxu0 0
        %4993 = vmatpush1.bf16.msra.mxu0 0
        %4994 = vmatprep.subr.bf16.mxu0 0
        %4995 = vmatpush1.bf16.msra.mxu0 0
        %4996 = vmatprep.subr.bf16.mxu0 0
        %4997 = vmatpush1.bf16.msra.mxu0 0
        %4998 = vmatprep.subr.bf16.mxu0 0
        %4999 = vmatpush1.bf16.msra.mxu0 0
        %5000 = vmatprep.subr.bf16.mxu0 0
        %5001 = vmatpush1.bf16.msra.mxu0 0
        %5002 = vmatprep.subr.bf16.mxu0 0
        %5003 = vmatpush1.bf16.msra.mxu0 0
        %5004 = vmatprep.subr.bf16.mxu0 0
        %5005 = vmatpush1.bf16.msra.mxu0 %v2080
        %5006 = vmatprep.subr.bf16.mxu0 0
        %5007 = vmatpush1.bf16.msra.mxu0 %v2079
        %5008 = vmatprep.subr.bf16.mxu0 0
        %5009 = vmatpush2.bf16.msra.mxu0 0
        %5010 = vmatprep.subr.bf16.mxu0 0
        %5011 = vmatpush2.bf16.msra.mxu0 0
        %5012 = vmatprep.subr.bf16.mxu0 0
        %5013 = vmatpush2.bf16.msra.mxu0 0
        %5014 = vmatprep.subr.bf16.mxu0 0
        %5015 = vmatpush2.bf16.msra.mxu0 0
        %5016 = vmatprep.subr.bf16.mxu0 0
        %5017 = vmatpush2.bf16.msra.mxu0 0
        %5018 = vmatprep.subr.bf16.mxu0 0
        %5019 = vmatpush2.bf16.msra.mxu0 0
        %5020 = vmatprep.subr.bf16.mxu0 0
        %5021 = vmatpush2.bf16.msra.mxu0 0
        %5022 = vmatprep.subr.bf16.mxu0 0
        %5023 = vmatpush2.bf16.msra.mxu0 0
        %5024 = vmatprep.mubr.bf16.mxu0 0
        %5025 = vmatmul.mubr.bf16.gmra.mxu0 %v4990
        %v5026 = vpop.f32.mrf.mxu0
        %v5027 = vadd.f32 %v2070, %v5026
        %v5028 = vpop.f32.mrf.mxu0
        %v5029 = vpop.f32.mrf.mxu0
        %v5030 = vpop.f32.mrf.mxu0
        %5031 = vdwg.mxu0
        %v5032 = vmax.f32 %v5027, 0.0
        %v5033 = vpack.c.bf16 %v5032, %v5032
        %v5035 = vsel %vm2172, %v5033, 0
        %5037 = vmatprep.subr.bf16.mxu0 0
        %5038 = vmatpush1.bf16.msra.mxu0 0
        %5039 = vmatprep.subr.bf16.mxu0 0
        %5040 = vmatpush1.bf16.msra.mxu0 0
        %5041 = vmatprep.subr.bf16.mxu0 0
        %5042 = vmatpush1.bf16.msra.mxu0 0
        %5043 = vmatprep.subr.bf16.mxu0 0
        %5044 = vmatpush1.bf16.msra.mxu0 0
        %5045 = vmatprep.subr.bf16.mxu0 0
        %5046 = vmatpush1.bf16.msra.mxu0 %v2167
        %5047 = vmatprep.subr.bf16.mxu0 0
        %5048 = vmatpush1.bf16.msra.mxu0 %v2166
        %5049 = vmatprep.subr.bf16.mxu0 0
        %5050 = vmatpush1.bf16.msra.mxu0 %v2165
        %5051 = vmatprep.subr.bf16.mxu0 0
        %5052 = vmatpush1.bf16.msra.mxu0 %v2164
        %5053 = vmatprep.subr.bf16.mxu0 0
        %5054 = vmatpush2.bf16.msra.mxu0 0
        %5055 = vmatprep.subr.bf16.mxu0 0
        %5056 = vmatpush2.bf16.msra.mxu0 0
        %5057 = vmatprep.subr.bf16.mxu0 0
        %5058 = vmatpush2.bf16.msra.mxu0 0
        %5059 = vmatprep.subr.bf16.mxu0 0
        %5060 = vmatpush2.bf16.msra.mxu0 0
        %5061 = vmatprep.subr.bf16.mxu0 0
        %5062 = vmatpush2.bf16.msra.mxu0 0
        %5063 = vmatprep.subr.bf16.mxu0 0
        %5064 = vmatpush2.bf16.msra.mxu0 0
        %5065 = vmatprep.subr.bf16.mxu0 0
        %5066 = vmatpush2.bf16.msra.mxu0 0
        %5067 = vmatprep.subr.bf16.mxu0 0
        %5068 = vmatpush2.bf16.msra.mxu0 0
        %5069 = vmatprep.mubr.bf16.mxu0 0
        %5070 = vmatmul.mubr.bf16.gmra.mxu0 %v5035
        %v5071 = vpop.f32.mrf.mxu0
        %v5072 = vadd.f32 %v2147, %v5071
        %v5073 = vpop.f32.mrf.mxu0
        %v5074 = vpop.f32.mrf.mxu0
        %v5075 = vpop.f32.mrf.mxu0
        %5076 = vdwg.mxu0
        %v5077 = vadd.f32 %v4972, %v5072
        %5079 = vset.pattern.permute.xlu0 0
        %5080 = vperm.xlu0 %5079, %v263
        %v5081 = vpop.permute.xlu0 %5080
        %5084 = vset.pattern.permute.xlu0 0
        %5085 = vperm.xlu0 %5084, %v264
        %v5086 = vpop.permute.xlu0 %5085
        %v5088 = vmul.f32 %v3656, %v5081
        %v5089 = vmul.f32 %v3657, %v5086
        %v5090 = vsel %vm676, %v5088, 0.0
        %v5091 = vsel %vm676, %v5089, 0.0
        %v5092 = vadd.f32 %v5090, %v5091
        %v5093 = vrot.slane %v5092, 4
        %v5094 = vadd.f32 %v5092, %v5093
        %v5095 = vrot.slane %v5094, 2
        %v5096 = vadd.f32 %v5094, %v5095
        %v5097 = vrot.slane %v5096, 1
        %v5098 = vadd.f32 %v5096, %v5097
        %5100 = vset.pattern.permute.xlu0 0
        %5101 = vperm.xlu0 %5100, %v270
        %v5102 = vpop.permute.xlu0 %5101
        %v5104 = vadd.f32 %v5098, %v5102
        %5106 = vset.pattern.permute.xlu0 0
        %5107 = vperm.xlu0 %5106, %v265
        %v5108 = vpop.permute.xlu0 %5107
        %5111 = vset.pattern.permute.xlu0 0
        %5112 = vperm.xlu0 %5111, %v266
        %v5113 = vpop.permute.xlu0 %5112
        %v5115 = vmul.f32 %v3658, %v5108
        %v5116 = vmul.f32 %v3659, %v5113
        %v5117 = vsel %vm676, %v5115, 0.0
        %v5118 = vsel %vm676, %v5116, 0.0
        %v5119 = vadd.f32 %v5117, %v5118
        %v5120 = vrot.slane %v5119, 4
        %v5121 = vadd.f32 %v5119, %v5120
        %v5122 = vrot.slane %v5121, 2
        %v5123 = vadd.f32 %v5121, %v5122
        %v5124 = vrot.slane %v5123, 1
        %v5125 = vadd.f32 %v5123, %v5124
        %v5126 = vadd.f32 %v5125, %v5102
        %5128 = vset.pattern.permute.xlu0 0
        %5129 = vperm.xlu0 %5128, %v267
        %v5130 = vpop.permute.xlu0 %5129
        %v5132 = vmul.f32 %v5077, %v5130
        %v5133 = vsel %vm676, %v5132, 0.0
        %v5134 = vrot.slane %v5133, 4
        %v5135 = vadd.f32 %v5133, %v5134
        %v5136 = vrot.slane %v5135, 2
        %v5137 = vadd.f32 %v5135, %v5136
        %v5138 = vrot.slane %v5137, 1
        %v5139 = vadd.f32 %v5137, %v5138
        %v5140 = vadd.f32 %v5139, %v5102
        %v5141 = vpack.c.bf16 %v5104, %v5104
        %v5142 = vld [vmem:[%s3 + $0x70] sm:$0xf]
        %v5143 = vld [vmem:[%s3 + $0x74] sm:$0xf]
        %v5144 = vld [vmem:[%s3 + $0x78] sm:$0xf]
        %v5145 = vld [vmem:[%s3 + $0x7c] sm:$0xf]
        %v5146 = vpack.c.bf16 %v5126, %v5126
        %v5147 = vld [vmem:[%s3 + $0x80] sm:$0xf]
        %v5148 = vld [vmem:[%s3 + $0x84] sm:$0xf]
        %v5149 = vld [vmem:[%s3 + $0x88] sm:$0xf]
        %v5150 = vld [vmem:[%s3 + $0x8c] sm:$0xf]
        %v5152 = vshrl.u32 %v5146, 16
        %v5158 = vunpack.c.l.b16 %v5147
        %v5159 = vunpack.c.l.b16 %v5148
        %v5160 = vunpack.c.l.b16 %v5149
        %v5161 = vunpack.c.l.b16 %v5150
        %v5162 = vpack.c.b16 %v5159, %v5158
        %v5163 = vpack.c.b16 %v5161, %v5160
        %v5167 = vsel %vm676, %v5152, 0
        %5169 = vmatprep.subr.bf16.mxu0 0
        %5170 = vmatpush1.bf16.msra.mxu0 0
        %5171 = vmatprep.subr.bf16.mxu0 0
        %5172 = vmatpush1.bf16.msra.mxu0 0
        %5173 = vmatprep.subr.bf16.mxu0 0
        %5174 = vmatpush1.bf16.msra.mxu0 0
        %5175 = vmatprep.subr.bf16.mxu0 0
        %5176 = vmatpush1.bf16.msra.mxu0 0
        %5177 = vmatprep.subr.bf16.mxu0 0
        %5178 = vmatpush1.bf16.msra.mxu0 0
        %5179 = vmatprep.subr.bf16.mxu0 0
        %5180 = vmatpush1.bf16.msra.mxu0 0
        %5181 = vmatprep.subr.bf16.mxu0 0
        %5182 = vmatpush1.bf16.msra.mxu0 %v5163
        %5183 = vmatprep.subr.bf16.mxu0 0
        %5184 = vmatpush1.bf16.msra.mxu0 %v5162
        %5185 = vmatprep.subr.bf16.mxu0 0
        %5186 = vmatpush2.bf16.msra.mxu0 0
        %5187 = vmatprep.subr.bf16.mxu0 0
        %5188 = vmatpush2.bf16.msra.mxu0 0
        %5189 = vmatprep.subr.bf16.mxu0 0
        %5190 = vmatpush2.bf16.msra.mxu0 0
        %5191 = vmatprep.subr.bf16.mxu0 0
        %5192 = vmatpush2.bf16.msra.mxu0 0
        %5193 = vmatprep.subr.bf16.mxu0 0
        %5194 = vmatpush2.bf16.msra.mxu0 0
        %5195 = vmatprep.subr.bf16.mxu0 0
        %5196 = vmatpush2.bf16.msra.mxu0 0
        %5197 = vmatprep.subr.bf16.mxu0 0
        %5198 = vmatpush2.bf16.msra.mxu0 0
        %5199 = vmatprep.subr.bf16.mxu0 0
        %5200 = vmatpush2.bf16.msra.mxu0 0
        %5201 = vmatprep.mubr.bf16.mxu0 0
        %5202 = vmatmul.mubr.bf16.gmra.mxu0 %v5167
        %v5203 = vpop.f32.mrf.mxu0
        %v5204 = vadd.f32 0.0, %v5203
        %v5205 = vpop.f32.mrf.mxu0
        %v5206 = vpop.f32.mrf.mxu0
        %v5207 = vpop.f32.mrf.mxu0
        %5208 = vdwg.mxu0
        %v5213 = vunpack.c.l.b16 %v5142
        %v5214 = vunpack.c.l.b16 %v5143
        %v5215 = vunpack.c.l.b16 %v5144
        %v5216 = vunpack.c.l.b16 %v5145
        %v5217 = vpack.c.b16 %v5214, %v5213
        %v5218 = vpack.c.b16 %v5216, %v5215
        %v5222 = vsel %vm676, %v5141, 0
        %5224 = vmatprep.subr.bf16.mxu0 0
        %5225 = vmatpush1.bf16.msra.mxu0 0
        %5226 = vmatprep.subr.bf16.mxu0 0
        %5227 = vmatpush1.bf16.msra.mxu0 0
        %5228 = vmatprep.subr.bf16.mxu0 0
        %5229 = vmatpush1.bf16.msra.mxu0 0
        %5230 = vmatprep.subr.bf16.mxu0 0
        %5231 = vmatpush1.bf16.msra.mxu0 0
        %5232 = vmatprep.subr.bf16.mxu0 0
        %5233 = vmatpush1.bf16.msra.mxu0 0
        %5234 = vmatprep.subr.bf16.mxu0 0
        %5235 = vmatpush1.bf16.msra.mxu0 0
        %5236 = vmatprep.subr.bf16.mxu0 0
        %5237 = vmatpush1.bf16.msra.mxu0 %v5218
        %5238 = vmatprep.subr.bf16.mxu0 0
        %5239 = vmatpush1.bf16.msra.mxu0 %v5217
        %5240 = vmatprep.subr.bf16.mxu0 0
        %5241 = vmatpush2.bf16.msra.mxu0 0
        %5242 = vmatprep.subr.bf16.mxu0 0
        %5243 = vmatpush2.bf16.msra.mxu0 0
        %5244 = vmatprep.subr.bf16.mxu0 0
        %5245 = vmatpush2.bf16.msra.mxu0 0
        %5246 = vmatprep.subr.bf16.mxu0 0
        %5247 = vmatpush2.bf16.msra.mxu0 0
        %5248 = vmatprep.subr.bf16.mxu0 0
        %5249 = vmatpush2.bf16.msra.mxu0 0
        %5250 = vmatprep.subr.bf16.mxu0 0
        %5251 = vmatpush2.bf16.msra.mxu0 0
        %5252 = vmatprep.subr.bf16.mxu0 0
        %5253 = vmatpush2.bf16.msra.mxu0 0
        %5254 = vmatprep.subr.bf16.mxu0 0
        %5255 = vmatpush2.bf16.msra.mxu0 0
        %5256 = vmatprep.mubr.bf16.mxu0 0
        %5257 = vmatmul.mubr.bf16.gmra.mxu0 %v5222
        %v5258 = vpop.f32.mrf.mxu0
        %v5259 = vadd.f32 %v5204, %v5258
        %v5260 = vpop.f32.mrf.mxu0
        %v5261 = vpop.f32.mrf.mxu0
        %v5262 = vpop.f32.mrf.mxu0
        %5263 = vdwg.mxu0
        %v5265 = vrot.slane %v269, 5
        %v5267 = vadd.f32 %v5259, %v5265
        %v5268 = vmax.f32 %v5267, 0.0
        %v5269 = vpack.c.bf16 %v5268, %v5268
        %v5270 = vld [vmem:[%s3 + $0x90] sm:$0xf]
        %v5271 = vld [vmem:[%s3 + $0x94] sm:$0xf]
        %v5272 = vld [vmem:[%s3 + $0x98] sm:$0xf]
        %v5273 = vld [vmem:[%s3 + $0x9c] sm:$0xf]
        %v5274 = vpack.c.bf16 %v5140, %v5140
        %v5275 = vld [vmem:[%s3 + $0xa0] sm:$0xf]
        %v5276 = vld [vmem:[%s3 + $0xa4] sm:$0xf]
        %v5277 = vld [vmem:[%s3 + $0xa8] sm:$0xf]
        %v5278 = vld [vmem:[%s3 + $0xac] sm:$0xf]
        %v5280 = vrot.slane %v5274, 1
        %v5285 = vunpack.c.l.b16 %v5275
        %v5286 = vunpack.c.l.b16 %v5276
        %v5287 = vunpack.c.l.b16 %v5277
        %v5288 = vunpack.c.l.b16 %v5278
        %v5289 = vpack.c.b16 %v5286, %v5285
        %v5290 = vpack.c.b16 %v5288, %v5287
        %v5294 = vsel %vm676, %v5280, 0
        %5296 = vmatprep.subr.bf16.mxu0 0
        %5297 = vmatpush1.bf16.msra.mxu0 0
        %5298 = vmatprep.subr.bf16.mxu0 0
        %5299 = vmatpush1.bf16.msra.mxu0 0
        %5300 = vmatprep.subr.bf16.mxu0 0
        %5301 = vmatpush1.bf16.msra.mxu0 0
        %5302 = vmatprep.subr.bf16.mxu0 0
        %5303 = vmatpush1.bf16.msra.mxu0 0
        %5304 = vmatprep.subr.bf16.mxu0 0
        %5305 = vmatpush1.bf16.msra.mxu0 0
        %5306 = vmatprep.subr.bf16.mxu0 0
        %5307 = vmatpush1.bf16.msra.mxu0 0
        %5308 = vmatprep.subr.bf16.mxu0 0
        %5309 = vmatpush1.bf16.msra.mxu0 %v5290
        %5310 = vmatprep.subr.bf16.mxu0 0
        %5311 = vmatpush1.bf16.msra.mxu0 %v5289
        %5312 = vmatprep.subr.bf16.mxu0 0
        %5313 = vmatpush2.bf16.msra.mxu0 0
        %5314 = vmatprep.subr.bf16.mxu0 0
        %5315 = vmatpush2.bf16.msra.mxu0 0
        %5316 = vmatprep.subr.bf16.mxu0 0
        %5317 = vmatpush2.bf16.msra.mxu0 0
        %5318 = vmatprep.subr.bf16.mxu0 0
        %5319 = vmatpush2.bf16.msra.mxu0 0
        %5320 = vmatprep.subr.bf16.mxu0 0
        %5321 = vmatpush2.bf16.msra.mxu0 0
        %5322 = vmatprep.subr.bf16.mxu0 0
        %5323 = vmatpush2.bf16.msra.mxu0 0
        %5324 = vmatprep.subr.bf16.mxu0 0
        %5325 = vmatpush2.bf16.msra.mxu0 0
        %5326 = vmatprep.subr.bf16.mxu0 0
        %5327 = vmatpush2.bf16.msra.mxu0 0
        %5328 = vmatprep.mubr.bf16.mxu0 0
        %5329 = vmatmul.mubr.bf16.gmra.mxu0 %v5294
        %v5330 = vpop.f32.mrf.mxu0
        %v5331 = vadd.f32 0.0, %v5330
        %v5332 = vpop.f32.mrf.mxu0
        %v5333 = vpop.f32.mrf.mxu0
        %v5334 = vpop.f32.mrf.mxu0
        %5335 = vdwg.mxu0
        %v5340 = vunpack.c.l.b16 %v5270
        %v5341 = vunpack.c.l.b16 %v5271
        %v5342 = vunpack.c.l.b16 %v5272
        %v5343 = vunpack.c.l.b16 %v5273
        %v5344 = vpack.c.b16 %v5341, %v5340
        %v5345 = vpack.c.b16 %v5343, %v5342
        %v5349 = vsel %vm676, %v5269, 0
        %5351 = vmatprep.subr.bf16.mxu0 0
        %5352 = vmatpush1.bf16.msra.mxu0 0
        %5353 = vmatprep.subr.bf16.mxu0 0
        %5354 = vmatpush1.bf16.msra.mxu0 0
        %5355 = vmatprep.subr.bf16.mxu0 0
        %5356 = vmatpush1.bf16.msra.mxu0 0
        %5357 = vmatprep.subr.bf16.mxu0 0
        %5358 = vmatpush1.bf16.msra.mxu0 0
        %5359 = vmatprep.subr.bf16.mxu0 0
        %5360 = vmatpush1.bf16.msra.mxu0 0
        %5361 = vmatprep.subr.bf16.mxu0 0
        %5362 = vmatpush1.bf16.msra.mxu0 0
        %5363 = vmatprep.subr.bf16.mxu0 0
        %5364 = vmatpush1.bf16.msra.mxu0 %v5345
        %5365 = vmatprep.subr.bf16.mxu0 0
        %5366 = vmatpush1.bf16.msra.mxu0 %v5344
        %5367 = vmatprep.subr.bf16.mxu0 0
        %5368 = vmatpush2.bf16.msra.mxu0 0
        %5369 = vmatprep.subr.bf16.mxu0 0
        %5370 = vmatpush2.bf16.msra.mxu0 0
        %5371 = vmatprep.subr.bf16.mxu0 0
        %5372 = vmatpush2.bf16.msra.mxu0 0
        %5373 = vmatprep.subr.bf16.mxu0 0
        %5374 = vmatpush2.bf16.msra.mxu0 0
        %5375 = vmatprep.subr.bf16.mxu0 0
        %5376 = vmatpush2.bf16.msra.mxu0 0
        %5377 = vmatprep.subr.bf16.mxu0 0
        %5378 = vmatpush2.bf16.msra.mxu0 0
        %5379 = vmatprep.subr.bf16.mxu0 0
        %5380 = vmatpush2.bf16.msra.mxu0 0
        %5381 = vmatprep.subr.bf16.mxu0 0
        %5382 = vmatpush2.bf16.msra.mxu0 0
        %5383 = vmatprep.mubr.bf16.mxu0 0
        %5384 = vmatmul.mubr.bf16.gmra.mxu0 %v5349
        %v5385 = vpop.f32.mrf.mxu0
        %v5386 = vadd.f32 %v5331, %v5385
        %v5387 = vpop.f32.mrf.mxu0
        %v5388 = vpop.f32.mrf.mxu0
        %v5389 = vpop.f32.mrf.mxu0
        %5390 = vdwg.mxu0
        %v5391 = vrot.slane %v269, 6
        %v5393 = vadd.f32 %v5386, %v5391
        %v5394 = vmax.f32 %v5393, 0.0
        %v5395 = vpack.c.bf16 %v5394, %v5394
        %v5396 = vld [vmem:[%s3 + $0xb0] sm:$0xf]
        %v5397 = vld [vmem:[%s3 + $0xb4] sm:$0xf]
        %v5398 = vld [vmem:[%s3 + $0xb8] sm:$0xf]
        %v5399 = vld [vmem:[%s3 + $0xbc] sm:$0xf]
        %v5404 = vunpack.c.l.b16 %v5396
        %v5405 = vunpack.c.l.b16 %v5397
        %v5406 = vunpack.c.l.b16 %v5398
        %v5407 = vunpack.c.l.b16 %v5399
        %v5408 = vpack.c.b16 %v5405, %v5404
        %v5409 = vpack.c.b16 %v5407, %v5406
        %v5412 = vrot.slane %v269, 7
        %v5415 = vsel %vm676, %v5395, 0
        %5417 = vmatprep.subr.bf16.mxu0 0
        %5418 = vmatpush1.bf16.msra.mxu0 0
        %5419 = vmatprep.subr.bf16.mxu0 0
        %5420 = vmatpush1.bf16.msra.mxu0 0
        %5421 = vmatprep.subr.bf16.mxu0 0
        %5422 = vmatpush1.bf16.msra.mxu0 0
        %5423 = vmatprep.subr.bf16.mxu0 0
        %5424 = vmatpush1.bf16.msra.mxu0 0
        %5425 = vmatprep.subr.bf16.mxu0 0
        %5426 = vmatpush1.bf16.msra.mxu0 0
        %5427 = vmatprep.subr.bf16.mxu0 0
        %5428 = vmatpush1.bf16.msra.mxu0 0
        %5429 = vmatprep.subr.bf16.mxu0 0
        %5430 = vmatpush1.bf16.msra.mxu0 %v5409
        %5431 = vmatprep.subr.bf16.mxu0 0
        %5432 = vmatpush1.bf16.msra.mxu0 %v5408
        %5433 = vmatprep.subr.bf16.mxu0 0
        %5434 = vmatpush2.bf16.msra.mxu0 0
        %5435 = vmatprep.subr.bf16.mxu0 0
        %5436 = vmatpush2.bf16.msra.mxu0 0
        %5437 = vmatprep.subr.bf16.mxu0 0
        %5438 = vmatpush2.bf16.msra.mxu0 0
        %5439 = vmatprep.subr.bf16.mxu0 0
        %5440 = vmatpush2.bf16.msra.mxu0 0
        %5441 = vmatprep.subr.bf16.mxu0 0
        %5442 = vmatpush2.bf16.msra.mxu0 0
        %5443 = vmatprep.subr.bf16.mxu0 0
        %5444 = vmatpush2.bf16.msra.mxu0 0
        %5445 = vmatprep.subr.bf16.mxu0 0
        %5446 = vmatpush2.bf16.msra.mxu0 0
        %5447 = vmatprep.subr.bf16.mxu0 0
        %5448 = vmatpush2.bf16.msra.mxu0 0
        %5449 = vmatprep.mubr.bf16.mxu0 0
        %5450 = vmatmul.mubr.bf16.gmra.mxu0 %v5415
        %v5451 = vpop.f32.mrf.mxu0
        %v5452 = vadd.f32 %v5412, %v5451
        %v5453 = vpop.f32.mrf.mxu0
        %v5454 = vpop.f32.mrf.mxu0
        %v5455 = vpop.f32.mrf.mxu0
        %5456 = vdwg.mxu0
        %v5457 = vxor.u32 %v5452, 2147483648
        %v5458 = vmul.f32 %v5457, 1.442695
        %v5459 = vpow.pop %v5458
        %v5460 = vadd.f32 %v5459, 1.0
        %v5461 = vrcp.pop %v5460
        %v5462 = vmul.f32 1.0, %v5461
        %vm5463 = vcmask 57344
        %5464 = vst.msk [vmem:[%s244] sm:$0x1] %vm5463, %v5462
        %s5465 = sand.u32 %s147, 1
        %s5466 = scalar_lea.sflag [#allocation3], %s5465
        %s5467 = sand.u32 %s147, 1
        %s5468 = scalar_lea.vmem [#allocation2], %s5467
        // Predicated region
        $region41: #{matnet_forward.1} parent=39 // pred_check
          %p5469 = pneg %p157
        $region42: #{matnet_forward.1} parent=39 // pred_check_branch
          %5471 = sbr.rel (%p5469) target = $region44
        $region43: #{matnet_forward.1} parent=39 // pred_region
          %s5473 = ssub.s32 16, 16
          %5474 = vsyncadd %s5466, %s5473
          %s5475 = smul.addr %s19, 16
          %s5476 = scalar_lea.hbm %s5, %s5475
          %s5478 = sshll.u32 %s5468, 4
          %s5479 = int_to_ptr.vmem [resolvable:$true] %s5478
          %5481 = dma.vmem_to_hbm [thread:$0]  %s5479, 16, %s5476, %s5466
        $region44: #{matnet_forward.1} parent=39 // pred_fallthru
          _
      $region40: #{matnet_forward.1} parent=5 // pred_fallthru
        _
      %p5482 = scmp.le.s32.totalorder 2, %s14
      // Predicated region
      $region45: #{matnet_forward.1} parent=5 // pred_check
        %p5483 = pneg %p5482
      $region46: #{matnet_forward.1} parent=5 // pred_check_branch
        %5485 = sbr.rel (%p5483) target = $region48
      $region47: #{matnet_forward.1} parent=5 // pred_region
        %s5486 = ssub.s32 %s14, 2
        // Predicated region
        $region49: #{matnet_forward.1} parent=47 // pred_check
          %p5487 = pneg %p163
        $region50: #{matnet_forward.1} parent=47 // pred_check_branch
          %5489 = sbr.rel (%p5487) target = $region52
        $region51: #{matnet_forward.1} parent=47 // pred_region
          %s5490 = sand.u32 %s148, 1
          %s5491 = scalar_lea.sflag [#allocation3], %s5490
          %s5492 = sand.u32 %s148, 1
          %s5493 = scalar_lea.vmem [#allocation2], %s5492
          %5494 = dma.done %s5491, 16
        $region52: #{matnet_forward.1} parent=47 // pred_fallthru
          _
      $region48: #{matnet_forward.1} parent=5 // pred_fallthru
        _
    $region6: #{matnet_forward.1} parent=1 // loop_footer
      %s18 = sadd.s32 1, %s14
    $region7: #{matnet_forward.1} parent=1 // loop_footer_branch
      %13 = sbr.rel target = $region3
    $region8: #{matnet_forward.1} parent=1 // loop_exit
      _
    %5495 = vsyncpa [#allocation3], 1
    %s5496 = scalar_lea.sflag [#allocation3], 1
    %5497 = vsyncpa %s5496, 1

</llo_original>
